<compile_context>
chip_gen: v5e
topology: v5e:2x2
jax: 0.10.0
libtpu: 0.0.40
codegen_flags: <defaults>
</compile_context>

<pallas_src>
import functools
import numpy as np

import jax
import jax.numpy as jnp
from jax.experimental import pallas as pl
from jax.experimental.pallas import tpu as pltpu


# ------------------------------------------------------------------
# Small helpers
# ------------------------------------------------------------------

def _ceil_to(x, m):
    return ((x + m - 1) // m) * m


def _row_tiling(m):
    """Pick (padded_rows, row_tile).  Never a giant single block."""
    mp = _ceil_to(m, 8)
    if mp <= 256:
        return mp, mp
    return _ceil_to(m, 256), 256


def _cparams(*sem):
    return pltpu.CompilerParams(dimension_semantics=tuple(sem),
                                vmem_limit_bytes=32 * 1024 * 1024)


def _pad_rows(a2, mp):
    m = a2.shape[0]
    if m == mp:
        return a2
    return jnp.pad(a2, ((0, mp - m), (0, 0)))


# ------------------------------------------------------------------
# Fused LN + matmul + epilogue kernel
# ------------------------------------------------------------------

def _fused_matmul_kernel(*refs, act, sig_tail, has_ln, has_premul,
                         has_postmul, has_residual):
    it = iter(refs)
    x = next(it)[...]                                   # (tm, K)  f32
    if has_ln:
        g = next(it)[...]
        bt = next(it)[...]
        mu = jnp.mean(x, axis=-1, keepdims=True)
        xc = x - mu
        var = jnp.mean(xc * xc, axis=-1, keepdims=True)
        x = xc * jax.lax.rsqrt(var + 1e-5) * g + bt
    w = next(it)[...]                                   # (K, N)   bf16
    b = next(it)[...]                                   # (1, N)   f32
    if has_premul:
        x = x * next(it)[...]
    acc = jnp.dot(x.astype(jnp.bfloat16), w,
                  preferred_element_type=jnp.float32) + b
    if act == "relu":
        head = jnp.maximum(acc, 0.0)
    elif act == "sigmoid":
        head = jax.nn.sigmoid(acc)
    else:
        head = acc
    if sig_tail > 0:
        col = jax.lax.broadcasted_iota(jnp.int32, acc.shape, 1)
        acc = jnp.where(col >= acc.shape[1] - sig_tail,
                        jax.nn.sigmoid(acc), head)
    else:
        acc = head
    if has_postmul:
        acc = acc * next(it)[...]
    if has_residual:
        acc = acc + next(it)[...]
    o_ref = next(it)
    o_ref[...] = acc


def fused_matmul(x, w, b, *, ln=None, act="none", sig_tail=0,
                 premul=None, postmul=None, residual=None):
    """y = act(LN(x) [*premul] @ W + b) [*postmul] [+ residual].

    x: (..., K), w: (K, n_out).  MXU operands in bf16, f32 accumulation.
    `sig_tail` applies sigmoid to the last `sig_tail` output columns (fused
    gate projections)."""
    shp = x.shape
    K = shp[-1]
    n_out = w.shape[1]
    x2 = x.reshape(-1, K).astype(jnp.float32)
    M = x2.shape[0]
    Mp, tm = _row_tiling(M)

    inputs = [_pad_rows(x2, Mp)]
    in_specs = [pl.BlockSpec((tm, K), lambda i: (i, 0))]
    if ln is not None:
        g, bt = ln
        inputs += [g.reshape(1, K).astype(jnp.float32),
                   bt.reshape(1, K).astype(jnp.float32)]
        in_specs += [pl.BlockSpec((1, K), lambda i: (0, 0)),
                     pl.BlockSpec((1, K), lambda i: (0, 0))]
    inputs += [w.astype(jnp.bfloat16), b.reshape(1, n_out).astype(jnp.float32)]
    in_specs += [pl.BlockSpec((K, n_out), lambda i: (0, 0)),
                 pl.BlockSpec((1, n_out), lambda i: (0, 0))]
    if premul is not None:
        inputs.append(_pad_rows(premul.reshape(-1, K).astype(jnp.float32), Mp))
        in_specs.append(pl.BlockSpec((tm, K), lambda i: (i, 0)))
    if postmul is not None:
        inputs.append(_pad_rows(postmul.reshape(-1, n_out).astype(jnp.float32), Mp))
        in_specs.append(pl.BlockSpec((tm, n_out), lambda i: (i, 0)))
    if residual is not None:
        inputs.append(_pad_rows(residual.reshape(-1, n_out).astype(jnp.float32), Mp))
        in_specs.append(pl.BlockSpec((tm, n_out), lambda i: (i, 0)))

    kern = functools.partial(
        _fused_matmul_kernel, act=act, sig_tail=sig_tail,
        has_ln=ln is not None, has_premul=premul is not None,
        has_postmul=postmul is not None, has_residual=residual is not None)

    out = pl.pallas_call(
        kern,
        out_shape=jax.ShapeDtypeStruct((Mp, n_out), jnp.float32),
        grid=(Mp // tm,),
        in_specs=in_specs,
        out_specs=pl.BlockSpec((tm, n_out), lambda i: (i, 0)),
        compiler_params=_cparams("parallel"),
    )(*inputs)
    return out[:M].reshape(shp[:-1] + (n_out,))


# ------------------------------------------------------------------
# Standalone LayerNorm / softmax kernels (used where no matmul follows)
# ------------------------------------------------------------------

def _layernorm_kernel(x_ref, g_ref, b_ref, o_ref):
    x = x_ref[...]
    mu = jnp.mean(x, axis=-1, keepdims=True)
    xc = x - mu
    var = jnp.mean(xc * xc, axis=-1, keepdims=True)
    o_ref[...] = xc * jax.lax.rsqrt(var + 1e-5) * g_ref[...] + b_ref[...]


def pallas_layernorm(x, gamma, beta):
    shp = x.shape
    D = shp[-1]
    x2 = x.reshape(-1, D).astype(jnp.float32)
    M = x2.shape[0]
    Mp, tm = _row_tiling(M)
    out = pl.pallas_call(
        _layernorm_kernel,
        out_shape=jax.ShapeDtypeStruct((Mp, D), jnp.float32),
        grid=(Mp // tm,),
        in_specs=[pl.BlockSpec((tm, D), lambda i: (i, 0)),
                  pl.BlockSpec((1, D), lambda i: (0, 0)),
                  pl.BlockSpec((1, D), lambda i: (0, 0))],
        out_specs=pl.BlockSpec((tm, D), lambda i: (i, 0)),
        compiler_params=_cparams("parallel"),
    )(_pad_rows(x2, Mp),
      gamma.reshape(1, D).astype(jnp.float32),
      beta.reshape(1, D).astype(jnp.float32))
    return out[:M].reshape(shp)


def _softmax_kernel(x_ref, o_ref):
    x = x_ref[...]
    m = jnp.max(x, axis=-1, keepdims=True)
    e = jnp.exp(x - m)
    o_ref[...] = e * pl.reciprocal(jnp.sum(e, axis=-1, keepdims=True), approx=True)


def pallas_softmax(x):
    """softmax over the last axis."""
    shp = x.shape
    S = shp[-1]
    x2 = x.reshape(-1, S).astype(jnp.float32)
    M = x2.shape[0]
    Mp, tm = _row_tiling(M)
    out = pl.pallas_call(
        _softmax_kernel,
        out_shape=jax.ShapeDtypeStruct((Mp, S), jnp.float32),
        grid=(Mp // tm,),
        in_specs=[pl.BlockSpec((tm, S), lambda i: (i, 0))],
        out_specs=pl.BlockSpec((tm, S), lambda i: (i, 0)),
        compiler_params=_cparams("parallel"),
    )(_pad_rows(x2, Mp))
    return out[:M].reshape(shp)


# ------------------------------------------------------------------
# Fused attention kernel: scores (+bias) -> softmax -> @V, all in VMEM
# ------------------------------------------------------------------

def _attention_kernel(*refs, has_bias, scale):
    if has_bias:
        q_ref, k_ref, v_ref, b_ref, o_ref = refs
    else:
        q_ref, k_ref, v_ref, o_ref = refs
    q = q_ref[...]                                     # (gb, M, D)  bf16
    k = k_ref[...]                                     # (gb, S, D)  bf16
    v = v_ref[...]                                     # (gb, S, Dv) bf16
    s = jnp.einsum('gmd,gsd->gms', q, k,
                   preferred_element_type=jnp.float32)
    if scale != 1.0:
        s = s * scale
    if has_bias:
        s = s + b_ref[...]
    m = jnp.max(s, axis=-1, keepdims=True)
    p = jnp.exp(s - m)
    p = p * pl.reciprocal(jnp.sum(p, axis=-1, keepdims=True), approx=True)
    o_ref[...] = jnp.einsum('gms,gsd->gmd', p.astype(v.dtype), v,
                            preferred_element_type=jnp.float32)


def pallas_attention(q, k, v, bias=None, scale=1.0):
    """q (G, M, D), k (G, S, D), v (G, S, Dv), bias (G, M, S) -> (G, M, Dv)."""
    G, M, D = q.shape
    S = k.shape[1]
    Dv = v.shape[2]
    per_group = (M * D + S * D + S * Dv) * 2 + 2 * M * S * 4 + M * Dv * 4
    gb = int(max(1, min(G, (2 * 1024 * 1024) // max(per_group, 1))))
    Gp = _ceil_to(G, gb)

    def padg(a):
        if a.shape[0] == Gp:
            return a
        return jnp.pad(a, ((0, Gp - a.shape[0]),) + ((0, 0),) * (a.ndim - 1))

    inputs = [padg(q.astype(jnp.bfloat16)),
              padg(k.astype(jnp.bfloat16)),
              padg(v.astype(jnp.bfloat16))]
    in_specs = [pl.BlockSpec((gb, M, D), lambda i: (i, 0, 0)),
                pl.BlockSpec((gb, S, D), lambda i: (i, 0, 0)),
                pl.BlockSpec((gb, S, Dv), lambda i: (i, 0, 0))]
    if bias is not None:
        inputs.append(padg(bias.astype(jnp.float32)))
        in_specs.append(pl.BlockSpec((gb, M, S), lambda i: (i, 0, 0)))

    # TODO(synk): for production N (tied row attention, D = N*dh very large)
    # add a contraction-axis grid dimension with an accumulator scratch so a
    # single group block never exceeds VMEM.
    out = pl.pallas_call(
        functools.partial(_attention_kernel, has_bias=bias is not None,
                          scale=float(scale)),
        out_shape=jax.ShapeDtypeStruct((Gp, M, Dv), jnp.float32),
        grid=(Gp // gb,),
        in_specs=in_specs,
        out_specs=pl.BlockSpec((gb, M, Dv), lambda i: (i, 0, 0)),
        compiler_params=_cparams("parallel"),
    )(*inputs)
    return out[:G]


# ------------------------------------------------------------------
# Group-batched, M/N-tiled batched matmul
# ------------------------------------------------------------------

def _bmm_kernel(a_ref, b_ref, o_ref):
    o_ref[...] = jnp.einsum('gmk,gkn->gmn', a_ref[...], b_ref[...],
                            preferred_element_type=jnp.float32)


def pallas_bmm(a, b):
    """Batched matmul: a (G, M, K) @ b (G, K, N) -> (G, M, N) (f32 accum)."""
    G, M, K = a.shape
    N = b.shape[2]
    tm = M if M <= 512 else 256
    tn = N if N <= 512 else 256
    Mp, Np = _ceil_to(M, tm), _ceil_to(N, tn)
    per_group = (tm * K + K * tn) * 2 + tm * tn * 4
    gb = int(max(1, min(G, (2 * 1024 * 1024) // max(per_group, 1))))
    Gp = _ceil_to(G, gb)

    a = a.astype(jnp.bfloat16)
    b = b.astype(jnp.bfloat16)
    if (Gp, Mp) != (G, M):
        a = jnp.pad(a, ((0, Gp - G), (0, Mp - M), (0, 0)))
    if (Gp, Np) != (G, N):
        b = jnp.pad(b, ((0, Gp - G), (0, 0), (0, Np - N)))

    out = pl.pallas_call(
        _bmm_kernel,
        out_shape=jax.ShapeDtypeStruct((Gp, Mp, Np), jnp.float32),
        grid=(Gp // gb, Mp // tm, Np // tn),
        in_specs=[pl.BlockSpec((gb, tm, K), lambda g, i, j: (g, i, 0)),
                  pl.BlockSpec((gb, K, tn), lambda g, i, j: (g, 0, j))],
        out_specs=pl.BlockSpec((gb, tm, tn), lambda g, i, j: (g, i, j)),
        compiler_params=_cparams("parallel", "parallel", "parallel"),
    )(a, b)
    return out[:G, :M, :N]


# ------------------------------------------------------------------
# Parameter construction (deterministic, in-script).  Multi-head projection
# weights are pre-fused (concatenated) so each module does one LN+matmul.
# ------------------------------------------------------------------

class KeyGen:
    def __init__(self, key):
        self.key = key

    def __call__(self):
        self.key, sub = jax.random.split(self.key)
        return sub


def p_linear(kg, d_in, d_out):
    w = jax.random.normal(kg(), (d_in, d_out), jnp.float32) * (1.0 / np.sqrt(d_in))
    return {"w": w, "b": jnp.zeros((d_out,), jnp.float32)}


def p_layernorm(d):
    return {"g": jnp.ones((d,), jnp.float32), "b": jnp.zeros((d,), jnp.float32)}


def p_row_attn(kg, d_msa, d_pair, n_head, d_hidden):
    hdh = n_head * d_hidden
    return {"norm_msa": p_layernorm(d_msa),
            "norm_pair": p_layernorm(d_pair),
            # fused [to_q | to_k | to_v | seq_weight.to_q | seq_weight.to_k | to_g]
            "qkv": p_linear(kg, d_msa, 6 * hdh),
            "to_b": p_linear(kg, d_pair, n_head),
            "to_out": p_linear(kg, hdh, d_msa)}


def p_col_attn(kg, d_msa, n_head, d_hidden):
    hdh = n_head * d_hidden
    return {"norm_msa": p_layernorm(d_msa),
            # fused [to_q | to_k | to_v | to_g]
            "qkvg": p_linear(kg, d_msa, 4 * hdh),
            "to_out": p_linear(kg, hdh, d_msa)}


def p_col_global_attn(kg, d_msa, n_head, d_hidden):
    hdh = n_head * d_hidden
    return {"norm_msa": p_layernorm(d_msa),
            # fused [to_q (hdh) | to_k (dh) | to_v (dh) | to_g (hdh)]
            "qkvg": p_linear(kg, d_msa, 2 * hdh + 2 * d_hidden),
            "to_out": p_linear(kg, hdh, d_msa)}


def p_ff(kg, d_model, r_ff):
    return {"norm": p_layernorm(d_model),
            "l1": p_linear(kg, d_model, d_model * r_ff),
            "l2": p_linear(kg, d_model * r_ff, d_model)}


def p_tri_mult(kg, d_pair, d_hidden):
    return {"norm": p_layernorm(d_pair),
            # fused [left_proj | right_proj | left_gate | right_gate | gate]
            "proj": p_linear(kg, d_pair, 4 * d_hidden + d_pair),
            "norm_out": p_layernorm(d_hidden),
            "out_proj": p_linear(kg, d_hidden, d_pair)}


def p_msa2pair(kg, d_msa, d_pair, d_hidden):
    # NOTE: PyTorch reset_parameter() zero-inits proj_out; a small random init
    # is used here so the kernel computation is non-trivial.
    return {"norm": p_layernorm(d_msa),
            "lr": p_linear(kg, d_msa, 2 * d_hidden),          # [left | right]
            "proj_out": p_linear(kg, d_hidden * d_hidden, d_pair)}


def p_msapair2msa(kg, d_msa, d_pair, n_head, d_hidden, use_global):
    col = (p_col_global_attn if use_global else p_col_attn)(kg, d_msa, n_head, d_hidden)
    return {"norm_pair": p_layernorm(d_pair),
            "row_attn": p_row_attn(kg, d_msa, d_pair, n_head, d_hidden),
            "col_attn": col,
            "ff": p_ff(kg, d_msa, 4)}


def p_pair2pair(kg, d_pair, d_hidden):
    return {"tri_mul_out": p_tri_mult(kg, d_pair, d_hidden),
            "tri_mul_in": p_tri_mult(kg, d_pair, d_hidden),
            "ff": p_ff(kg, d_pair, 2)}


def p_iterblock(kg, d_msa, d_pair, n_head_msa, d_hidden, d_hidden_msa, use_global):
    return {"msa2msa": p_msapair2msa(kg, d_msa, d_pair, n_head_msa, d_hidden_msa, use_global),
            "msa2pair": p_msa2pair(kg, d_msa, d_pair, d_hidden // 2),
            "pair2pair": p_pair2pair(kg, d_pair, d_hidden)}


# ------------------------------------------------------------------
# Module forward passes
# ------------------------------------------------------------------

def feed_forward_fwd(p, x):
    h = fused_matmul(x, p["l1"]["w"], p["l1"]["b"],
                     ln=(p["norm"]["g"], p["norm"]["b"]), act="relu")
    return fused_matmul(h, p["l2"]["w"], p["l2"]["b"], residual=x)


def msa_row_attn_bias_fwd(p, msa, pair, n_head, d_hidden):
    """Tied row attention with pair bias; returns msa + attn_out (residual fused)."""
    B, N, L, _ = msa.shape
    h, dh = n_head, d_hidden
    hdh = h * dh

    # one fused LN + [q|k|v|seq_q|seq_k|gate] projection (sigmoid on gate tail)
    y = fused_matmul(msa, p["qkv"]["w"], p["qkv"]["b"],
                     ln=(p["norm_msa"]["g"], p["norm_msa"]["b"]),
                     sig_tail=hdh)
    q = y[..., 0 * hdh:1 * hdh].reshape(B, N, L, h, dh)
    k = y[..., 1 * hdh:2 * hdh].reshape(B, N, L, h, dh)
    v = y[..., 2 * hdh:3 * hdh].reshape(B, N, L, h, dh)
    swq = y[:, 0, :, 3 * hdh:4 * hdh].reshape(B, L, h, dh)   # target sequence only
    swk = y[..., 4 * hdh:5 * hdh].reshape(B, N, L, h, dh)
    gate = y[..., 5 * hdh:6 * hdh]

    # pair bias: fused LN(norm_pair) + to_b
    bias = fused_matmul(pair, p["to_b"]["w"], p["to_b"]["b"],
                        ln=(p["norm_pair"]["g"], p["norm_pair"]["b"]))  # (B,L,L,h)

    # sequence weights (softmax over the N sequences)
    sw_logits = jnp.einsum('blhd,bnlhd->bnlh', swq, swk) * float(1.0 / np.sqrt(dh))
    seqw = jnp.moveaxis(pallas_softmax(jnp.moveaxis(sw_logits, 1, -1)), -1, 1)

    # fused scores + bias + softmax + P@V per (B, h) group
    qg = jnp.transpose(q * seqw[..., None], (0, 3, 2, 1, 4)).reshape(B * h, L, N * dh)
    kg = jnp.transpose(k, (0, 3, 2, 1, 4)).reshape(B * h, L, N * dh)
    vg = jnp.transpose(v, (0, 3, 2, 1, 4)).reshape(B * h, L, N * dh)
    bg = jnp.transpose(bias, (0, 3, 1, 2)).reshape(B * h, L, L)
    out = pallas_attention(qg, kg, vg, bias=bg, scale=1.0 / np.sqrt(dh))

    out = out.reshape(B, h, L, N, dh)
    out = jnp.transpose(out, (0, 3, 2, 1, 4)).reshape(B, N, L, hdh)
    # gate * out -> to_out -> + msa, all fused in one kernel
    return fused_matmul(out, p["to_out"]["w"], p["to_out"]["b"],
                        premul=gate, residual=msa)


def msa_col_attn_fwd(p, msa, n_head, d_hidden):
    B, N, L, _ = msa.shape
    h, dh = n_head, d_hidden
    hdh = h * dh
    y = fused_matmul(msa, p["qkvg"]["w"], p["qkvg"]["b"],
                     ln=(p["norm_msa"]["g"], p["norm_msa"]["b"]),
                     sig_tail=hdh)
    q = y[..., :hdh].reshape(B, N, L, h, dh)
    k = y[..., hdh:2 * hdh].reshape(B, N, L, h, dh)
    v = y[..., 2 * hdh:3 * hdh].reshape(B, N, L, h, dh)
    gate = y[..., 3 * hdh:]

    qg = jnp.transpose(q, (0, 2, 3, 1, 4)).reshape(B * L * h, N, dh)
    kg = jnp.transpose(k, (0, 2, 3, 1, 4)).reshape(B * L * h, N, dh)
    vg = jnp.transpose(v, (0, 2, 3, 1, 4)).reshape(B * L * h, N, dh)
    out = pallas_attention(qg, kg, vg, scale=1.0 / np.sqrt(dh))

    out = out.reshape(B, L, h, N, dh)
    out = jnp.transpose(out, (0, 3, 1, 2, 4)).reshape(B, N, L, hdh)
    return fused_matmul(out, p["to_out"]["w"], p["to_out"]["b"],
                        premul=gate, residual=msa)


def msa_col_global_attn_fwd(p, msa, n_head, d_hidden):
    B, N, L, _ = msa.shape
    h, dh = n_head, d_hidden
    hdh = h * dh
    y = fused_matmul(msa, p["qkvg"]["w"], p["qkvg"]["b"],
                     ln=(p["norm_msa"]["g"], p["norm_msa"]["b"]),
                     sig_tail=hdh)
    q = y[..., :hdh].reshape(B, N, L, h, dh).mean(axis=1)      # (B, L, h, dh)
    k = y[..., hdh:hdh + dh]                                    # (B, N, L, dh)
    v = y[..., hdh + dh:hdh + 2 * dh]
    gate = y[..., hdh + 2 * dh:]                                # (B, N, L, hdh)

    qg = q.reshape(B * L, h, dh)
    kg = jnp.transpose(k, (0, 2, 1, 3)).reshape(B * L, N, dh)
    vg = jnp.transpose(v, (0, 2, 1, 3)).reshape(B * L, N, dh)
    out = pallas_attention(qg, kg, vg, scale=1.0 / np.sqrt(dh))  # (B*L, h, dh)

    out = out.reshape(B, 1, L, hdh)
    out = gate * out                                             # broadcast over N
    return fused_matmul(out, p["to_out"]["w"], p["to_out"]["b"], residual=msa)


def triangle_mult_fwd(p, pair, d_hidden, outgoing):
    """Triangle multiplication; returns pair + gated update (residual fused)."""
    B, L, _, d_pair = pair.shape
    dh = d_hidden
    # one fused LN + [left_proj|right_proj|left_gate|right_gate|gate] projection
    y = fused_matmul(pair, p["proj"]["w"], p["proj"]["b"],
                     ln=(p["norm"]["g"], p["norm"]["b"]),
                     sig_tail=2 * dh + d_pair)
    left = y[..., :dh] * y[..., 2 * dh:3 * dh]
    right = y[..., dh:2 * dh] * y[..., 3 * dh:4 * dh]
    gate = y[..., 4 * dh:]

    if outgoing:
        a = jnp.transpose(left, (0, 3, 1, 2)).reshape(B * dh, L, L)
        bm = jnp.transpose(right, (0, 3, 2, 1)).reshape(B * dh, L, L)
    else:
        a = jnp.transpose(left, (0, 3, 2, 1)).reshape(B * dh, L, L)
        bm = jnp.transpose(right, (0, 3, 1, 2)).reshape(B * dh, L, L)
    out = pallas_bmm(a, bm).reshape(B, dh, L, L)
    out = jnp.transpose(out, (0, 2, 3, 1))                       # (B, L, L, dh)

    # LN(norm_out) + out_proj, gated, + pair residual: one fused kernel
    return fused_matmul(out, p["out_proj"]["w"], p["out_proj"]["b"],
                        ln=(p["norm_out"]["g"], p["norm_out"]["b"]),
                        postmul=gate, residual=pair)


def msa2pair_fwd(p, msa, pair, d_hidden):
    B, N, L, _ = msa.shape
    dh = d_hidden
    y = fused_matmul(msa, p["lr"]["w"], p["lr"]["b"],
                     ln=(p["norm"]["g"], p["norm"]["b"]))
    left = y[..., :dh]
    right = y[..., dh:] * (1.0 / float(N))
    # outer product over sequences: op[b,l,m,i,j] = sum_s left[b,s,l,i]*right[b,s,m,j]
    a = jnp.transpose(left, (0, 2, 3, 1)).reshape(B, L * dh, N)
    bm = right.reshape(B, N, L * dh)
    op = pallas_bmm(a, bm).reshape(B, L, dh, L, dh)
    op = jnp.transpose(op, (0, 1, 3, 2, 4)).reshape(B, L, L, dh * dh)
    # TODO(synk): fuse this outer product with proj_out per (i,j) tile so the
    # (B, L, L, dh*dh) intermediate is never materialized at production L.
    return fused_matmul(op, p["proj_out"]["w"], p["proj_out"]["b"], residual=pair)


def msa_pair2msa_fwd(p, msa, pair, n_head, d_hidden, use_global):
    pair_n = pallas_layernorm(pair, p["norm_pair"]["g"], p["norm_pair"]["b"])
    msa = msa_row_attn_bias_fwd(p["row_attn"], msa, pair_n, n_head, d_hidden)
    if use_global:
        msa = msa_col_global_attn_fwd(p["col_attn"], msa, n_head, d_hidden)
    else:
        msa = msa_col_attn_fwd(p["col_attn"], msa, n_head, d_hidden)
    msa = feed_forward_fwd(p["ff"], msa)
    return msa


def pair2pair_fwd(p, pair, d_hidden):
    pair = triangle_mult_fwd(p["tri_mul_out"], pair, d_hidden, outgoing=True)
    pair = triangle_mult_fwd(p["tri_mul_in"], pair, d_hidden, outgoing=False)
    pair = feed_forward_fwd(p["ff"], pair)
    return pair


def iter_block_fwd(p, msa, pair, n_head_msa, d_hidden, d_hidden_msa, use_global):
    msa = msa_pair2msa_fwd(p["msa2msa"], msa, pair, n_head_msa, d_hidden_msa, use_global)
    pair = msa2pair_fwd(p["msa2pair"], msa, pair, d_hidden // 2)
    pair = pair2pair_fwd(p["pair2pair"], pair, d_hidden)
    return msa, pair


def iterative_simulator_fwd(params, msa, msa_extra, pair, cfg):
    for blk in params["extra_block"]:
        msa_extra, pair = iter_block_fwd(
            blk, msa_extra, pair,
            n_head_msa=cfg["n_head_msa"], d_hidden=cfg["d_hidden"],
            d_hidden_msa=cfg["d_hidden_msa_extra"], use_global=True)
    for blk in params["main_block"]:
        msa, pair = iter_block_fwd(
            blk, msa, pair,
            n_head_msa=cfg["n_head_msa"], d_hidden=cfg["d_hidden"],
            d_hidden_msa=cfg["d_hidden"], use_global=False)
    return msa, pair


# ------------------------------------------------------------------
# Main
# ------------------------------------------------------------------

if __name__ == "__main__":
    # Small configuration consistent with IterativeSimulator structure.
    cfg = dict(n_extra_block=1, n_main_block=2,
               d_msa=32, d_msa_extra=16, d_pair=16,
               d_hidden=8, d_hidden_msa_extra=8,
               n_head_msa=4, n_head_pair=2)
    B, N, L = 1, 8, 8

    key = jax.random.PRNGKey(0)
    k_msa, k_msae, k_pair, k_params = jax.random.split(key, 4)
    msa = jax.random.normal(k_msa, (B, N, L, cfg["d_msa"]), jnp.float32)
    msa_extra = jax.random.normal(k_msae, (B, N, L, cfg["d_msa_extra"]), jnp.float32)
    pair = jax.random.normal(k_pair, (B, L, L, cfg["d_pair"]), jnp.float32)

    kg = KeyGen(k_params)
    params = {
        "extra_block": [
            p_iterblock(kg, cfg["d_msa_extra"], cfg["d_pair"], cfg["n_head_msa"],
                        cfg["d_hidden"], cfg["d_hidden_msa_extra"], use_global=True)
            for _ in range(cfg["n_extra_block"])],
        "main_block": [
            p_iterblock(kg, cfg["d_msa"], cfg["d_pair"], cfg["n_head_msa"],
                        cfg["d_hidden"], cfg["d_hidden"], use_global=False)
            for _ in range(cfg["n_main_block"])],
    }

    fwd = jax.jit(functools.partial(iterative_simulator_fwd, cfg=cfg))
    msa_out, pair_out = fwd(params, msa, msa_extra, pair)
    jax.block_until_ready((msa_out, pair_out))

    assert msa_out.shape == (B, N, L, cfg["d_msa"])
    assert pair_out.shape == (B, L, L, cfg["d_pair"])
    assert bool(jnp.isfinite(msa_out).all()) and bool(jnp.isfinite(pair_out).all())
    print("KERNEL_OK")
</pallas_src>

<mosaic_0001>
module attributes {stable_mosaic.version = 11 : i64} {
  func.func @_fused_matmul_kernel(%arg0: i32, %arg1: memref<64x16xf32, #tpu.memory_space<vmem>>, %arg2: memref<1x16xf32, #tpu.memory_space<vmem>>, %arg3: memref<1x16xf32, #tpu.memory_space<vmem>>, %arg4: memref<16x192xbf16, #tpu.memory_space<vmem>>, %arg5: memref<1x192xf32, #tpu.memory_space<vmem>>, %arg6: memref<64x192xf32, #tpu.memory_space<vmem>>) attributes {dimension_semantics = [#tpu.dimension_semantics<parallel>], iteration_bounds = array<i64: 1>, scalar_prefetch = 0 : i64, scratch_operands = 0 : i64, tpu.core_type = #tpu.core_type<tc>, window_params = [{transform_indices = @transform_0, window_bounds = array<i64: 64, 16>}, {pipeline_mode = #tpu.pipeline_mode<synchronous>, transform_indices = @transform_1, window_bounds = array<i64: 1, 16>}, {pipeline_mode = #tpu.pipeline_mode<synchronous>, transform_indices = @transform_2, window_bounds = array<i64: 1, 16>}, {pipeline_mode = #tpu.pipeline_mode<synchronous>, transform_indices = @transform_3, window_bounds = array<i64: 16, 192>}, {pipeline_mode = #tpu.pipeline_mode<synchronous>, transform_indices = @transform_4, window_bounds = array<i64: 1, 192>}, {transform_indices = @transform_5, window_bounds = array<i64: 64, 192>}]} {
    %c0 = arith.constant 0 : index
    %c0_0 = arith.constant 0 : index
    %0 = vector.load %arg1[%c0, %c0_0] : memref<64x16xf32, #tpu.memory_space<vmem>>, vector<64x16xf32>
    %c0_1 = arith.constant 0 : index
    %c0_2 = arith.constant 0 : index
    %1 = vector.load %arg2[%c0_1, %c0_2] : memref<1x16xf32, #tpu.memory_space<vmem>>, vector<1x16xf32>
    %c0_3 = arith.constant 0 : index
    %c0_4 = arith.constant 0 : index
    %2 = vector.load %arg3[%c0_3, %c0_4] : memref<1x16xf32, #tpu.memory_space<vmem>>, vector<1x16xf32>
    %cst = arith.constant dense<0.000000e+00> : vector<64xf32>
    %3 = vector.multi_reduction <add>, %0, %cst [1] : vector<64x16xf32> to vector<64xf32>
    %4 = vector.shape_cast %3 : vector<64xf32> to vector<64x1xf32>
    %cst_5 = arith.constant 1.600000e+01 : f32
    %5 = vector.broadcast %cst_5 : f32 to vector<64x1xf32>
    %6 = arith.divf %4, %5 : vector<64x1xf32>
    %7 = vector.broadcast %6 : vector<64x1xf32> to vector<64x16xf32>
    %8 = arith.subf %0, %7 : vector<64x16xf32>
    %9 = arith.mulf %8, %8 : vector<64x16xf32>
    %cst_6 = arith.constant dense<0.000000e+00> : vector<64xf32>
    %10 = vector.multi_reduction <add>, %9, %cst_6 [1] : vector<64x16xf32> to vector<64xf32>
    %11 = vector.shape_cast %10 : vector<64xf32> to vector<64x1xf32>
    %cst_7 = arith.constant 1.600000e+01 : f32
    %12 = vector.broadcast %cst_7 : f32 to vector<64x1xf32>
    %13 = arith.divf %11, %12 : vector<64x1xf32>
    %cst_8 = arith.constant 9.99999974E-6 : f32
    %14 = vector.broadcast %cst_8 : f32 to vector<64x1xf32>
    %15 = arith.addf %13, %14 : vector<64x1xf32>
    %16 = math.rsqrt %15 : vector<64x1xf32>
    %17 = vector.broadcast %16 : vector<64x1xf32> to vector<64x16xf32>
    %18 = arith.mulf %8, %17 : vector<64x16xf32>
    %19 = vector.broadcast %1 : vector<1x16xf32> to vector<64x16xf32>
    %20 = arith.mulf %18, %19 : vector<64x16xf32>
    %21 = vector.broadcast %2 : vector<1x16xf32> to vector<64x16xf32>
    %22 = arith.addf %20, %21 : vector<64x16xf32>
    %c0_9 = arith.constant 0 : index
    %c0_10 = arith.constant 0 : index
    %23 = vector.load %arg4[%c0_9, %c0_10] : memref<16x192xbf16, #tpu.memory_space<vmem>>, vector<16x192xbf16>
    %c0_11 = arith.constant 0 : index
    %c0_12 = arith.constant 0 : index
    %24 = vector.load %arg5[%c0_11, %c0_12] : memref<1x192xf32, #tpu.memory_space<vmem>>, vector<1x192xf32>
    %25 = arith.truncf %22 : vector<64x16xf32> to vector<64x16xbf16>
    %cst_13 = arith.constant dense<0.000000e+00> : vector<64x192xf32>
    %26 = tpu.matmul %25, %23, %cst_13 {dimension_numbers = #tpu.dot_dimension_numbers<[1], [0], [0], [1], [0, 0, 1, 1], [], []>} : vector<64x16xbf16>, vector<16x192xbf16>, vector<64x192xf32> -> vector<64x192xf32>
    %27 = vector.broadcast %24 : vector<1x192xf32> to vector<64x192xf32>
    %28 = arith.addf %26, %27 : vector<64x192xf32>
    %29 = tpu.iota {dimensions = array<i32: 1>} : vector<64x192xi32>
    %c160_i32 = arith.constant 160 : i32
    %30 = vector.broadcast %c160_i32 : i32 to vector<64x192xi32>
    %31 = arith.cmpi sge, %29, %30 : vector<64x192xi32>
    %32 = arith.negf %28 : vector<64x192xf32>
    %33 = math.exp %32 : vector<64x192xf32>
    %cst_14 = arith.constant 1.000000e+00 : f32
    %34 = vector.broadcast %cst_14 : f32 to vector<64x192xf32>
    %35 = arith.addf %34, %33 : vector<64x192xf32>
    %36 = arith.divf %34, %35 : vector<64x192xf32>
    %37 = arith.select %31, %36, %28 : vector<64x192xi1>, vector<64x192xf32>
    %c0_15 = arith.constant 0 : index
    %c0_16 = arith.constant 0 : index
    %38 = vector.load %arg6[%c0_15, %c0_16] : memref<64x192xf32, #tpu.memory_space<vmem>>, vector<64x192xf32>
    tpu.vector_store %arg6[%c0_15, %c0_16], %37 {strides = array<i32>} : memref<64x192xf32, #tpu.memory_space<vmem>>, vector<64x192xf32>,
    return
  }
  func.func @transform_0(%arg0: i32) -> (i32, i32) {
    %c0_i32 = arith.constant 0 : i32
    %c0_i32_0 = arith.constant 0 : i32
    return %arg0, %c0_i32 : i32, i32
  }
  func.func @transform_1(%arg0: i32) -> (i32, i32) {
    %c0_i32 = arith.constant 0 : i32
    %c0_i32_0 = arith.constant 0 : i32
    %c0_i32_1 = arith.constant 0 : i32
    return %c0_i32, %c0_i32_0 : i32, i32
  }
  func.func @transform_2(%arg0: i32) -> (i32, i32) {
    %c0_i32 = arith.constant 0 : i32
    %c0_i32_0 = arith.constant 0 : i32
    %c0_i32_1 = arith.constant 0 : i32
    return %c0_i32, %c0_i32_0 : i32, i32
  }
  func.func @transform_3(%arg0: i32) -> (i32, i32) {
    %c0_i32 = arith.constant 0 : i32
    %c0_i32_0 = arith.constant 0 : i32
    %c0_i32_1 = arith.constant 0 : i32
    return %c0_i32, %c0_i32_0 : i32, i32
  }
  func.func @transform_4(%arg0: i32) -> (i32, i32) {
    %c0_i32 = arith.constant 0 : i32
    %c0_i32_0 = arith.constant 0 : i32
    %c0_i32_1 = arith.constant 0 : i32
    return %c0_i32, %c0_i32_0 : i32, i32
  }
  func.func @transform_5(%arg0: i32) -> (i32, i32) {
    %c0_i32 = arith.constant 0 : i32
    %c0_i32_0 = arith.constant 0 : i32
    return %arg0, %c0_i32 : i32, i32
  }
}

module attributes {stable_mosaic.version = 11 : i64} {
  func.func @_softmax_kernel(%arg0: i32, %arg1: memref<32x8xf32, #tpu.memory_space<vmem>>, %arg2: memref<32x8xf32, #tpu.memory_space<vmem>>) attributes {dimension_semantics = [#tpu.dimension_semantics<parallel>], iteration_bounds = array<i64: 1>, scalar_prefetch = 0 : i64, scratch_operands = 0 : i64, tpu.core_type = #tpu.core_type<tc>, window_params = [{transform_indices = @transform_0, window_bounds = array<i64: 32, 8>}, {transform_indices = @transform_1, window_bounds = array<i64: 32, 8>}]} {
    %c0 = arith.constant 0 : index
    %c0_0 = arith.constant 0 : index
    %0 = vector.load %arg1[%c0, %c0_0] : memref<32x8xf32, #tpu.memory_space<vmem>>, vector<32x8xf32>
    %cst = arith.constant dense<0xFF800000> : vector<32xf32>
    %1 = vector.multi_reduction <maximumf>, %0, %cst [1] : vector<32x8xf32> to vector<32xf32>
    %2 = vector.shape_cast %1 : vector<32xf32> to vector<32x1xf32>
    %3 = vector.broadcast %2 : vector<32x1xf32> to vector<32x8xf32>
    %4 = arith.subf %0, %3 : vector<32x8xf32>
    %5 = math.exp %4 : vector<32x8xf32>
    %cst_1 = arith.constant dense<0.000000e+00> : vector<32xf32>
    %6 = vector.multi_reduction <add>, %5, %cst_1 [1] : vector<32x8xf32> to vector<32xf32>
    %7 = vector.shape_cast %6 : vector<32xf32> to vector<32x1xf32>
    %8 = tpu.reciprocal %7 {approx = true} : vector<32x1xf32> -> vector<32x1xf32>
    %9 = vector.broadcast %8 : vector<32x1xf32> to vector<32x8xf32>
    %10 = arith.mulf %5, %9 : vector<32x8xf32>
    %c0_2 = arith.constant 0 : index
    %c0_3 = arith.constant 0 : index
    %11 = vector.load %arg2[%c0_2, %c0_3] : memref<32x8xf32, #tpu.memory_space<vmem>>, vector<32x8xf32>
    tpu.vector_store %arg2[%c0_2, %c0_3], %10 {strides = array<i32>} : memref<32x8xf32, #tpu.memory_space<vmem>>, vector<32x8xf32>,
    return
  }
  func.func @transform_0(%arg0: i32) -> (i32, i32) {
    %c0_i32 = arith.constant 0 : i32
    %c0_i32_0 = arith.constant 0 : i32
    return %arg0, %c0_i32 : i32, i32
  }
  func.func @transform_1(%arg0: i32) -> (i32, i32) {
    %c0_i32 = arith.constant 0 : i32
    %c0_i32_0 = arith.constant 0 : i32
    return %arg0, %c0_i32 : i32, i32
  }
}

module attributes {stable_mosaic.version = 11 : i64} {
  func.func @_layernorm_kernel(%arg0: i32, %arg1: memref<64x16xf32, #tpu.memory_space<vmem>>, %arg2: memref<1x16xf32, #tpu.memory_space<vmem>>, %arg3: memref<1x16xf32, #tpu.memory_space<vmem>>, %arg4: memref<64x16xf32, #tpu.memory_space<vmem>>) attributes {dimension_semantics = [#tpu.dimension_semantics<parallel>], iteration_bounds = array<i64: 1>, scalar_prefetch = 0 : i64, scratch_operands = 0 : i64, tpu.core_type = #tpu.core_type<tc>, window_params = [{transform_indices = @transform_0, window_bounds = array<i64: 64, 16>}, {pipeline_mode = #tpu.pipeline_mode<synchronous>, transform_indices = @transform_1, window_bounds = array<i64: 1, 16>}, {pipeline_mode = #tpu.pipeline_mode<synchronous>, transform_indices = @transform_2, window_bounds = array<i64: 1, 16>}, {transform_indices = @transform_3, window_bounds = array<i64: 64, 16>}]} {
    %c0 = arith.constant 0 : index
    %c0_0 = arith.constant 0 : index
    %0 = vector.load %arg1[%c0, %c0_0] : memref<64x16xf32, #tpu.memory_space<vmem>>, vector<64x16xf32>
    %cst = arith.constant dense<0.000000e+00> : vector<64xf32>
    %1 = vector.multi_reduction <add>, %0, %cst [1] : vector<64x16xf32> to vector<64xf32>
    %2 = vector.shape_cast %1 : vector<64xf32> to vector<64x1xf32>
    %cst_1 = arith.constant 1.600000e+01 : f32
    %3 = vector.broadcast %cst_1 : f32 to vector<64x1xf32>
    %4 = arith.divf %2, %3 : vector<64x1xf32>
    %5 = vector.broadcast %4 : vector<64x1xf32> to vector<64x16xf32>
    %6 = arith.subf %0, %5 : vector<64x16xf32>
    %7 = arith.mulf %6, %6 : vector<64x16xf32>
    %cst_2 = arith.constant dense<0.000000e+00> : vector<64xf32>
    %8 = vector.multi_reduction <add>, %7, %cst_2 [1] : vector<64x16xf32> to vector<64xf32>
    %9 = vector.shape_cast %8 : vector<64xf32> to vector<64x1xf32>
    %cst_3 = arith.constant 1.600000e+01 : f32
    %10 = vector.broadcast %cst_3 : f32 to vector<64x1xf32>
    %11 = arith.divf %9, %10 : vector<64x1xf32>
    %cst_4 = arith.constant 9.99999974E-6 : f32
    %12 = vector.broadcast %cst_4 : f32 to vector<64x1xf32>
    %13 = arith.addf %11, %12 : vector<64x1xf32>
    %14 = math.rsqrt %13 : vector<64x1xf32>
    %15 = vector.broadcast %14 : vector<64x1xf32> to vector<64x16xf32>
    %16 = arith.mulf %6, %15 : vector<64x16xf32>
    %c0_5 = arith.constant 0 : index
    %c0_6 = arith.constant 0 : index
    %17 = vector.load %arg2[%c0_5, %c0_6] : memref<1x16xf32, #tpu.memory_space<vmem>>, vector<1x16xf32>
    %18 = vector.broadcast %17 : vector<1x16xf32> to vector<64x16xf32>
    %19 = arith.mulf %16, %18 : vector<64x16xf32>
    %c0_7 = arith.constant 0 : index
    %c0_8 = arith.constant 0 : index
    %20 = vector.load %arg3[%c0_7, %c0_8] : memref<1x16xf32, #tpu.memory_space<vmem>>, vector<1x16xf32>
    %21 = vector.broadcast %20 : vector<1x16xf32> to vector<64x16xf32>
    %22 = arith.addf %19, %21 : vector<64x16xf32>
    %c0_9 = arith.constant 0 : index
    %c0_10 = arith.constant 0 : index
    %23 = vector.load %arg4[%c0_9, %c0_10] : memref<64x16xf32, #tpu.memory_space<vmem>>, vector<64x16xf32>
    tpu.vector_store %arg4[%c0_9, %c0_10], %22 {strides = array<i32>} : memref<64x16xf32, #tpu.memory_space<vmem>>, vector<64x16xf32>,
    return
  }
  func.func @transform_0(%arg0: i32) -> (i32, i32) {
    %c0_i32 = arith.constant 0 : i32
    %c0_i32_0 = arith.constant 0 : i32
    return %arg0, %c0_i32 : i32, i32
  }
  func.func @transform_1(%arg0: i32) -> (i32, i32) {
    %c0_i32 = arith.constant 0 : i32
    %c0_i32_0 = arith.constant 0 : i32
    %c0_i32_1 = arith.constant 0 : i32
    return %c0_i32, %c0_i32_0 : i32, i32
  }
  func.func @transform_2(%arg0: i32) -> (i32, i32) {
    %c0_i32 = arith.constant 0 : i32
    %c0_i32_0 = arith.constant 0 : i32
    %c0_i32_1 = arith.constant 0 : i32
    return %c0_i32, %c0_i32_0 : i32, i32
  }
  func.func @transform_3(%arg0: i32) -> (i32, i32) {
    %c0_i32 = arith.constant 0 : i32
    %c0_i32_0 = arith.constant 0 : i32
    return %arg0, %c0_i32 : i32, i32
  }
}

module attributes {stable_mosaic.version = 11 : i64} {
  func.func @_fused_matmul_kernel(%arg0: i32, %arg1: memref<64x16xf32, #tpu.memory_space<vmem>>, %arg2: memref<1x16xf32, #tpu.memory_space<vmem>>, %arg3: memref<1x16xf32, #tpu.memory_space<vmem>>, %arg4: memref<16x4xbf16, #tpu.memory_space<vmem>>, %arg5: memref<1x4xf32, #tpu.memory_space<vmem>>, %arg6: memref<64x4xf32, #tpu.memory_space<vmem>>) attributes {dimension_semantics = [#tpu.dimension_semantics<parallel>], iteration_bounds = array<i64: 1>, scalar_prefetch = 0 : i64, scratch_operands = 0 : i64, tpu.core_type = #tpu.core_type<tc>, window_params = [{transform_indices = @transform_0, window_bounds = array<i64: 64, 16>}, {pipeline_mode = #tpu.pipeline_mode<synchronous>, transform_indices = @transform_1, window_bounds = array<i64: 1, 16>}, {pipeline_mode = #tpu.pipeline_mode<synchronous>, transform_indices = @transform_2, window_bounds = array<i64: 1, 16>}, {pipeline_mode = #tpu.pipeline_mode<synchronous>, transform_indices = @transform_3, window_bounds = array<i64: 16, 4>}, {pipeline_mode = #tpu.pipeline_mode<synchronous>, transform_indices = @transform_4, window_bounds = array<i64: 1, 4>}, {transform_indices = @transform_5, window_bounds = array<i64: 64, 4>}]} {
    %c0 = arith.constant 0 : index
    %c0_0 = arith.constant 0 : index
    %0 = vector.load %arg1[%c0, %c0_0] : memref<64x16xf32, #tpu.memory_space<vmem>>, vector<64x16xf32>
    %c0_1 = arith.constant 0 : index
    %c0_2 = arith.constant 0 : index
    %1 = vector.load %arg2[%c0_1, %c0_2] : memref<1x16xf32, #tpu.memory_space<vmem>>, vector<1x16xf32>
    %c0_3 = arith.constant 0 : index
    %c0_4 = arith.constant 0 : index
    %2 = vector.load %arg3[%c0_3, %c0_4] : memref<1x16xf32, #tpu.memory_space<vmem>>, vector<1x16xf32>
    %cst = arith.constant dense<0.000000e+00> : vector<64xf32>
    %3 = vector.multi_reduction <add>, %0, %cst [1] : vector<64x16xf32> to vector<64xf32>
    %4 = vector.shape_cast %3 : vector<64xf32> to vector<64x1xf32>
    %cst_5 = arith.constant 1.600000e+01 : f32
    %5 = vector.broadcast %cst_5 : f32 to vector<64x1xf32>
    %6 = arith.divf %4, %5 : vector<64x1xf32>
    %7 = vector.broadcast %6 : vector<64x1xf32> to vector<64x16xf32>
    %8 = arith.subf %0, %7 : vector<64x16xf32>
    %9 = arith.mulf %8, %8 : vector<64x16xf32>
    %cst_6 = arith.constant dense<0.000000e+00> : vector<64xf32>
    %10 = vector.multi_reduction <add>, %9, %cst_6 [1] : vector<64x16xf32> to vector<64xf32>
    %11 = vector.shape_cast %10 : vector<64xf32> to vector<64x1xf32>
    %cst_7 = arith.constant 1.600000e+01 : f32
    %12 = vector.broadcast %cst_7 : f32 to vector<64x1xf32>
    %13 = arith.divf %11, %12 : vector<64x1xf32>
    %cst_8 = arith.constant 9.99999974E-6 : f32
    %14 = vector.broadcast %cst_8 : f32 to vector<64x1xf32>
    %15 = arith.addf %13, %14 : vector<64x1xf32>
    %16 = math.rsqrt %15 : vector<64x1xf32>
    %17 = vector.broadcast %16 : vector<64x1xf32> to vector<64x16xf32>
    %18 = arith.mulf %8, %17 : vector<64x16xf32>
    %19 = vector.broadcast %1 : vector<1x16xf32> to vector<64x16xf32>
    %20 = arith.mulf %18, %19 : vector<64x16xf32>
    %21 = vector.broadcast %2 : vector<1x16xf32> to vector<64x16xf32>
    %22 = arith.addf %20, %21 : vector<64x16xf32>
    %c0_9 = arith.constant 0 : index
    %c0_10 = arith.constant 0 : index
    %23 = vector.load %arg4[%c0_9, %c0_10] : memref<16x4xbf16, #tpu.memory_space<vmem>>, vector<16x4xbf16>
    %c0_11 = arith.constant 0 : index
    %c0_12 = arith.constant 0 : index
    %24 = vector.load %arg5[%c0_11, %c0_12] : memref<1x4xf32, #tpu.memory_space<vmem>>, vector<1x4xf32>
    %25 = arith.truncf %22 : vector<64x16xf32> to vector<64x16xbf16>
    %cst_13 = arith.constant dense<0.000000e+00> : vector<64x4xf32>
    %26 = tpu.matmul %25, %23, %cst_13 {dimension_numbers = #tpu.dot_dimension_numbers<[1], [0], [0], [1], [0, 0, 1, 1], [], []>} : vector<64x16xbf16>, vector<16x4xbf16>, vector<64x4xf32> -> vector<64x4xf32>
    %27 = vector.broadcast %24 : vector<1x4xf32> to vector<64x4xf32>
    %28 = arith.addf %26, %27 : vector<64x4xf32>
    %c0_14 = arith.constant 0 : index
    %c0_15 = arith.constant 0 : index
    %29 = vector.load %arg6[%c0_14, %c0_15] : memref<64x4xf32, #tpu.memory_space<vmem>>, vector<64x4xf32>
    tpu.vector_store %arg6[%c0_14, %c0_15], %28 {strides = array<i32>} : memref<64x4xf32, #tpu.memory_space<vmem>>, vector<64x4xf32>,
    return
  }
  func.func @transform_0(%arg0: i32) -> (i32, i32) {
    %c0_i32 = arith.constant 0 : i32
    %c0_i32_0 = arith.constant 0 : i32
    return %arg0, %c0_i32 : i32, i32
  }
  func.func @transform_1(%arg0: i32) -> (i32, i32) {
    %c0_i32 = arith.constant 0 : i32
    %c0_i32_0 = arith.constant 0 : i32
    %c0_i32_1 = arith.constant 0 : i32
    return %c0_i32, %c0_i32_0 : i32, i32
  }
  func.func @transform_2(%arg0: i32) -> (i32, i32) {
    %c0_i32 = arith.constant 0 : i32
    %c0_i32_0 = arith.constant 0 : i32
    %c0_i32_1 = arith.constant 0 : i32
    return %c0_i32, %c0_i32_0 : i32, i32
  }
  func.func @transform_3(%arg0: i32) -> (i32, i32) {
    %c0_i32 = arith.constant 0 : i32
    %c0_i32_0 = arith.constant 0 : i32
    %c0_i32_1 = arith.constant 0 : i32
    return %c0_i32, %c0_i32_0 : i32, i32
  }
  func.func @transform_4(%arg0: i32) -> (i32, i32) {
    %c0_i32 = arith.constant 0 : i32
    %c0_i32_0 = arith.constant 0 : i32
    %c0_i32_1 = arith.constant 0 : i32
    return %c0_i32, %c0_i32_0 : i32, i32
  }
  func.func @transform_5(%arg0: i32) -> (i32, i32) {
    %c0_i32 = arith.constant 0 : i32
    %c0_i32_0 = arith.constant 0 : i32
    return %arg0, %c0_i32 : i32, i32
  }
}

module attributes {stable_mosaic.version = 11 : i64} {
  func.func @_attention_kernel(%arg0: i32, %arg1: memref<4x8x64xbf16, #tpu.memory_space<vmem>>, %arg2: memref<4x8x64xbf16, #tpu.memory_space<vmem>>, %arg3: memref<4x8x64xbf16, #tpu.memory_space<vmem>>, %arg4: memref<4x8x8xf32, #tpu.memory_space<vmem>>, %arg5: memref<4x8x64xf32, #tpu.memory_space<vmem>>) attributes {dimension_semantics = [#tpu.dimension_semantics<parallel>], iteration_bounds = array<i64: 1>, scalar_prefetch = 0 : i64, scratch_operands = 0 : i64, tpu.core_type = #tpu.core_type<tc>, window_params = [{transform_indices = @transform_0, window_bounds = array<i64: 4, 8, 64>}, {transform_indices = @transform_1, window_bounds = array<i64: 4, 8, 64>}, {transform_indices = @transform_2, window_bounds = array<i64: 4, 8, 64>}, {transform_indices = @transform_3, window_bounds = array<i64: 4, 8, 8>}, {transform_indices = @transform_4, window_bounds = array<i64: 4, 8, 64>}]} {
    %c0 = arith.constant 0 : index
    %c0_0 = arith.constant 0 : index
    %c0_1 = arith.constant 0 : index
    %0 = vector.load %arg1[%c0, %c0_0, %c0_1] : memref<4x8x64xbf16, #tpu.memory_space<vmem>>, vector<4x8x64xbf16>
    %c0_2 = arith.constant 0 : index
    %c0_3 = arith.constant 0 : index
    %c0_4 = arith.constant 0 : index
    %1 = vector.load %arg2[%c0_2, %c0_3, %c0_4] : memref<4x8x64xbf16, #tpu.memory_space<vmem>>, vector<4x8x64xbf16>
    %c0_5 = arith.constant 0 : index
    %c0_6 = arith.constant 0 : index
    %c0_7 = arith.constant 0 : index
    %2 = vector.load %arg3[%c0_5, %c0_6, %c0_7] : memref<4x8x64xbf16, #tpu.memory_space<vmem>>, vector<4x8x64xbf16>
    "tpu.trace_start"() <{level = 10 : i32, message = "gmd,gsd->gms"}> : () -> ()
    %cst = arith.constant dense<0.000000e+00> : vector<4x8x8xf32>
    %3 = tpu.matmul %0, %1, %cst {dimension_numbers = #tpu.dot_dimension_numbers<[2], [2], [1], [1], [0, 0, 0, 1, 1, 1], [0], [0]>} : vector<4x8x64xbf16>, vector<4x8x64xbf16>, vector<4x8x8xf32> -> vector<4x8x8xf32>
    "tpu.trace_stop"() : () -> ()
    %cst_8 = arith.constant 0.353553385 : f32
    %4 = vector.broadcast %cst_8 : f32 to vector<4x8x8xf32>
    %5 = arith.mulf %3, %4 : vector<4x8x8xf32>
    %c0_9 = arith.constant 0 : index
    %c0_10 = arith.constant 0 : index
    %c0_11 = arith.constant 0 : index
    %6 = vector.load %arg4[%c0_9, %c0_10, %c0_11] : memref<4x8x8xf32, #tpu.memory_space<vmem>>, vector<4x8x8xf32>
    %7 = arith.addf %5, %6 : vector<4x8x8xf32>
    %cst_12 = arith.constant dense<0xFF800000> : vector<4x8xf32>
    %8 = vector.multi_reduction <maximumf>, %7, %cst_12 [2] : vector<4x8x8xf32> to vector<4x8xf32>
    %9 = vector.shape_cast %8 : vector<4x8xf32> to vector<4x8x1xf32>
    %10 = vector.broadcast %9 : vector<4x8x1xf32> to vector<4x8x8xf32>
    %11 = arith.subf %7, %10 : vector<4x8x8xf32>
    %12 = math.exp %11 : vector<4x8x8xf32>
    %cst_13 = arith.constant dense<0.000000e+00> : vector<4x8xf32>
    %13 = vector.multi_reduction <add>, %12, %cst_13 [2] : vector<4x8x8xf32> to vector<4x8xf32>
    %14 = vector.shape_cast %13 : vector<4x8xf32> to vector<4x8x1xf32>
    %15 = tpu.reciprocal %14 {approx = true} : vector<4x8x1xf32> -> vector<4x8x1xf32>
    %16 = vector.broadcast %15 : vector<4x8x1xf32> to vector<4x8x8xf32>
    %17 = arith.mulf %12, %16 : vector<4x8x8xf32>
    %18 = arith.truncf %17 : vector<4x8x8xf32> to vector<4x8x8xbf16>
    "tpu.trace_start"() <{level = 10 : i32, message = "gms,gsd->gmd"}> : () -> ()
    %cst_14 = arith.constant dense<0.000000e+00> : vector<4x8x64xf32>
    %19 = tpu.matmul %18, %2, %cst_14 {dimension_numbers = #tpu.dot_dimension_numbers<[2], [1], [1], [2], [0, 0, 0, 1, 1, 2], [0], [0]>} : vector<4x8x8xbf16>, vector<4x8x64xbf16>, vector<4x8x64xf32> -> vector<4x8x64xf32>
    "tpu.trace_stop"() : () -> ()
    %c0_15 = arith.constant 0 : index
    %c0_16 = arith.constant 0 : index
    %c0_17 = arith.constant 0 : index
    %20 = vector.load %arg5[%c0_15, %c0_16, %c0_17] : memref<4x8x64xf32, #tpu.memory_space<vmem>>, vector<4x8x64xf32>
    tpu.vector_store %arg5[%c0_15, %c0_16, %c0_17], %19 {strides = array<i32>} : memref<4x8x64xf32, #tpu.memory_space<vmem>>, vector<4x8x64xf32>,
    return
  }
  func.func @transform_0(%arg0: i32) -> (i32, i32, i32) {
    %c0_i32 = arith.constant 0 : i32
    %c0_i32_0 = arith.constant 0 : i32
    %c0_i32_1 = arith.constant 0 : i32
    return %arg0, %c0_i32, %c0_i32_0 : i32, i32, i32
  }
  func.func @transform_1(%arg0: i32) -> (i32, i32, i32) {
    %c0_i32 = arith.constant 0 : i32
    %c0_i32_0 = arith.constant 0 : i32
    %c0_i32_1 = arith.constant 0 : i32
    return %arg0, %c0_i32, %c0_i32_0 : i32, i32, i32
  }
  func.func @transform_2(%arg0: i32) -> (i32, i32, i32) {
    %c0_i32 = arith.constant 0 : i32
    %c0_i32_0 = arith.constant 0 : i32
    %c0_i32_1 = arith.constant 0 : i32
    return %arg0, %c0_i32, %c0_i32_0 : i32, i32, i32
  }
  func.func @transform_3(%arg0: i32) -> (i32, i32, i32) {
    %c0_i32 = arith.constant 0 : i32
    %c0_i32_0 = arith.constant 0 : i32
    %c0_i32_1 = arith.constant 0 : i32
    return %arg0, %c0_i32, %c0_i32_0 : i32, i32, i32
  }
  func.func @transform_4(%arg0: i32) -> (i32, i32, i32) {
    %c0_i32 = arith.constant 0 : i32
    %c0_i32_0 = arith.constant 0 : i32
    %c0_i32_1 = arith.constant 0 : i32
    return %arg0, %c0_i32, %c0_i32_0 : i32, i32, i32
  }
}

module attributes {stable_mosaic.version = 11 : i64} {
  func.func @_fused_matmul_kernel(%arg0: i32, %arg1: memref<64x16xf32, #tpu.memory_space<vmem>>, %arg2: memref<1x16xf32, #tpu.memory_space<vmem>>, %arg3: memref<1x16xf32, #tpu.memory_space<vmem>>, %arg4: memref<16x80xbf16, #tpu.memory_space<vmem>>, %arg5: memref<1x80xf32, #tpu.memory_space<vmem>>, %arg6: memref<64x80xf32, #tpu.memory_space<vmem>>) attributes {dimension_semantics = [#tpu.dimension_semantics<parallel>], iteration_bounds = array<i64: 1>, scalar_prefetch = 0 : i64, scratch_operands = 0 : i64, tpu.core_type = #tpu.core_type<tc>, window_params = [{transform_indices = @transform_0, window_bounds = array<i64: 64, 16>}, {pipeline_mode = #tpu.pipeline_mode<synchronous>, transform_indices = @transform_1, window_bounds = array<i64: 1, 16>}, {pipeline_mode = #tpu.pipeline_mode<synchronous>, transform_indices = @transform_2, window_bounds = array<i64: 1, 16>}, {pipeline_mode = #tpu.pipeline_mode<synchronous>, transform_indices = @transform_3, window_bounds = array<i64: 16, 80>}, {pipeline_mode = #tpu.pipeline_mode<synchronous>, transform_indices = @transform_4, window_bounds = array<i64: 1, 80>}, {transform_indices = @transform_5, window_bounds = array<i64: 64, 80>}]} {
    %c0 = arith.constant 0 : index
    %c0_0 = arith.constant 0 : index
    %0 = vector.load %arg1[%c0, %c0_0] : memref<64x16xf32, #tpu.memory_space<vmem>>, vector<64x16xf32>
    %c0_1 = arith.constant 0 : index
    %c0_2 = arith.constant 0 : index
    %1 = vector.load %arg2[%c0_1, %c0_2] : memref<1x16xf32, #tpu.memory_space<vmem>>, vector<1x16xf32>
    %c0_3 = arith.constant 0 : index
    %c0_4 = arith.constant 0 : index
    %2 = vector.load %arg3[%c0_3, %c0_4] : memref<1x16xf32, #tpu.memory_space<vmem>>, vector<1x16xf32>
    %cst = arith.constant dense<0.000000e+00> : vector<64xf32>
    %3 = vector.multi_reduction <add>, %0, %cst [1] : vector<64x16xf32> to vector<64xf32>
    %4 = vector.shape_cast %3 : vector<64xf32> to vector<64x1xf32>
    %cst_5 = arith.constant 1.600000e+01 : f32
    %5 = vector.broadcast %cst_5 : f32 to vector<64x1xf32>
    %6 = arith.divf %4, %5 : vector<64x1xf32>
    %7 = vector.broadcast %6 : vector<64x1xf32> to vector<64x16xf32>
    %8 = arith.subf %0, %7 : vector<64x16xf32>
    %9 = arith.mulf %8, %8 : vector<64x16xf32>
    %cst_6 = arith.constant dense<0.000000e+00> : vector<64xf32>
    %10 = vector.multi_reduction <add>, %9, %cst_6 [1] : vector<64x16xf32> to vector<64xf32>
    %11 = vector.shape_cast %10 : vector<64xf32> to vector<64x1xf32>
    %cst_7 = arith.constant 1.600000e+01 : f32
    %12 = vector.broadcast %cst_7 : f32 to vector<64x1xf32>
    %13 = arith.divf %11, %12 : vector<64x1xf32>
    %cst_8 = arith.constant 9.99999974E-6 : f32
    %14 = vector.broadcast %cst_8 : f32 to vector<64x1xf32>
    %15 = arith.addf %13, %14 : vector<64x1xf32>
    %16 = math.rsqrt %15 : vector<64x1xf32>
    %17 = vector.broadcast %16 : vector<64x1xf32> to vector<64x16xf32>
    %18 = arith.mulf %8, %17 : vector<64x16xf32>
    %19 = vector.broadcast %1 : vector<1x16xf32> to vector<64x16xf32>
    %20 = arith.mulf %18, %19 : vector<64x16xf32>
    %21 = vector.broadcast %2 : vector<1x16xf32> to vector<64x16xf32>
    %22 = arith.addf %20, %21 : vector<64x16xf32>
    %c0_9 = arith.constant 0 : index
    %c0_10 = arith.constant 0 : index
    %23 = vector.load %arg4[%c0_9, %c0_10] : memref<16x80xbf16, #tpu.memory_space<vmem>>, vector<16x80xbf16>
    %c0_11 = arith.constant 0 : index
    %c0_12 = arith.constant 0 : index
    %24 = vector.load %arg5[%c0_11, %c0_12] : memref<1x80xf32, #tpu.memory_space<vmem>>, vector<1x80xf32>
    %25 = arith.truncf %22 : vector<64x16xf32> to vector<64x16xbf16>
    %cst_13 = arith.constant dense<0.000000e+00> : vector<64x80xf32>
    %26 = tpu.matmul %25, %23, %cst_13 {dimension_numbers = #tpu.dot_dimension_numbers<[1], [0], [0], [1], [0, 0, 1, 1], [], []>} : vector<64x16xbf16>, vector<16x80xbf16>, vector<64x80xf32> -> vector<64x80xf32>
    %27 = vector.broadcast %24 : vector<1x80xf32> to vector<64x80xf32>
    %28 = arith.addf %26, %27 : vector<64x80xf32>
    %29 = tpu.iota {dimensions = array<i32: 1>} : vector<64x80xi32>
    %c48_i32 = arith.constant 48 : i32
    %30 = vector.broadcast %c48_i32 : i32 to vector<64x80xi32>
    %31 = arith.cmpi sge, %29, %30 : vector<64x80xi32>
    %32 = arith.negf %28 : vector<64x80xf32>
    %33 = math.exp %32 : vector<64x80xf32>
    %cst_14 = arith.constant 1.000000e+00 : f32
    %34 = vector.broadcast %cst_14 : f32 to vector<64x80xf32>
    %35 = arith.addf %34, %33 : vector<64x80xf32>
    %36 = arith.divf %34, %35 : vector<64x80xf32>
    %37 = arith.select %31, %36, %28 : vector<64x80xi1>, vector<64x80xf32>
    %c0_15 = arith.constant 0 : index
    %c0_16 = arith.constant 0 : index
    %38 = vector.load %arg6[%c0_15, %c0_16] : memref<64x80xf32, #tpu.memory_space<vmem>>, vector<64x80xf32>
    tpu.vector_store %arg6[%c0_15, %c0_16], %37 {strides = array<i32>} : memref<64x80xf32, #tpu.memory_space<vmem>>, vector<64x80xf32>,
    return
  }
  func.func @transform_0(%arg0: i32) -> (i32, i32) {
    %c0_i32 = arith.constant 0 : i32
    %c0_i32_0 = arith.constant 0 : i32
    return %arg0, %c0_i32 : i32, i32
  }
  func.func @transform_1(%arg0: i32) -> (i32, i32) {
    %c0_i32 = arith.constant 0 : i32
    %c0_i32_0 = arith.constant 0 : i32
    %c0_i32_1 = arith.constant 0 : i32
    return %c0_i32, %c0_i32_0 : i32, i32
  }
  func.func @transform_2(%arg0: i32) -> (i32, i32) {
    %c0_i32 = arith.constant 0 : i32
    %c0_i32_0 = arith.constant 0 : i32
    %c0_i32_1 = arith.constant 0 : i32
    return %c0_i32, %c0_i32_0 : i32, i32
  }
  func.func @transform_3(%arg0: i32) -> (i32, i32) {
    %c0_i32 = arith.constant 0 : i32
    %c0_i32_0 = arith.constant 0 : i32
    %c0_i32_1 = arith.constant 0 : i32
    return %c0_i32, %c0_i32_0 : i32, i32
  }
  func.func @transform_4(%arg0: i32) -> (i32, i32) {
    %c0_i32 = arith.constant 0 : i32
    %c0_i32_0 = arith.constant 0 : i32
    %c0_i32_1 = arith.constant 0 : i32
    return %c0_i32, %c0_i32_0 : i32, i32
  }
  func.func @transform_5(%arg0: i32) -> (i32, i32) {
    %c0_i32 = arith.constant 0 : i32
    %c0_i32_0 = arith.constant 0 : i32
    return %arg0, %c0_i32 : i32, i32
  }
}

module attributes {stable_mosaic.version = 11 : i64} {
  func.func @_fused_matmul_kernel(%arg0: i32, %arg1: memref<64x32xf32, #tpu.memory_space<vmem>>, %arg2: memref<32x16xbf16, #tpu.memory_space<vmem>>, %arg3: memref<1x16xf32, #tpu.memory_space<vmem>>, %arg4: memref<64x32xf32, #tpu.memory_space<vmem>>, %arg5: memref<64x16xf32, #tpu.memory_space<vmem>>, %arg6: memref<64x16xf32, #tpu.memory_space<vmem>>) attributes {dimension_semantics = [#tpu.dimension_semantics<parallel>], iteration_bounds = array<i64: 1>, scalar_prefetch = 0 : i64, scratch_operands = 0 : i64, tpu.core_type = #tpu.core_type<tc>, window_params = [{transform_indices = @transform_0, window_bounds = array<i64: 64, 32>}, {pipeline_mode = #tpu.pipeline_mode<synchronous>, transform_indices = @transform_1, window_bounds = array<i64: 32, 16>}, {pipeline_mode = #tpu.pipeline_mode<synchronous>, transform_indices = @transform_2, window_bounds = array<i64: 1, 16>}, {transform_indices = @transform_3, window_bounds = array<i64: 64, 32>}, {transform_indices = @transform_4, window_bounds = array<i64: 64, 16>}, {transform_indices = @transform_5, window_bounds = array<i64: 64, 16>}]} {
    %c0 = arith.constant 0 : index
    %c0_0 = arith.constant 0 : index
    %0 = vector.load %arg1[%c0, %c0_0] : memref<64x32xf32, #tpu.memory_space<vmem>>, vector<64x32xf32>
    %c0_1 = arith.constant 0 : index
    %c0_2 = arith.constant 0 : index
    %1 = vector.load %arg2[%c0_1, %c0_2] : memref<32x16xbf16, #tpu.memory_space<vmem>>, vector<32x16xbf16>
    %c0_3 = arith.constant 0 : index
    %c0_4 = arith.constant 0 : index
    %2 = vector.load %arg3[%c0_3, %c0_4] : memref<1x16xf32, #tpu.memory_space<vmem>>, vector<1x16xf32>
    %c0_5 = arith.constant 0 : index
    %c0_6 = arith.constant 0 : index
    %3 = vector.load %arg4[%c0_5, %c0_6] : memref<64x32xf32, #tpu.memory_space<vmem>>, vector<64x32xf32>
    %4 = arith.mulf %0, %3 : vector<64x32xf32>
    %5 = arith.truncf %4 : vector<64x32xf32> to vector<64x32xbf16>
    %cst = arith.constant dense<0.000000e+00> : vector<64x16xf32>
    %6 = tpu.matmul %5, %1, %cst {dimension_numbers = #tpu.dot_dimension_numbers<[1], [0], [0], [1], [0, 0, 1, 1], [], []>} : vector<64x32xbf16>, vector<32x16xbf16>, vector<64x16xf32> -> vector<64x16xf32>
    %7 = vector.broadcast %2 : vector<1x16xf32> to vector<64x16xf32>
    %8 = arith.addf %6, %7 : vector<64x16xf32>
    %c0_7 = arith.constant 0 : index
    %c0_8 = arith.constant 0 : index
    %9 = vector.load %arg5[%c0_7, %c0_8] : memref<64x16xf32, #tpu.memory_space<vmem>>, vector<64x16xf32>
    %10 = arith.addf %8, %9 : vector<64x16xf32>
    %c0_9 = arith.constant 0 : index
    %c0_10 = arith.constant 0 : index
    %11 = vector.load %arg6[%c0_9, %c0_10] : memref<64x16xf32, #tpu.memory_space<vmem>>, vector<64x16xf32>
    tpu.vector_store %arg6[%c0_9, %c0_10], %10 {strides = array<i32>} : memref<64x16xf32, #tpu.memory_space<vmem>>, vector<64x16xf32>,
    return
  }
  func.func @transform_0(%arg0: i32) -> (i32, i32) {
    %c0_i32 = arith.constant 0 : i32
    %c0_i32_0 = arith.constant 0 : i32
    return %arg0, %c0_i32 : i32, i32
  }
  func.func @transform_1(%arg0: i32) -> (i32, i32) {
    %c0_i32 = arith.constant 0 : i32
    %c0_i32_0 = arith.constant 0 : i32
    %c0_i32_1 = arith.constant 0 : i32
    return %c0_i32, %c0_i32_0 : i32, i32
  }
  func.func @transform_2(%arg0: i32) -> (i32, i32) {
    %c0_i32 = arith.constant 0 : i32
    %c0_i32_0 = arith.constant 0 : i32
    %c0_i32_1 = arith.constant 0 : i32
    return %c0_i32, %c0_i32_0 : i32, i32
  }
  func.func @transform_3(%arg0: i32) -> (i32, i32) {
    %c0_i32 = arith.constant 0 : i32
    %c0_i32_0 = arith.constant 0 : i32
    return %arg0, %c0_i32 : i32, i32
  }
  func.func @transform_4(%arg0: i32) -> (i32, i32) {
    %c0_i32 = arith.constant 0 : i32
    %c0_i32_0 = arith.constant 0 : i32
    return %arg0, %c0_i32 : i32, i32
  }
  func.func @transform_5(%arg0: i32) -> (i32, i32) {
    %c0_i32 = arith.constant 0 : i32
    %c0_i32_0 = arith.constant 0 : i32
    return %arg0, %c0_i32 : i32, i32
  }
}

module attributes {stable_mosaic.version = 11 : i64} {
  func.func @_attention_kernel(%arg0: i32, %arg1: memref<8x4x8xbf16, #tpu.memory_space<vmem>>, %arg2: memref<8x8x8xbf16, #tpu.memory_space<vmem>>, %arg3: memref<8x8x8xbf16, #tpu.memory_space<vmem>>, %arg4: memref<8x4x8xf32, #tpu.memory_space<vmem>>) attributes {dimension_semantics = [#tpu.dimension_semantics<parallel>], iteration_bounds = array<i64: 1>, scalar_prefetch = 0 : i64, scratch_operands = 0 : i64, tpu.core_type = #tpu.core_type<tc>, window_params = [{transform_indices = @transform_0, window_bounds = array<i64: 8, 4, 8>}, {transform_indices = @transform_1, window_bounds = array<i64: 8, 8, 8>}, {transform_indices = @transform_2, window_bounds = array<i64: 8, 8, 8>}, {transform_indices = @transform_3, window_bounds = array<i64: 8, 4, 8>}]} {
    %c0 = arith.constant 0 : index
    %c0_0 = arith.constant 0 : index
    %c0_1 = arith.constant 0 : index
    %0 = vector.load %arg1[%c0, %c0_0, %c0_1] : memref<8x4x8xbf16, #tpu.memory_space<vmem>>, vector<8x4x8xbf16>
    %c0_2 = arith.constant 0 : index
    %c0_3 = arith.constant 0 : index
    %c0_4 = arith.constant 0 : index
    %1 = vector.load %arg2[%c0_2, %c0_3, %c0_4] : memref<8x8x8xbf16, #tpu.memory_space<vmem>>, vector<8x8x8xbf16>
    %c0_5 = arith.constant 0 : index
    %c0_6 = arith.constant 0 : index
    %c0_7 = arith.constant 0 : index
    %2 = vector.load %arg3[%c0_5, %c0_6, %c0_7] : memref<8x8x8xbf16, #tpu.memory_space<vmem>>, vector<8x8x8xbf16>
    "tpu.trace_start"() <{level = 10 : i32, message = "gmd,gsd->gms"}> : () -> ()
    %cst = arith.constant dense<0.000000e+00> : vector<8x4x8xf32>
    %3 = tpu.matmul %0, %1, %cst {dimension_numbers = #tpu.dot_dimension_numbers<[2], [2], [1], [1], [0, 0, 0, 1, 1, 1], [0], [0]>} : vector<8x4x8xbf16>, vector<8x8x8xbf16>, vector<8x4x8xf32> -> vector<8x4x8xf32>
    "tpu.trace_stop"() : () -> ()
    %cst_8 = arith.constant 0.353553385 : f32
    %4 = vector.broadcast %cst_8 : f32 to vector<8x4x8xf32>
    %5 = arith.mulf %3, %4 : vector<8x4x8xf32>
    %cst_9 = arith.constant dense<0xFF800000> : vector<8x4xf32>
    %6 = vector.multi_reduction <maximumf>, %5, %cst_9 [2] : vector<8x4x8xf32> to vector<8x4xf32>
    %7 = vector.shape_cast %6 : vector<8x4xf32> to vector<8x4x1xf32>
    %8 = vector.broadcast %7 : vector<8x4x1xf32> to vector<8x4x8xf32>
    %9 = arith.subf %5, %8 : vector<8x4x8xf32>
    %10 = math.exp %9 : vector<8x4x8xf32>
    %cst_10 = arith.constant dense<0.000000e+00> : vector<8x4xf32>
    %11 = vector.multi_reduction <add>, %10, %cst_10 [2] : vector<8x4x8xf32> to vector<8x4xf32>
    %12 = vector.shape_cast %11 : vector<8x4xf32> to vector<8x4x1xf32>
    %13 = tpu.reciprocal %12 {approx = true} : vector<8x4x1xf32> -> vector<8x4x1xf32>
    %14 = vector.broadcast %13 : vector<8x4x1xf32> to vector<8x4x8xf32>
    %15 = arith.mulf %10, %14 : vector<8x4x8xf32>
    %16 = arith.truncf %15 : vector<8x4x8xf32> to vector<8x4x8xbf16>
    "tpu.trace_start"() <{level = 10 : i32, message = "gms,gsd->gmd"}> : () -> ()
    %cst_11 = arith.constant dense<0.000000e+00> : vector<8x4x8xf32>
    %17 = tpu.matmul %16, %2, %cst_11 {dimension_numbers = #tpu.dot_dimension_numbers<[2], [1], [1], [2], [0, 0, 0, 1, 1, 2], [0], [0]>} : vector<8x4x8xbf16>, vector<8x8x8xbf16>, vector<8x4x8xf32> -> vector<8x4x8xf32>
    "tpu.trace_stop"() : () -> ()
    %c0_12 = arith.constant 0 : index
    %c0_13 = arith.constant 0 : index
    %c0_14 = arith.constant 0 : index
    %18 = vector.load %arg4[%c0_12, %c0_13, %c0_14] : memref<8x4x8xf32, #tpu.memory_space<vmem>>, vector<8x4x8xf32>
    tpu.vector_store %arg4[%c0_12, %c0_13, %c0_14], %17 {strides = array<i32>} : memref<8x4x8xf32, #tpu.memory_space<vmem>>, vector<8x4x8xf32>,
    return
  }
  func.func @transform_0(%arg0: i32) -> (i32, i32, i32) {
    %c0_i32 = arith.constant 0 : i32
    %c0_i32_0 = arith.constant 0 : i32
    %c0_i32_1 = arith.constant 0 : i32
    return %arg0, %c0_i32, %c0_i32_0 : i32, i32, i32
  }
  func.func @transform_1(%arg0: i32) -> (i32, i32, i32) {
    %c0_i32 = arith.constant 0 : i32
    %c0_i32_0 = arith.constant 0 : i32
    %c0_i32_1 = arith.constant 0 : i32
    return %arg0, %c0_i32, %c0_i32_0 : i32, i32, i32
  }
  func.func @transform_2(%arg0: i32) -> (i32, i32, i32) {
    %c0_i32 = arith.constant 0 : i32
    %c0_i32_0 = arith.constant 0 : i32
    %c0_i32_1 = arith.constant 0 : i32
    return %arg0, %c0_i32, %c0_i32_0 : i32, i32, i32
  }
  func.func @transform_3(%arg0: i32) -> (i32, i32, i32) {
    %c0_i32 = arith.constant 0 : i32
    %c0_i32_0 = arith.constant 0 : i32
    %c0_i32_1 = arith.constant 0 : i32
    return %arg0, %c0_i32, %c0_i32_0 : i32, i32, i32
  }
}

module attributes {stable_mosaic.version = 11 : i64} {
  func.func @_fused_matmul_kernel(%arg0: i32, %arg1: memref<64x32xf32, #tpu.memory_space<vmem>>, %arg2: memref<32x16xbf16, #tpu.memory_space<vmem>>, %arg3: memref<1x16xf32, #tpu.memory_space<vmem>>, %arg4: memref<64x16xf32, #tpu.memory_space<vmem>>, %arg5: memref<64x16xf32, #tpu.memory_space<vmem>>) attributes {dimension_semantics = [#tpu.dimension_semantics<parallel>], iteration_bounds = array<i64: 1>, scalar_prefetch = 0 : i64, scratch_operands = 0 : i64, tpu.core_type = #tpu.core_type<tc>, window_params = [{transform_indices = @transform_0, window_bounds = array<i64: 64, 32>}, {pipeline_mode = #tpu.pipeline_mode<synchronous>, transform_indices = @transform_1, window_bounds = array<i64: 32, 16>}, {pipeline_mode = #tpu.pipeline_mode<synchronous>, transform_indices = @transform_2, window_bounds = array<i64: 1, 16>}, {transform_indices = @transform_3, window_bounds = array<i64: 64, 16>}, {transform_indices = @transform_4, window_bounds = array<i64: 64, 16>}]} {
    %c0 = arith.constant 0 : index
    %c0_0 = arith.constant 0 : index
    %0 = vector.load %arg1[%c0, %c0_0] : memref<64x32xf32, #tpu.memory_space<vmem>>, vector<64x32xf32>
    %c0_1 = arith.constant 0 : index
    %c0_2 = arith.constant 0 : index
    %1 = vector.load %arg2[%c0_1, %c0_2] : memref<32x16xbf16, #tpu.memory_space<vmem>>, vector<32x16xbf16>
    %c0_3 = arith.constant 0 : index
    %c0_4 = arith.constant 0 : index
    %2 = vector.load %arg3[%c0_3, %c0_4] : memref<1x16xf32, #tpu.memory_space<vmem>>, vector<1x16xf32>
    %3 = arith.truncf %0 : vector<64x32xf32> to vector<64x32xbf16>
    %cst = arith.constant dense<0.000000e+00> : vector<64x16xf32>
    %4 = tpu.matmul %3, %1, %cst {dimension_numbers = #tpu.dot_dimension_numbers<[1], [0], [0], [1], [0, 0, 1, 1], [], []>} : vector<64x32xbf16>, vector<32x16xbf16>, vector<64x16xf32> -> vector<64x16xf32>
    %5 = vector.broadcast %2 : vector<1x16xf32> to vector<64x16xf32>
    %6 = arith.addf %4, %5 : vector<64x16xf32>
    %c0_5 = arith.constant 0 : index
    %c0_6 = arith.constant 0 : index
    %7 = vector.load %arg4[%c0_5, %c0_6] : memref<64x16xf32, #tpu.memory_space<vmem>>, vector<64x16xf32>
    %8 = arith.addf %6, %7 : vector<64x16xf32>
    %c0_7 = arith.constant 0 : index
    %c0_8 = arith.constant 0 : index
    %9 = vector.load %arg5[%c0_7, %c0_8] : memref<64x16xf32, #tpu.memory_space<vmem>>, vector<64x16xf32>
    tpu.vector_store %arg5[%c0_7, %c0_8], %8 {strides = array<i32>} : memref<64x16xf32, #tpu.memory_space<vmem>>, vector<64x16xf32>,
    return
  }
  func.func @transform_0(%arg0: i32) -> (i32, i32) {
    %c0_i32 = arith.constant 0 : i32
    %c0_i32_0 = arith.constant 0 : i32
    return %arg0, %c0_i32 : i32, i32
  }
  func.func @transform_1(%arg0: i32) -> (i32, i32) {
    %c0_i32 = arith.constant 0 : i32
    %c0_i32_0 = arith.constant 0 : i32
    %c0_i32_1 = arith.constant 0 : i32
    return %c0_i32, %c0_i32_0 : i32, i32
  }
  func.func @transform_2(%arg0: i32) -> (i32, i32) {
    %c0_i32 = arith.constant 0 : i32
    %c0_i32_0 = arith.constant 0 : i32
    %c0_i32_1 = arith.constant 0 : i32
    return %c0_i32, %c0_i32_0 : i32, i32
  }
  func.func @transform_3(%arg0: i32) -> (i32, i32) {
    %c0_i32 = arith.constant 0 : i32
    %c0_i32_0 = arith.constant 0 : i32
    return %arg0, %c0_i32 : i32, i32
  }
  func.func @transform_4(%arg0: i32) -> (i32, i32) {
    %c0_i32 = arith.constant 0 : i32
    %c0_i32_0 = arith.constant 0 : i32
    return %arg0, %c0_i32 : i32, i32
  }
}

module attributes {stable_mosaic.version = 11 : i64} {
  func.func @_fused_matmul_kernel(%arg0: i32, %arg1: memref<64x16xf32, #tpu.memory_space<vmem>>, %arg2: memref<1x16xf32, #tpu.memory_space<vmem>>, %arg3: memref<1x16xf32, #tpu.memory_space<vmem>>, %arg4: memref<16x64xbf16, #tpu.memory_space<vmem>>, %arg5: memref<1x64xf32, #tpu.memory_space<vmem>>, %arg6: memref<64x64xf32, #tpu.memory_space<vmem>>) attributes {dimension_semantics = [#tpu.dimension_semantics<parallel>], iteration_bounds = array<i64: 1>, scalar_prefetch = 0 : i64, scratch_operands = 0 : i64, tpu.core_type = #tpu.core_type<tc>, window_params = [{transform_indices = @transform_0, window_bounds = array<i64: 64, 16>}, {pipeline_mode = #tpu.pipeline_mode<synchronous>, transform_indices = @transform_1, window_bounds = array<i64: 1, 16>}, {pipeline_mode = #tpu.pipeline_mode<synchronous>, transform_indices = @transform_2, window_bounds = array<i64: 1, 16>}, {pipeline_mode = #tpu.pipeline_mode<synchronous>, transform_indices = @transform_3, window_bounds = array<i64: 16, 64>}, {pipeline_mode = #tpu.pipeline_mode<synchronous>, transform_indices = @transform_4, window_bounds = array<i64: 1, 64>}, {transform_indices = @transform_5, window_bounds = array<i64: 64, 64>}]} {
    %c0 = arith.constant 0 : index
    %c0_0 = arith.constant 0 : index
    %0 = vector.load %arg1[%c0, %c0_0] : memref<64x16xf32, #tpu.memory_space<vmem>>, vector<64x16xf32>
    %c0_1 = arith.constant 0 : index
    %c0_2 = arith.constant 0 : index
    %1 = vector.load %arg2[%c0_1, %c0_2] : memref<1x16xf32, #tpu.memory_space<vmem>>, vector<1x16xf32>
    %c0_3 = arith.constant 0 : index
    %c0_4 = arith.constant 0 : index
    %2 = vector.load %arg3[%c0_3, %c0_4] : memref<1x16xf32, #tpu.memory_space<vmem>>, vector<1x16xf32>
    %cst = arith.constant dense<0.000000e+00> : vector<64xf32>
    %3 = vector.multi_reduction <add>, %0, %cst [1] : vector<64x16xf32> to vector<64xf32>
    %4 = vector.shape_cast %3 : vector<64xf32> to vector<64x1xf32>
    %cst_5 = arith.constant 1.600000e+01 : f32
    %5 = vector.broadcast %cst_5 : f32 to vector<64x1xf32>
    %6 = arith.divf %4, %5 : vector<64x1xf32>
    %7 = vector.broadcast %6 : vector<64x1xf32> to vector<64x16xf32>
    %8 = arith.subf %0, %7 : vector<64x16xf32>
    %9 = arith.mulf %8, %8 : vector<64x16xf32>
    %cst_6 = arith.constant dense<0.000000e+00> : vector<64xf32>
    %10 = vector.multi_reduction <add>, %9, %cst_6 [1] : vector<64x16xf32> to vector<64xf32>
    %11 = vector.shape_cast %10 : vector<64xf32> to vector<64x1xf32>
    %cst_7 = arith.constant 1.600000e+01 : f32
    %12 = vector.broadcast %cst_7 : f32 to vector<64x1xf32>
    %13 = arith.divf %11, %12 : vector<64x1xf32>
    %cst_8 = arith.constant 9.99999974E-6 : f32
    %14 = vector.broadcast %cst_8 : f32 to vector<64x1xf32>
    %15 = arith.addf %13, %14 : vector<64x1xf32>
    %16 = math.rsqrt %15 : vector<64x1xf32>
    %17 = vector.broadcast %16 : vector<64x1xf32> to vector<64x16xf32>
    %18 = arith.mulf %8, %17 : vector<64x16xf32>
    %19 = vector.broadcast %1 : vector<1x16xf32> to vector<64x16xf32>
    %20 = arith.mulf %18, %19 : vector<64x16xf32>
    %21 = vector.broadcast %2 : vector<1x16xf32> to vector<64x16xf32>
    %22 = arith.addf %20, %21 : vector<64x16xf32>
    %c0_9 = arith.constant 0 : index
    %c0_10 = arith.constant 0 : index
    %23 = vector.load %arg4[%c0_9, %c0_10] : memref<16x64xbf16, #tpu.memory_space<vmem>>, vector<16x64xbf16>
    %c0_11 = arith.constant 0 : index
    %c0_12 = arith.constant 0 : index
    %24 = vector.load %arg5[%c0_11, %c0_12] : memref<1x64xf32, #tpu.memory_space<vmem>>, vector<1x64xf32>
    %25 = arith.truncf %22 : vector<64x16xf32> to vector<64x16xbf16>
    %cst_13 = arith.constant dense<0.000000e+00> : vector<64x64xf32>
    %26 = tpu.matmul %25, %23, %cst_13 {dimension_numbers = #tpu.dot_dimension_numbers<[1], [0], [0], [1], [0, 0, 1, 1], [], []>} : vector<64x16xbf16>, vector<16x64xbf16>, vector<64x64xf32> -> vector<64x64xf32>
    %27 = vector.broadcast %24 : vector<1x64xf32> to vector<64x64xf32>
    %28 = arith.addf %26, %27 : vector<64x64xf32>
    %cst_14 = arith.constant 0.000000e+00 : f32
    %29 = vector.broadcast %cst_14 : f32 to vector<64x64xf32>
    %30 = arith.maximumf %28, %29 : vector<64x64xf32>
    %c0_15 = arith.constant 0 : index
    %c0_16 = arith.constant 0 : index
    %31 = vector.load %arg6[%c0_15, %c0_16] : memref<64x64xf32, #tpu.memory_space<vmem>>, vector<64x64xf32>
    tpu.vector_store %arg6[%c0_15, %c0_16], %30 {strides = array<i32>} : memref<64x64xf32, #tpu.memory_space<vmem>>, vector<64x64xf32>,
    return
  }
  func.func @transform_0(%arg0: i32) -> (i32, i32) {
    %c0_i32 = arith.constant 0 : i32
    %c0_i32_0 = arith.constant 0 : i32
    return %arg0, %c0_i32 : i32, i32
  }
  func.func @transform_1(%arg0: i32) -> (i32, i32) {
    %c0_i32 = arith.constant 0 : i32
    %c0_i32_0 = arith.constant 0 : i32
    %c0_i32_1 = arith.constant 0 : i32
    return %c0_i32, %c0_i32_0 : i32, i32
  }
  func.func @transform_2(%arg0: i32) -> (i32, i32) {
    %c0_i32 = arith.constant 0 : i32
    %c0_i32_0 = arith.constant 0 : i32
    %c0_i32_1 = arith.constant 0 : i32
    return %c0_i32, %c0_i32_0 : i32, i32
  }
  func.func @transform_3(%arg0: i32) -> (i32, i32) {
    %c0_i32 = arith.constant 0 : i32
    %c0_i32_0 = arith.constant 0 : i32
    %c0_i32_1 = arith.constant 0 : i32
    return %c0_i32, %c0_i32_0 : i32, i32
  }
  func.func @transform_4(%arg0: i32) -> (i32, i32) {
    %c0_i32 = arith.constant 0 : i32
    %c0_i32_0 = arith.constant 0 : i32
    %c0_i32_1 = arith.constant 0 : i32
    return %c0_i32, %c0_i32_0 : i32, i32
  }
  func.func @transform_5(%arg0: i32) -> (i32, i32) {
    %c0_i32 = arith.constant 0 : i32
    %c0_i32_0 = arith.constant 0 : i32
    return %arg0, %c0_i32 : i32, i32
  }
}

module attributes {stable_mosaic.version = 11 : i64} {
  func.func @_fused_matmul_kernel(%arg0: i32, %arg1: memref<64x64xf32, #tpu.memory_space<vmem>>, %arg2: memref<64x16xbf16, #tpu.memory_space<vmem>>, %arg3: memref<1x16xf32, #tpu.memory_space<vmem>>, %arg4: memref<64x16xf32, #tpu.memory_space<vmem>>, %arg5: memref<64x16xf32, #tpu.memory_space<vmem>>) attributes {dimension_semantics = [#tpu.dimension_semantics<parallel>], iteration_bounds = array<i64: 1>, scalar_prefetch = 0 : i64, scratch_operands = 0 : i64, tpu.core_type = #tpu.core_type<tc>, window_params = [{transform_indices = @transform_0, window_bounds = array<i64: 64, 64>}, {pipeline_mode = #tpu.pipeline_mode<synchronous>, transform_indices = @transform_1, window_bounds = array<i64: 64, 16>}, {pipeline_mode = #tpu.pipeline_mode<synchronous>, transform_indices = @transform_2, window_bounds = array<i64: 1, 16>}, {transform_indices = @transform_3, window_bounds = array<i64: 64, 16>}, {transform_indices = @transform_4, window_bounds = array<i64: 64, 16>}]} {
    %c0 = arith.constant 0 : index
    %c0_0 = arith.constant 0 : index
    %0 = vector.load %arg1[%c0, %c0_0] : memref<64x64xf32, #tpu.memory_space<vmem>>, vector<64x64xf32>
    %c0_1 = arith.constant 0 : index
    %c0_2 = arith.constant 0 : index
    %1 = vector.load %arg2[%c0_1, %c0_2] : memref<64x16xbf16, #tpu.memory_space<vmem>>, vector<64x16xbf16>
    %c0_3 = arith.constant 0 : index
    %c0_4 = arith.constant 0 : index
    %2 = vector.load %arg3[%c0_3, %c0_4] : memref<1x16xf32, #tpu.memory_space<vmem>>, vector<1x16xf32>
    %3 = arith.truncf %0 : vector<64x64xf32> to vector<64x64xbf16>
    %cst = arith.constant dense<0.000000e+00> : vector<64x16xf32>
    %4 = tpu.matmul %3, %1, %cst {dimension_numbers = #tpu.dot_dimension_numbers<[1], [0], [0], [1], [0, 0, 1, 1], [], []>} : vector<64x64xbf16>, vector<64x16xbf16>, vector<64x16xf32> -> vector<64x16xf32>
    %5 = vector.broadcast %2 : vector<1x16xf32> to vector<64x16xf32>
    %6 = arith.addf %4, %5 : vector<64x16xf32>
    %c0_5 = arith.constant 0 : index
    %c0_6 = arith.constant 0 : index
    %7 = vector.load %arg4[%c0_5, %c0_6] : memref<64x16xf32, #tpu.memory_space<vmem>>, vector<64x16xf32>
    %8 = arith.addf %6, %7 : vector<64x16xf32>
    %c0_7 = arith.constant 0 : index
    %c0_8 = arith.constant 0 : index
    %9 = vector.load %arg5[%c0_7, %c0_8] : memref<64x16xf32, #tpu.memory_space<vmem>>, vector<64x16xf32>
    tpu.vector_store %arg5[%c0_7, %c0_8], %8 {strides = array<i32>} : memref<64x16xf32, #tpu.memory_space<vmem>>, vector<64x16xf32>,
    return
  }
  func.func @transform_0(%arg0: i32) -> (i32, i32) {
    %c0_i32 = arith.constant 0 : i32
    %c0_i32_0 = arith.constant 0 : i32
    return %arg0, %c0_i32 : i32, i32
  }
  func.func @transform_1(%arg0: i32) -> (i32, i32) {
    %c0_i32 = arith.constant 0 : i32
    %c0_i32_0 = arith.constant 0 : i32
    %c0_i32_1 = arith.constant 0 : i32
    return %c0_i32, %c0_i32_0 : i32, i32
  }
  func.func @transform_2(%arg0: i32) -> (i32, i32) {
    %c0_i32 = arith.constant 0 : i32
    %c0_i32_0 = arith.constant 0 : i32
    %c0_i32_1 = arith.constant 0 : i32
    return %c0_i32, %c0_i32_0 : i32, i32
  }
  func.func @transform_3(%arg0: i32) -> (i32, i32) {
    %c0_i32 = arith.constant 0 : i32
    %c0_i32_0 = arith.constant 0 : i32
    return %arg0, %c0_i32 : i32, i32
  }
  func.func @transform_4(%arg0: i32) -> (i32, i32) {
    %c0_i32 = arith.constant 0 : i32
    %c0_i32_0 = arith.constant 0 : i32
    return %arg0, %c0_i32 : i32, i32
  }
}

module attributes {stable_mosaic.version = 11 : i64} {
  func.func @_fused_matmul_kernel(%arg0: i32, %arg1: memref<64x16xf32, #tpu.memory_space<vmem>>, %arg2: memref<1x16xf32, #tpu.memory_space<vmem>>, %arg3: memref<1x16xf32, #tpu.memory_space<vmem>>, %arg4: memref<16x8xbf16, #tpu.memory_space<vmem>>, %arg5: memref<1x8xf32, #tpu.memory_space<vmem>>, %arg6: memref<64x8xf32, #tpu.memory_space<vmem>>) attributes {dimension_semantics = [#tpu.dimension_semantics<parallel>], iteration_bounds = array<i64: 1>, scalar_prefetch = 0 : i64, scratch_operands = 0 : i64, tpu.core_type = #tpu.core_type<tc>, window_params = [{transform_indices = @transform_0, window_bounds = array<i64: 64, 16>}, {pipeline_mode = #tpu.pipeline_mode<synchronous>, transform_indices = @transform_1, window_bounds = array<i64: 1, 16>}, {pipeline_mode = #tpu.pipeline_mode<synchronous>, transform_indices = @transform_2, window_bounds = array<i64: 1, 16>}, {pipeline_mode = #tpu.pipeline_mode<synchronous>, transform_indices = @transform_3, window_bounds = array<i64: 16, 8>}, {pipeline_mode = #tpu.pipeline_mode<synchronous>, transform_indices = @transform_4, window_bounds = array<i64: 1, 8>}, {transform_indices = @transform_5, window_bounds = array<i64: 64, 8>}]} {
    %c0 = arith.constant 0 : index
    %c0_0 = arith.constant 0 : index
    %0 = vector.load %arg1[%c0, %c0_0] : memref<64x16xf32, #tpu.memory_space<vmem>>, vector<64x16xf32>
    %c0_1 = arith.constant 0 : index
    %c0_2 = arith.constant 0 : index
    %1 = vector.load %arg2[%c0_1, %c0_2] : memref<1x16xf32, #tpu.memory_space<vmem>>, vector<1x16xf32>
    %c0_3 = arith.constant 0 : index
    %c0_4 = arith.constant 0 : index
    %2 = vector.load %arg3[%c0_3, %c0_4] : memref<1x16xf32, #tpu.memory_space<vmem>>, vector<1x16xf32>
    %cst = arith.constant dense<0.000000e+00> : vector<64xf32>
    %3 = vector.multi_reduction <add>, %0, %cst [1] : vector<64x16xf32> to vector<64xf32>
    %4 = vector.shape_cast %3 : vector<64xf32> to vector<64x1xf32>
    %cst_5 = arith.constant 1.600000e+01 : f32
    %5 = vector.broadcast %cst_5 : f32 to vector<64x1xf32>
    %6 = arith.divf %4, %5 : vector<64x1xf32>
    %7 = vector.broadcast %6 : vector<64x1xf32> to vector<64x16xf32>
    %8 = arith.subf %0, %7 : vector<64x16xf32>
    %9 = arith.mulf %8, %8 : vector<64x16xf32>
    %cst_6 = arith.constant dense<0.000000e+00> : vector<64xf32>
    %10 = vector.multi_reduction <add>, %9, %cst_6 [1] : vector<64x16xf32> to vector<64xf32>
    %11 = vector.shape_cast %10 : vector<64xf32> to vector<64x1xf32>
    %cst_7 = arith.constant 1.600000e+01 : f32
    %12 = vector.broadcast %cst_7 : f32 to vector<64x1xf32>
    %13 = arith.divf %11, %12 : vector<64x1xf32>
    %cst_8 = arith.constant 9.99999974E-6 : f32
    %14 = vector.broadcast %cst_8 : f32 to vector<64x1xf32>
    %15 = arith.addf %13, %14 : vector<64x1xf32>
    %16 = math.rsqrt %15 : vector<64x1xf32>
    %17 = vector.broadcast %16 : vector<64x1xf32> to vector<64x16xf32>
    %18 = arith.mulf %8, %17 : vector<64x16xf32>
    %19 = vector.broadcast %1 : vector<1x16xf32> to vector<64x16xf32>
    %20 = arith.mulf %18, %19 : vector<64x16xf32>
    %21 = vector.broadcast %2 : vector<1x16xf32> to vector<64x16xf32>
    %22 = arith.addf %20, %21 : vector<64x16xf32>
    %c0_9 = arith.constant 0 : index
    %c0_10 = arith.constant 0 : index
    %23 = vector.load %arg4[%c0_9, %c0_10] : memref<16x8xbf16, #tpu.memory_space<vmem>>, vector<16x8xbf16>
    %c0_11 = arith.constant 0 : index
    %c0_12 = arith.constant 0 : index
    %24 = vector.load %arg5[%c0_11, %c0_12] : memref<1x8xf32, #tpu.memory_space<vmem>>, vector<1x8xf32>
    %25 = arith.truncf %22 : vector<64x16xf32> to vector<64x16xbf16>
    %cst_13 = arith.constant dense<0.000000e+00> : vector<64x8xf32>
    %26 = tpu.matmul %25, %23, %cst_13 {dimension_numbers = #tpu.dot_dimension_numbers<[1], [0], [0], [1], [0, 0, 1, 1], [], []>} : vector<64x16xbf16>, vector<16x8xbf16>, vector<64x8xf32> -> vector<64x8xf32>
    %27 = vector.broadcast %24 : vector<1x8xf32> to vector<64x8xf32>
    %28 = arith.addf %26, %27 : vector<64x8xf32>
    %c0_14 = arith.constant 0 : index
    %c0_15 = arith.constant 0 : index
    %29 = vector.load %arg6[%c0_14, %c0_15] : memref<64x8xf32, #tpu.memory_space<vmem>>, vector<64x8xf32>
    tpu.vector_store %arg6[%c0_14, %c0_15], %28 {strides = array<i32>} : memref<64x8xf32, #tpu.memory_space<vmem>>, vector<64x8xf32>,
    return
  }
  func.func @transform_0(%arg0: i32) -> (i32, i32) {
    %c0_i32 = arith.constant 0 : i32
    %c0_i32_0 = arith.constant 0 : i32
    return %arg0, %c0_i32 : i32, i32
  }
  func.func @transform_1(%arg0: i32) -> (i32, i32) {
    %c0_i32 = arith.constant 0 : i32
    %c0_i32_0 = arith.constant 0 : i32
    %c0_i32_1 = arith.constant 0 : i32
    return %c0_i32, %c0_i32_0 : i32, i32
  }
  func.func @transform_2(%arg0: i32) -> (i32, i32) {
    %c0_i32 = arith.constant 0 : i32
    %c0_i32_0 = arith.constant 0 : i32
    %c0_i32_1 = arith.constant 0 : i32
    return %c0_i32, %c0_i32_0 : i32, i32
  }
  func.func @transform_3(%arg0: i32) -> (i32, i32) {
    %c0_i32 = arith.constant 0 : i32
    %c0_i32_0 = arith.constant 0 : i32
    %c0_i32_1 = arith.constant 0 : i32
    return %c0_i32, %c0_i32_0 : i32, i32
  }
  func.func @transform_4(%arg0: i32) -> (i32, i32) {
    %c0_i32 = arith.constant 0 : i32
    %c0_i32_0 = arith.constant 0 : i32
    %c0_i32_1 = arith.constant 0 : i32
    return %c0_i32, %c0_i32_0 : i32, i32
  }
  func.func @transform_5(%arg0: i32) -> (i32, i32) {
    %c0_i32 = arith.constant 0 : i32
    %c0_i32_0 = arith.constant 0 : i32
    return %arg0, %c0_i32 : i32, i32
  }
}

module attributes {stable_mosaic.version = 11 : i64} {
  func.func @_bmm_kernel(%arg0: i32, %arg1: i32, %arg2: i32, %arg3: memref<1x32x8xbf16, #tpu.memory_space<vmem>>, %arg4: memref<1x8x32xbf16, #tpu.memory_space<vmem>>, %arg5: memref<1x32x32xf32, #tpu.memory_space<vmem>>) attributes {dimension_semantics = [#tpu.dimension_semantics<parallel>, #tpu.dimension_semantics<parallel>, #tpu.dimension_semantics<parallel>], iteration_bounds = array<i64: 1, 1, 1>, scalar_prefetch = 0 : i64, scratch_operands = 0 : i64, tpu.core_type = #tpu.core_type<tc>, window_params = [{transform_indices = @transform_0, window_bounds = array<i64: 1, 32, 8>}, {transform_indices = @transform_1, window_bounds = array<i64: 1, 8, 32>}, {transform_indices = @transform_2, window_bounds = array<i64: 1, 32, 32>}]} {
    %c0 = arith.constant 0 : index
    %c0_0 = arith.constant 0 : index
    %c0_1 = arith.constant 0 : index
    %0 = vector.load %arg3[%c0, %c0_0, %c0_1] : memref<1x32x8xbf16, #tpu.memory_space<vmem>>, vector<1x32x8xbf16>
    %c0_2 = arith.constant 0 : index
    %c0_3 = arith.constant 0 : index
    %c0_4 = arith.constant 0 : index
    %1 = vector.load %arg4[%c0_2, %c0_3, %c0_4] : memref<1x8x32xbf16, #tpu.memory_space<vmem>>, vector<1x8x32xbf16>
    "tpu.trace_start"() <{level = 10 : i32, message = "gmk,gkn->gmn"}> : () -> ()
    %cst = arith.constant dense<0.000000e+00> : vector<1x32x32xf32>
    %2 = tpu.matmul %0, %1, %cst {dimension_numbers = #tpu.dot_dimension_numbers<[2], [1], [1], [2], [0, 0, 0, 1, 1, 2], [0], [0]>} : vector<1x32x8xbf16>, vector<1x8x32xbf16>, vector<1x32x32xf32> -> vector<1x32x32xf32>
    "tpu.trace_stop"() : () -> ()
    %c0_5 = arith.constant 0 : index
    %c0_6 = arith.constant 0 : index
    %c0_7 = arith.constant 0 : index
    %3 = vector.load %arg5[%c0_5, %c0_6, %c0_7] : memref<1x32x32xf32, #tpu.memory_space<vmem>>, vector<1x32x32xf32>
    tpu.vector_store %arg5[%c0_5, %c0_6, %c0_7], %2 {strides = array<i32>} : memref<1x32x32xf32, #tpu.memory_space<vmem>>, vector<1x32x32xf32>,
    return
  }
  func.func @transform_0(%arg0: i32, %arg1: i32, %arg2: i32) -> (i32, i32, i32) {
    %c0_i32 = arith.constant 0 : i32
    %c0_i32_0 = arith.constant 0 : i32
    return %arg0, %arg1, %c0_i32 : i32, i32, i32
  }
  func.func @transform_1(%arg0: i32, %arg1: i32, %arg2: i32) -> (i32, i32, i32) {
    %c0_i32 = arith.constant 0 : i32
    %c0_i32_0 = arith.constant 0 : i32
    return %arg0, %c0_i32, %arg2 : i32, i32, i32
  }
  func.func @transform_2(%arg0: i32, %arg1: i32, %arg2: i32) -> (i32, i32, i32) {
    %c0_i32 = arith.constant 0 : i32
    return %arg0, %arg1, %arg2 : i32, i32, i32
  }
}

module attributes {stable_mosaic.version = 11 : i64} {
  func.func @_fused_matmul_kernel(%arg0: i32, %arg1: memref<64x16xf32, #tpu.memory_space<vmem>>, %arg2: memref<16x16xbf16, #tpu.memory_space<vmem>>, %arg3: memref<1x16xf32, #tpu.memory_space<vmem>>, %arg4: memref<64x16xf32, #tpu.memory_space<vmem>>, %arg5: memref<64x16xf32, #tpu.memory_space<vmem>>) attributes {dimension_semantics = [#tpu.dimension_semantics<parallel>], iteration_bounds = array<i64: 1>, scalar_prefetch = 0 : i64, scratch_operands = 0 : i64, tpu.core_type = #tpu.core_type<tc>, window_params = [{transform_indices = @transform_0, window_bounds = array<i64: 64, 16>}, {pipeline_mode = #tpu.pipeline_mode<synchronous>, transform_indices = @transform_1, window_bounds = array<i64: 16, 16>}, {pipeline_mode = #tpu.pipeline_mode<synchronous>, transform_indices = @transform_2, window_bounds = array<i64: 1, 16>}, {transform_indices = @transform_3, window_bounds = array<i64: 64, 16>}, {transform_indices = @transform_4, window_bounds = array<i64: 64, 16>}]} {
    %c0 = arith.constant 0 : index
    %c0_0 = arith.constant 0 : index
    %0 = vector.load %arg1[%c0, %c0_0] : memref<64x16xf32, #tpu.memory_space<vmem>>, vector<64x16xf32>
    %c0_1 = arith.constant 0 : index
    %c0_2 = arith.constant 0 : index
    %1 = vector.load %arg2[%c0_1, %c0_2] : memref<16x16xbf16, #tpu.memory_space<vmem>>, vector<16x16xbf16>
    %c0_3 = arith.constant 0 : index
    %c0_4 = arith.constant 0 : index
    %2 = vector.load %arg3[%c0_3, %c0_4] : memref<1x16xf32, #tpu.memory_space<vmem>>, vector<1x16xf32>
    %3 = arith.truncf %0 : vector<64x16xf32> to vector<64x16xbf16>
    %cst = arith.constant dense<0.000000e+00> : vector<64x16xf32>
    %4 = tpu.matmul %3, %1, %cst {dimension_numbers = #tpu.dot_dimension_numbers<[1], [0], [0], [1], [0, 0, 1, 1], [], []>} : vector<64x16xbf16>, vector<16x16xbf16>, vector<64x16xf32> -> vector<64x16xf32>
    %5 = vector.broadcast %2 : vector<1x16xf32> to vector<64x16xf32>
    %6 = arith.addf %4, %5 : vector<64x16xf32>
    %c0_5 = arith.constant 0 : index
    %c0_6 = arith.constant 0 : index
    %7 = vector.load %arg4[%c0_5, %c0_6] : memref<64x16xf32, #tpu.memory_space<vmem>>, vector<64x16xf32>
    %8 = arith.addf %6, %7 : vector<64x16xf32>
    %c0_7 = arith.constant 0 : index
    %c0_8 = arith.constant 0 : index
    %9 = vector.load %arg5[%c0_7, %c0_8] : memref<64x16xf32, #tpu.memory_space<vmem>>, vector<64x16xf32>
    tpu.vector_store %arg5[%c0_7, %c0_8], %8 {strides = array<i32>} : memref<64x16xf32, #tpu.memory_space<vmem>>, vector<64x16xf32>,
    return
  }
  func.func @transform_0(%arg0: i32) -> (i32, i32) {
    %c0_i32 = arith.constant 0 : i32
    %c0_i32_0 = arith.constant 0 : i32
    return %arg0, %c0_i32 : i32, i32
  }
  func.func @transform_1(%arg0: i32) -> (i32, i32) {
    %c0_i32 = arith.constant 0 : i32
    %c0_i32_0 = arith.constant 0 : i32
    %c0_i32_1 = arith.constant 0 : i32
    return %c0_i32, %c0_i32_0 : i32, i32
  }
  func.func @transform_2(%arg0: i32) -> (i32, i32) {
    %c0_i32 = arith.constant 0 : i32
    %c0_i32_0 = arith.constant 0 : i32
    %c0_i32_1 = arith.constant 0 : i32
    return %c0_i32, %c0_i32_0 : i32, i32
  }
  func.func @transform_3(%arg0: i32) -> (i32, i32) {
    %c0_i32 = arith.constant 0 : i32
    %c0_i32_0 = arith.constant 0 : i32
    return %arg0, %c0_i32 : i32, i32
  }
  func.func @transform_4(%arg0: i32) -> (i32, i32) {
    %c0_i32 = arith.constant 0 : i32
    %c0_i32_0 = arith.constant 0 : i32
    return %arg0, %c0_i32 : i32, i32
  }
}

module attributes {stable_mosaic.version = 11 : i64} {
  func.func @_fused_matmul_kernel(%arg0: i32, %arg1: memref<64x16xf32, #tpu.memory_space<vmem>>, %arg2: memref<1x16xf32, #tpu.memory_space<vmem>>, %arg3: memref<1x16xf32, #tpu.memory_space<vmem>>, %arg4: memref<16x48xbf16, #tpu.memory_space<vmem>>, %arg5: memref<1x48xf32, #tpu.memory_space<vmem>>, %arg6: memref<64x48xf32, #tpu.memory_space<vmem>>) attributes {dimension_semantics = [#tpu.dimension_semantics<parallel>], iteration_bounds = array<i64: 1>, scalar_prefetch = 0 : i64, scratch_operands = 0 : i64, tpu.core_type = #tpu.core_type<tc>, window_params = [{transform_indices = @transform_0, window_bounds = array<i64: 64, 16>}, {pipeline_mode = #tpu.pipeline_mode<synchronous>, transform_indices = @transform_1, window_bounds = array<i64: 1, 16>}, {pipeline_mode = #tpu.pipeline_mode<synchronous>, transform_indices = @transform_2, window_bounds = array<i64: 1, 16>}, {pipeline_mode = #tpu.pipeline_mode<synchronous>, transform_indices = @transform_3, window_bounds = array<i64: 16, 48>}, {pipeline_mode = #tpu.pipeline_mode<synchronous>, transform_indices = @transform_4, window_bounds = array<i64: 1, 48>}, {transform_indices = @transform_5, window_bounds = array<i64: 64, 48>}]} {
    %c0 = arith.constant 0 : index
    %c0_0 = arith.constant 0 : index
    %0 = vector.load %arg1[%c0, %c0_0] : memref<64x16xf32, #tpu.memory_space<vmem>>, vector<64x16xf32>
    %c0_1 = arith.constant 0 : index
    %c0_2 = arith.constant 0 : index
    %1 = vector.load %arg2[%c0_1, %c0_2] : memref<1x16xf32, #tpu.memory_space<vmem>>, vector<1x16xf32>
    %c0_3 = arith.constant 0 : index
    %c0_4 = arith.constant 0 : index
    %2 = vector.load %arg3[%c0_3, %c0_4] : memref<1x16xf32, #tpu.memory_space<vmem>>, vector<1x16xf32>
    %cst = arith.constant dense<0.000000e+00> : vector<64xf32>
    %3 = vector.multi_reduction <add>, %0, %cst [1] : vector<64x16xf32> to vector<64xf32>
    %4 = vector.shape_cast %3 : vector<64xf32> to vector<64x1xf32>
    %cst_5 = arith.constant 1.600000e+01 : f32
    %5 = vector.broadcast %cst_5 : f32 to vector<64x1xf32>
    %6 = arith.divf %4, %5 : vector<64x1xf32>
    %7 = vector.broadcast %6 : vector<64x1xf32> to vector<64x16xf32>
    %8 = arith.subf %0, %7 : vector<64x16xf32>
    %9 = arith.mulf %8, %8 : vector<64x16xf32>
    %cst_6 = arith.constant dense<0.000000e+00> : vector<64xf32>
    %10 = vector.multi_reduction <add>, %9, %cst_6 [1] : vector<64x16xf32> to vector<64xf32>
    %11 = vector.shape_cast %10 : vector<64xf32> to vector<64x1xf32>
    %cst_7 = arith.constant 1.600000e+01 : f32
    %12 = vector.broadcast %cst_7 : f32 to vector<64x1xf32>
    %13 = arith.divf %11, %12 : vector<64x1xf32>
    %cst_8 = arith.constant 9.99999974E-6 : f32
    %14 = vector.broadcast %cst_8 : f32 to vector<64x1xf32>
    %15 = arith.addf %13, %14 : vector<64x1xf32>
    %16 = math.rsqrt %15 : vector<64x1xf32>
    %17 = vector.broadcast %16 : vector<64x1xf32> to vector<64x16xf32>
    %18 = arith.mulf %8, %17 : vector<64x16xf32>
    %19 = vector.broadcast %1 : vector<1x16xf32> to vector<64x16xf32>
    %20 = arith.mulf %18, %19 : vector<64x16xf32>
    %21 = vector.broadcast %2 : vector<1x16xf32> to vector<64x16xf32>
    %22 = arith.addf %20, %21 : vector<64x16xf32>
    %c0_9 = arith.constant 0 : index
    %c0_10 = arith.constant 0 : index
    %23 = vector.load %arg4[%c0_9, %c0_10] : memref<16x48xbf16, #tpu.memory_space<vmem>>, vector<16x48xbf16>
    %c0_11 = arith.constant 0 : index
    %c0_12 = arith.constant 0 : index
    %24 = vector.load %arg5[%c0_11, %c0_12] : memref<1x48xf32, #tpu.memory_space<vmem>>, vector<1x48xf32>
    %25 = arith.truncf %22 : vector<64x16xf32> to vector<64x16xbf16>
    %cst_13 = arith.constant dense<0.000000e+00> : vector<64x48xf32>
    %26 = tpu.matmul %25, %23, %cst_13 {dimension_numbers = #tpu.dot_dimension_numbers<[1], [0], [0], [1], [0, 0, 1, 1], [], []>} : vector<64x16xbf16>, vector<16x48xbf16>, vector<64x48xf32> -> vector<64x48xf32>
    %27 = vector.broadcast %24 : vector<1x48xf32> to vector<64x48xf32>
    %28 = arith.addf %26, %27 : vector<64x48xf32>
    %29 = tpu.iota {dimensions = array<i32: 1>} : vector<64x48xi32>
    %c16_i32 = arith.constant 16 : i32
    %30 = vector.broadcast %c16_i32 : i32 to vector<64x48xi32>
    %31 = arith.cmpi sge, %29, %30 : vector<64x48xi32>
    %32 = arith.negf %28 : vector<64x48xf32>
    %33 = math.exp %32 : vector<64x48xf32>
    %cst_14 = arith.constant 1.000000e+00 : f32
    %34 = vector.broadcast %cst_14 : f32 to vector<64x48xf32>
    %35 = arith.addf %34, %33 : vector<64x48xf32>
    %36 = arith.divf %34, %35 : vector<64x48xf32>
    %37 = arith.select %31, %36, %28 : vector<64x48xi1>, vector<64x48xf32>
    %c0_15 = arith.constant 0 : index
    %c0_16 = arith.constant 0 : index
    %38 = vector.load %arg6[%c0_15, %c0_16] : memref<64x48xf32, #tpu.memory_space<vmem>>, vector<64x48xf32>
    tpu.vector_store %arg6[%c0_15, %c0_16], %37 {strides = array<i32>} : memref<64x48xf32, #tpu.memory_space<vmem>>, vector<64x48xf32>,
    return
  }
  func.func @transform_0(%arg0: i32) -> (i32, i32) {
    %c0_i32 = arith.constant 0 : i32
    %c0_i32_0 = arith.constant 0 : i32
    return %arg0, %c0_i32 : i32, i32
  }
  func.func @transform_1(%arg0: i32) -> (i32, i32) {
    %c0_i32 = arith.constant 0 : i32
    %c0_i32_0 = arith.constant 0 : i32
    %c0_i32_1 = arith.constant 0 : i32
    return %c0_i32, %c0_i32_0 : i32, i32
  }
  func.func @transform_2(%arg0: i32) -> (i32, i32) {
    %c0_i32 = arith.constant 0 : i32
    %c0_i32_0 = arith.constant 0 : i32
    %c0_i32_1 = arith.constant 0 : i32
    return %c0_i32, %c0_i32_0 : i32, i32
  }
  func.func @transform_3(%arg0: i32) -> (i32, i32) {
    %c0_i32 = arith.constant 0 : i32
    %c0_i32_0 = arith.constant 0 : i32
    %c0_i32_1 = arith.constant 0 : i32
    return %c0_i32, %c0_i32_0 : i32, i32
  }
  func.func @transform_4(%arg0: i32) -> (i32, i32) {
    %c0_i32 = arith.constant 0 : i32
    %c0_i32_0 = arith.constant 0 : i32
    %c0_i32_1 = arith.constant 0 : i32
    return %c0_i32, %c0_i32_0 : i32, i32
  }
  func.func @transform_5(%arg0: i32) -> (i32, i32) {
    %c0_i32 = arith.constant 0 : i32
    %c0_i32_0 = arith.constant 0 : i32
    return %arg0, %c0_i32 : i32, i32
  }
}

module attributes {stable_mosaic.version = 11 : i64} {
  func.func @_bmm_kernel(%arg0: i32, %arg1: i32, %arg2: i32, %arg3: memref<8x8x8xbf16, #tpu.memory_space<vmem>>, %arg4: memref<8x8x8xbf16, #tpu.memory_space<vmem>>, %arg5: memref<8x8x8xf32, #tpu.memory_space<vmem>>) attributes {dimension_semantics = [#tpu.dimension_semantics<parallel>, #tpu.dimension_semantics<parallel>, #tpu.dimension_semantics<parallel>], iteration_bounds = array<i64: 1, 1, 1>, scalar_prefetch = 0 : i64, scratch_operands = 0 : i64, tpu.core_type = #tpu.core_type<tc>, window_params = [{transform_indices = @transform_0, window_bounds = array<i64: 8, 8, 8>}, {transform_indices = @transform_1, window_bounds = array<i64: 8, 8, 8>}, {transform_indices = @transform_2, window_bounds = array<i64: 8, 8, 8>}]} {
    %c0 = arith.constant 0 : index
    %c0_0 = arith.constant 0 : index
    %c0_1 = arith.constant 0 : index
    %0 = vector.load %arg3[%c0, %c0_0, %c0_1] : memref<8x8x8xbf16, #tpu.memory_space<vmem>>, vector<8x8x8xbf16>
    %c0_2 = arith.constant 0 : index
    %c0_3 = arith.constant 0 : index
    %c0_4 = arith.constant 0 : index
    %1 = vector.load %arg4[%c0_2, %c0_3, %c0_4] : memref<8x8x8xbf16, #tpu.memory_space<vmem>>, vector<8x8x8xbf16>
    "tpu.trace_start"() <{level = 10 : i32, message = "gmk,gkn->gmn"}> : () -> ()
    %cst = arith.constant dense<0.000000e+00> : vector<8x8x8xf32>
    %2 = tpu.matmul %0, %1, %cst {dimension_numbers = #tpu.dot_dimension_numbers<[2], [1], [1], [2], [0, 0, 0, 1, 1, 2], [0], [0]>} : vector<8x8x8xbf16>, vector<8x8x8xbf16>, vector<8x8x8xf32> -> vector<8x8x8xf32>
    "tpu.trace_stop"() : () -> ()
    %c0_5 = arith.constant 0 : index
    %c0_6 = arith.constant 0 : index
    %c0_7 = arith.constant 0 : index
    %3 = vector.load %arg5[%c0_5, %c0_6, %c0_7] : memref<8x8x8xf32, #tpu.memory_space<vmem>>, vector<8x8x8xf32>
    tpu.vector_store %arg5[%c0_5, %c0_6, %c0_7], %2 {strides = array<i32>} : memref<8x8x8xf32, #tpu.memory_space<vmem>>, vector<8x8x8xf32>,
    return
  }
  func.func @transform_0(%arg0: i32, %arg1: i32, %arg2: i32) -> (i32, i32, i32) {
    %c0_i32 = arith.constant 0 : i32
    %c0_i32_0 = arith.constant 0 : i32
    return %arg0, %arg1, %c0_i32 : i32, i32, i32
  }
  func.func @transform_1(%arg0: i32, %arg1: i32, %arg2: i32) -> (i32, i32, i32) {
    %c0_i32 = arith.constant 0 : i32
    %c0_i32_0 = arith.constant 0 : i32
    return %arg0, %c0_i32, %arg2 : i32, i32, i32
  }
  func.func @transform_2(%arg0: i32, %arg1: i32, %arg2: i32) -> (i32, i32, i32) {
    %c0_i32 = arith.constant 0 : i32
    return %arg0, %arg1, %arg2 : i32, i32, i32
  }
}

module attributes {stable_mosaic.version = 11 : i64} {
  func.func @_fused_matmul_kernel(%arg0: i32, %arg1: memref<64x8xf32, #tpu.memory_space<vmem>>, %arg2: memref<1x8xf32, #tpu.memory_space<vmem>>, %arg3: memref<1x8xf32, #tpu.memory_space<vmem>>, %arg4: memref<8x16xbf16, #tpu.memory_space<vmem>>, %arg5: memref<1x16xf32, #tpu.memory_space<vmem>>, %arg6: memref<64x16xf32, #tpu.memory_space<vmem>>, %arg7: memref<64x16xf32, #tpu.memory_space<vmem>>, %arg8: memref<64x16xf32, #tpu.memory_space<vmem>>) attributes {dimension_semantics = [#tpu.dimension_semantics<parallel>], iteration_bounds = array<i64: 1>, scalar_prefetch = 0 : i64, scratch_operands = 0 : i64, tpu.core_type = #tpu.core_type<tc>, window_params = [{transform_indices = @transform_0, window_bounds = array<i64: 64, 8>}, {pipeline_mode = #tpu.pipeline_mode<synchronous>, transform_indices = @transform_1, window_bounds = array<i64: 1, 8>}, {pipeline_mode = #tpu.pipeline_mode<synchronous>, transform_indices = @transform_2, window_bounds = array<i64: 1, 8>}, {pipeline_mode = #tpu.pipeline_mode<synchronous>, transform_indices = @transform_3, window_bounds = array<i64: 8, 16>}, {pipeline_mode = #tpu.pipeline_mode<synchronous>, transform_indices = @transform_4, window_bounds = array<i64: 1, 16>}, {transform_indices = @transform_5, window_bounds = array<i64: 64, 16>}, {transform_indices = @transform_6, window_bounds = array<i64: 64, 16>}, {transform_indices = @transform_7, window_bounds = array<i64: 64, 16>}]} {
    %c0 = arith.constant 0 : index
    %c0_0 = arith.constant 0 : index
    %0 = vector.load %arg1[%c0, %c0_0] : memref<64x8xf32, #tpu.memory_space<vmem>>, vector<64x8xf32>
    %c0_1 = arith.constant 0 : index
    %c0_2 = arith.constant 0 : index
    %1 = vector.load %arg2[%c0_1, %c0_2] : memref<1x8xf32, #tpu.memory_space<vmem>>, vector<1x8xf32>
    %c0_3 = arith.constant 0 : index
    %c0_4 = arith.constant 0 : index
    %2 = vector.load %arg3[%c0_3, %c0_4] : memref<1x8xf32, #tpu.memory_space<vmem>>, vector<1x8xf32>
    %cst = arith.constant dense<0.000000e+00> : vector<64xf32>
    %3 = vector.multi_reduction <add>, %0, %cst [1] : vector<64x8xf32> to vector<64xf32>
    %4 = vector.shape_cast %3 : vector<64xf32> to vector<64x1xf32>
    %cst_5 = arith.constant 8.000000e+00 : f32
    %5 = vector.broadcast %cst_5 : f32 to vector<64x1xf32>
    %6 = arith.divf %4, %5 : vector<64x1xf32>
    %7 = vector.broadcast %6 : vector<64x1xf32> to vector<64x8xf32>
    %8 = arith.subf %0, %7 : vector<64x8xf32>
    %9 = arith.mulf %8, %8 : vector<64x8xf32>
    %cst_6 = arith.constant dense<0.000000e+00> : vector<64xf32>
    %10 = vector.multi_reduction <add>, %9, %cst_6 [1] : vector<64x8xf32> to vector<64xf32>
    %11 = vector.shape_cast %10 : vector<64xf32> to vector<64x1xf32>
    %cst_7 = arith.constant 8.000000e+00 : f32
    %12 = vector.broadcast %cst_7 : f32 to vector<64x1xf32>
    %13 = arith.divf %11, %12 : vector<64x1xf32>
    %cst_8 = arith.constant 9.99999974E-6 : f32
    %14 = vector.broadcast %cst_8 : f32 to vector<64x1xf32>
    %15 = arith.addf %13, %14 : vector<64x1xf32>
    %16 = math.rsqrt %15 : vector<64x1xf32>
    %17 = vector.broadcast %16 : vector<64x1xf32> to vector<64x8xf32>
    %18 = arith.mulf %8, %17 : vector<64x8xf32>
    %19 = vector.broadcast %1 : vector<1x8xf32> to vector<64x8xf32>
    %20 = arith.mulf %18, %19 : vector<64x8xf32>
    %21 = vector.broadcast %2 : vector<1x8xf32> to vector<64x8xf32>
    %22 = arith.addf %20, %21 : vector<64x8xf32>
    %c0_9 = arith.constant 0 : index
    %c0_10 = arith.constant 0 : index
    %23 = vector.load %arg4[%c0_9, %c0_10] : memref<8x16xbf16, #tpu.memory_space<vmem>>, vector<8x16xbf16>
    %c0_11 = arith.constant 0 : index
    %c0_12 = arith.constant 0 : index
    %24 = vector.load %arg5[%c0_11, %c0_12] : memref<1x16xf32, #tpu.memory_space<vmem>>, vector<1x16xf32>
    %25 = arith.truncf %22 : vector<64x8xf32> to vector<64x8xbf16>
    %cst_13 = arith.constant dense<0.000000e+00> : vector<64x16xf32>
    %26 = tpu.matmul %25, %23, %cst_13 {dimension_numbers = #tpu.dot_dimension_numbers<[1], [0], [0], [1], [0, 0, 1, 1], [], []>} : vector<64x8xbf16>, vector<8x16xbf16>, vector<64x16xf32> -> vector<64x16xf32>
    %27 = vector.broadcast %24 : vector<1x16xf32> to vector<64x16xf32>
    %28 = arith.addf %26, %27 : vector<64x16xf32>
    %c0_14 = arith.constant 0 : index
    %c0_15 = arith.constant 0 : index
    %29 = vector.load %arg6[%c0_14, %c0_15] : memref<64x16xf32, #tpu.memory_space<vmem>>, vector<64x16xf32>
    %30 = arith.mulf %28, %29 : vector<64x16xf32>
    %c0_16 = arith.constant 0 : index
    %c0_17 = arith.constant 0 : index
    %31 = vector.load %arg7[%c0_16, %c0_17] : memref<64x16xf32, #tpu.memory_space<vmem>>, vector<64x16xf32>
    %32 = arith.addf %30, %31 : vector<64x16xf32>
    %c0_18 = arith.constant 0 : index
    %c0_19 = arith.constant 0 : index
    %33 = vector.load %arg8[%c0_18, %c0_19] : memref<64x16xf32, #tpu.memory_space<vmem>>, vector<64x16xf32>
    tpu.vector_store %arg8[%c0_18, %c0_19], %32 {strides = array<i32>} : memref<64x16xf32, #tpu.memory_space<vmem>>, vector<64x16xf32>,
    return
  }
  func.func @transform_0(%arg0: i32) -> (i32, i32) {
    %c0_i32 = arith.constant 0 : i32
    %c0_i32_0 = arith.constant 0 : i32
    return %arg0, %c0_i32 : i32, i32
  }
  func.func @transform_1(%arg0: i32) -> (i32, i32) {
    %c0_i32 = arith.constant 0 : i32
    %c0_i32_0 = arith.constant 0 : i32
    %c0_i32_1 = arith.constant 0 : i32
    return %c0_i32, %c0_i32_0 : i32, i32
  }
  func.func @transform_2(%arg0: i32) -> (i32, i32) {
    %c0_i32 = arith.constant 0 : i32
    %c0_i32_0 = arith.constant 0 : i32
    %c0_i32_1 = arith.constant 0 : i32
    return %c0_i32, %c0_i32_0 : i32, i32
  }
  func.func @transform_3(%arg0: i32) -> (i32, i32) {
    %c0_i32 = arith.constant 0 : i32
    %c0_i32_0 = arith.constant 0 : i32
    %c0_i32_1 = arith.constant 0 : i32
    return %c0_i32, %c0_i32_0 : i32, i32
  }
  func.func @transform_4(%arg0: i32) -> (i32, i32) {
    %c0_i32 = arith.constant 0 : i32
    %c0_i32_0 = arith.constant 0 : i32
    %c0_i32_1 = arith.constant 0 : i32
    return %c0_i32, %c0_i32_0 : i32, i32
  }
  func.func @transform_5(%arg0: i32) -> (i32, i32) {
    %c0_i32 = arith.constant 0 : i32
    %c0_i32_0 = arith.constant 0 : i32
    return %arg0, %c0_i32 : i32, i32
  }
  func.func @transform_6(%arg0: i32) -> (i32, i32) {
    %c0_i32 = arith.constant 0 : i32
    %c0_i32_0 = arith.constant 0 : i32
    return %arg0, %c0_i32 : i32, i32
  }
  func.func @transform_7(%arg0: i32) -> (i32, i32) {
    %c0_i32 = arith.constant 0 : i32
    %c0_i32_0 = arith.constant 0 : i32
    return %arg0, %c0_i32 : i32, i32
  }
}

module attributes {stable_mosaic.version = 11 : i64} {
  func.func @_fused_matmul_kernel(%arg0: i32, %arg1: memref<64x16xf32, #tpu.memory_space<vmem>>, %arg2: memref<1x16xf32, #tpu.memory_space<vmem>>, %arg3: memref<1x16xf32, #tpu.memory_space<vmem>>, %arg4: memref<16x32xbf16, #tpu.memory_space<vmem>>, %arg5: memref<1x32xf32, #tpu.memory_space<vmem>>, %arg6: memref<64x32xf32, #tpu.memory_space<vmem>>) attributes {dimension_semantics = [#tpu.dimension_semantics<parallel>], iteration_bounds = array<i64: 1>, scalar_prefetch = 0 : i64, scratch_operands = 0 : i64, tpu.core_type = #tpu.core_type<tc>, window_params = [{transform_indices = @transform_0, window_bounds = array<i64: 64, 16>}, {pipeline_mode = #tpu.pipeline_mode<synchronous>, transform_indices = @transform_1, window_bounds = array<i64: 1, 16>}, {pipeline_mode = #tpu.pipeline_mode<synchronous>, transform_indices = @transform_2, window_bounds = array<i64: 1, 16>}, {pipeline_mode = #tpu.pipeline_mode<synchronous>, transform_indices = @transform_3, window_bounds = array<i64: 16, 32>}, {pipeline_mode = #tpu.pipeline_mode<synchronous>, transform_indices = @transform_4, window_bounds = array<i64: 1, 32>}, {transform_indices = @transform_5, window_bounds = array<i64: 64, 32>}]} {
    %c0 = arith.constant 0 : index
    %c0_0 = arith.constant 0 : index
    %0 = vector.load %arg1[%c0, %c0_0] : memref<64x16xf32, #tpu.memory_space<vmem>>, vector<64x16xf32>
    %c0_1 = arith.constant 0 : index
    %c0_2 = arith.constant 0 : index
    %1 = vector.load %arg2[%c0_1, %c0_2] : memref<1x16xf32, #tpu.memory_space<vmem>>, vector<1x16xf32>
    %c0_3 = arith.constant 0 : index
    %c0_4 = arith.constant 0 : index
    %2 = vector.load %arg3[%c0_3, %c0_4] : memref<1x16xf32, #tpu.memory_space<vmem>>, vector<1x16xf32>
    %cst = arith.constant dense<0.000000e+00> : vector<64xf32>
    %3 = vector.multi_reduction <add>, %0, %cst [1] : vector<64x16xf32> to vector<64xf32>
    %4 = vector.shape_cast %3 : vector<64xf32> to vector<64x1xf32>
    %cst_5 = arith.constant 1.600000e+01 : f32
    %5 = vector.broadcast %cst_5 : f32 to vector<64x1xf32>
    %6 = arith.divf %4, %5 : vector<64x1xf32>
    %7 = vector.broadcast %6 : vector<64x1xf32> to vector<64x16xf32>
    %8 = arith.subf %0, %7 : vector<64x16xf32>
    %9 = arith.mulf %8, %8 : vector<64x16xf32>
    %cst_6 = arith.constant dense<0.000000e+00> : vector<64xf32>
    %10 = vector.multi_reduction <add>, %9, %cst_6 [1] : vector<64x16xf32> to vector<64xf32>
    %11 = vector.shape_cast %10 : vector<64xf32> to vector<64x1xf32>
    %cst_7 = arith.constant 1.600000e+01 : f32
    %12 = vector.broadcast %cst_7 : f32 to vector<64x1xf32>
    %13 = arith.divf %11, %12 : vector<64x1xf32>
    %cst_8 = arith.constant 9.99999974E-6 : f32
    %14 = vector.broadcast %cst_8 : f32 to vector<64x1xf32>
    %15 = arith.addf %13, %14 : vector<64x1xf32>
    %16 = math.rsqrt %15 : vector<64x1xf32>
    %17 = vector.broadcast %16 : vector<64x1xf32> to vector<64x16xf32>
    %18 = arith.mulf %8, %17 : vector<64x16xf32>
    %19 = vector.broadcast %1 : vector<1x16xf32> to vector<64x16xf32>
    %20 = arith.mulf %18, %19 : vector<64x16xf32>
    %21 = vector.broadcast %2 : vector<1x16xf32> to vector<64x16xf32>
    %22 = arith.addf %20, %21 : vector<64x16xf32>
    %c0_9 = arith.constant 0 : index
    %c0_10 = arith.constant 0 : index
    %23 = vector.load %arg4[%c0_9, %c0_10] : memref<16x32xbf16, #tpu.memory_space<vmem>>, vector<16x32xbf16>
    %c0_11 = arith.constant 0 : index
    %c0_12 = arith.constant 0 : index
    %24 = vector.load %arg5[%c0_11, %c0_12] : memref<1x32xf32, #tpu.memory_space<vmem>>, vector<1x32xf32>
    %25 = arith.truncf %22 : vector<64x16xf32> to vector<64x16xbf16>
    %cst_13 = arith.constant dense<0.000000e+00> : vector<64x32xf32>
    %26 = tpu.matmul %25, %23, %cst_13 {dimension_numbers = #tpu.dot_dimension_numbers<[1], [0], [0], [1], [0, 0, 1, 1], [], []>} : vector<64x16xbf16>, vector<16x32xbf16>, vector<64x32xf32> -> vector<64x32xf32>
    %27 = vector.broadcast %24 : vector<1x32xf32> to vector<64x32xf32>
    %28 = arith.addf %26, %27 : vector<64x32xf32>
    %cst_14 = arith.constant 0.000000e+00 : f32
    %29 = vector.broadcast %cst_14 : f32 to vector<64x32xf32>
    %30 = arith.maximumf %28, %29 : vector<64x32xf32>
    %c0_15 = arith.constant 0 : index
    %c0_16 = arith.constant 0 : index
    %31 = vector.load %arg6[%c0_15, %c0_16] : memref<64x32xf32, #tpu.memory_space<vmem>>, vector<64x32xf32>
    tpu.vector_store %arg6[%c0_15, %c0_16], %30 {strides = array<i32>} : memref<64x32xf32, #tpu.memory_space<vmem>>, vector<64x32xf32>,
    return
  }
  func.func @transform_0(%arg0: i32) -> (i32, i32) {
    %c0_i32 = arith.constant 0 : i32
    %c0_i32_0 = arith.constant 0 : i32
    return %arg0, %c0_i32 : i32, i32
  }
  func.func @transform_1(%arg0: i32) -> (i32, i32) {
    %c0_i32 = arith.constant 0 : i32
    %c0_i32_0 = arith.constant 0 : i32
    %c0_i32_1 = arith.constant 0 : i32
    return %c0_i32, %c0_i32_0 : i32, i32
  }
  func.func @transform_2(%arg0: i32) -> (i32, i32) {
    %c0_i32 = arith.constant 0 : i32
    %c0_i32_0 = arith.constant 0 : i32
    %c0_i32_1 = arith.constant 0 : i32
    return %c0_i32, %c0_i32_0 : i32, i32
  }
  func.func @transform_3(%arg0: i32) -> (i32, i32) {
    %c0_i32 = arith.constant 0 : i32
    %c0_i32_0 = arith.constant 0 : i32
    %c0_i32_1 = arith.constant 0 : i32
    return %c0_i32, %c0_i32_0 : i32, i32
  }
  func.func @transform_4(%arg0: i32) -> (i32, i32) {
    %c0_i32 = arith.constant 0 : i32
    %c0_i32_0 = arith.constant 0 : i32
    %c0_i32_1 = arith.constant 0 : i32
    return %c0_i32, %c0_i32_0 : i32, i32
  }
  func.func @transform_5(%arg0: i32) -> (i32, i32) {
    %c0_i32 = arith.constant 0 : i32
    %c0_i32_0 = arith.constant 0 : i32
    return %arg0, %c0_i32 : i32, i32
  }
}

module attributes {stable_mosaic.version = 11 : i64} {
  func.func @_fused_matmul_kernel(%arg0: i32, %arg1: memref<64x32xf32, #tpu.memory_space<vmem>>, %arg2: memref<1x32xf32, #tpu.memory_space<vmem>>, %arg3: memref<1x32xf32, #tpu.memory_space<vmem>>, %arg4: memref<32x192xbf16, #tpu.memory_space<vmem>>, %arg5: memref<1x192xf32, #tpu.memory_space<vmem>>, %arg6: memref<64x192xf32, #tpu.memory_space<vmem>>) attributes {dimension_semantics = [#tpu.dimension_semantics<parallel>], iteration_bounds = array<i64: 1>, scalar_prefetch = 0 : i64, scratch_operands = 0 : i64, tpu.core_type = #tpu.core_type<tc>, window_params = [{transform_indices = @transform_0, window_bounds = array<i64: 64, 32>}, {pipeline_mode = #tpu.pipeline_mode<synchronous>, transform_indices = @transform_1, window_bounds = array<i64: 1, 32>}, {pipeline_mode = #tpu.pipeline_mode<synchronous>, transform_indices = @transform_2, window_bounds = array<i64: 1, 32>}, {pipeline_mode = #tpu.pipeline_mode<synchronous>, transform_indices = @transform_3, window_bounds = array<i64: 32, 192>}, {pipeline_mode = #tpu.pipeline_mode<synchronous>, transform_indices = @transform_4, window_bounds = array<i64: 1, 192>}, {transform_indices = @transform_5, window_bounds = array<i64: 64, 192>}]} {
    %c0 = arith.constant 0 : index
    %c0_0 = arith.constant 0 : index
    %0 = vector.load %arg1[%c0, %c0_0] : memref<64x32xf32, #tpu.memory_space<vmem>>, vector<64x32xf32>
    %c0_1 = arith.constant 0 : index
    %c0_2 = arith.constant 0 : index
    %1 = vector.load %arg2[%c0_1, %c0_2] : memref<1x32xf32, #tpu.memory_space<vmem>>, vector<1x32xf32>
    %c0_3 = arith.constant 0 : index
    %c0_4 = arith.constant 0 : index
    %2 = vector.load %arg3[%c0_3, %c0_4] : memref<1x32xf32, #tpu.memory_space<vmem>>, vector<1x32xf32>
    %cst = arith.constant dense<0.000000e+00> : vector<64xf32>
    %3 = vector.multi_reduction <add>, %0, %cst [1] : vector<64x32xf32> to vector<64xf32>
    %4 = vector.shape_cast %3 : vector<64xf32> to vector<64x1xf32>
    %cst_5 = arith.constant 3.200000e+01 : f32
    %5 = vector.broadcast %cst_5 : f32 to vector<64x1xf32>
    %6 = arith.divf %4, %5 : vector<64x1xf32>
    %7 = vector.broadcast %6 : vector<64x1xf32> to vector<64x32xf32>
    %8 = arith.subf %0, %7 : vector<64x32xf32>
    %9 = arith.mulf %8, %8 : vector<64x32xf32>
    %cst_6 = arith.constant dense<0.000000e+00> : vector<64xf32>
    %10 = vector.multi_reduction <add>, %9, %cst_6 [1] : vector<64x32xf32> to vector<64xf32>
    %11 = vector.shape_cast %10 : vector<64xf32> to vector<64x1xf32>
    %cst_7 = arith.constant 3.200000e+01 : f32
    %12 = vector.broadcast %cst_7 : f32 to vector<64x1xf32>
    %13 = arith.divf %11, %12 : vector<64x1xf32>
    %cst_8 = arith.constant 9.99999974E-6 : f32
    %14 = vector.broadcast %cst_8 : f32 to vector<64x1xf32>
    %15 = arith.addf %13, %14 : vector<64x1xf32>
    %16 = math.rsqrt %15 : vector<64x1xf32>
    %17 = vector.broadcast %16 : vector<64x1xf32> to vector<64x32xf32>
    %18 = arith.mulf %8, %17 : vector<64x32xf32>
    %19 = vector.broadcast %1 : vector<1x32xf32> to vector<64x32xf32>
    %20 = arith.mulf %18, %19 : vector<64x32xf32>
    %21 = vector.broadcast %2 : vector<1x32xf32> to vector<64x32xf32>
    %22 = arith.addf %20, %21 : vector<64x32xf32>
    %c0_9 = arith.constant 0 : index
    %c0_10 = arith.constant 0 : index
    %23 = vector.load %arg4[%c0_9, %c0_10] : memref<32x192xbf16, #tpu.memory_space<vmem>>, vector<32x192xbf16>
    %c0_11 = arith.constant 0 : index
    %c0_12 = arith.constant 0 : index
    %24 = vector.load %arg5[%c0_11, %c0_12] : memref<1x192xf32, #tpu.memory_space<vmem>>, vector<1x192xf32>
    %25 = arith.truncf %22 : vector<64x32xf32> to vector<64x32xbf16>
    %cst_13 = arith.constant dense<0.000000e+00> : vector<64x192xf32>
    %26 = tpu.matmul %25, %23, %cst_13 {dimension_numbers = #tpu.dot_dimension_numbers<[1], [0], [0], [1], [0, 0, 1, 1], [], []>} : vector<64x32xbf16>, vector<32x192xbf16>, vector<64x192xf32> -> vector<64x192xf32>
    %27 = vector.broadcast %24 : vector<1x192xf32> to vector<64x192xf32>
    %28 = arith.addf %26, %27 : vector<64x192xf32>
    %29 = tpu.iota {dimensions = array<i32: 1>} : vector<64x192xi32>
    %c160_i32 = arith.constant 160 : i32
    %30 = vector.broadcast %c160_i32 : i32 to vector<64x192xi32>
    %31 = arith.cmpi sge, %29, %30 : vector<64x192xi32>
    %32 = arith.negf %28 : vector<64x192xf32>
    %33 = math.exp %32 : vector<64x192xf32>
    %cst_14 = arith.constant 1.000000e+00 : f32
    %34 = vector.broadcast %cst_14 : f32 to vector<64x192xf32>
    %35 = arith.addf %34, %33 : vector<64x192xf32>
    %36 = arith.divf %34, %35 : vector<64x192xf32>
    %37 = arith.select %31, %36, %28 : vector<64x192xi1>, vector<64x192xf32>
    %c0_15 = arith.constant 0 : index
    %c0_16 = arith.constant 0 : index
    %38 = vector.load %arg6[%c0_15, %c0_16] : memref<64x192xf32, #tpu.memory_space<vmem>>, vector<64x192xf32>
    tpu.vector_store %arg6[%c0_15, %c0_16], %37 {strides = array<i32>} : memref<64x192xf32, #tpu.memory_space<vmem>>, vector<64x192xf32>,
    return
  }
  func.func @transform_0(%arg0: i32) -> (i32, i32) {
    %c0_i32 = arith.constant 0 : i32
    %c0_i32_0 = arith.constant 0 : i32
    return %arg0, %c0_i32 : i32, i32
  }
  func.func @transform_1(%arg0: i32) -> (i32, i32) {
    %c0_i32 = arith.constant 0 : i32
    %c0_i32_0 = arith.constant 0 : i32
    %c0_i32_1 = arith.constant 0 : i32
    return %c0_i32, %c0_i32_0 : i32, i32
  }
  func.func @transform_2(%arg0: i32) -> (i32, i32) {
    %c0_i32 = arith.constant 0 : i32
    %c0_i32_0 = arith.constant 0 : i32
    %c0_i32_1 = arith.constant 0 : i32
    return %c0_i32, %c0_i32_0 : i32, i32
  }
  func.func @transform_3(%arg0: i32) -> (i32, i32) {
    %c0_i32 = arith.constant 0 : i32
    %c0_i32_0 = arith.constant 0 : i32
    %c0_i32_1 = arith.constant 0 : i32
    return %c0_i32, %c0_i32_0 : i32, i32
  }
  func.func @transform_4(%arg0: i32) -> (i32, i32) {
    %c0_i32 = arith.constant 0 : i32
    %c0_i32_0 = arith.constant 0 : i32
    %c0_i32_1 = arith.constant 0 : i32
    return %c0_i32, %c0_i32_0 : i32, i32
  }
  func.func @transform_5(%arg0: i32) -> (i32, i32) {
    %c0_i32 = arith.constant 0 : i32
    %c0_i32_0 = arith.constant 0 : i32
    return %arg0, %c0_i32 : i32, i32
  }
}

module attributes {stable_mosaic.version = 11 : i64} {
  func.func @_fused_matmul_kernel(%arg0: i32, %arg1: memref<64x32xf32, #tpu.memory_space<vmem>>, %arg2: memref<32x32xbf16, #tpu.memory_space<vmem>>, %arg3: memref<1x32xf32, #tpu.memory_space<vmem>>, %arg4: memref<64x32xf32, #tpu.memory_space<vmem>>, %arg5: memref<64x32xf32, #tpu.memory_space<vmem>>, %arg6: memref<64x32xf32, #tpu.memory_space<vmem>>) attributes {dimension_semantics = [#tpu.dimension_semantics<parallel>], iteration_bounds = array<i64: 1>, scalar_prefetch = 0 : i64, scratch_operands = 0 : i64, tpu.core_type = #tpu.core_type<tc>, window_params = [{transform_indices = @transform_0, window_bounds = array<i64: 64, 32>}, {pipeline_mode = #tpu.pipeline_mode<synchronous>, transform_indices = @transform_1, window_bounds = array<i64: 32, 32>}, {pipeline_mode = #tpu.pipeline_mode<synchronous>, transform_indices = @transform_2, window_bounds = array<i64: 1, 32>}, {transform_indices = @transform_3, window_bounds = array<i64: 64, 32>}, {transform_indices = @transform_4, window_bounds = array<i64: 64, 32>}, {transform_indices = @transform_5, window_bounds = array<i64: 64, 32>}]} {
    %c0 = arith.constant 0 : index
    %c0_0 = arith.constant 0 : index
    %0 = vector.load %arg1[%c0, %c0_0] : memref<64x32xf32, #tpu.memory_space<vmem>>, vector<64x32xf32>
    %c0_1 = arith.constant 0 : index
    %c0_2 = arith.constant 0 : index
    %1 = vector.load %arg2[%c0_1, %c0_2] : memref<32x32xbf16, #tpu.memory_space<vmem>>, vector<32x32xbf16>
    %c0_3 = arith.constant 0 : index
    %c0_4 = arith.constant 0 : index
    %2 = vector.load %arg3[%c0_3, %c0_4] : memref<1x32xf32, #tpu.memory_space<vmem>>, vector<1x32xf32>
    %c0_5 = arith.constant 0 : index
    %c0_6 = arith.constant 0 : index
    %3 = vector.load %arg4[%c0_5, %c0_6] : memref<64x32xf32, #tpu.memory_space<vmem>>, vector<64x32xf32>
    %4 = arith.mulf %0, %3 : vector<64x32xf32>
    %5 = arith.truncf %4 : vector<64x32xf32> to vector<64x32xbf16>
    %cst = arith.constant dense<0.000000e+00> : vector<64x32xf32>
    %6 = tpu.matmul %5, %1, %cst {dimension_numbers = #tpu.dot_dimension_numbers<[1], [0], [0], [1], [0, 0, 1, 1], [], []>} : vector<64x32xbf16>, vector<32x32xbf16>, vector<64x32xf32> -> vector<64x32xf32>
    %7 = vector.broadcast %2 : vector<1x32xf32> to vector<64x32xf32>
    %8 = arith.addf %6, %7 : vector<64x32xf32>
    %c0_7 = arith.constant 0 : index
    %c0_8 = arith.constant 0 : index
    %9 = vector.load %arg5[%c0_7, %c0_8] : memref<64x32xf32, #tpu.memory_space<vmem>>, vector<64x32xf32>
    %10 = arith.addf %8, %9 : vector<64x32xf32>
    %c0_9 = arith.constant 0 : index
    %c0_10 = arith.constant 0 : index
    %11 = vector.load %arg6[%c0_9, %c0_10] : memref<64x32xf32, #tpu.memory_space<vmem>>, vector<64x32xf32>
    tpu.vector_store %arg6[%c0_9, %c0_10], %10 {strides = array<i32>} : memref<64x32xf32, #tpu.memory_space<vmem>>, vector<64x32xf32>,
    return
  }
  func.func @transform_0(%arg0: i32) -> (i32, i32) {
    %c0_i32 = arith.constant 0 : i32
    %c0_i32_0 = arith.constant 0 : i32
    return %arg0, %c0_i32 : i32, i32
  }
  func.func @transform_1(%arg0: i32) -> (i32, i32) {
    %c0_i32 = arith.constant 0 : i32
    %c0_i32_0 = arith.constant 0 : i32
    %c0_i32_1 = arith.constant 0 : i32
    return %c0_i32, %c0_i32_0 : i32, i32
  }
  func.func @transform_2(%arg0: i32) -> (i32, i32) {
    %c0_i32 = arith.constant 0 : i32
    %c0_i32_0 = arith.constant 0 : i32
    %c0_i32_1 = arith.constant 0 : i32
    return %c0_i32, %c0_i32_0 : i32, i32
  }
  func.func @transform_3(%arg0: i32) -> (i32, i32) {
    %c0_i32 = arith.constant 0 : i32
    %c0_i32_0 = arith.constant 0 : i32
    return %arg0, %c0_i32 : i32, i32
  }
  func.func @transform_4(%arg0: i32) -> (i32, i32) {
    %c0_i32 = arith.constant 0 : i32
    %c0_i32_0 = arith.constant 0 : i32
    return %arg0, %c0_i32 : i32, i32
  }
  func.func @transform_5(%arg0: i32) -> (i32, i32) {
    %c0_i32 = arith.constant 0 : i32
    %c0_i32_0 = arith.constant 0 : i32
    return %arg0, %c0_i32 : i32, i32
  }
}

module attributes {stable_mosaic.version = 11 : i64} {
  func.func @_fused_matmul_kernel(%arg0: i32, %arg1: memref<64x32xf32, #tpu.memory_space<vmem>>, %arg2: memref<1x32xf32, #tpu.memory_space<vmem>>, %arg3: memref<1x32xf32, #tpu.memory_space<vmem>>, %arg4: memref<32x128xbf16, #tpu.memory_space<vmem>>, %arg5: memref<1x128xf32, #tpu.memory_space<vmem>>, %arg6: memref<64x128xf32, #tpu.memory_space<vmem>>) attributes {dimension_semantics = [#tpu.dimension_semantics<parallel>], iteration_bounds = array<i64: 1>, scalar_prefetch = 0 : i64, scratch_operands = 0 : i64, tpu.core_type = #tpu.core_type<tc>, window_params = [{transform_indices = @transform_0, window_bounds = array<i64: 64, 32>}, {pipeline_mode = #tpu.pipeline_mode<synchronous>, transform_indices = @transform_1, window_bounds = array<i64: 1, 32>}, {pipeline_mode = #tpu.pipeline_mode<synchronous>, transform_indices = @transform_2, window_bounds = array<i64: 1, 32>}, {pipeline_mode = #tpu.pipeline_mode<synchronous>, transform_indices = @transform_3, window_bounds = array<i64: 32, 128>}, {pipeline_mode = #tpu.pipeline_mode<synchronous>, transform_indices = @transform_4, window_bounds = array<i64: 1, 128>}, {transform_indices = @transform_5, window_bounds = array<i64: 64, 128>}]} {
    %c0 = arith.constant 0 : index
    %c0_0 = arith.constant 0 : index
    %0 = vector.load %arg1[%c0, %c0_0] : memref<64x32xf32, #tpu.memory_space<vmem>>, vector<64x32xf32>
    %c0_1 = arith.constant 0 : index
    %c0_2 = arith.constant 0 : index
    %1 = vector.load %arg2[%c0_1, %c0_2] : memref<1x32xf32, #tpu.memory_space<vmem>>, vector<1x32xf32>
    %c0_3 = arith.constant 0 : index
    %c0_4 = arith.constant 0 : index
    %2 = vector.load %arg3[%c0_3, %c0_4] : memref<1x32xf32, #tpu.memory_space<vmem>>, vector<1x32xf32>
    %cst = arith.constant dense<0.000000e+00> : vector<64xf32>
    %3 = vector.multi_reduction <add>, %0, %cst [1] : vector<64x32xf32> to vector<64xf32>
    %4 = vector.shape_cast %3 : vector<64xf32> to vector<64x1xf32>
    %cst_5 = arith.constant 3.200000e+01 : f32
    %5 = vector.broadcast %cst_5 : f32 to vector<64x1xf32>
    %6 = arith.divf %4, %5 : vector<64x1xf32>
    %7 = vector.broadcast %6 : vector<64x1xf32> to vector<64x32xf32>
    %8 = arith.subf %0, %7 : vector<64x32xf32>
    %9 = arith.mulf %8, %8 : vector<64x32xf32>
    %cst_6 = arith.constant dense<0.000000e+00> : vector<64xf32>
    %10 = vector.multi_reduction <add>, %9, %cst_6 [1] : vector<64x32xf32> to vector<64xf32>
    %11 = vector.shape_cast %10 : vector<64xf32> to vector<64x1xf32>
    %cst_7 = arith.constant 3.200000e+01 : f32
    %12 = vector.broadcast %cst_7 : f32 to vector<64x1xf32>
    %13 = arith.divf %11, %12 : vector<64x1xf32>
    %cst_8 = arith.constant 9.99999974E-6 : f32
    %14 = vector.broadcast %cst_8 : f32 to vector<64x1xf32>
    %15 = arith.addf %13, %14 : vector<64x1xf32>
    %16 = math.rsqrt %15 : vector<64x1xf32>
    %17 = vector.broadcast %16 : vector<64x1xf32> to vector<64x32xf32>
    %18 = arith.mulf %8, %17 : vector<64x32xf32>
    %19 = vector.broadcast %1 : vector<1x32xf32> to vector<64x32xf32>
    %20 = arith.mulf %18, %19 : vector<64x32xf32>
    %21 = vector.broadcast %2 : vector<1x32xf32> to vector<64x32xf32>
    %22 = arith.addf %20, %21 : vector<64x32xf32>
    %c0_9 = arith.constant 0 : index
    %c0_10 = arith.constant 0 : index
    %23 = vector.load %arg4[%c0_9, %c0_10] : memref<32x128xbf16, #tpu.memory_space<vmem>>, vector<32x128xbf16>
    %c0_11 = arith.constant 0 : index
    %c0_12 = arith.constant 0 : index
    %24 = vector.load %arg5[%c0_11, %c0_12] : memref<1x128xf32, #tpu.memory_space<vmem>>, vector<1x128xf32>
    %25 = arith.truncf %22 : vector<64x32xf32> to vector<64x32xbf16>
    %cst_13 = arith.constant dense<0.000000e+00> : vector<64x128xf32>
    %26 = tpu.matmul %25, %23, %cst_13 {dimension_numbers = #tpu.dot_dimension_numbers<[1], [0], [0], [1], [0, 0, 1, 1], [], []>} : vector<64x32xbf16>, vector<32x128xbf16>, vector<64x128xf32> -> vector<64x128xf32>
    %27 = vector.broadcast %24 : vector<1x128xf32> to vector<64x128xf32>
    %28 = arith.addf %26, %27 : vector<64x128xf32>
    %29 = tpu.iota {dimensions = array<i32: 1>} : vector<64x128xi32>
    %c96_i32 = arith.constant 96 : i32
    %30 = vector.broadcast %c96_i32 : i32 to vector<64x128xi32>
    %31 = arith.cmpi sge, %29, %30 : vector<64x128xi32>
    %32 = arith.negf %28 : vector<64x128xf32>
    %33 = math.exp %32 : vector<64x128xf32>
    %cst_14 = arith.constant 1.000000e+00 : f32
    %34 = vector.broadcast %cst_14 : f32 to vector<64x128xf32>
    %35 = arith.addf %34, %33 : vector<64x128xf32>
    %36 = arith.divf %34, %35 : vector<64x128xf32>
    %37 = arith.select %31, %36, %28 : vector<64x128xi1>, vector<64x128xf32>
    %c0_15 = arith.constant 0 : index
    %c0_16 = arith.constant 0 : index
    %38 = vector.load %arg6[%c0_15, %c0_16] : memref<64x128xf32, #tpu.memory_space<vmem>>, vector<64x128xf32>
    tpu.vector_store %arg6[%c0_15, %c0_16], %37 {strides = array<i32>} : memref<64x128xf32, #tpu.memory_space<vmem>>, vector<64x128xf32>,
    return
  }
  func.func @transform_0(%arg0: i32) -> (i32, i32) {
    %c0_i32 = arith.constant 0 : i32
    %c0_i32_0 = arith.constant 0 : i32
    return %arg0, %c0_i32 : i32, i32
  }
  func.func @transform_1(%arg0: i32) -> (i32, i32) {
    %c0_i32 = arith.constant 0 : i32
    %c0_i32_0 = arith.constant 0 : i32
    %c0_i32_1 = arith.constant 0 : i32
    return %c0_i32, %c0_i32_0 : i32, i32
  }
  func.func @transform_2(%arg0: i32) -> (i32, i32) {
    %c0_i32 = arith.constant 0 : i32
    %c0_i32_0 = arith.constant 0 : i32
    %c0_i32_1 = arith.constant 0 : i32
    return %c0_i32, %c0_i32_0 : i32, i32
  }
  func.func @transform_3(%arg0: i32) -> (i32, i32) {
    %c0_i32 = arith.constant 0 : i32
    %c0_i32_0 = arith.constant 0 : i32
    %c0_i32_1 = arith.constant 0 : i32
    return %c0_i32, %c0_i32_0 : i32, i32
  }
  func.func @transform_4(%arg0: i32) -> (i32, i32) {
    %c0_i32 = arith.constant 0 : i32
    %c0_i32_0 = arith.constant 0 : i32
    %c0_i32_1 = arith.constant 0 : i32
    return %c0_i32, %c0_i32_0 : i32, i32
  }
  func.func @transform_5(%arg0: i32) -> (i32, i32) {
    %c0_i32 = arith.constant 0 : i32
    %c0_i32_0 = arith.constant 0 : i32
    return %arg0, %c0_i32 : i32, i32
  }
}

module attributes {stable_mosaic.version = 11 : i64} {
  func.func @_attention_kernel(%arg0: i32, %arg1: memref<32x8x8xbf16, #tpu.memory_space<vmem>>, %arg2: memref<32x8x8xbf16, #tpu.memory_space<vmem>>, %arg3: memref<32x8x8xbf16, #tpu.memory_space<vmem>>, %arg4: memref<32x8x8xf32, #tpu.memory_space<vmem>>) attributes {dimension_semantics = [#tpu.dimension_semantics<parallel>], iteration_bounds = array<i64: 1>, scalar_prefetch = 0 : i64, scratch_operands = 0 : i64, tpu.core_type = #tpu.core_type<tc>, window_params = [{transform_indices = @transform_0, window_bounds = array<i64: 32, 8, 8>}, {transform_indices = @transform_1, window_bounds = array<i64: 32, 8, 8>}, {transform_indices = @transform_2, window_bounds = array<i64: 32, 8, 8>}, {transform_indices = @transform_3, window_bounds = array<i64: 32, 8, 8>}]} {
    %c0 = arith.constant 0 : index
    %c0_0 = arith.constant 0 : index
    %c0_1 = arith.constant 0 : index
    %0 = vector.load %arg1[%c0, %c0_0, %c0_1] : memref<32x8x8xbf16, #tpu.memory_space<vmem>>, vector<32x8x8xbf16>
    %c0_2 = arith.constant 0 : index
    %c0_3 = arith.constant 0 : index
    %c0_4 = arith.constant 0 : index
    %1 = vector.load %arg2[%c0_2, %c0_3, %c0_4] : memref<32x8x8xbf16, #tpu.memory_space<vmem>>, vector<32x8x8xbf16>
    %c0_5 = arith.constant 0 : index
    %c0_6 = arith.constant 0 : index
    %c0_7 = arith.constant 0 : index
    %2 = vector.load %arg3[%c0_5, %c0_6, %c0_7] : memref<32x8x8xbf16, #tpu.memory_space<vmem>>, vector<32x8x8xbf16>
    "tpu.trace_start"() <{level = 10 : i32, message = "gmd,gsd->gms"}> : () -> ()
    %cst = arith.constant dense<0.000000e+00> : vector<32x8x8xf32>
    %3 = tpu.matmul %0, %1, %cst {dimension_numbers = #tpu.dot_dimension_numbers<[2], [2], [1], [1], [0, 0, 0, 1, 1, 1], [0], [0]>} : vector<32x8x8xbf16>, vector<32x8x8xbf16>, vector<32x8x8xf32> -> vector<32x8x8xf32>
    "tpu.trace_stop"() : () -> ()
    %cst_8 = arith.constant 0.353553385 : f32
    %4 = vector.broadcast %cst_8 : f32 to vector<32x8x8xf32>
    %5 = arith.mulf %3, %4 : vector<32x8x8xf32>
    %cst_9 = arith.constant dense<0xFF800000> : vector<32x8xf32>
    %6 = vector.multi_reduction <maximumf>, %5, %cst_9 [2] : vector<32x8x8xf32> to vector<32x8xf32>
    %7 = vector.shape_cast %6 : vector<32x8xf32> to vector<32x8x1xf32>
    %8 = vector.broadcast %7 : vector<32x8x1xf32> to vector<32x8x8xf32>
    %9 = arith.subf %5, %8 : vector<32x8x8xf32>
    %10 = math.exp %9 : vector<32x8x8xf32>
    %cst_10 = arith.constant dense<0.000000e+00> : vector<32x8xf32>
    %11 = vector.multi_reduction <add>, %10, %cst_10 [2] : vector<32x8x8xf32> to vector<32x8xf32>
    %12 = vector.shape_cast %11 : vector<32x8xf32> to vector<32x8x1xf32>
    %13 = tpu.reciprocal %12 {approx = true} : vector<32x8x1xf32> -> vector<32x8x1xf32>
    %14 = vector.broadcast %13 : vector<32x8x1xf32> to vector<32x8x8xf32>
    %15 = arith.mulf %10, %14 : vector<32x8x8xf32>
    %16 = arith.truncf %15 : vector<32x8x8xf32> to vector<32x8x8xbf16>
    "tpu.trace_start"() <{level = 10 : i32, message = "gms,gsd->gmd"}> : () -> ()
    %cst_11 = arith.constant dense<0.000000e+00> : vector<32x8x8xf32>
    %17 = tpu.matmul %16, %2, %cst_11 {dimension_numbers = #tpu.dot_dimension_numbers<[2], [1], [1], [2], [0, 0, 0, 1, 1, 2], [0], [0]>} : vector<32x8x8xbf16>, vector<32x8x8xbf16>, vector<32x8x8xf32> -> vector<32x8x8xf32>
    "tpu.trace_stop"() : () -> ()
    %c0_12 = arith.constant 0 : index
    %c0_13 = arith.constant 0 : index
    %c0_14 = arith.constant 0 : index
    %18 = vector.load %arg4[%c0_12, %c0_13, %c0_14] : memref<32x8x8xf32, #tpu.memory_space<vmem>>, vector<32x8x8xf32>
    tpu.vector_store %arg4[%c0_12, %c0_13, %c0_14], %17 {strides = array<i32>} : memref<32x8x8xf32, #tpu.memory_space<vmem>>, vector<32x8x8xf32>,
    return
  }
  func.func @transform_0(%arg0: i32) -> (i32, i32, i32) {
    %c0_i32 = arith.constant 0 : i32
    %c0_i32_0 = arith.constant 0 : i32
    %c0_i32_1 = arith.constant 0 : i32
    return %arg0, %c0_i32, %c0_i32_0 : i32, i32, i32
  }
  func.func @transform_1(%arg0: i32) -> (i32, i32, i32) {
    %c0_i32 = arith.constant 0 : i32
    %c0_i32_0 = arith.constant 0 : i32
    %c0_i32_1 = arith.constant 0 : i32
    return %arg0, %c0_i32, %c0_i32_0 : i32, i32, i32
  }
  func.func @transform_2(%arg0: i32) -> (i32, i32, i32) {
    %c0_i32 = arith.constant 0 : i32
    %c0_i32_0 = arith.constant 0 : i32
    %c0_i32_1 = arith.constant 0 : i32
    return %arg0, %c0_i32, %c0_i32_0 : i32, i32, i32
  }
  func.func @transform_3(%arg0: i32) -> (i32, i32, i32) {
    %c0_i32 = arith.constant 0 : i32
    %c0_i32_0 = arith.constant 0 : i32
    %c0_i32_1 = arith.constant 0 : i32
    return %arg0, %c0_i32, %c0_i32_0 : i32, i32, i32
  }
}

module attributes {stable_mosaic.version = 11 : i64} {
  func.func @_fused_matmul_kernel(%arg0: i32, %arg1: memref<64x32xf32, #tpu.memory_space<vmem>>, %arg2: memref<1x32xf32, #tpu.memory_space<vmem>>, %arg3: memref<1x32xf32, #tpu.memory_space<vmem>>, %arg4: memref<32x128xbf16, #tpu.memory_space<vmem>>, %arg5: memref<1x128xf32, #tpu.memory_space<vmem>>, %arg6: memref<64x128xf32, #tpu.memory_space<vmem>>) attributes {dimension_semantics = [#tpu.dimension_semantics<parallel>], iteration_bounds = array<i64: 1>, scalar_prefetch = 0 : i64, scratch_operands = 0 : i64, tpu.core_type = #tpu.core_type<tc>, window_params = [{transform_indices = @transform_0, window_bounds = array<i64: 64, 32>}, {pipeline_mode = #tpu.pipeline_mode<synchronous>, transform_indices = @transform_1, window_bounds = array<i64: 1, 32>}, {pipeline_mode = #tpu.pipeline_mode<synchronous>, transform_indices = @transform_2, window_bounds = array<i64: 1, 32>}, {pipeline_mode = #tpu.pipeline_mode<synchronous>, transform_indices = @transform_3, window_bounds = array<i64: 32, 128>}, {pipeline_mode = #tpu.pipeline_mode<synchronous>, transform_indices = @transform_4, window_bounds = array<i64: 1, 128>}, {transform_indices = @transform_5, window_bounds = array<i64: 64, 128>}]} {
    %c0 = arith.constant 0 : index
    %c0_0 = arith.constant 0 : index
    %0 = vector.load %arg1[%c0, %c0_0] : memref<64x32xf32, #tpu.memory_space<vmem>>, vector<64x32xf32>
    %c0_1 = arith.constant 0 : index
    %c0_2 = arith.constant 0 : index
    %1 = vector.load %arg2[%c0_1, %c0_2] : memref<1x32xf32, #tpu.memory_space<vmem>>, vector<1x32xf32>
    %c0_3 = arith.constant 0 : index
    %c0_4 = arith.constant 0 : index
    %2 = vector.load %arg3[%c0_3, %c0_4] : memref<1x32xf32, #tpu.memory_space<vmem>>, vector<1x32xf32>
    %cst = arith.constant dense<0.000000e+00> : vector<64xf32>
    %3 = vector.multi_reduction <add>, %0, %cst [1] : vector<64x32xf32> to vector<64xf32>
    %4 = vector.shape_cast %3 : vector<64xf32> to vector<64x1xf32>
    %cst_5 = arith.constant 3.200000e+01 : f32
    %5 = vector.broadcast %cst_5 : f32 to vector<64x1xf32>
    %6 = arith.divf %4, %5 : vector<64x1xf32>
    %7 = vector.broadcast %6 : vector<64x1xf32> to vector<64x32xf32>
    %8 = arith.subf %0, %7 : vector<64x32xf32>
    %9 = arith.mulf %8, %8 : vector<64x32xf32>
    %cst_6 = arith.constant dense<0.000000e+00> : vector<64xf32>
    %10 = vector.multi_reduction <add>, %9, %cst_6 [1] : vector<64x32xf32> to vector<64xf32>
    %11 = vector.shape_cast %10 : vector<64xf32> to vector<64x1xf32>
    %cst_7 = arith.constant 3.200000e+01 : f32
    %12 = vector.broadcast %cst_7 : f32 to vector<64x1xf32>
    %13 = arith.divf %11, %12 : vector<64x1xf32>
    %cst_8 = arith.constant 9.99999974E-6 : f32
    %14 = vector.broadcast %cst_8 : f32 to vector<64x1xf32>
    %15 = arith.addf %13, %14 : vector<64x1xf32>
    %16 = math.rsqrt %15 : vector<64x1xf32>
    %17 = vector.broadcast %16 : vector<64x1xf32> to vector<64x32xf32>
    %18 = arith.mulf %8, %17 : vector<64x32xf32>
    %19 = vector.broadcast %1 : vector<1x32xf32> to vector<64x32xf32>
    %20 = arith.mulf %18, %19 : vector<64x32xf32>
    %21 = vector.broadcast %2 : vector<1x32xf32> to vector<64x32xf32>
    %22 = arith.addf %20, %21 : vector<64x32xf32>
    %c0_9 = arith.constant 0 : index
    %c0_10 = arith.constant 0 : index
    %23 = vector.load %arg4[%c0_9, %c0_10] : memref<32x128xbf16, #tpu.memory_space<vmem>>, vector<32x128xbf16>
    %c0_11 = arith.constant 0 : index
    %c0_12 = arith.constant 0 : index
    %24 = vector.load %arg5[%c0_11, %c0_12] : memref<1x128xf32, #tpu.memory_space<vmem>>, vector<1x128xf32>
    %25 = arith.truncf %22 : vector<64x32xf32> to vector<64x32xbf16>
    %cst_13 = arith.constant dense<0.000000e+00> : vector<64x128xf32>
    %26 = tpu.matmul %25, %23, %cst_13 {dimension_numbers = #tpu.dot_dimension_numbers<[1], [0], [0], [1], [0, 0, 1, 1], [], []>} : vector<64x32xbf16>, vector<32x128xbf16>, vector<64x128xf32> -> vector<64x128xf32>
    %27 = vector.broadcast %24 : vector<1x128xf32> to vector<64x128xf32>
    %28 = arith.addf %26, %27 : vector<64x128xf32>
    %cst_14 = arith.constant 0.000000e+00 : f32
    %29 = vector.broadcast %cst_14 : f32 to vector<64x128xf32>
    %30 = arith.maximumf %28, %29 : vector<64x128xf32>
    %c0_15 = arith.constant 0 : index
    %c0_16 = arith.constant 0 : index
    %31 = vector.load %arg6[%c0_15, %c0_16] : memref<64x128xf32, #tpu.memory_space<vmem>>, vector<64x128xf32>
    tpu.vector_store %arg6[%c0_15, %c0_16], %30 {strides = array<i32>} : memref<64x128xf32, #tpu.memory_space<vmem>>, vector<64x128xf32>,
    return
  }
  func.func @transform_0(%arg0: i32) -> (i32, i32) {
    %c0_i32 = arith.constant 0 : i32
    %c0_i32_0 = arith.constant 0 : i32
    return %arg0, %c0_i32 : i32, i32
  }
  func.func @transform_1(%arg0: i32) -> (i32, i32) {
    %c0_i32 = arith.constant 0 : i32
    %c0_i32_0 = arith.constant 0 : i32
    %c0_i32_1 = arith.constant 0 : i32
    return %c0_i32, %c0_i32_0 : i32, i32
  }
  func.func @transform_2(%arg0: i32) -> (i32, i32) {
    %c0_i32 = arith.constant 0 : i32
    %c0_i32_0 = arith.constant 0 : i32
    %c0_i32_1 = arith.constant 0 : i32
    return %c0_i32, %c0_i32_0 : i32, i32
  }
  func.func @transform_3(%arg0: i32) -> (i32, i32) {
    %c0_i32 = arith.constant 0 : i32
    %c0_i32_0 = arith.constant 0 : i32
    %c0_i32_1 = arith.constant 0 : i32
    return %c0_i32, %c0_i32_0 : i32, i32
  }
  func.func @transform_4(%arg0: i32) -> (i32, i32) {
    %c0_i32 = arith.constant 0 : i32
    %c0_i32_0 = arith.constant 0 : i32
    %c0_i32_1 = arith.constant 0 : i32
    return %c0_i32, %c0_i32_0 : i32, i32
  }
  func.func @transform_5(%arg0: i32) -> (i32, i32) {
    %c0_i32 = arith.constant 0 : i32
    %c0_i32_0 = arith.constant 0 : i32
    return %arg0, %c0_i32 : i32, i32
  }
}

module attributes {stable_mosaic.version = 11 : i64} {
  func.func @_fused_matmul_kernel(%arg0: i32, %arg1: memref<64x128xf32, #tpu.memory_space<vmem>>, %arg2: memref<128x32xbf16, #tpu.memory_space<vmem>>, %arg3: memref<1x32xf32, #tpu.memory_space<vmem>>, %arg4: memref<64x32xf32, #tpu.memory_space<vmem>>, %arg5: memref<64x32xf32, #tpu.memory_space<vmem>>) attributes {dimension_semantics = [#tpu.dimension_semantics<parallel>], iteration_bounds = array<i64: 1>, scalar_prefetch = 0 : i64, scratch_operands = 0 : i64, tpu.core_type = #tpu.core_type<tc>, window_params = [{transform_indices = @transform_0, window_bounds = array<i64: 64, 128>}, {pipeline_mode = #tpu.pipeline_mode<synchronous>, transform_indices = @transform_1, window_bounds = array<i64: 128, 32>}, {pipeline_mode = #tpu.pipeline_mode<synchronous>, transform_indices = @transform_2, window_bounds = array<i64: 1, 32>}, {transform_indices = @transform_3, window_bounds = array<i64: 64, 32>}, {transform_indices = @transform_4, window_bounds = array<i64: 64, 32>}]} {
    %c0 = arith.constant 0 : index
    %c0_0 = arith.constant 0 : index
    %0 = vector.load %arg1[%c0, %c0_0] : memref<64x128xf32, #tpu.memory_space<vmem>>, vector<64x128xf32>
    %c0_1 = arith.constant 0 : index
    %c0_2 = arith.constant 0 : index
    %1 = vector.load %arg2[%c0_1, %c0_2] : memref<128x32xbf16, #tpu.memory_space<vmem>>, vector<128x32xbf16>
    %c0_3 = arith.constant 0 : index
    %c0_4 = arith.constant 0 : index
    %2 = vector.load %arg3[%c0_3, %c0_4] : memref<1x32xf32, #tpu.memory_space<vmem>>, vector<1x32xf32>
    %3 = arith.truncf %0 : vector<64x128xf32> to vector<64x128xbf16>
    %cst = arith.constant dense<0.000000e+00> : vector<64x32xf32>
    %4 = tpu.matmul %3, %1, %cst {dimension_numbers = #tpu.dot_dimension_numbers<[1], [0], [0], [1], [0, 0, 1, 1], [], []>} : vector<64x128xbf16>, vector<128x32xbf16>, vector<64x32xf32> -> vector<64x32xf32>
    %5 = vector.broadcast %2 : vector<1x32xf32> to vector<64x32xf32>
    %6 = arith.addf %4, %5 : vector<64x32xf32>
    %c0_5 = arith.constant 0 : index
    %c0_6 = arith.constant 0 : index
    %7 = vector.load %arg4[%c0_5, %c0_6] : memref<64x32xf32, #tpu.memory_space<vmem>>, vector<64x32xf32>
    %8 = arith.addf %6, %7 : vector<64x32xf32>
    %c0_7 = arith.constant 0 : index
    %c0_8 = arith.constant 0 : index
    %9 = vector.load %arg5[%c0_7, %c0_8] : memref<64x32xf32, #tpu.memory_space<vmem>>, vector<64x32xf32>
    tpu.vector_store %arg5[%c0_7, %c0_8], %8 {strides = array<i32>} : memref<64x32xf32, #tpu.memory_space<vmem>>, vector<64x32xf32>,
    return
  }
  func.func @transform_0(%arg0: i32) -> (i32, i32) {
    %c0_i32 = arith.constant 0 : i32
    %c0_i32_0 = arith.constant 0 : i32
    return %arg0, %c0_i32 : i32, i32
  }
  func.func @transform_1(%arg0: i32) -> (i32, i32) {
    %c0_i32 = arith.constant 0 : i32
    %c0_i32_0 = arith.constant 0 : i32
    %c0_i32_1 = arith.constant 0 : i32
    return %c0_i32, %c0_i32_0 : i32, i32
  }
  func.func @transform_2(%arg0: i32) -> (i32, i32) {
    %c0_i32 = arith.constant 0 : i32
    %c0_i32_0 = arith.constant 0 : i32
    %c0_i32_1 = arith.constant 0 : i32
    return %c0_i32, %c0_i32_0 : i32, i32
  }
  func.func @transform_3(%arg0: i32) -> (i32, i32) {
    %c0_i32 = arith.constant 0 : i32
    %c0_i32_0 = arith.constant 0 : i32
    return %arg0, %c0_i32 : i32, i32
  }
  func.func @transform_4(%arg0: i32) -> (i32, i32) {
    %c0_i32 = arith.constant 0 : i32
    %c0_i32_0 = arith.constant 0 : i32
    return %arg0, %c0_i32 : i32, i32
  }
}

module attributes {stable_mosaic.version = 11 : i64} {
  func.func @_fused_matmul_kernel(%arg0: i32, %arg1: memref<64x32xf32, #tpu.memory_space<vmem>>, %arg2: memref<1x32xf32, #tpu.memory_space<vmem>>, %arg3: memref<1x32xf32, #tpu.memory_space<vmem>>, %arg4: memref<32x8xbf16, #tpu.memory_space<vmem>>, %arg5: memref<1x8xf32, #tpu.memory_space<vmem>>, %arg6: memref<64x8xf32, #tpu.memory_space<vmem>>) attributes {dimension_semantics = [#tpu.dimension_semantics<parallel>], iteration_bounds = array<i64: 1>, scalar_prefetch = 0 : i64, scratch_operands = 0 : i64, tpu.core_type = #tpu.core_type<tc>, window_params = [{transform_indices = @transform_0, window_bounds = array<i64: 64, 32>}, {pipeline_mode = #tpu.pipeline_mode<synchronous>, transform_indices = @transform_1, window_bounds = array<i64: 1, 32>}, {pipeline_mode = #tpu.pipeline_mode<synchronous>, transform_indices = @transform_2, window_bounds = array<i64: 1, 32>}, {pipeline_mode = #tpu.pipeline_mode<synchronous>, transform_indices = @transform_3, window_bounds = array<i64: 32, 8>}, {pipeline_mode = #tpu.pipeline_mode<synchronous>, transform_indices = @transform_4, window_bounds = array<i64: 1, 8>}, {transform_indices = @transform_5, window_bounds = array<i64: 64, 8>}]} {
    %c0 = arith.constant 0 : index
    %c0_0 = arith.constant 0 : index
    %0 = vector.load %arg1[%c0, %c0_0] : memref<64x32xf32, #tpu.memory_space<vmem>>, vector<64x32xf32>
    %c0_1 = arith.constant 0 : index
    %c0_2 = arith.constant 0 : index
    %1 = vector.load %arg2[%c0_1, %c0_2] : memref<1x32xf32, #tpu.memory_space<vmem>>, vector<1x32xf32>
    %c0_3 = arith.constant 0 : index
    %c0_4 = arith.constant 0 : index
    %2 = vector.load %arg3[%c0_3, %c0_4] : memref<1x32xf32, #tpu.memory_space<vmem>>, vector<1x32xf32>
    %cst = arith.constant dense<0.000000e+00> : vector<64xf32>
    %3 = vector.multi_reduction <add>, %0, %cst [1] : vector<64x32xf32> to vector<64xf32>
    %4 = vector.shape_cast %3 : vector<64xf32> to vector<64x1xf32>
    %cst_5 = arith.constant 3.200000e+01 : f32
    %5 = vector.broadcast %cst_5 : f32 to vector<64x1xf32>
    %6 = arith.divf %4, %5 : vector<64x1xf32>
    %7 = vector.broadcast %6 : vector<64x1xf32> to vector<64x32xf32>
    %8 = arith.subf %0, %7 : vector<64x32xf32>
    %9 = arith.mulf %8, %8 : vector<64x32xf32>
    %cst_6 = arith.constant dense<0.000000e+00> : vector<64xf32>
    %10 = vector.multi_reduction <add>, %9, %cst_6 [1] : vector<64x32xf32> to vector<64xf32>
    %11 = vector.shape_cast %10 : vector<64xf32> to vector<64x1xf32>
    %cst_7 = arith.constant 3.200000e+01 : f32
    %12 = vector.broadcast %cst_7 : f32 to vector<64x1xf32>
    %13 = arith.divf %11, %12 : vector<64x1xf32>
    %cst_8 = arith.constant 9.99999974E-6 : f32
    %14 = vector.broadcast %cst_8 : f32 to vector<64x1xf32>
    %15 = arith.addf %13, %14 : vector<64x1xf32>
    %16 = math.rsqrt %15 : vector<64x1xf32>
    %17 = vector.broadcast %16 : vector<64x1xf32> to vector<64x32xf32>
    %18 = arith.mulf %8, %17 : vector<64x32xf32>
    %19 = vector.broadcast %1 : vector<1x32xf32> to vector<64x32xf32>
    %20 = arith.mulf %18, %19 : vector<64x32xf32>
    %21 = vector.broadcast %2 : vector<1x32xf32> to vector<64x32xf32>
    %22 = arith.addf %20, %21 : vector<64x32xf32>
    %c0_9 = arith.constant 0 : index
    %c0_10 = arith.constant 0 : index
    %23 = vector.load %arg4[%c0_9, %c0_10] : memref<32x8xbf16, #tpu.memory_space<vmem>>, vector<32x8xbf16>
    %c0_11 = arith.constant 0 : index
    %c0_12 = arith.constant 0 : index
    %24 = vector.load %arg5[%c0_11, %c0_12] : memref<1x8xf32, #tpu.memory_space<vmem>>, vector<1x8xf32>
    %25 = arith.truncf %22 : vector<64x32xf32> to vector<64x32xbf16>
    %cst_13 = arith.constant dense<0.000000e+00> : vector<64x8xf32>
    %26 = tpu.matmul %25, %23, %cst_13 {dimension_numbers = #tpu.dot_dimension_numbers<[1], [0], [0], [1], [0, 0, 1, 1], [], []>} : vector<64x32xbf16>, vector<32x8xbf16>, vector<64x8xf32> -> vector<64x8xf32>
    %27 = vector.broadcast %24 : vector<1x8xf32> to vector<64x8xf32>
    %28 = arith.addf %26, %27 : vector<64x8xf32>
    %c0_14 = arith.constant 0 : index
    %c0_15 = arith.constant 0 : index
    %29 = vector.load %arg6[%c0_14, %c0_15] : memref<64x8xf32, #tpu.memory_space<vmem>>, vector<64x8xf32>
    tpu.vector_store %arg6[%c0_14, %c0_15], %28 {strides = array<i32>} : memref<64x8xf32, #tpu.memory_space<vmem>>, vector<64x8xf32>,
    return
  }
  func.func @transform_0(%arg0: i32) -> (i32, i32) {
    %c0_i32 = arith.constant 0 : i32
    %c0_i32_0 = arith.constant 0 : i32
    return %arg0, %c0_i32 : i32, i32
  }
  func.func @transform_1(%arg0: i32) -> (i32, i32) {
    %c0_i32 = arith.constant 0 : i32
    %c0_i32_0 = arith.constant 0 : i32
    %c0_i32_1 = arith.constant 0 : i32
    return %c0_i32, %c0_i32_0 : i32, i32
  }
  func.func @transform_2(%arg0: i32) -> (i32, i32) {
    %c0_i32 = arith.constant 0 : i32
    %c0_i32_0 = arith.constant 0 : i32
    %c0_i32_1 = arith.constant 0 : i32
    return %c0_i32, %c0_i32_0 : i32, i32
  }
  func.func @transform_3(%arg0: i32) -> (i32, i32) {
    %c0_i32 = arith.constant 0 : i32
    %c0_i32_0 = arith.constant 0 : i32
    %c0_i32_1 = arith.constant 0 : i32
    return %c0_i32, %c0_i32_0 : i32, i32
  }
  func.func @transform_4(%arg0: i32) -> (i32, i32) {
    %c0_i32 = arith.constant 0 : i32
    %c0_i32_0 = arith.constant 0 : i32
    %c0_i32_1 = arith.constant 0 : i32
    return %c0_i32, %c0_i32_0 : i32, i32
  }
  func.func @transform_5(%arg0: i32) -> (i32, i32) {
    %c0_i32 = arith.constant 0 : i32
    %c0_i32_0 = arith.constant 0 : i32
    return %arg0, %c0_i32 : i32, i32
  }
}

module attributes {stable_mosaic.version = 11 : i64} {
  func.func @_fused_matmul_kernel(%arg0: i32, %arg1: memref<64x32xf32, #tpu.memory_space<vmem>>, %arg2: memref<32x16xbf16, #tpu.memory_space<vmem>>, %arg3: memref<1x16xf32, #tpu.memory_space<vmem>>, %arg4: memref<64x16xf32, #tpu.memory_space<vmem>>, %arg5: memref<64x16xf32, #tpu.memory_space<vmem>>) attributes {dimension_semantics = [#tpu.dimension_semantics<parallel>], iteration_bounds = array<i64: 1>, scalar_prefetch = 0 : i64, scratch_operands = 0 : i64, tpu.core_type = #tpu.core_type<tc>, window_params = [{transform_indices = @transform_0, window_bounds = array<i64: 64, 32>}, {pipeline_mode = #tpu.pipeline_mode<synchronous>, transform_indices = @transform_1, window_bounds = array<i64: 32, 16>}, {pipeline_mode = #tpu.pipeline_mode<synchronous>, transform_indices = @transform_2, window_bounds = array<i64: 1, 16>}, {transform_indices = @transform_3, window_bounds = array<i64: 64, 16>}, {transform_indices = @transform_4, window_bounds = array<i64: 64, 16>}]} {
    %c0 = arith.constant 0 : index
    %c0_0 = arith.constant 0 : index
    %0 = vector.load %arg1[%c0, %c0_0] : memref<64x32xf32, #tpu.memory_space<vmem>>, vector<64x32xf32>
    %c0_1 = arith.constant 0 : index
    %c0_2 = arith.constant 0 : index
    %1 = vector.load %arg2[%c0_1, %c0_2] : memref<32x16xbf16, #tpu.memory_space<vmem>>, vector<32x16xbf16>
    %c0_3 = arith.constant 0 : index
    %c0_4 = arith.constant 0 : index
    %2 = vector.load %arg3[%c0_3, %c0_4] : memref<1x16xf32, #tpu.memory_space<vmem>>, vector<1x16xf32>
    %3 = arith.truncf %0 : vector<64x32xf32> to vector<64x32xbf16>
    %cst = arith.constant dense<0.000000e+00> : vector<64x16xf32>
    %4 = tpu.matmul %3, %1, %cst {dimension_numbers = #tpu.dot_dimension_numbers<[1], [0], [0], [1], [0, 0, 1, 1], [], []>} : vector<64x32xbf16>, vector<32x16xbf16>, vector<64x16xf32> -> vector<64x16xf32>
    %5 = vector.broadcast %2 : vector<1x16xf32> to vector<64x16xf32>
    %6 = arith.addf %4, %5 : vector<64x16xf32>
    %c0_5 = arith.constant 0 : index
    %c0_6 = arith.constant 0 : index
    %7 = vector.load %arg4[%c0_5, %c0_6] : memref<64x16xf32, #tpu.memory_space<vmem>>, vector<64x16xf32>
    %8 = arith.addf %6, %7 : vector<64x16xf32>
    %c0_7 = arith.constant 0 : index
    %c0_8 = arith.constant 0 : index
    %9 = vector.load %arg5[%c0_7, %c0_8] : memref<64x16xf32, #tpu.memory_space<vmem>>, vector<64x16xf32>
    tpu.vector_store %arg5[%c0_7, %c0_8], %8 {strides = array<i32>} : memref<64x16xf32, #tpu.memory_space<vmem>>, vector<64x16xf32>,
    return
  }
  func.func @transform_0(%arg0: i32) -> (i32, i32) {
    %c0_i32 = arith.constant 0 : i32
    %c0_i32_0 = arith.constant 0 : i32
    return %arg0, %c0_i32 : i32, i32
  }
  func.func @transform_1(%arg0: i32) -> (i32, i32) {
    %c0_i32 = arith.constant 0 : i32
    %c0_i32_0 = arith.constant 0 : i32
    %c0_i32_1 = arith.constant 0 : i32
    return %c0_i32, %c0_i32_0 : i32, i32
  }
  func.func @transform_2(%arg0: i32) -> (i32, i32) {
    %c0_i32 = arith.constant 0 : i32
    %c0_i32_0 = arith.constant 0 : i32
    %c0_i32_1 = arith.constant 0 : i32
    return %c0_i32, %c0_i32_0 : i32, i32
  }
  func.func @transform_3(%arg0: i32) -> (i32, i32) {
    %c0_i32 = arith.constant 0 : i32
    %c0_i32_0 = arith.constant 0 : i32
    return %arg0, %c0_i32 : i32, i32
  }
  func.func @transform_4(%arg0: i32) -> (i32, i32) {
    %c0_i32 = arith.constant 0 : i32
    %c0_i32_0 = arith.constant 0 : i32
    return %arg0, %c0_i32 : i32, i32
  }
}

</mosaic_0001>

<llo_original>
// kernel: iterative_simulator_fwd.69
$region0: #{iterative_simulator_fwd.69}
  #allocation0 [shape = 'u32[]', space=smem, size = 0x4, offset = 0x4, fixed_abs, tag = 'smem constant byte address 0x4 - core index']
  #allocation1 [shape = 'u32[72,128]{1,0:T(1,128)}', space=vmem, size = 0x9000, scoped, tag = 'internal scratch']
  %s0 = inlined_call_operand.vmem [shape: f32[32,8], index: 0, kind: input, shape index: {}]
  %s1 = inlined_call_operand.vmem [shape: f32[32,8], index: 1, kind: output, shape index: {}]
  %s2 = sld [smem:[#allocation0]]
  $region14: #{iterative_simulator_fwd.69} parent=0
    _
  %s4 = ssub.s32 1, %s2
  %s5 = scalar_select 0, %s4, %s2
  // Predicated region
  $region2: #{iterative_simulator_fwd.69} parent=0 // pred_check
    _
  $region3: #{iterative_simulator_fwd.69} parent=0 // pred_check_branch
    %7 = sbr.rel (0) target = $region5
  $region4: #{iterative_simulator_fwd.69} parent=0 // pred_region
    _
  $region5: #{iterative_simulator_fwd.69} parent=0 // pred_fallthru
    _
  %v8 = vld [vmem:[%s0] sm:$0xff]
  %v9 = vld [vmem:[%s0 + $0x8] sm:$0xff]
  %v10 = vld [vmem:[%s0 + $0x10] sm:$0xff]
  %v11 = vld [vmem:[%s0 + $0x18] sm:$0xff]
  %vm12 = vcmask 64512
  %v13 = vsel %vm12, %v8, -inf
  %14 = vmax.xlane.f32.xlu0 %v13
  %v15 = vpop.xlane.xlu0 %14
  %v16 = vsel %vm12, %v9, -inf
  %17 = vmax.xlane.f32.xlu0 %v16
  %v18 = vpop.xlane.xlu0 %17
  %v19 = vsel %vm12, %v10, -inf
  %20 = vmax.xlane.f32.xlu0 %v19
  %v21 = vpop.xlane.xlu0 %20
  %v22 = vsel %vm12, %v11, -inf
  %23 = vmax.xlane.f32.xlu0 %v22
  %v24 = vpop.xlane.xlu0 %23
  %v25 = vsub.f32 %v8, %v15
  %v26 = vsub.f32 %v9, %v18
  %v27 = vsub.f32 %v10, %v21
  %v28 = vsub.f32 %v11, %v24
  %v29 = vmul.f32 %v25, 1.442695
  %v30 = vpow.pop %v29
  %v31 = vmul.f32 %v26, 1.442695
  %v32 = vpow.pop %v31
  %v33 = vmul.f32 %v27, 1.442695
  %v34 = vpow.pop %v33
  %v35 = vmul.f32 %v28, 1.442695
  %v36 = vpow.pop %v35
  %v37 = vsel %vm12, %v30, 0.0
  %38 = vadd.xlane.f32.xlu0 %v37
  %v39 = vpop.xlane.xlu0 %38
  %v40 = vsel %vm12, %v32, 0.0
  %41 = vadd.xlane.f32.xlu0 %v40
  %v42 = vpop.xlane.xlu0 %41
  %v43 = vsel %vm12, %v34, 0.0
  %44 = vadd.xlane.f32.xlu0 %v43
  %v45 = vpop.xlane.xlu0 %44
  %v46 = vsel %vm12, %v36, 0.0
  %47 = vadd.xlane.f32.xlu0 %v46
  %v48 = vpop.xlane.xlu0 %47
  %v49 = vrcp.pop %v39
  %v50 = vrcp.pop %v42
  %v51 = vrcp.pop %v45
  %v52 = vrcp.pop %v48
  %v53 = vmul.f32 %v30, %v49
  %v54 = vmul.f32 %v32, %v50
  %v55 = vmul.f32 %v34, %v51
  %v56 = vmul.f32 %v36, %v52
  %57 = vst.msk [vmem:[%s1] sm:$0xff] %vm12, %v53
  %58 = vst.msk [vmem:[%s1 + $0x8] sm:$0xff] %vm12, %v54
  %59 = vst.msk [vmem:[%s1 + $0x10] sm:$0xff] %vm12, %v55
  %60 = vst.msk [vmem:[%s1 + $0x18] sm:$0xff] %vm12, %v56
  // Predicated region
  $region6: #{iterative_simulator_fwd.69} parent=0 // pred_check
    _
  $region7: #{iterative_simulator_fwd.69} parent=0 // pred_check_branch
    %62 = sbr.rel (0) target = $region9
  $region8: #{iterative_simulator_fwd.69} parent=0 // pred_region
    _
  $region9: #{iterative_simulator_fwd.69} parent=0 // pred_fallthru
    _
  // Predicated region
  $region10: #{iterative_simulator_fwd.69} parent=0 // pred_check
    _
  $region11: #{iterative_simulator_fwd.69} parent=0 // pred_check_branch
    %64 = sbr.rel (0) target = $region13
  $region12: #{iterative_simulator_fwd.69} parent=0 // pred_region
    _
  $region13: #{iterative_simulator_fwd.69} parent=0 // pred_fallthru
    _

// kernel: iterative_simulator_fwd.67
$region0: #{iterative_simulator_fwd.67}
  #allocation0 [shape = 'u32[]', space=smem, size = 0x4, offset = 0x4, fixed_abs, tag = 'smem constant byte address 0x4 - core index']
  #allocation1 [shape = 'u32[72,128]{1,0:T(1,128)}', space=vmem, size = 0x9000, scoped, tag = 'internal scratch']
  %s0 = inlined_call_operand.vmem [shape: f32[64,16], index: 0, kind: input, shape index: {}]
  %s1 = inlined_call_operand.vmem [shape: f32[1,16], index: 1, kind: input, shape index: {}]
  %s2 = inlined_call_operand.vmem [shape: f32[1,16], index: 2, kind: input, shape index: {}]
  %s3 = inlined_call_operand.vmem [shape: bf16[16,192], index: 3, kind: input, shape index: {}]
  %s4 = inlined_call_operand.vmem [shape: f32[1,192], index: 4, kind: input, shape index: {}]
  %s5 = inlined_call_operand.vmem [shape: f32[64,192], index: 5, kind: output, shape index: {}]
  %s6 = sld [smem:[#allocation0]]
  $region30: #{iterative_simulator_fwd.67} parent=0
    _
  %s8 = ssub.s32 1, %s6
  %s9 = scalar_select 0, %s8, %s6
  // Predicated region
  $region2: #{iterative_simulator_fwd.67} parent=0 // pred_check
    _
  $region3: #{iterative_simulator_fwd.67} parent=0 // pred_check_branch
    %11 = sbr.rel (0) target = $region5
  $region4: #{iterative_simulator_fwd.67} parent=0 // pred_region
    _
  $region5: #{iterative_simulator_fwd.67} parent=0 // pred_fallthru
    _
  // Predicated region
  $region6: #{iterative_simulator_fwd.67} parent=0 // pred_check
    _
  $region7: #{iterative_simulator_fwd.67} parent=0 // pred_check_branch
    %13 = sbr.rel (0) target = $region9
  $region8: #{iterative_simulator_fwd.67} parent=0 // pred_region
    _
  $region9: #{iterative_simulator_fwd.67} parent=0 // pred_fallthru
    _
  // Predicated region
  $region10: #{iterative_simulator_fwd.67} parent=0 // pred_check
    _
  $region11: #{iterative_simulator_fwd.67} parent=0 // pred_check_branch
    %15 = sbr.rel (0) target = $region13
  $region12: #{iterative_simulator_fwd.67} parent=0 // pred_region
    _
  $region13: #{iterative_simulator_fwd.67} parent=0 // pred_fallthru
    _
  // Predicated region
  $region14: #{iterative_simulator_fwd.67} parent=0 // pred_check
    _
  $region15: #{iterative_simulator_fwd.67} parent=0 // pred_check_branch
    %17 = sbr.rel (0) target = $region17
  $region16: #{iterative_simulator_fwd.67} parent=0 // pred_region
    _
  $region17: #{iterative_simulator_fwd.67} parent=0 // pred_fallthru
    _
  // Predicated region
  $region18: #{iterative_simulator_fwd.67} parent=0 // pred_check
    _
  $region19: #{iterative_simulator_fwd.67} parent=0 // pred_check_branch
    %19 = sbr.rel (0) target = $region21
  $region20: #{iterative_simulator_fwd.67} parent=0 // pred_region
    _
  $region21: #{iterative_simulator_fwd.67} parent=0 // pred_fallthru
    _
  %v21 = vld [vmem:[%s0] sm:$0xff]
  %v22 = vld [vmem:[%s0 + $0x8] sm:$0xff]
  %v23 = vld [vmem:[%s0 + $0x10] sm:$0xff]
  %v24 = vld [vmem:[%s0 + $0x18] sm:$0xff]
  %v25 = vld [vmem:[%s0 + $0x20] sm:$0xff]
  %v26 = vld [vmem:[%s0 + $0x28] sm:$0xff]
  %v27 = vld [vmem:[%s0 + $0x30] sm:$0xff]
  %v28 = vld [vmem:[%s0 + $0x38] sm:$0xff]
  %v29 = vld [vmem:[%s1] sm:$0x1]
  %v30 = vld [vmem:[%s2] sm:$0x1]
  %vm31 = vcmask 130048
  %v32 = vsel %vm31, %v21, 0.0
  %33 = vadd.xlane.f32.xlu0 %v32
  %v34 = vpop.xlane.xlu0 %33
  %v35 = vsel %vm31, %v22, 0.0
  %36 = vadd.xlane.f32.xlu0 %v35
  %v37 = vpop.xlane.xlu0 %36
  %v38 = vsel %vm31, %v23, 0.0
  %39 = vadd.xlane.f32.xlu0 %v38
  %v40 = vpop.xlane.xlu0 %39
  %v41 = vsel %vm31, %v24, 0.0
  %42 = vadd.xlane.f32.xlu0 %v41
  %v43 = vpop.xlane.xlu0 %42
  %v44 = vsel %vm31, %v25, 0.0
  %45 = vadd.xlane.f32.xlu0 %v44
  %v46 = vpop.xlane.xlu0 %45
  %v47 = vsel %vm31, %v26, 0.0
  %48 = vadd.xlane.f32.xlu0 %v47
  %v49 = vpop.xlane.xlu0 %48
  %v50 = vsel %vm31, %v27, 0.0
  %51 = vadd.xlane.f32.xlu0 %v50
  %v52 = vpop.xlane.xlu0 %51
  %v53 = vsel %vm31, %v28, 0.0
  %54 = vadd.xlane.f32.xlu0 %v53
  %v55 = vpop.xlane.xlu0 %54
  %v56 = vrcp.pop 16.0
  %v57 = vmul.f32 16.0, %v56
  %v58 = vsub.f32 1.0, %v57
  %v59 = vmul.f32 %v56, %v58
  %v60 = vadd.f32 %v56, %v59
  %vm61 = vweird.f32 %v56
  %v62 = vsel %vm61, %v56, %v60
  %v63 = vmul.f32 %v34, %v62
  %v64 = vmul.f32 %v37, %v62
  %v65 = vmul.f32 %v40, %v62
  %v66 = vmul.f32 %v43, %v62
  %v67 = vmul.f32 %v46, %v62
  %v68 = vmul.f32 %v49, %v62
  %v69 = vmul.f32 %v52, %v62
  %v70 = vmul.f32 %v55, %v62
  %v71 = vsub.f32 %v21, %v63
  %v72 = vsub.f32 %v22, %v64
  %v73 = vsub.f32 %v23, %v65
  %v74 = vsub.f32 %v24, %v66
  %v75 = vsub.f32 %v25, %v67
  %v76 = vsub.f32 %v26, %v68
  %v77 = vsub.f32 %v27, %v69
  %v78 = vsub.f32 %v28, %v70
  %v79 = vmul.f32 %v71, %v71
  %v80 = vmul.f32 %v72, %v72
  %v81 = vmul.f32 %v73, %v73
  %v82 = vmul.f32 %v74, %v74
  %v83 = vmul.f32 %v75, %v75
  %v84 = vmul.f32 %v76, %v76
  %v85 = vmul.f32 %v77, %v77
  %v86 = vmul.f32 %v78, %v78
  %v87 = vsel %vm31, %v79, 0.0
  %88 = vadd.xlane.f32.xlu0 %v87
  %v89 = vpop.xlane.xlu0 %88
  %v90 = vsel %vm31, %v80, 0.0
  %91 = vadd.xlane.f32.xlu0 %v90
  %v92 = vpop.xlane.xlu0 %91
  %v93 = vsel %vm31, %v81, 0.0
  %94 = vadd.xlane.f32.xlu0 %v93
  %v95 = vpop.xlane.xlu0 %94
  %v96 = vsel %vm31, %v82, 0.0
  %97 = vadd.xlane.f32.xlu0 %v96
  %v98 = vpop.xlane.xlu0 %97
  %v99 = vsel %vm31, %v83, 0.0
  %100 = vadd.xlane.f32.xlu0 %v99
  %v101 = vpop.xlane.xlu0 %100
  %v102 = vsel %vm31, %v84, 0.0
  %103 = vadd.xlane.f32.xlu0 %v102
  %v104 = vpop.xlane.xlu0 %103
  %v105 = vsel %vm31, %v85, 0.0
  %106 = vadd.xlane.f32.xlu0 %v105
  %v107 = vpop.xlane.xlu0 %106
  %v108 = vsel %vm31, %v86, 0.0
  %109 = vadd.xlane.f32.xlu0 %v108
  %v110 = vpop.xlane.xlu0 %109
  %v111 = vmul.f32 %v89, %v62
  %v112 = vmul.f32 %v92, %v62
  %v113 = vmul.f32 %v95, %v62
  %v114 = vmul.f32 %v98, %v62
  %v115 = vmul.f32 %v101, %v62
  %v116 = vmul.f32 %v104, %v62
  %v117 = vmul.f32 %v107, %v62
  %v118 = vmul.f32 %v110, %v62
  %v119 = vadd.f32 %v111, 1e-05
  %v120 = vadd.f32 %v112, 1e-05
  %v121 = vadd.f32 %v113, 1e-05
  %v122 = vadd.f32 %v114, 1e-05
  %v123 = vadd.f32 %v115, 1e-05
  %v124 = vadd.f32 %v116, 1e-05
  %v125 = vadd.f32 %v117, 1e-05
  %v126 = vadd.f32 %v118, 1e-05
  %v127 = vrsqrt.pop %v119
  %v128 = vmul.f32 %v127, %v119
  %v129 = vmul.f32 %v128, %v127
  %v130 = vmul.f32 0.5, %v129
  %v131 = vsub.f32 1.5, %v130
  %v132 = vmul.f32 %v127, %v131
  %vm133 = vweird.f32 %v119
  %vm134 = vweird.f32 %v127
  %vm135 = vmor %vm133, %vm134
  %v136 = vsel %vm135, %v127, %v132
  %v137 = vrsqrt.pop %v120
  %v138 = vmul.f32 %v137, %v120
  %v139 = vmul.f32 %v138, %v137
  %v140 = vmul.f32 0.5, %v139
  %v141 = vsub.f32 1.5, %v140
  %v142 = vmul.f32 %v137, %v141
  %vm143 = vweird.f32 %v120
  %vm144 = vweird.f32 %v137
  %vm145 = vmor %vm143, %vm144
  %v146 = vsel %vm145, %v137, %v142
  %v147 = vrsqrt.pop %v121
  %v148 = vmul.f32 %v147, %v121
  %v149 = vmul.f32 %v148, %v147
  %v150 = vmul.f32 0.5, %v149
  %v151 = vsub.f32 1.5, %v150
  %v152 = vmul.f32 %v147, %v151
  %vm153 = vweird.f32 %v121
  %vm154 = vweird.f32 %v147
  %vm155 = vmor %vm153, %vm154
  %v156 = vsel %vm155, %v147, %v152
  %v157 = vrsqrt.pop %v122
  %v158 = vmul.f32 %v157, %v122
  %v159 = vmul.f32 %v158, %v157
  %v160 = vmul.f32 0.5, %v159
  %v161 = vsub.f32 1.5, %v160
  %v162 = vmul.f32 %v157, %v161
  %vm163 = vweird.f32 %v122
  %vm164 = vweird.f32 %v157
  %vm165 = vmor %vm163, %vm164
  %v166 = vsel %vm165, %v157, %v162
  %v167 = vrsqrt.pop %v123
  %v168 = vmul.f32 %v167, %v123
  %v169 = vmul.f32 %v168, %v167
  %v170 = vmul.f32 0.5, %v169
  %v171 = vsub.f32 1.5, %v170
  %v172 = vmul.f32 %v167, %v171
  %vm173 = vweird.f32 %v123
  %vm174 = vweird.f32 %v167
  %vm175 = vmor %vm173, %vm174
  %v176 = vsel %vm175, %v167, %v172
  %v177 = vrsqrt.pop %v124
  %v178 = vmul.f32 %v177, %v124
  %v179 = vmul.f32 %v178, %v177
  %v180 = vmul.f32 0.5, %v179
  %v181 = vsub.f32 1.5, %v180
  %v182 = vmul.f32 %v177, %v181
  %vm183 = vweird.f32 %v124
  %vm184 = vweird.f32 %v177
  %vm185 = vmor %vm183, %vm184
  %v186 = vsel %vm185, %v177, %v182
  %v187 = vrsqrt.pop %v125
  %v188 = vmul.f32 %v187, %v125
  %v189 = vmul.f32 %v188, %v187
  %v190 = vmul.f32 0.5, %v189
  %v191 = vsub.f32 1.5, %v190
  %v192 = vmul.f32 %v187, %v191
  %vm193 = vweird.f32 %v125
  %vm194 = vweird.f32 %v187
  %vm195 = vmor %vm193, %vm194
  %v196 = vsel %vm195, %v187, %v192
  %v197 = vrsqrt.pop %v126
  %v198 = vmul.f32 %v197, %v126
  %v199 = vmul.f32 %v198, %v197
  %v200 = vmul.f32 0.5, %v199
  %v201 = vsub.f32 1.5, %v200
  %v202 = vmul.f32 %v197, %v201
  %vm203 = vweird.f32 %v126
  %vm204 = vweird.f32 %v197
  %vm205 = vmor %vm203, %vm204
  %v206 = vsel %vm205, %v197, %v202
  %v207 = vmul.f32 %v71, %v136
  %v208 = vmul.f32 %v72, %v146
  %v209 = vmul.f32 %v73, %v156
  %v210 = vmul.f32 %v74, %v166
  %v211 = vmul.f32 %v75, %v176
  %v212 = vmul.f32 %v76, %v186
  %v213 = vmul.f32 %v77, %v196
  %v214 = vmul.f32 %v78, %v206
  %v216 = vperm.slane %v29, 0
  %v218 = vmul.f32 %v207, %v216
  %v219 = vmul.f32 %v208, %v216
  %v220 = vmul.f32 %v209, %v216
  %v221 = vmul.f32 %v210, %v216
  %v222 = vmul.f32 %v211, %v216
  %v223 = vmul.f32 %v212, %v216
  %v224 = vmul.f32 %v213, %v216
  %v225 = vmul.f32 %v214, %v216
  %v227 = vperm.slane %v30, 0
  %v229 = vadd.f32 %v218, %v227
  %v230 = vadd.f32 %v219, %v227
  %v231 = vadd.f32 %v220, %v227
  %v232 = vadd.f32 %v221, %v227
  %v233 = vadd.f32 %v222, %v227
  %v234 = vadd.f32 %v223, %v227
  %v235 = vadd.f32 %v224, %v227
  %v236 = vadd.f32 %v225, %v227
  %v237 = vld [vmem:[%s3] sm:$0xff]
  %v238 = vld [vmem:[%s3 + $0x8] sm:$0xff]
  %v239 = vld [vmem:[%s4] sm:$0x3]
  %v240 = vpack.c.bf16 %v230, %v229
  %v241 = vpack.c.bf16 %v232, %v231
  %v242 = vpack.c.bf16 %v234, %v233
  %v243 = vpack.c.bf16 %v236, %v235
  %v245 = vperm.slane %v239, 0
  %v246 = vperm.slane %v239, 1
  %v251 = vunpack.c.l.b16 %v237
  %v252 = vunpack.c.h.b16 %v237
  %v253 = vunpack.c.l.b16 %v238
  %v254 = vunpack.c.h.b16 %v238
  %v255 = vpack.c.b16 %v253, %v251
  %v256 = vpack.c.b16 %v254, %v252
  %v260 = vsel %vm31, %v240, 0
  %v263 = vsel %vm31, %v241, 0
  %v266 = vsel %vm31, %v242, 0
  %v269 = vsel %vm31, %v243, 0
  %271 = vmatpush.bf16.msra.mxu0 0
  %272 = vmatpush.bf16.msra.mxu0 0
  %273 = vmatpush.bf16.msra.mxu0 0
  %274 = vmatpush.bf16.msra.mxu0 0
  %275 = vmatpush.bf16.msra.mxu0 0
  %276 = vmatpush.bf16.msra.mxu0 0
  %277 = vmatpush.bf16.msra.mxu0 0
  %278 = vmatpush.bf16.msra.mxu0 %v255
  %279 = vmatmul.bf16.gmra.mxu0 %v260
  %v280 = vpop.f32.mrf.mxu0
  %v281 = vadd.f32 %v245, %v280
  %v282 = vpop.f32.mrf.mxu0
  %v283 = vadd.f32 %v245, %v282
  %284 = vmatmul.bf16.gmra.mxu0 %v263
  %v285 = vpop.f32.mrf.mxu0
  %v286 = vadd.f32 %v245, %v285
  %v287 = vpop.f32.mrf.mxu0
  %v288 = vadd.f32 %v245, %v287
  %289 = vmatmul.bf16.gmra.mxu0 %v266
  %v290 = vpop.f32.mrf.mxu0
  %v291 = vadd.f32 %v245, %v290
  %v292 = vpop.f32.mrf.mxu0
  %v293 = vadd.f32 %v245, %v292
  %294 = vmatmul.bf16.gmra.mxu0 %v269
  %v295 = vpop.f32.mrf.mxu0
  %v296 = vadd.f32 %v245, %v295
  %v297 = vpop.f32.mrf.mxu0
  %v298 = vadd.f32 %v245, %v297
  %299 = vdwg.mxu0
  %300 = vmatpush.bf16.msra.mxu0 0
  %301 = vmatpush.bf16.msra.mxu0 0
  %302 = vmatpush.bf16.msra.mxu0 0
  %303 = vmatpush.bf16.msra.mxu0 0
  %304 = vmatpush.bf16.msra.mxu0 0
  %305 = vmatpush.bf16.msra.mxu0 0
  %306 = vmatpush.bf16.msra.mxu0 0
  %307 = vmatpush.bf16.msra.mxu0 %v256
  %308 = vmatmul.bf16.gmra.mxu0 %v260
  %v309 = vpop.f32.mrf.mxu0
  %v310 = vadd.f32 %v246, %v309
  %v311 = vpop.f32.mrf.mxu0
  %v312 = vadd.f32 %v246, %v311
  %313 = vmatmul.bf16.gmra.mxu0 %v263
  %v314 = vpop.f32.mrf.mxu0
  %v315 = vadd.f32 %v246, %v314
  %v316 = vpop.f32.mrf.mxu0
  %v317 = vadd.f32 %v246, %v316
  %318 = vmatmul.bf16.gmra.mxu0 %v266
  %v319 = vpop.f32.mrf.mxu0
  %v320 = vadd.f32 %v246, %v319
  %v321 = vpop.f32.mrf.mxu0
  %v322 = vadd.f32 %v246, %v321
  %323 = vmatmul.bf16.gmra.mxu0 %v269
  %v324 = vpop.f32.mrf.mxu0
  %v325 = vadd.f32 %v246, %v324
  %v326 = vpop.f32.mrf.mxu0
  %v327 = vadd.f32 %v246, %v326
  %328 = vdwg.mxu0
  %v329 = vlaneseq
  %v330 = vand.u32 %v329, 127
  %v331 = vadd.s32 %v330, 128
  %vm332 = vcmp.ge.s32.totalorder %v330, 160
  %vm333 = vcmp.ge.s32.totalorder %v331, 160
  %v334 = vxor.u32 %v281, 2147483648
  %v335 = vxor.u32 %v310, 2147483648
  %v336 = vxor.u32 %v283, 2147483648
  %v337 = vxor.u32 %v312, 2147483648
  %v338 = vxor.u32 %v286, 2147483648
  %v339 = vxor.u32 %v315, 2147483648
  %v340 = vxor.u32 %v288, 2147483648
  %v341 = vxor.u32 %v317, 2147483648
  %v342 = vxor.u32 %v291, 2147483648
  %v343 = vxor.u32 %v320, 2147483648
  %v344 = vxor.u32 %v293, 2147483648
  %v345 = vxor.u32 %v322, 2147483648
  %v346 = vxor.u32 %v296, 2147483648
  %v347 = vxor.u32 %v325, 2147483648
  %v348 = vxor.u32 %v298, 2147483648
  %v349 = vxor.u32 %v327, 2147483648
  %v350 = vmul.f32 %v334, 1.442695
  %v351 = vpow.pop %v350
  %v352 = vmul.f32 %v335, 1.442695
  %v353 = vpow.pop %v352
  %v354 = vmul.f32 %v336, 1.442695
  %v355 = vpow.pop %v354
  %v356 = vmul.f32 %v337, 1.442695
  %v357 = vpow.pop %v356
  %v358 = vmul.f32 %v338, 1.442695
  %v359 = vpow.pop %v358
  %v360 = vmul.f32 %v339, 1.442695
  %v361 = vpow.pop %v360
  %v362 = vmul.f32 %v340, 1.442695
  %v363 = vpow.pop %v362
  %v364 = vmul.f32 %v341, 1.442695
  %v365 = vpow.pop %v364
  %v366 = vmul.f32 %v342, 1.442695
  %v367 = vpow.pop %v366
  %v368 = vmul.f32 %v343, 1.442695
  %v369 = vpow.pop %v368
  %v370 = vmul.f32 %v344, 1.442695
  %v371 = vpow.pop %v370
  %v372 = vmul.f32 %v345, 1.442695
  %v373 = vpow.pop %v372
  %v374 = vmul.f32 %v346, 1.442695
  %v375 = vpow.pop %v374
  %v376 = vmul.f32 %v347, 1.442695
  %v377 = vpow.pop %v376
  %v378 = vmul.f32 %v348, 1.442695
  %v379 = vpow.pop %v378
  %v380 = vmul.f32 %v349, 1.442695
  %v381 = vpow.pop %v380
  %v382 = vadd.f32 %v351, 1.0
  %v383 = vadd.f32 %v353, 1.0
  %v384 = vadd.f32 %v355, 1.0
  %v385 = vadd.f32 %v357, 1.0
  %v386 = vadd.f32 %v359, 1.0
  %v387 = vadd.f32 %v361, 1.0
  %v388 = vadd.f32 %v363, 1.0
  %v389 = vadd.f32 %v365, 1.0
  %v390 = vadd.f32 %v367, 1.0
  %v391 = vadd.f32 %v369, 1.0
  %v392 = vadd.f32 %v371, 1.0
  %v393 = vadd.f32 %v373, 1.0
  %v394 = vadd.f32 %v375, 1.0
  %v395 = vadd.f32 %v377, 1.0
  %v396 = vadd.f32 %v379, 1.0
  %v397 = vadd.f32 %v381, 1.0
  %v398 = vrcp.pop %v382
  %v399 = vmul.f32 %v382, %v398
  %v400 = vsub.f32 1.0, %v399
  %v401 = vmul.f32 %v398, %v400
  %v402 = vadd.f32 %v398, %v401
  %vm403 = vweird.f32 %v382
  %vm404 = vweird.f32 %v398
  %vm405 = vmor %vm403, %vm404
  %v406 = vsel %vm405, %v398, %v402
  %v407 = vand.u32 2147483647, %v382
  %vm408 = vcmp.eq.f32.partialorder %v407, 8.507059e+37
  %v409 = vand.u32 %v382, 2147483648
  %v410 = vor.u32 1.1754944e-38, %v409
  %v411 = vsel %vm408, %v410, %v406
  %v412 = vmul.f32 1.0, %v411
  %v413 = vrcp.pop %v383
  %v414 = vmul.f32 %v383, %v413
  %v415 = vsub.f32 1.0, %v414
  %v416 = vmul.f32 %v413, %v415
  %v417 = vadd.f32 %v413, %v416
  %vm418 = vweird.f32 %v383
  %vm419 = vweird.f32 %v413
  %vm420 = vmor %vm418, %vm419
  %v421 = vsel %vm420, %v413, %v417
  %v422 = vand.u32 2147483647, %v383
  %vm423 = vcmp.eq.f32.partialorder %v422, 8.507059e+37
  %v424 = vand.u32 %v383, 2147483648
  %v425 = vor.u32 1.1754944e-38, %v424
  %v426 = vsel %vm423, %v425, %v421
  %v427 = vmul.f32 1.0, %v426
  %v428 = vrcp.pop %v384
  %v429 = vmul.f32 %v384, %v428
  %v430 = vsub.f32 1.0, %v429
  %v431 = vmul.f32 %v428, %v430
  %v432 = vadd.f32 %v428, %v431
  %vm433 = vweird.f32 %v384
  %vm434 = vweird.f32 %v428
  %vm435 = vmor %vm433, %vm434
  %v436 = vsel %vm435, %v428, %v432
  %v437 = vand.u32 2147483647, %v384
  %vm438 = vcmp.eq.f32.partialorder %v437, 8.507059e+37
  %v439 = vand.u32 %v384, 2147483648
  %v440 = vor.u32 1.1754944e-38, %v439
  %v441 = vsel %vm438, %v440, %v436
  %v442 = vmul.f32 1.0, %v441
  %v443 = vrcp.pop %v385
  %v444 = vmul.f32 %v385, %v443
  %v445 = vsub.f32 1.0, %v444
  %v446 = vmul.f32 %v443, %v445
  %v447 = vadd.f32 %v443, %v446
  %vm448 = vweird.f32 %v385
  %vm449 = vweird.f32 %v443
  %vm450 = vmor %vm448, %vm449
  %v451 = vsel %vm450, %v443, %v447
  %v452 = vand.u32 2147483647, %v385
  %vm453 = vcmp.eq.f32.partialorder %v452, 8.507059e+37
  %v454 = vand.u32 %v385, 2147483648
  %v455 = vor.u32 1.1754944e-38, %v454
  %v456 = vsel %vm453, %v455, %v451
  %v457 = vmul.f32 1.0, %v456
  %v458 = vrcp.pop %v386
  %v459 = vmul.f32 %v386, %v458
  %v460 = vsub.f32 1.0, %v459
  %v461 = vmul.f32 %v458, %v460
  %v462 = vadd.f32 %v458, %v461
  %vm463 = vweird.f32 %v386
  %vm464 = vweird.f32 %v458
  %vm465 = vmor %vm463, %vm464
  %v466 = vsel %vm465, %v458, %v462
  %v467 = vand.u32 2147483647, %v386
  %vm468 = vcmp.eq.f32.partialorder %v467, 8.507059e+37
  %v469 = vand.u32 %v386, 2147483648
  %v470 = vor.u32 1.1754944e-38, %v469
  %v471 = vsel %vm468, %v470, %v466
  %v472 = vmul.f32 1.0, %v471
  %v473 = vrcp.pop %v387
  %v474 = vmul.f32 %v387, %v473
  %v475 = vsub.f32 1.0, %v474
  %v476 = vmul.f32 %v473, %v475
  %v477 = vadd.f32 %v473, %v476
  %vm478 = vweird.f32 %v387
  %vm479 = vweird.f32 %v473
  %vm480 = vmor %vm478, %vm479
  %v481 = vsel %vm480, %v473, %v477
  %v482 = vand.u32 2147483647, %v387
  %vm483 = vcmp.eq.f32.partialorder %v482, 8.507059e+37
  %v484 = vand.u32 %v387, 2147483648
  %v485 = vor.u32 1.1754944e-38, %v484
  %v486 = vsel %vm483, %v485, %v481
  %v487 = vmul.f32 1.0, %v486
  %v488 = vrcp.pop %v388
  %v489 = vmul.f32 %v388, %v488
  %v490 = vsub.f32 1.0, %v489
  %v491 = vmul.f32 %v488, %v490
  %v492 = vadd.f32 %v488, %v491
  %vm493 = vweird.f32 %v388
  %vm494 = vweird.f32 %v488
  %vm495 = vmor %vm493, %vm494
  %v496 = vsel %vm495, %v488, %v492
  %v497 = vand.u32 2147483647, %v388
  %vm498 = vcmp.eq.f32.partialorder %v497, 8.507059e+37
  %v499 = vand.u32 %v388, 2147483648
  %v500 = vor.u32 1.1754944e-38, %v499
  %v501 = vsel %vm498, %v500, %v496
  %v502 = vmul.f32 1.0, %v501
  %v503 = vrcp.pop %v389
  %v504 = vmul.f32 %v389, %v503
  %v505 = vsub.f32 1.0, %v504
  %v506 = vmul.f32 %v503, %v505
  %v507 = vadd.f32 %v503, %v506
  %vm508 = vweird.f32 %v389
  %vm509 = vweird.f32 %v503
  %vm510 = vmor %vm508, %vm509
  %v511 = vsel %vm510, %v503, %v507
  %v512 = vand.u32 2147483647, %v389
  %vm513 = vcmp.eq.f32.partialorder %v512, 8.507059e+37
  %v514 = vand.u32 %v389, 2147483648
  %v515 = vor.u32 1.1754944e-38, %v514
  %v516 = vsel %vm513, %v515, %v511
  %v517 = vmul.f32 1.0, %v516
  %v518 = vrcp.pop %v390
  %v519 = vmul.f32 %v390, %v518
  %v520 = vsub.f32 1.0, %v519
  %v521 = vmul.f32 %v518, %v520
  %v522 = vadd.f32 %v518, %v521
  %vm523 = vweird.f32 %v390
  %vm524 = vweird.f32 %v518
  %vm525 = vmor %vm523, %vm524
  %v526 = vsel %vm525, %v518, %v522
  %v527 = vand.u32 2147483647, %v390
  %vm528 = vcmp.eq.f32.partialorder %v527, 8.507059e+37
  %v529 = vand.u32 %v390, 2147483648
  %v530 = vor.u32 1.1754944e-38, %v529
  %v531 = vsel %vm528, %v530, %v526
  %v532 = vmul.f32 1.0, %v531
  %v533 = vrcp.pop %v391
  %v534 = vmul.f32 %v391, %v533
  %v535 = vsub.f32 1.0, %v534
  %v536 = vmul.f32 %v533, %v535
  %v537 = vadd.f32 %v533, %v536
  %vm538 = vweird.f32 %v391
  %vm539 = vweird.f32 %v533
  %vm540 = vmor %vm538, %vm539
  %v541 = vsel %vm540, %v533, %v537
  %v542 = vand.u32 2147483647, %v391
  %vm543 = vcmp.eq.f32.partialorder %v542, 8.507059e+37
  %v544 = vand.u32 %v391, 2147483648
  %v545 = vor.u32 1.1754944e-38, %v544
  %v546 = vsel %vm543, %v545, %v541
  %v547 = vmul.f32 1.0, %v546
  %v548 = vrcp.pop %v392
  %v549 = vmul.f32 %v392, %v548
  %v550 = vsub.f32 1.0, %v549
  %v551 = vmul.f32 %v548, %v550
  %v552 = vadd.f32 %v548, %v551
  %vm553 = vweird.f32 %v392
  %vm554 = vweird.f32 %v548
  %vm555 = vmor %vm553, %vm554
  %v556 = vsel %vm555, %v548, %v552
  %v557 = vand.u32 2147483647, %v392
  %vm558 = vcmp.eq.f32.partialorder %v557, 8.507059e+37
  %v559 = vand.u32 %v392, 2147483648
  %v560 = vor.u32 1.1754944e-38, %v559
  %v561 = vsel %vm558, %v560, %v556
  %v562 = vmul.f32 1.0, %v561
  %v563 = vrcp.pop %v393
  %v564 = vmul.f32 %v393, %v563
  %v565 = vsub.f32 1.0, %v564
  %v566 = vmul.f32 %v563, %v565
  %v567 = vadd.f32 %v563, %v566
  %vm568 = vweird.f32 %v393
  %vm569 = vweird.f32 %v563
  %vm570 = vmor %vm568, %vm569
  %v571 = vsel %vm570, %v563, %v567
  %v572 = vand.u32 2147483647, %v393
  %vm573 = vcmp.eq.f32.partialorder %v572, 8.507059e+37
  %v574 = vand.u32 %v393, 2147483648
  %v575 = vor.u32 1.1754944e-38, %v574
  %v576 = vsel %vm573, %v575, %v571
  %v577 = vmul.f32 1.0, %v576
  %v578 = vrcp.pop %v394
  %v579 = vmul.f32 %v394, %v578
  %v580 = vsub.f32 1.0, %v579
  %v581 = vmul.f32 %v578, %v580
  %v582 = vadd.f32 %v578, %v581
  %vm583 = vweird.f32 %v394
  %vm584 = vweird.f32 %v578
  %vm585 = vmor %vm583, %vm584
  %v586 = vsel %vm585, %v578, %v582
  %v587 = vand.u32 2147483647, %v394
  %vm588 = vcmp.eq.f32.partialorder %v587, 8.507059e+37
  %v589 = vand.u32 %v394, 2147483648
  %v590 = vor.u32 1.1754944e-38, %v589
  %v591 = vsel %vm588, %v590, %v586
  %v592 = vmul.f32 1.0, %v591
  %v593 = vrcp.pop %v395
  %v594 = vmul.f32 %v395, %v593
  %v595 = vsub.f32 1.0, %v594
  %v596 = vmul.f32 %v593, %v595
  %v597 = vadd.f32 %v593, %v596
  %vm598 = vweird.f32 %v395
  %vm599 = vweird.f32 %v593
  %vm600 = vmor %vm598, %vm599
  %v601 = vsel %vm600, %v593, %v597
  %v602 = vand.u32 2147483647, %v395
  %vm603 = vcmp.eq.f32.partialorder %v602, 8.507059e+37
  %v604 = vand.u32 %v395, 2147483648
  %v605 = vor.u32 1.1754944e-38, %v604
  %v606 = vsel %vm603, %v605, %v601
  %v607 = vmul.f32 1.0, %v606
  %v608 = vrcp.pop %v396
  %v609 = vmul.f32 %v396, %v608
  %v610 = vsub.f32 1.0, %v609
  %v611 = vmul.f32 %v608, %v610
  %v612 = vadd.f32 %v608, %v611
  %vm613 = vweird.f32 %v396
  %vm614 = vweird.f32 %v608
  %vm615 = vmor %vm613, %vm614
  %v616 = vsel %vm615, %v608, %v612
  %v617 = vand.u32 2147483647, %v396
  %vm618 = vcmp.eq.f32.partialorder %v617, 8.507059e+37
  %v619 = vand.u32 %v396, 2147483648
  %v620 = vor.u32 1.1754944e-38, %v619
  %v621 = vsel %vm618, %v620, %v616
  %v622 = vmul.f32 1.0, %v621
  %v623 = vrcp.pop %v397
  %v624 = vmul.f32 %v397, %v623
  %v625 = vsub.f32 1.0, %v624
  %v626 = vmul.f32 %v623, %v625
  %v627 = vadd.f32 %v623, %v626
  %vm628 = vweird.f32 %v397
  %vm629 = vweird.f32 %v623
  %vm630 = vmor %vm628, %vm629
  %v631 = vsel %vm630, %v623, %v627
  %v632 = vand.u32 2147483647, %v397
  %vm633 = vcmp.eq.f32.partialorder %v632, 8.507059e+37
  %v634 = vand.u32 %v397, 2147483648
  %v635 = vor.u32 1.1754944e-38, %v634
  %v636 = vsel %vm633, %v635, %v631
  %v637 = vmul.f32 1.0, %v636
  %v638 = vsel %vm332, %v412, %v281
  %v639 = vsel %vm333, %v427, %v310
  %v640 = vsel %vm332, %v442, %v283
  %v641 = vsel %vm333, %v457, %v312
  %v642 = vsel %vm332, %v472, %v286
  %v643 = vsel %vm333, %v487, %v315
  %v644 = vsel %vm332, %v502, %v288
  %v645 = vsel %vm333, %v517, %v317
  %v646 = vsel %vm332, %v532, %v291
  %v647 = vsel %vm333, %v547, %v320
  %v648 = vsel %vm332, %v562, %v293
  %v649 = vsel %vm333, %v577, %v322
  %v650 = vsel %vm332, %v592, %v296
  %v651 = vsel %vm333, %v607, %v325
  %v652 = vsel %vm332, %v622, %v298
  %v653 = vsel %vm333, %v637, %v327
  %654 = vst [vmem:[%s5] sm:$0xff] %v638
  %vm655 = vcmask 523264
  %656 = vst.msk [vmem:[%s5 + $0x8] sm:$0xff] %vm655, %v639
  %657 = vst [vmem:[%s5 + $0x10] sm:$0xff] %v640
  %658 = vst.msk [vmem:[%s5 + $0x18] sm:$0xff] %vm655, %v641
  %659 = vst [vmem:[%s5 + $0x20] sm:$0xff] %v642
  %660 = vst.msk [vmem:[%s5 + $0x28] sm:$0xff] %vm655, %v643
  %661 = vst [vmem:[%s5 + $0x30] sm:$0xff] %v644
  %662 = vst.msk [vmem:[%s5 + $0x38] sm:$0xff] %vm655, %v645
  %663 = vst [vmem:[%s5 + $0x40] sm:$0xff] %v646
  %664 = vst.msk [vmem:[%s5 + $0x48] sm:$0xff] %vm655, %v647
  %665 = vst [vmem:[%s5 + $0x50] sm:$0xff] %v648
  %666 = vst.msk [vmem:[%s5 + $0x58] sm:$0xff] %vm655, %v649
  %667 = vst [vmem:[%s5 + $0x60] sm:$0xff] %v650
  %668 = vst.msk [vmem:[%s5 + $0x68] sm:$0xff] %vm655, %v651
  %669 = vst [vmem:[%s5 + $0x70] sm:$0xff] %v652
  %670 = vst.msk [vmem:[%s5 + $0x78] sm:$0xff] %vm655, %v653
  // Predicated region
  $region22: #{iterative_simulator_fwd.67} parent=0 // pred_check
    _
  $region23: #{iterative_simulator_fwd.67} parent=0 // pred_check_branch
    %672 = sbr.rel (0) target = $region25
  $region24: #{iterative_simulator_fwd.67} parent=0 // pred_region
    _
  $region25: #{iterative_simulator_fwd.67} parent=0 // pred_fallthru
    _
  // Predicated region
  $region26: #{iterative_simulator_fwd.67} parent=0 // pred_check
    _
  $region27: #{iterative_simulator_fwd.67} parent=0 // pred_check_branch
    %674 = sbr.rel (0) target = $region29
  $region28: #{iterative_simulator_fwd.67} parent=0 // pred_region
    _
  $region29: #{iterative_simulator_fwd.67} parent=0 // pred_fallthru
    _

// kernel: iterative_simulator_fwd.66
$region0: #{iterative_simulator_fwd.66}
  #allocation0 [shape = 'u32[]', space=smem, size = 0x4, offset = 0x4, fixed_abs, tag = 'smem constant byte address 0x4 - core index']
  #allocation1 [shape = 'u32[72,128]{1,0:T(1,128)}', space=vmem, size = 0x9000, scoped, tag = 'internal scratch']
  %s0 = inlined_call_operand.vmem [shape: f32[64,16], index: 0, kind: input, shape index: {}]
  %s1 = inlined_call_operand.vmem [shape: f32[1,16], index: 1, kind: input, shape index: {}]
  %s2 = inlined_call_operand.vmem [shape: f32[1,16], index: 2, kind: input, shape index: {}]
  %s3 = inlined_call_operand.vmem [shape: f32[64,16], index: 3, kind: output, shape index: {}]
  %s4 = sld [smem:[#allocation0]]
  $region22: #{iterative_simulator_fwd.66} parent=0
    _
  %s6 = ssub.s32 1, %s4
  %s7 = scalar_select 0, %s6, %s4
  // Predicated region
  $region2: #{iterative_simulator_fwd.66} parent=0 // pred_check
    _
  $region3: #{iterative_simulator_fwd.66} parent=0 // pred_check_branch
    %9 = sbr.rel (0) target = $region5
  $region4: #{iterative_simulator_fwd.66} parent=0 // pred_region
    _
  $region5: #{iterative_simulator_fwd.66} parent=0 // pred_fallthru
    _
  // Predicated region
  $region6: #{iterative_simulator_fwd.66} parent=0 // pred_check
    _
  $region7: #{iterative_simulator_fwd.66} parent=0 // pred_check_branch
    %11 = sbr.rel (0) target = $region9
  $region8: #{iterative_simulator_fwd.66} parent=0 // pred_region
    _
  $region9: #{iterative_simulator_fwd.66} parent=0 // pred_fallthru
    _
  // Predicated region
  $region10: #{iterative_simulator_fwd.66} parent=0 // pred_check
    _
  $region11: #{iterative_simulator_fwd.66} parent=0 // pred_check_branch
    %13 = sbr.rel (0) target = $region13
  $region12: #{iterative_simulator_fwd.66} parent=0 // pred_region
    _
  $region13: #{iterative_simulator_fwd.66} parent=0 // pred_fallthru
    _
  %v14 = vld [vmem:[%s0] sm:$0xff]
  %v15 = vld [vmem:[%s0 + $0x8] sm:$0xff]
  %v16 = vld [vmem:[%s0 + $0x10] sm:$0xff]
  %v17 = vld [vmem:[%s0 + $0x18] sm:$0xff]
  %v18 = vld [vmem:[%s0 + $0x20] sm:$0xff]
  %v19 = vld [vmem:[%s0 + $0x28] sm:$0xff]
  %v20 = vld [vmem:[%s0 + $0x30] sm:$0xff]
  %v21 = vld [vmem:[%s0 + $0x38] sm:$0xff]
  %vm22 = vcmask 130048
  %v23 = vsel %vm22, %v14, 0.0
  %24 = vadd.xlane.f32.xlu0 %v23
  %v25 = vpop.xlane.xlu0 %24
  %v26 = vsel %vm22, %v15, 0.0
  %27 = vadd.xlane.f32.xlu0 %v26
  %v28 = vpop.xlane.xlu0 %27
  %v29 = vsel %vm22, %v16, 0.0
  %30 = vadd.xlane.f32.xlu0 %v29
  %v31 = vpop.xlane.xlu0 %30
  %v32 = vsel %vm22, %v17, 0.0
  %33 = vadd.xlane.f32.xlu0 %v32
  %v34 = vpop.xlane.xlu0 %33
  %v35 = vsel %vm22, %v18, 0.0
  %36 = vadd.xlane.f32.xlu0 %v35
  %v37 = vpop.xlane.xlu0 %36
  %v38 = vsel %vm22, %v19, 0.0
  %39 = vadd.xlane.f32.xlu0 %v38
  %v40 = vpop.xlane.xlu0 %39
  %v41 = vsel %vm22, %v20, 0.0
  %42 = vadd.xlane.f32.xlu0 %v41
  %v43 = vpop.xlane.xlu0 %42
  %v44 = vsel %vm22, %v21, 0.0
  %45 = vadd.xlane.f32.xlu0 %v44
  %v46 = vpop.xlane.xlu0 %45
  %v47 = vrcp.pop 16.0
  %v48 = vmul.f32 16.0, %v47
  %v49 = vsub.f32 1.0, %v48
  %v50 = vmul.f32 %v47, %v49
  %v51 = vadd.f32 %v47, %v50
  %vm52 = vweird.f32 %v47
  %v53 = vsel %vm52, %v47, %v51
  %v54 = vmul.f32 %v25, %v53
  %v55 = vmul.f32 %v28, %v53
  %v56 = vmul.f32 %v31, %v53
  %v57 = vmul.f32 %v34, %v53
  %v58 = vmul.f32 %v37, %v53
  %v59 = vmul.f32 %v40, %v53
  %v60 = vmul.f32 %v43, %v53
  %v61 = vmul.f32 %v46, %v53
  %v62 = vsub.f32 %v14, %v54
  %v63 = vsub.f32 %v15, %v55
  %v64 = vsub.f32 %v16, %v56
  %v65 = vsub.f32 %v17, %v57
  %v66 = vsub.f32 %v18, %v58
  %v67 = vsub.f32 %v19, %v59
  %v68 = vsub.f32 %v20, %v60
  %v69 = vsub.f32 %v21, %v61
  %v70 = vmul.f32 %v62, %v62
  %v71 = vmul.f32 %v63, %v63
  %v72 = vmul.f32 %v64, %v64
  %v73 = vmul.f32 %v65, %v65
  %v74 = vmul.f32 %v66, %v66
  %v75 = vmul.f32 %v67, %v67
  %v76 = vmul.f32 %v68, %v68
  %v77 = vmul.f32 %v69, %v69
  %v78 = vsel %vm22, %v70, 0.0
  %79 = vadd.xlane.f32.xlu0 %v78
  %v80 = vpop.xlane.xlu0 %79
  %v81 = vsel %vm22, %v71, 0.0
  %82 = vadd.xlane.f32.xlu0 %v81
  %v83 = vpop.xlane.xlu0 %82
  %v84 = vsel %vm22, %v72, 0.0
  %85 = vadd.xlane.f32.xlu0 %v84
  %v86 = vpop.xlane.xlu0 %85
  %v87 = vsel %vm22, %v73, 0.0
  %88 = vadd.xlane.f32.xlu0 %v87
  %v89 = vpop.xlane.xlu0 %88
  %v90 = vsel %vm22, %v74, 0.0
  %91 = vadd.xlane.f32.xlu0 %v90
  %v92 = vpop.xlane.xlu0 %91
  %v93 = vsel %vm22, %v75, 0.0
  %94 = vadd.xlane.f32.xlu0 %v93
  %v95 = vpop.xlane.xlu0 %94
  %v96 = vsel %vm22, %v76, 0.0
  %97 = vadd.xlane.f32.xlu0 %v96
  %v98 = vpop.xlane.xlu0 %97
  %v99 = vsel %vm22, %v77, 0.0
  %100 = vadd.xlane.f32.xlu0 %v99
  %v101 = vpop.xlane.xlu0 %100
  %v102 = vmul.f32 %v80, %v53
  %v103 = vmul.f32 %v83, %v53
  %v104 = vmul.f32 %v86, %v53
  %v105 = vmul.f32 %v89, %v53
  %v106 = vmul.f32 %v92, %v53
  %v107 = vmul.f32 %v95, %v53
  %v108 = vmul.f32 %v98, %v53
  %v109 = vmul.f32 %v101, %v53
  %v110 = vadd.f32 %v102, 1e-05
  %v111 = vadd.f32 %v103, 1e-05
  %v112 = vadd.f32 %v104, 1e-05
  %v113 = vadd.f32 %v105, 1e-05
  %v114 = vadd.f32 %v106, 1e-05
  %v115 = vadd.f32 %v107, 1e-05
  %v116 = vadd.f32 %v108, 1e-05
  %v117 = vadd.f32 %v109, 1e-05
  %v118 = vrsqrt.pop %v110
  %v119 = vmul.f32 %v118, %v110
  %v120 = vmul.f32 %v119, %v118
  %v121 = vmul.f32 0.5, %v120
  %v122 = vsub.f32 1.5, %v121
  %v123 = vmul.f32 %v118, %v122
  %vm124 = vweird.f32 %v110
  %vm125 = vweird.f32 %v118
  %vm126 = vmor %vm124, %vm125
  %v127 = vsel %vm126, %v118, %v123
  %v128 = vrsqrt.pop %v111
  %v129 = vmul.f32 %v128, %v111
  %v130 = vmul.f32 %v129, %v128
  %v131 = vmul.f32 0.5, %v130
  %v132 = vsub.f32 1.5, %v131
  %v133 = vmul.f32 %v128, %v132
  %vm134 = vweird.f32 %v111
  %vm135 = vweird.f32 %v128
  %vm136 = vmor %vm134, %vm135
  %v137 = vsel %vm136, %v128, %v133
  %v138 = vrsqrt.pop %v112
  %v139 = vmul.f32 %v138, %v112
  %v140 = vmul.f32 %v139, %v138
  %v141 = vmul.f32 0.5, %v140
  %v142 = vsub.f32 1.5, %v141
  %v143 = vmul.f32 %v138, %v142
  %vm144 = vweird.f32 %v112
  %vm145 = vweird.f32 %v138
  %vm146 = vmor %vm144, %vm145
  %v147 = vsel %vm146, %v138, %v143
  %v148 = vrsqrt.pop %v113
  %v149 = vmul.f32 %v148, %v113
  %v150 = vmul.f32 %v149, %v148
  %v151 = vmul.f32 0.5, %v150
  %v152 = vsub.f32 1.5, %v151
  %v153 = vmul.f32 %v148, %v152
  %vm154 = vweird.f32 %v113
  %vm155 = vweird.f32 %v148
  %vm156 = vmor %vm154, %vm155
  %v157 = vsel %vm156, %v148, %v153
  %v158 = vrsqrt.pop %v114
  %v159 = vmul.f32 %v158, %v114
  %v160 = vmul.f32 %v159, %v158
  %v161 = vmul.f32 0.5, %v160
  %v162 = vsub.f32 1.5, %v161
  %v163 = vmul.f32 %v158, %v162
  %vm164 = vweird.f32 %v114
  %vm165 = vweird.f32 %v158
  %vm166 = vmor %vm164, %vm165
  %v167 = vsel %vm166, %v158, %v163
  %v168 = vrsqrt.pop %v115
  %v169 = vmul.f32 %v168, %v115
  %v170 = vmul.f32 %v169, %v168
  %v171 = vmul.f32 0.5, %v170
  %v172 = vsub.f32 1.5, %v171
  %v173 = vmul.f32 %v168, %v172
  %vm174 = vweird.f32 %v115
  %vm175 = vweird.f32 %v168
  %vm176 = vmor %vm174, %vm175
  %v177 = vsel %vm176, %v168, %v173
  %v178 = vrsqrt.pop %v116
  %v179 = vmul.f32 %v178, %v116
  %v180 = vmul.f32 %v179, %v178
  %v181 = vmul.f32 0.5, %v180
  %v182 = vsub.f32 1.5, %v181
  %v183 = vmul.f32 %v178, %v182
  %vm184 = vweird.f32 %v116
  %vm185 = vweird.f32 %v178
  %vm186 = vmor %vm184, %vm185
  %v187 = vsel %vm186, %v178, %v183
  %v188 = vrsqrt.pop %v117
  %v189 = vmul.f32 %v188, %v117
  %v190 = vmul.f32 %v189, %v188
  %v191 = vmul.f32 0.5, %v190
  %v192 = vsub.f32 1.5, %v191
  %v193 = vmul.f32 %v188, %v192
  %vm194 = vweird.f32 %v117
  %vm195 = vweird.f32 %v188
  %vm196 = vmor %vm194, %vm195
  %v197 = vsel %vm196, %v188, %v193
  %v198 = vmul.f32 %v62, %v127
  %v199 = vmul.f32 %v63, %v137
  %v200 = vmul.f32 %v64, %v147
  %v201 = vmul.f32 %v65, %v157
  %v202 = vmul.f32 %v66, %v167
  %v203 = vmul.f32 %v67, %v177
  %v204 = vmul.f32 %v68, %v187
  %v205 = vmul.f32 %v69, %v197
  %v206 = vld [vmem:[%s1] sm:$0x1]
  %v208 = vperm.slane %v206, 0
  %v210 = vmul.f32 %v198, %v208
  %v211 = vmul.f32 %v199, %v208
  %v212 = vmul.f32 %v200, %v208
  %v213 = vmul.f32 %v201, %v208
  %v214 = vmul.f32 %v202, %v208
  %v215 = vmul.f32 %v203, %v208
  %v216 = vmul.f32 %v204, %v208
  %v217 = vmul.f32 %v205, %v208
  %v218 = vld [vmem:[%s2] sm:$0x1]
  %v220 = vperm.slane %v218, 0
  %v222 = vadd.f32 %v210, %v220
  %v223 = vadd.f32 %v211, %v220
  %v224 = vadd.f32 %v212, %v220
  %v225 = vadd.f32 %v213, %v220
  %v226 = vadd.f32 %v214, %v220
  %v227 = vadd.f32 %v215, %v220
  %v228 = vadd.f32 %v216, %v220
  %v229 = vadd.f32 %v217, %v220
  %230 = vst.msk [vmem:[%s3] sm:$0xff] %vm22, %v222
  %231 = vst.msk [vmem:[%s3 + $0x8] sm:$0xff] %vm22, %v223
  %232 = vst.msk [vmem:[%s3 + $0x10] sm:$0xff] %vm22, %v224
  %233 = vst.msk [vmem:[%s3 + $0x18] sm:$0xff] %vm22, %v225
  %234 = vst.msk [vmem:[%s3 + $0x20] sm:$0xff] %vm22, %v226
  %235 = vst.msk [vmem:[%s3 + $0x28] sm:$0xff] %vm22, %v227
  %236 = vst.msk [vmem:[%s3 + $0x30] sm:$0xff] %vm22, %v228
  %237 = vst.msk [vmem:[%s3 + $0x38] sm:$0xff] %vm22, %v229
  // Predicated region
  $region14: #{iterative_simulator_fwd.66} parent=0 // pred_check
    _
  $region15: #{iterative_simulator_fwd.66} parent=0 // pred_check_branch
    %239 = sbr.rel (0) target = $region17
  $region16: #{iterative_simulator_fwd.66} parent=0 // pred_region
    _
  $region17: #{iterative_simulator_fwd.66} parent=0 // pred_fallthru
    _
  // Predicated region
  $region18: #{iterative_simulator_fwd.66} parent=0 // pred_check
    _
  $region19: #{iterative_simulator_fwd.66} parent=0 // pred_check_branch
    %241 = sbr.rel (0) target = $region21
  $region20: #{iterative_simulator_fwd.66} parent=0 // pred_region
    _
  $region21: #{iterative_simulator_fwd.66} parent=0 // pred_fallthru
    _

// kernel: iterative_simulator_fwd.68
$region0: #{iterative_simulator_fwd.68}
  #allocation0 [shape = 'u32[]', space=smem, size = 0x4, offset = 0x4, fixed_abs, tag = 'smem constant byte address 0x4 - core index']
  #allocation1 [shape = 'u32[72,128]{1,0:T(1,128)}', space=vmem, size = 0x9000, scoped, tag = 'internal scratch']
  %s0 = inlined_call_operand.vmem [shape: f32[64,16], index: 0, kind: input, shape index: {}]
  %s1 = inlined_call_operand.vmem [shape: f32[1,16], index: 1, kind: input, shape index: {}]
  %s2 = inlined_call_operand.vmem [shape: f32[1,16], index: 2, kind: input, shape index: {}]
  %s3 = inlined_call_operand.vmem [shape: bf16[16,4], index: 3, kind: input, shape index: {}]
  %s4 = inlined_call_operand.vmem [shape: f32[1,4], index: 4, kind: input, shape index: {}]
  %s5 = inlined_call_operand.vmem [shape: f32[64,4], index: 5, kind: output, shape index: {}]
  %s6 = sld [smem:[#allocation0]]
  $region30: #{iterative_simulator_fwd.68} parent=0
    _
  %s8 = ssub.s32 1, %s6
  %s9 = scalar_select 0, %s8, %s6
  // Predicated region
  $region2: #{iterative_simulator_fwd.68} parent=0 // pred_check
    _
  $region3: #{iterative_simulator_fwd.68} parent=0 // pred_check_branch
    %11 = sbr.rel (0) target = $region5
  $region4: #{iterative_simulator_fwd.68} parent=0 // pred_region
    _
  $region5: #{iterative_simulator_fwd.68} parent=0 // pred_fallthru
    _
  // Predicated region
  $region6: #{iterative_simulator_fwd.68} parent=0 // pred_check
    _
  $region7: #{iterative_simulator_fwd.68} parent=0 // pred_check_branch
    %13 = sbr.rel (0) target = $region9
  $region8: #{iterative_simulator_fwd.68} parent=0 // pred_region
    _
  $region9: #{iterative_simulator_fwd.68} parent=0 // pred_fallthru
    _
  // Predicated region
  $region10: #{iterative_simulator_fwd.68} parent=0 // pred_check
    _
  $region11: #{iterative_simulator_fwd.68} parent=0 // pred_check_branch
    %15 = sbr.rel (0) target = $region13
  $region12: #{iterative_simulator_fwd.68} parent=0 // pred_region
    _
  $region13: #{iterative_simulator_fwd.68} parent=0 // pred_fallthru
    _
  // Predicated region
  $region14: #{iterative_simulator_fwd.68} parent=0 // pred_check
    _
  $region15: #{iterative_simulator_fwd.68} parent=0 // pred_check_branch
    %17 = sbr.rel (0) target = $region17
  $region16: #{iterative_simulator_fwd.68} parent=0 // pred_region
    _
  $region17: #{iterative_simulator_fwd.68} parent=0 // pred_fallthru
    _
  // Predicated region
  $region18: #{iterative_simulator_fwd.68} parent=0 // pred_check
    _
  $region19: #{iterative_simulator_fwd.68} parent=0 // pred_check_branch
    %19 = sbr.rel (0) target = $region21
  $region20: #{iterative_simulator_fwd.68} parent=0 // pred_region
    _
  $region21: #{iterative_simulator_fwd.68} parent=0 // pred_fallthru
    _
  %v21 = vld [vmem:[%s0] sm:$0xff]
  %v22 = vld [vmem:[%s0 + $0x8] sm:$0xff]
  %v23 = vld [vmem:[%s0 + $0x10] sm:$0xff]
  %v24 = vld [vmem:[%s0 + $0x18] sm:$0xff]
  %v25 = vld [vmem:[%s0 + $0x20] sm:$0xff]
  %v26 = vld [vmem:[%s0 + $0x28] sm:$0xff]
  %v27 = vld [vmem:[%s0 + $0x30] sm:$0xff]
  %v28 = vld [vmem:[%s0 + $0x38] sm:$0xff]
  %v29 = vld [vmem:[%s1] sm:$0x1]
  %v30 = vld [vmem:[%s2] sm:$0x1]
  %vm31 = vcmask 130048
  %v32 = vsel %vm31, %v21, 0.0
  %33 = vadd.xlane.f32.xlu0 %v32
  %v34 = vpop.xlane.xlu0 %33
  %v35 = vsel %vm31, %v22, 0.0
  %36 = vadd.xlane.f32.xlu0 %v35
  %v37 = vpop.xlane.xlu0 %36
  %v38 = vsel %vm31, %v23, 0.0
  %39 = vadd.xlane.f32.xlu0 %v38
  %v40 = vpop.xlane.xlu0 %39
  %v41 = vsel %vm31, %v24, 0.0
  %42 = vadd.xlane.f32.xlu0 %v41
  %v43 = vpop.xlane.xlu0 %42
  %v44 = vsel %vm31, %v25, 0.0
  %45 = vadd.xlane.f32.xlu0 %v44
  %v46 = vpop.xlane.xlu0 %45
  %v47 = vsel %vm31, %v26, 0.0
  %48 = vadd.xlane.f32.xlu0 %v47
  %v49 = vpop.xlane.xlu0 %48
  %v50 = vsel %vm31, %v27, 0.0
  %51 = vadd.xlane.f32.xlu0 %v50
  %v52 = vpop.xlane.xlu0 %51
  %v53 = vsel %vm31, %v28, 0.0
  %54 = vadd.xlane.f32.xlu0 %v53
  %v55 = vpop.xlane.xlu0 %54
  %v56 = vrcp.pop 16.0
  %v57 = vmul.f32 16.0, %v56
  %v58 = vsub.f32 1.0, %v57
  %v59 = vmul.f32 %v56, %v58
  %v60 = vadd.f32 %v56, %v59
  %vm61 = vweird.f32 %v56
  %v62 = vsel %vm61, %v56, %v60
  %v63 = vmul.f32 %v34, %v62
  %v64 = vmul.f32 %v37, %v62
  %v65 = vmul.f32 %v40, %v62
  %v66 = vmul.f32 %v43, %v62
  %v67 = vmul.f32 %v46, %v62
  %v68 = vmul.f32 %v49, %v62
  %v69 = vmul.f32 %v52, %v62
  %v70 = vmul.f32 %v55, %v62
  %v71 = vsub.f32 %v21, %v63
  %v72 = vsub.f32 %v22, %v64
  %v73 = vsub.f32 %v23, %v65
  %v74 = vsub.f32 %v24, %v66
  %v75 = vsub.f32 %v25, %v67
  %v76 = vsub.f32 %v26, %v68
  %v77 = vsub.f32 %v27, %v69
  %v78 = vsub.f32 %v28, %v70
  %v79 = vmul.f32 %v71, %v71
  %v80 = vmul.f32 %v72, %v72
  %v81 = vmul.f32 %v73, %v73
  %v82 = vmul.f32 %v74, %v74
  %v83 = vmul.f32 %v75, %v75
  %v84 = vmul.f32 %v76, %v76
  %v85 = vmul.f32 %v77, %v77
  %v86 = vmul.f32 %v78, %v78
  %v87 = vsel %vm31, %v79, 0.0
  %88 = vadd.xlane.f32.xlu0 %v87
  %v89 = vpop.xlane.xlu0 %88
  %v90 = vsel %vm31, %v80, 0.0
  %91 = vadd.xlane.f32.xlu0 %v90
  %v92 = vpop.xlane.xlu0 %91
  %v93 = vsel %vm31, %v81, 0.0
  %94 = vadd.xlane.f32.xlu0 %v93
  %v95 = vpop.xlane.xlu0 %94
  %v96 = vsel %vm31, %v82, 0.0
  %97 = vadd.xlane.f32.xlu0 %v96
  %v98 = vpop.xlane.xlu0 %97
  %v99 = vsel %vm31, %v83, 0.0
  %100 = vadd.xlane.f32.xlu0 %v99
  %v101 = vpop.xlane.xlu0 %100
  %v102 = vsel %vm31, %v84, 0.0
  %103 = vadd.xlane.f32.xlu0 %v102
  %v104 = vpop.xlane.xlu0 %103
  %v105 = vsel %vm31, %v85, 0.0
  %106 = vadd.xlane.f32.xlu0 %v105
  %v107 = vpop.xlane.xlu0 %106
  %v108 = vsel %vm31, %v86, 0.0
  %109 = vadd.xlane.f32.xlu0 %v108
  %v110 = vpop.xlane.xlu0 %109
  %v111 = vmul.f32 %v89, %v62
  %v112 = vmul.f32 %v92, %v62
  %v113 = vmul.f32 %v95, %v62
  %v114 = vmul.f32 %v98, %v62
  %v115 = vmul.f32 %v101, %v62
  %v116 = vmul.f32 %v104, %v62
  %v117 = vmul.f32 %v107, %v62
  %v118 = vmul.f32 %v110, %v62
  %v119 = vadd.f32 %v111, 1e-05
  %v120 = vadd.f32 %v112, 1e-05
  %v121 = vadd.f32 %v113, 1e-05
  %v122 = vadd.f32 %v114, 1e-05
  %v123 = vadd.f32 %v115, 1e-05
  %v124 = vadd.f32 %v116, 1e-05
  %v125 = vadd.f32 %v117, 1e-05
  %v126 = vadd.f32 %v118, 1e-05
  %v127 = vrsqrt.pop %v119
  %v128 = vmul.f32 %v127, %v119
  %v129 = vmul.f32 %v128, %v127
  %v130 = vmul.f32 0.5, %v129
  %v131 = vsub.f32 1.5, %v130
  %v132 = vmul.f32 %v127, %v131
  %vm133 = vweird.f32 %v119
  %vm134 = vweird.f32 %v127
  %vm135 = vmor %vm133, %vm134
  %v136 = vsel %vm135, %v127, %v132
  %v137 = vrsqrt.pop %v120
  %v138 = vmul.f32 %v137, %v120
  %v139 = vmul.f32 %v138, %v137
  %v140 = vmul.f32 0.5, %v139
  %v141 = vsub.f32 1.5, %v140
  %v142 = vmul.f32 %v137, %v141
  %vm143 = vweird.f32 %v120
  %vm144 = vweird.f32 %v137
  %vm145 = vmor %vm143, %vm144
  %v146 = vsel %vm145, %v137, %v142
  %v147 = vrsqrt.pop %v121
  %v148 = vmul.f32 %v147, %v121
  %v149 = vmul.f32 %v148, %v147
  %v150 = vmul.f32 0.5, %v149
  %v151 = vsub.f32 1.5, %v150
  %v152 = vmul.f32 %v147, %v151
  %vm153 = vweird.f32 %v121
  %vm154 = vweird.f32 %v147
  %vm155 = vmor %vm153, %vm154
  %v156 = vsel %vm155, %v147, %v152
  %v157 = vrsqrt.pop %v122
  %v158 = vmul.f32 %v157, %v122
  %v159 = vmul.f32 %v158, %v157
  %v160 = vmul.f32 0.5, %v159
  %v161 = vsub.f32 1.5, %v160
  %v162 = vmul.f32 %v157, %v161
  %vm163 = vweird.f32 %v122
  %vm164 = vweird.f32 %v157
  %vm165 = vmor %vm163, %vm164
  %v166 = vsel %vm165, %v157, %v162
  %v167 = vrsqrt.pop %v123
  %v168 = vmul.f32 %v167, %v123
  %v169 = vmul.f32 %v168, %v167
  %v170 = vmul.f32 0.5, %v169
  %v171 = vsub.f32 1.5, %v170
  %v172 = vmul.f32 %v167, %v171
  %vm173 = vweird.f32 %v123
  %vm174 = vweird.f32 %v167
  %vm175 = vmor %vm173, %vm174
  %v176 = vsel %vm175, %v167, %v172
  %v177 = vrsqrt.pop %v124
  %v178 = vmul.f32 %v177, %v124
  %v179 = vmul.f32 %v178, %v177
  %v180 = vmul.f32 0.5, %v179
  %v181 = vsub.f32 1.5, %v180
  %v182 = vmul.f32 %v177, %v181
  %vm183 = vweird.f32 %v124
  %vm184 = vweird.f32 %v177
  %vm185 = vmor %vm183, %vm184
  %v186 = vsel %vm185, %v177, %v182
  %v187 = vrsqrt.pop %v125
  %v188 = vmul.f32 %v187, %v125
  %v189 = vmul.f32 %v188, %v187
  %v190 = vmul.f32 0.5, %v189
  %v191 = vsub.f32 1.5, %v190
  %v192 = vmul.f32 %v187, %v191
  %vm193 = vweird.f32 %v125
  %vm194 = vweird.f32 %v187
  %vm195 = vmor %vm193, %vm194
  %v196 = vsel %vm195, %v187, %v192
  %v197 = vrsqrt.pop %v126
  %v198 = vmul.f32 %v197, %v126
  %v199 = vmul.f32 %v198, %v197
  %v200 = vmul.f32 0.5, %v199
  %v201 = vsub.f32 1.5, %v200
  %v202 = vmul.f32 %v197, %v201
  %vm203 = vweird.f32 %v126
  %vm204 = vweird.f32 %v197
  %vm205 = vmor %vm203, %vm204
  %v206 = vsel %vm205, %v197, %v202
  %v207 = vmul.f32 %v71, %v136
  %v208 = vmul.f32 %v72, %v146
  %v209 = vmul.f32 %v73, %v156
  %v210 = vmul.f32 %v74, %v166
  %v211 = vmul.f32 %v75, %v176
  %v212 = vmul.f32 %v76, %v186
  %v213 = vmul.f32 %v77, %v196
  %v214 = vmul.f32 %v78, %v206
  %v216 = vperm.slane %v29, 0
  %v218 = vmul.f32 %v207, %v216
  %v219 = vmul.f32 %v208, %v216
  %v220 = vmul.f32 %v209, %v216
  %v221 = vmul.f32 %v210, %v216
  %v222 = vmul.f32 %v211, %v216
  %v223 = vmul.f32 %v212, %v216
  %v224 = vmul.f32 %v213, %v216
  %v225 = vmul.f32 %v214, %v216
  %v227 = vperm.slane %v30, 0
  %v229 = vadd.f32 %v218, %v227
  %v230 = vadd.f32 %v219, %v227
  %v231 = vadd.f32 %v220, %v227
  %v232 = vadd.f32 %v221, %v227
  %v233 = vadd.f32 %v222, %v227
  %v234 = vadd.f32 %v223, %v227
  %v235 = vadd.f32 %v224, %v227
  %v236 = vadd.f32 %v225, %v227
  %v237 = vld [vmem:[%s3] sm:$0xf]
  %v238 = vld [vmem:[%s3 + $0x4] sm:$0xf]
  %v239 = vld [vmem:[%s4] sm:$0x1]
  %v240 = vpack.c.bf16 %v230, %v229
  %v241 = vpack.c.bf16 %v232, %v231
  %v242 = vpack.c.bf16 %v234, %v233
  %v243 = vpack.c.bf16 %v236, %v235
  %v245 = vperm.slane %v239, 0
  %v249 = vunpack.c.l.b16 %v237
  %v250 = vunpack.c.l.b16 %v238
  %v251 = vpack.c.b16 %v250, %v249
  %v254 = vsel %vm31, %v240, 0
  %v257 = vsel %vm31, %v241, 0
  %v260 = vsel %vm31, %v242, 0
  %v263 = vsel %vm31, %v243, 0
  %265 = vmatpush.bf16.msra.mxu0 0
  %266 = vmatpush.bf16.msra.mxu0 0
  %267 = vmatpush.bf16.msra.mxu0 0
  %268 = vmatpush.bf16.msra.mxu0 0
  %269 = vmatpush.bf16.msra.mxu0 0
  %270 = vmatpush.bf16.msra.mxu0 0
  %271 = vmatpush.bf16.msra.mxu0 0
  %272 = vmatpush.bf16.msra.mxu0 %v251
  %273 = vmatmul.bf16.gmra.mxu0 %v254
  %v274 = vpop.f32.mrf.mxu0
  %v275 = vadd.f32 %v245, %v274
  %v276 = vpop.f32.mrf.mxu0
  %v277 = vadd.f32 %v245, %v276
  %278 = vmatmul.bf16.gmra.mxu0 %v257
  %v279 = vpop.f32.mrf.mxu0
  %v280 = vadd.f32 %v245, %v279
  %v281 = vpop.f32.mrf.mxu0
  %v282 = vadd.f32 %v245, %v281
  %283 = vmatmul.bf16.gmra.mxu0 %v260
  %v284 = vpop.f32.mrf.mxu0
  %v285 = vadd.f32 %v245, %v284
  %v286 = vpop.f32.mrf.mxu0
  %v287 = vadd.f32 %v245, %v286
  %288 = vmatmul.bf16.gmra.mxu0 %v263
  %v289 = vpop.f32.mrf.mxu0
  %v290 = vadd.f32 %v245, %v289
  %v291 = vpop.f32.mrf.mxu0
  %v292 = vadd.f32 %v245, %v291
  %293 = vdwg.mxu0
  %vm294 = vcmask 31744
  %295 = vst.msk [vmem:[%s5] sm:$0xff] %vm294, %v275
  %296 = vst.msk [vmem:[%s5 + $0x8] sm:$0xff] %vm294, %v277
  %297 = vst.msk [vmem:[%s5 + $0x10] sm:$0xff] %vm294, %v280
  %298 = vst.msk [vmem:[%s5 + $0x18] sm:$0xff] %vm294, %v282
  %299 = vst.msk [vmem:[%s5 + $0x20] sm:$0xff] %vm294, %v285
  %300 = vst.msk [vmem:[%s5 + $0x28] sm:$0xff] %vm294, %v287
  %301 = vst.msk [vmem:[%s5 + $0x30] sm:$0xff] %vm294, %v290
  %302 = vst.msk [vmem:[%s5 + $0x38] sm:$0xff] %vm294, %v292
  // Predicated region
  $region22: #{iterative_simulator_fwd.68} parent=0 // pred_check
    _
  $region23: #{iterative_simulator_fwd.68} parent=0 // pred_check_branch
    %304 = sbr.rel (0) target = $region25
  $region24: #{iterative_simulator_fwd.68} parent=0 // pred_region
    _
  $region25: #{iterative_simulator_fwd.68} parent=0 // pred_fallthru
    _
  // Predicated region
  $region26: #{iterative_simulator_fwd.68} parent=0 // pred_check
    _
  $region27: #{iterative_simulator_fwd.68} parent=0 // pred_check_branch
    %306 = sbr.rel (0) target = $region29
  $region28: #{iterative_simulator_fwd.68} parent=0 // pred_region
    _
  $region29: #{iterative_simulator_fwd.68} parent=0 // pred_fallthru
    _

// kernel: iterative_simulator_fwd.70
$region0: #{iterative_simulator_fwd.70}
  #allocation0 [shape = 'u32[]', space=smem, size = 0x4, offset = 0x4, fixed_abs, tag = 'smem constant byte address 0x4 - core index']
  #allocation1 [shape = 'u32[72,128]{1,0:T(1,128)}', space=vmem, size = 0x9000, scoped, tag = 'internal scratch']
  %s0 = inlined_call_operand.vmem [shape: bf16[4,8,64], index: 0, kind: input, shape index: {}]
  %s1 = inlined_call_operand.vmem [shape: bf16[4,8,64], index: 1, kind: input, shape index: {}]
  %s2 = inlined_call_operand.vmem [shape: bf16[4,8,64], index: 2, kind: input, shape index: {}]
  %s3 = inlined_call_operand.vmem [shape: f32[4,8,8], index: 3, kind: input, shape index: {}]
  %s4 = inlined_call_operand.vmem [shape: f32[4,8,64], index: 4, kind: output, shape index: {}]
  %s5 = sld [smem:[#allocation0]]
  $region26: #{iterative_simulator_fwd.70} parent=0
    _
  %s7 = ssub.s32 1, %s5
  %s8 = scalar_select 0, %s7, %s5
  // Predicated region
  $region2: #{iterative_simulator_fwd.70} parent=0 // pred_check
    _
  $region3: #{iterative_simulator_fwd.70} parent=0 // pred_check_branch
    %10 = sbr.rel (0) target = $region5
  $region4: #{iterative_simulator_fwd.70} parent=0 // pred_region
    _
  $region5: #{iterative_simulator_fwd.70} parent=0 // pred_fallthru
    _
  // Predicated region
  $region6: #{iterative_simulator_fwd.70} parent=0 // pred_check
    _
  $region7: #{iterative_simulator_fwd.70} parent=0 // pred_check_branch
    %12 = sbr.rel (0) target = $region9
  $region8: #{iterative_simulator_fwd.70} parent=0 // pred_region
    _
  $region9: #{iterative_simulator_fwd.70} parent=0 // pred_fallthru
    _
  // Predicated region
  $region10: #{iterative_simulator_fwd.70} parent=0 // pred_check
    _
  $region11: #{iterative_simulator_fwd.70} parent=0 // pred_check_branch
    %14 = sbr.rel (0) target = $region13
  $region12: #{iterative_simulator_fwd.70} parent=0 // pred_region
    _
  $region13: #{iterative_simulator_fwd.70} parent=0 // pred_fallthru
    _
  // Predicated region
  $region14: #{iterative_simulator_fwd.70} parent=0 // pred_check
    _
  $region15: #{iterative_simulator_fwd.70} parent=0 // pred_check_branch
    %16 = sbr.rel (0) target = $region17
  $region16: #{iterative_simulator_fwd.70} parent=0 // pred_region
    _
  $region17: #{iterative_simulator_fwd.70} parent=0 // pred_fallthru
    _
  %v18 = vld [vmem:[%s0] sm:$0xf]
  %v19 = vld [vmem:[%s0 + $0x4] sm:$0xf]
  %v20 = vld [vmem:[%s0 + $0x8] sm:$0xf]
  %v21 = vld [vmem:[%s0 + $0xc] sm:$0xf]
  %v22 = vld [vmem:[%s1] sm:$0xf]
  %v23 = vld [vmem:[%s1 + $0x4] sm:$0xf]
  %v24 = vld [vmem:[%s1 + $0x8] sm:$0xf]
  %v25 = vld [vmem:[%s1 + $0xc] sm:$0xf]
  %v26 = vld [vmem:[%s2] sm:$0xf]
  %v27 = vld [vmem:[%s2 + $0x4] sm:$0xf]
  %v28 = vld [vmem:[%s2 + $0x8] sm:$0xf]
  %v29 = vld [vmem:[%s2 + $0xc] sm:$0xf]
  %vm30 = vcmask 523264
  %v32 = vsel %vm30, %v18, 0
  %v35 = vsel %vm30, %v22, 0
  %37 = vmatpush.bf16.xpose.msra.mxu0 0
  %38 = vmatpush.bf16.xpose.msra.mxu0 0
  %39 = vmatpush.bf16.xpose.msra.mxu0 0
  %40 = vmatpush.bf16.xpose.msra.mxu0 0
  %41 = vmatpush.bf16.xpose.msra.mxu0 0
  %42 = vmatpush.bf16.xpose.msra.mxu0 0
  %43 = vmatpush.bf16.xpose.msra.mxu0 0
  %44 = vmatpush.bf16.xpose.msra.mxu0 %v35
  %45 = vmatmul.bf16.gmra.mxu0 %v32
  %v46 = vpop.f32.mrf.mxu0
  %v47 = vadd.f32 0.0, %v46
  %v48 = vpop.f32.mrf.mxu0
  %49 = vdwg.mxu0
  %v51 = vsel %vm30, %v19, 0
  %v54 = vsel %vm30, %v23, 0
  %56 = vmatpush.bf16.xpose.msra.mxu0 0
  %57 = vmatpush.bf16.xpose.msra.mxu0 0
  %58 = vmatpush.bf16.xpose.msra.mxu0 0
  %59 = vmatpush.bf16.xpose.msra.mxu0 0
  %60 = vmatpush.bf16.xpose.msra.mxu0 0
  %61 = vmatpush.bf16.xpose.msra.mxu0 0
  %62 = vmatpush.bf16.xpose.msra.mxu0 0
  %63 = vmatpush.bf16.xpose.msra.mxu0 %v54
  %64 = vmatmul.bf16.gmra.mxu0 %v51
  %v65 = vpop.f32.mrf.mxu0
  %v66 = vadd.f32 0.0, %v65
  %v67 = vpop.f32.mrf.mxu0
  %68 = vdwg.mxu0
  %v70 = vsel %vm30, %v20, 0
  %v73 = vsel %vm30, %v24, 0
  %75 = vmatpush.bf16.xpose.msra.mxu0 0
  %76 = vmatpush.bf16.xpose.msra.mxu0 0
  %77 = vmatpush.bf16.xpose.msra.mxu0 0
  %78 = vmatpush.bf16.xpose.msra.mxu0 0
  %79 = vmatpush.bf16.xpose.msra.mxu0 0
  %80 = vmatpush.bf16.xpose.msra.mxu0 0
  %81 = vmatpush.bf16.xpose.msra.mxu0 0
  %82 = vmatpush.bf16.xpose.msra.mxu0 %v73
  %83 = vmatmul.bf16.gmra.mxu0 %v70
  %v84 = vpop.f32.mrf.mxu0
  %v85 = vadd.f32 0.0, %v84
  %v86 = vpop.f32.mrf.mxu0
  %87 = vdwg.mxu0
  %v89 = vsel %vm30, %v21, 0
  %v92 = vsel %vm30, %v25, 0
  %94 = vmatpush.bf16.xpose.msra.mxu0 0
  %95 = vmatpush.bf16.xpose.msra.mxu0 0
  %96 = vmatpush.bf16.xpose.msra.mxu0 0
  %97 = vmatpush.bf16.xpose.msra.mxu0 0
  %98 = vmatpush.bf16.xpose.msra.mxu0 0
  %99 = vmatpush.bf16.xpose.msra.mxu0 0
  %100 = vmatpush.bf16.xpose.msra.mxu0 0
  %101 = vmatpush.bf16.xpose.msra.mxu0 %v92
  %102 = vmatmul.bf16.gmra.mxu0 %v89
  %v103 = vpop.f32.mrf.mxu0
  %v104 = vadd.f32 0.0, %v103
  %v105 = vpop.f32.mrf.mxu0
  %106 = vdwg.mxu0
  %v107 = vmul.f32 %v47, 0.35355338
  %v108 = vmul.f32 %v66, 0.35355338
  %v109 = vmul.f32 %v85, 0.35355338
  %v110 = vmul.f32 %v104, 0.35355338
  %v111 = vld [vmem:[%s3] sm:$0xff]
  %v112 = vld [vmem:[%s3 + $0x8] sm:$0xff]
  %v113 = vld [vmem:[%s3 + $0x10] sm:$0xff]
  %v114 = vld [vmem:[%s3 + $0x18] sm:$0xff]
  %v115 = vadd.f32 %v107, %v111
  %v116 = vadd.f32 %v108, %v112
  %v117 = vadd.f32 %v109, %v113
  %v118 = vadd.f32 %v110, %v114
  %vm119 = vcmask 64512
  %v120 = vsel %vm119, %v115, -inf
  %121 = vmax.xlane.f32.xlu0 %v120
  %v122 = vpop.xlane.xlu0 %121
  %v123 = vsel %vm119, %v116, -inf
  %124 = vmax.xlane.f32.xlu0 %v123
  %v125 = vpop.xlane.xlu0 %124
  %v126 = vsel %vm119, %v117, -inf
  %127 = vmax.xlane.f32.xlu0 %v126
  %v128 = vpop.xlane.xlu0 %127
  %v129 = vsel %vm119, %v118, -inf
  %130 = vmax.xlane.f32.xlu0 %v129
  %v131 = vpop.xlane.xlu0 %130
  %v132 = vsub.f32 %v115, %v122
  %v133 = vsub.f32 %v116, %v125
  %v134 = vsub.f32 %v117, %v128
  %v135 = vsub.f32 %v118, %v131
  %v136 = vmul.f32 %v132, 1.442695
  %v137 = vpow.pop %v136
  %v138 = vmul.f32 %v133, 1.442695
  %v139 = vpow.pop %v138
  %v140 = vmul.f32 %v134, 1.442695
  %v141 = vpow.pop %v140
  %v142 = vmul.f32 %v135, 1.442695
  %v143 = vpow.pop %v142
  %v144 = vsel %vm119, %v137, 0.0
  %145 = vadd.xlane.f32.xlu0 %v144
  %v146 = vpop.xlane.xlu0 %145
  %v147 = vsel %vm119, %v139, 0.0
  %148 = vadd.xlane.f32.xlu0 %v147
  %v149 = vpop.xlane.xlu0 %148
  %v150 = vsel %vm119, %v141, 0.0
  %151 = vadd.xlane.f32.xlu0 %v150
  %v152 = vpop.xlane.xlu0 %151
  %v153 = vsel %vm119, %v143, 0.0
  %154 = vadd.xlane.f32.xlu0 %v153
  %v155 = vpop.xlane.xlu0 %154
  %v156 = vrcp.pop %v146
  %v157 = vrcp.pop %v149
  %v158 = vrcp.pop %v152
  %v159 = vrcp.pop %v155
  %v160 = vmul.f32 %v137, %v156
  %v161 = vmul.f32 %v139, %v157
  %v162 = vmul.f32 %v141, %v158
  %v163 = vmul.f32 %v143, %v159
  %v164 = vpack.c.bf16 %v160, %v160
  %v165 = vpack.c.bf16 %v161, %v161
  %v166 = vpack.c.bf16 %v162, %v162
  %v167 = vpack.c.bf16 %v163, %v163
  %v169 = vsel %vm119, %v164, 0
  %vm171 = vcmask 1043456
  %v173 = vsel %vm171, %v26, 0
  %175 = vmatpush.bf16.msra.mxu0 0
  %176 = vmatpush.bf16.msra.mxu0 0
  %177 = vmatpush.bf16.msra.mxu0 0
  %178 = vmatpush.bf16.msra.mxu0 0
  %179 = vmatpush.bf16.msra.mxu0 0
  %180 = vmatpush.bf16.msra.mxu0 0
  %181 = vmatpush.bf16.msra.mxu0 0
  %182 = vmatpush.bf16.msra.mxu0 %v173
  %183 = vmatmul.bf16.gmra.mxu0 %v169
  %v184 = vpop.f32.mrf.mxu0
  %v185 = vadd.f32 0.0, %v184
  %v186 = vpop.f32.mrf.mxu0
  %187 = vdwg.mxu0
  %v189 = vsel %vm119, %v165, 0
  %v192 = vsel %vm171, %v27, 0
  %194 = vmatpush.bf16.msra.mxu0 0
  %195 = vmatpush.bf16.msra.mxu0 0
  %196 = vmatpush.bf16.msra.mxu0 0
  %197 = vmatpush.bf16.msra.mxu0 0
  %198 = vmatpush.bf16.msra.mxu0 0
  %199 = vmatpush.bf16.msra.mxu0 0
  %200 = vmatpush.bf16.msra.mxu0 0
  %201 = vmatpush.bf16.msra.mxu0 %v192
  %202 = vmatmul.bf16.gmra.mxu0 %v189
  %v203 = vpop.f32.mrf.mxu0
  %v204 = vadd.f32 0.0, %v203
  %v205 = vpop.f32.mrf.mxu0
  %206 = vdwg.mxu0
  %v208 = vsel %vm119, %v166, 0
  %v211 = vsel %vm171, %v28, 0
  %213 = vmatpush.bf16.msra.mxu0 0
  %214 = vmatpush.bf16.msra.mxu0 0
  %215 = vmatpush.bf16.msra.mxu0 0
  %216 = vmatpush.bf16.msra.mxu0 0
  %217 = vmatpush.bf16.msra.mxu0 0
  %218 = vmatpush.bf16.msra.mxu0 0
  %219 = vmatpush.bf16.msra.mxu0 0
  %220 = vmatpush.bf16.msra.mxu0 %v211
  %221 = vmatmul.bf16.gmra.mxu0 %v208
  %v222 = vpop.f32.mrf.mxu0
  %v223 = vadd.f32 0.0, %v222
  %v224 = vpop.f32.mrf.mxu0
  %225 = vdwg.mxu0
  %v227 = vsel %vm119, %v167, 0
  %v230 = vsel %vm171, %v29, 0
  %232 = vmatpush.bf16.msra.mxu0 0
  %233 = vmatpush.bf16.msra.mxu0 0
  %234 = vmatpush.bf16.msra.mxu0 0
  %235 = vmatpush.bf16.msra.mxu0 0
  %236 = vmatpush.bf16.msra.mxu0 0
  %237 = vmatpush.bf16.msra.mxu0 0
  %238 = vmatpush.bf16.msra.mxu0 0
  %239 = vmatpush.bf16.msra.mxu0 %v230
  %240 = vmatmul.bf16.gmra.mxu0 %v227
  %v241 = vpop.f32.mrf.mxu0
  %v242 = vadd.f32 0.0, %v241
  %v243 = vpop.f32.mrf.mxu0
  %244 = vdwg.mxu0
  %245 = vst.msk [vmem:[%s4] sm:$0xff] %vm30, %v185
  %246 = vst.msk [vmem:[%s4 + $0x8] sm:$0xff] %vm30, %v204
  %247 = vst.msk [vmem:[%s4 + $0x10] sm:$0xff] %vm30, %v223
  %248 = vst.msk [vmem:[%s4 + $0x18] sm:$0xff] %vm30, %v242
  // Predicated region
  $region18: #{iterative_simulator_fwd.70} parent=0 // pred_check
    _
  $region19: #{iterative_simulator_fwd.70} parent=0 // pred_check_branch
    %250 = sbr.rel (0) target = $region21
  $region20: #{iterative_simulator_fwd.70} parent=0 // pred_region
    _
  $region21: #{iterative_simulator_fwd.70} parent=0 // pred_fallthru
    _
  // Predicated region
  $region22: #{iterative_simulator_fwd.70} parent=0 // pred_check
    _
  $region23: #{iterative_simulator_fwd.70} parent=0 // pred_check_branch
    %252 = sbr.rel (0) target = $region25
  $region24: #{iterative_simulator_fwd.70} parent=0 // pred_region
    _
  $region25: #{iterative_simulator_fwd.70} parent=0 // pred_fallthru
    _

// kernel: iterative_simulator_fwd.71
$region0: #{iterative_simulator_fwd.71}
  #allocation0 [shape = 'u32[]', space=smem, size = 0x4, offset = 0x4, fixed_abs, tag = 'smem constant byte address 0x4 - core index']
  #allocation1 [shape = 'u32[72,128]{1,0:T(1,128)}', space=vmem, size = 0x9000, scoped, tag = 'internal scratch']
  %s0 = inlined_call_operand.vmem [shape: f32[64,32], index: 0, kind: input, shape index: {}]
  %s1 = inlined_call_operand.vmem [shape: bf16[32,16], index: 1, kind: input, shape index: {}]
  %s2 = inlined_call_operand.vmem [shape: f32[1,16], index: 2, kind: input, shape index: {}]
  %s3 = inlined_call_operand.vmem [shape: f32[64,32], index: 3, kind: input, shape index: {}]
  %s4 = inlined_call_operand.vmem [shape: f32[64,16], index: 4, kind: input, shape index: {}]
  %s5 = inlined_call_operand.vmem [shape: f32[64,16], index: 5, kind: output, shape index: {}]
  %s6 = sld [smem:[#allocation0]]
  $region30: #{iterative_simulator_fwd.71} parent=0
    _
  %s8 = ssub.s32 1, %s6
  %s9 = scalar_select 0, %s8, %s6
  // Predicated region
  $region2: #{iterative_simulator_fwd.71} parent=0 // pred_check
    _
  $region3: #{iterative_simulator_fwd.71} parent=0 // pred_check_branch
    %11 = sbr.rel (0) target = $region5
  $region4: #{iterative_simulator_fwd.71} parent=0 // pred_region
    _
  $region5: #{iterative_simulator_fwd.71} parent=0 // pred_fallthru
    _
  // Predicated region
  $region6: #{iterative_simulator_fwd.71} parent=0 // pred_check
    _
  $region7: #{iterative_simulator_fwd.71} parent=0 // pred_check_branch
    %13 = sbr.rel (0) target = $region9
  $region8: #{iterative_simulator_fwd.71} parent=0 // pred_region
    _
  $region9: #{iterative_simulator_fwd.71} parent=0 // pred_fallthru
    _
  // Predicated region
  $region10: #{iterative_simulator_fwd.71} parent=0 // pred_check
    _
  $region11: #{iterative_simulator_fwd.71} parent=0 // pred_check_branch
    %15 = sbr.rel (0) target = $region13
  $region12: #{iterative_simulator_fwd.71} parent=0 // pred_region
    _
  $region13: #{iterative_simulator_fwd.71} parent=0 // pred_fallthru
    _
  // Predicated region
  $region14: #{iterative_simulator_fwd.71} parent=0 // pred_check
    _
  $region15: #{iterative_simulator_fwd.71} parent=0 // pred_check_branch
    %17 = sbr.rel (0) target = $region17
  $region16: #{iterative_simulator_fwd.71} parent=0 // pred_region
    _
  $region17: #{iterative_simulator_fwd.71} parent=0 // pred_fallthru
    _
  // Predicated region
  $region18: #{iterative_simulator_fwd.71} parent=0 // pred_check
    _
  $region19: #{iterative_simulator_fwd.71} parent=0 // pred_check_branch
    %19 = sbr.rel (0) target = $region21
  $region20: #{iterative_simulator_fwd.71} parent=0 // pred_region
    _
  $region21: #{iterative_simulator_fwd.71} parent=0 // pred_fallthru
    _
  %v21 = vld [vmem:[%s0] sm:$0xff]
  %v22 = vld [vmem:[%s0 + $0x8] sm:$0xff]
  %v23 = vld [vmem:[%s0 + $0x10] sm:$0xff]
  %v24 = vld [vmem:[%s0 + $0x18] sm:$0xff]
  %v25 = vld [vmem:[%s0 + $0x20] sm:$0xff]
  %v26 = vld [vmem:[%s0 + $0x28] sm:$0xff]
  %v27 = vld [vmem:[%s0 + $0x30] sm:$0xff]
  %v28 = vld [vmem:[%s0 + $0x38] sm:$0xff]
  %v29 = vld [vmem:[%s1] sm:$0xf]
  %v30 = vld [vmem:[%s1 + $0x4] sm:$0xf]
  %v31 = vld [vmem:[%s1 + $0x8] sm:$0xf]
  %v32 = vld [vmem:[%s1 + $0xc] sm:$0xf]
  %v33 = vld [vmem:[%s2] sm:$0x1]
  %v34 = vld [vmem:[%s3] sm:$0xff]
  %v35 = vld [vmem:[%s3 + $0x8] sm:$0xff]
  %v36 = vld [vmem:[%s3 + $0x10] sm:$0xff]
  %v37 = vld [vmem:[%s3 + $0x18] sm:$0xff]
  %v38 = vld [vmem:[%s3 + $0x20] sm:$0xff]
  %v39 = vld [vmem:[%s3 + $0x28] sm:$0xff]
  %v40 = vld [vmem:[%s3 + $0x30] sm:$0xff]
  %v41 = vld [vmem:[%s3 + $0x38] sm:$0xff]
  %v42 = vmul.f32 %v21, %v34
  %v43 = vmul.f32 %v22, %v35
  %v44 = vmul.f32 %v23, %v36
  %v45 = vmul.f32 %v24, %v37
  %v46 = vmul.f32 %v25, %v38
  %v47 = vmul.f32 %v26, %v39
  %v48 = vmul.f32 %v27, %v40
  %v49 = vmul.f32 %v28, %v41
  %v50 = vpack.c.bf16 %v43, %v42
  %v51 = vpack.c.bf16 %v45, %v44
  %v52 = vpack.c.bf16 %v47, %v46
  %v53 = vpack.c.bf16 %v49, %v48
  %v55 = vperm.slane %v33, 0
  %v61 = vunpack.c.l.b16 %v29
  %v62 = vunpack.c.l.b16 %v30
  %v63 = vunpack.c.l.b16 %v31
  %v64 = vunpack.c.l.b16 %v32
  %v65 = vpack.c.b16 %v62, %v61
  %v66 = vpack.c.b16 %v64, %v63
  %vm69 = vcmask 261120
  %v71 = vsel %vm69, %v50, 0
  %v74 = vsel %vm69, %v51, 0
  %v77 = vsel %vm69, %v52, 0
  %v80 = vsel %vm69, %v53, 0
  %82 = vmatpush.bf16.msra.mxu0 0
  %83 = vmatpush.bf16.msra.mxu0 0
  %84 = vmatpush.bf16.msra.mxu0 0
  %85 = vmatpush.bf16.msra.mxu0 0
  %86 = vmatpush.bf16.msra.mxu0 0
  %87 = vmatpush.bf16.msra.mxu0 0
  %88 = vmatpush.bf16.msra.mxu0 %v66
  %89 = vmatpush.bf16.msra.mxu0 %v65
  %90 = vmatmul.bf16.gmra.mxu0 %v71
  %v91 = vpop.f32.mrf.mxu0
  %v92 = vadd.f32 %v55, %v91
  %v93 = vpop.f32.mrf.mxu0
  %v94 = vadd.f32 %v55, %v93
  %95 = vmatmul.bf16.gmra.mxu0 %v74
  %v96 = vpop.f32.mrf.mxu0
  %v97 = vadd.f32 %v55, %v96
  %v98 = vpop.f32.mrf.mxu0
  %v99 = vadd.f32 %v55, %v98
  %100 = vmatmul.bf16.gmra.mxu0 %v77
  %v101 = vpop.f32.mrf.mxu0
  %v102 = vadd.f32 %v55, %v101
  %v103 = vpop.f32.mrf.mxu0
  %v104 = vadd.f32 %v55, %v103
  %105 = vmatmul.bf16.gmra.mxu0 %v80
  %v106 = vpop.f32.mrf.mxu0
  %v107 = vadd.f32 %v55, %v106
  %v108 = vpop.f32.mrf.mxu0
  %v109 = vadd.f32 %v55, %v108
  %110 = vdwg.mxu0
  %v111 = vld [vmem:[%s4] sm:$0xff]
  %v112 = vld [vmem:[%s4 + $0x8] sm:$0xff]
  %v113 = vld [vmem:[%s4 + $0x10] sm:$0xff]
  %v114 = vld [vmem:[%s4 + $0x18] sm:$0xff]
  %v115 = vld [vmem:[%s4 + $0x20] sm:$0xff]
  %v116 = vld [vmem:[%s4 + $0x28] sm:$0xff]
  %v117 = vld [vmem:[%s4 + $0x30] sm:$0xff]
  %v118 = vld [vmem:[%s4 + $0x38] sm:$0xff]
  %v119 = vadd.f32 %v92, %v111
  %v120 = vadd.f32 %v94, %v112
  %v121 = vadd.f32 %v97, %v113
  %v122 = vadd.f32 %v99, %v114
  %v123 = vadd.f32 %v102, %v115
  %v124 = vadd.f32 %v104, %v116
  %v125 = vadd.f32 %v107, %v117
  %v126 = vadd.f32 %v109, %v118
  %vm127 = vcmask 130048
  %128 = vst.msk [vmem:[%s5] sm:$0xff] %vm127, %v119
  %129 = vst.msk [vmem:[%s5 + $0x8] sm:$0xff] %vm127, %v120
  %130 = vst.msk [vmem:[%s5 + $0x10] sm:$0xff] %vm127, %v121
  %131 = vst.msk [vmem:[%s5 + $0x18] sm:$0xff] %vm127, %v122
  %132 = vst.msk [vmem:[%s5 + $0x20] sm:$0xff] %vm127, %v123
  %133 = vst.msk [vmem:[%s5 + $0x28] sm:$0xff] %vm127, %v124
  %134 = vst.msk [vmem:[%s5 + $0x30] sm:$0xff] %vm127, %v125
  %135 = vst.msk [vmem:[%s5 + $0x38] sm:$0xff] %vm127, %v126
  // Predicated region
  $region22: #{iterative_simulator_fwd.71} parent=0 // pred_check
    _
  $region23: #{iterative_simulator_fwd.71} parent=0 // pred_check_branch
    %137 = sbr.rel (0) target = $region25
  $region24: #{iterative_simulator_fwd.71} parent=0 // pred_region
    _
  $region25: #{iterative_simulator_fwd.71} parent=0 // pred_fallthru
    _
  // Predicated region
  $region26: #{iterative_simulator_fwd.71} parent=0 // pred_check
    _
  $region27: #{iterative_simulator_fwd.71} parent=0 // pred_check_branch
    %139 = sbr.rel (0) target = $region29
  $region28: #{iterative_simulator_fwd.71} parent=0 // pred_region
    _
  $region29: #{iterative_simulator_fwd.71} parent=0 // pred_fallthru
    _

// kernel: iterative_simulator_fwd.72
$region0: #{iterative_simulator_fwd.72}
  #allocation0 [shape = 'u32[]', space=smem, size = 0x4, offset = 0x4, fixed_abs, tag = 'smem constant byte address 0x4 - core index']
  #allocation1 [shape = 'u32[72,128]{1,0:T(1,128)}', space=vmem, size = 0x9000, scoped, tag = 'internal scratch']
  %s0 = inlined_call_operand.vmem [shape: f32[64,16], index: 0, kind: input, shape index: {}]
  %s1 = inlined_call_operand.vmem [shape: f32[1,16], index: 1, kind: input, shape index: {}]
  %s2 = inlined_call_operand.vmem [shape: f32[1,16], index: 2, kind: input, shape index: {}]
  %s3 = inlined_call_operand.vmem [shape: bf16[16,80], index: 3, kind: input, shape index: {}]
  %s4 = inlined_call_operand.vmem [shape: f32[1,80], index: 4, kind: input, shape index: {}]
  %s5 = inlined_call_operand.vmem [shape: f32[64,80], index: 5, kind: output, shape index: {}]
  %s6 = sld [smem:[#allocation0]]
  $region30: #{iterative_simulator_fwd.72} parent=0
    _
  %s8 = ssub.s32 1, %s6
  %s9 = scalar_select 0, %s8, %s6
  // Predicated region
  $region2: #{iterative_simulator_fwd.72} parent=0 // pred_check
    _
  $region3: #{iterative_simulator_fwd.72} parent=0 // pred_check_branch
    %11 = sbr.rel (0) target = $region5
  $region4: #{iterative_simulator_fwd.72} parent=0 // pred_region
    _
  $region5: #{iterative_simulator_fwd.72} parent=0 // pred_fallthru
    _
  // Predicated region
  $region6: #{iterative_simulator_fwd.72} parent=0 // pred_check
    _
  $region7: #{iterative_simulator_fwd.72} parent=0 // pred_check_branch
    %13 = sbr.rel (0) target = $region9
  $region8: #{iterative_simulator_fwd.72} parent=0 // pred_region
    _
  $region9: #{iterative_simulator_fwd.72} parent=0 // pred_fallthru
    _
  // Predicated region
  $region10: #{iterative_simulator_fwd.72} parent=0 // pred_check
    _
  $region11: #{iterative_simulator_fwd.72} parent=0 // pred_check_branch
    %15 = sbr.rel (0) target = $region13
  $region12: #{iterative_simulator_fwd.72} parent=0 // pred_region
    _
  $region13: #{iterative_simulator_fwd.72} parent=0 // pred_fallthru
    _
  // Predicated region
  $region14: #{iterative_simulator_fwd.72} parent=0 // pred_check
    _
  $region15: #{iterative_simulator_fwd.72} parent=0 // pred_check_branch
    %17 = sbr.rel (0) target = $region17
  $region16: #{iterative_simulator_fwd.72} parent=0 // pred_region
    _
  $region17: #{iterative_simulator_fwd.72} parent=0 // pred_fallthru
    _
  // Predicated region
  $region18: #{iterative_simulator_fwd.72} parent=0 // pred_check
    _
  $region19: #{iterative_simulator_fwd.72} parent=0 // pred_check_branch
    %19 = sbr.rel (0) target = $region21
  $region20: #{iterative_simulator_fwd.72} parent=0 // pred_region
    _
  $region21: #{iterative_simulator_fwd.72} parent=0 // pred_fallthru
    _
  %v21 = vld [vmem:[%s0] sm:$0xff]
  %v22 = vld [vmem:[%s0 + $0x8] sm:$0xff]
  %v23 = vld [vmem:[%s0 + $0x10] sm:$0xff]
  %v24 = vld [vmem:[%s0 + $0x18] sm:$0xff]
  %v25 = vld [vmem:[%s0 + $0x20] sm:$0xff]
  %v26 = vld [vmem:[%s0 + $0x28] sm:$0xff]
  %v27 = vld [vmem:[%s0 + $0x30] sm:$0xff]
  %v28 = vld [vmem:[%s0 + $0x38] sm:$0xff]
  %v29 = vld [vmem:[%s1] sm:$0x1]
  %v30 = vld [vmem:[%s2] sm:$0x1]
  %vm31 = vcmask 130048
  %v32 = vsel %vm31, %v21, 0.0
  %33 = vadd.xlane.f32.xlu0 %v32
  %v34 = vpop.xlane.xlu0 %33
  %v35 = vsel %vm31, %v22, 0.0
  %36 = vadd.xlane.f32.xlu0 %v35
  %v37 = vpop.xlane.xlu0 %36
  %v38 = vsel %vm31, %v23, 0.0
  %39 = vadd.xlane.f32.xlu0 %v38
  %v40 = vpop.xlane.xlu0 %39
  %v41 = vsel %vm31, %v24, 0.0
  %42 = vadd.xlane.f32.xlu0 %v41
  %v43 = vpop.xlane.xlu0 %42
  %v44 = vsel %vm31, %v25, 0.0
  %45 = vadd.xlane.f32.xlu0 %v44
  %v46 = vpop.xlane.xlu0 %45
  %v47 = vsel %vm31, %v26, 0.0
  %48 = vadd.xlane.f32.xlu0 %v47
  %v49 = vpop.xlane.xlu0 %48
  %v50 = vsel %vm31, %v27, 0.0
  %51 = vadd.xlane.f32.xlu0 %v50
  %v52 = vpop.xlane.xlu0 %51
  %v53 = vsel %vm31, %v28, 0.0
  %54 = vadd.xlane.f32.xlu0 %v53
  %v55 = vpop.xlane.xlu0 %54
  %v56 = vrcp.pop 16.0
  %v57 = vmul.f32 16.0, %v56
  %v58 = vsub.f32 1.0, %v57
  %v59 = vmul.f32 %v56, %v58
  %v60 = vadd.f32 %v56, %v59
  %vm61 = vweird.f32 %v56
  %v62 = vsel %vm61, %v56, %v60
  %v63 = vmul.f32 %v34, %v62
  %v64 = vmul.f32 %v37, %v62
  %v65 = vmul.f32 %v40, %v62
  %v66 = vmul.f32 %v43, %v62
  %v67 = vmul.f32 %v46, %v62
  %v68 = vmul.f32 %v49, %v62
  %v69 = vmul.f32 %v52, %v62
  %v70 = vmul.f32 %v55, %v62
  %v71 = vsub.f32 %v21, %v63
  %v72 = vsub.f32 %v22, %v64
  %v73 = vsub.f32 %v23, %v65
  %v74 = vsub.f32 %v24, %v66
  %v75 = vsub.f32 %v25, %v67
  %v76 = vsub.f32 %v26, %v68
  %v77 = vsub.f32 %v27, %v69
  %v78 = vsub.f32 %v28, %v70
  %v79 = vmul.f32 %v71, %v71
  %v80 = vmul.f32 %v72, %v72
  %v81 = vmul.f32 %v73, %v73
  %v82 = vmul.f32 %v74, %v74
  %v83 = vmul.f32 %v75, %v75
  %v84 = vmul.f32 %v76, %v76
  %v85 = vmul.f32 %v77, %v77
  %v86 = vmul.f32 %v78, %v78
  %v87 = vsel %vm31, %v79, 0.0
  %88 = vadd.xlane.f32.xlu0 %v87
  %v89 = vpop.xlane.xlu0 %88
  %v90 = vsel %vm31, %v80, 0.0
  %91 = vadd.xlane.f32.xlu0 %v90
  %v92 = vpop.xlane.xlu0 %91
  %v93 = vsel %vm31, %v81, 0.0
  %94 = vadd.xlane.f32.xlu0 %v93
  %v95 = vpop.xlane.xlu0 %94
  %v96 = vsel %vm31, %v82, 0.0
  %97 = vadd.xlane.f32.xlu0 %v96
  %v98 = vpop.xlane.xlu0 %97
  %v99 = vsel %vm31, %v83, 0.0
  %100 = vadd.xlane.f32.xlu0 %v99
  %v101 = vpop.xlane.xlu0 %100
  %v102 = vsel %vm31, %v84, 0.0
  %103 = vadd.xlane.f32.xlu0 %v102
  %v104 = vpop.xlane.xlu0 %103
  %v105 = vsel %vm31, %v85, 0.0
  %106 = vadd.xlane.f32.xlu0 %v105
  %v107 = vpop.xlane.xlu0 %106
  %v108 = vsel %vm31, %v86, 0.0
  %109 = vadd.xlane.f32.xlu0 %v108
  %v110 = vpop.xlane.xlu0 %109
  %v111 = vmul.f32 %v89, %v62
  %v112 = vmul.f32 %v92, %v62
  %v113 = vmul.f32 %v95, %v62
  %v114 = vmul.f32 %v98, %v62
  %v115 = vmul.f32 %v101, %v62
  %v116 = vmul.f32 %v104, %v62
  %v117 = vmul.f32 %v107, %v62
  %v118 = vmul.f32 %v110, %v62
  %v119 = vadd.f32 %v111, 1e-05
  %v120 = vadd.f32 %v112, 1e-05
  %v121 = vadd.f32 %v113, 1e-05
  %v122 = vadd.f32 %v114, 1e-05
  %v123 = vadd.f32 %v115, 1e-05
  %v124 = vadd.f32 %v116, 1e-05
  %v125 = vadd.f32 %v117, 1e-05
  %v126 = vadd.f32 %v118, 1e-05
  %v127 = vrsqrt.pop %v119
  %v128 = vmul.f32 %v127, %v119
  %v129 = vmul.f32 %v128, %v127
  %v130 = vmul.f32 0.5, %v129
  %v131 = vsub.f32 1.5, %v130
  %v132 = vmul.f32 %v127, %v131
  %vm133 = vweird.f32 %v119
  %vm134 = vweird.f32 %v127
  %vm135 = vmor %vm133, %vm134
  %v136 = vsel %vm135, %v127, %v132
  %v137 = vrsqrt.pop %v120
  %v138 = vmul.f32 %v137, %v120
  %v139 = vmul.f32 %v138, %v137
  %v140 = vmul.f32 0.5, %v139
  %v141 = vsub.f32 1.5, %v140
  %v142 = vmul.f32 %v137, %v141
  %vm143 = vweird.f32 %v120
  %vm144 = vweird.f32 %v137
  %vm145 = vmor %vm143, %vm144
  %v146 = vsel %vm145, %v137, %v142
  %v147 = vrsqrt.pop %v121
  %v148 = vmul.f32 %v147, %v121
  %v149 = vmul.f32 %v148, %v147
  %v150 = vmul.f32 0.5, %v149
  %v151 = vsub.f32 1.5, %v150
  %v152 = vmul.f32 %v147, %v151
  %vm153 = vweird.f32 %v121
  %vm154 = vweird.f32 %v147
  %vm155 = vmor %vm153, %vm154
  %v156 = vsel %vm155, %v147, %v152
  %v157 = vrsqrt.pop %v122
  %v158 = vmul.f32 %v157, %v122
  %v159 = vmul.f32 %v158, %v157
  %v160 = vmul.f32 0.5, %v159
  %v161 = vsub.f32 1.5, %v160
  %v162 = vmul.f32 %v157, %v161
  %vm163 = vweird.f32 %v122
  %vm164 = vweird.f32 %v157
  %vm165 = vmor %vm163, %vm164
  %v166 = vsel %vm165, %v157, %v162
  %v167 = vrsqrt.pop %v123
  %v168 = vmul.f32 %v167, %v123
  %v169 = vmul.f32 %v168, %v167
  %v170 = vmul.f32 0.5, %v169
  %v171 = vsub.f32 1.5, %v170
  %v172 = vmul.f32 %v167, %v171
  %vm173 = vweird.f32 %v123
  %vm174 = vweird.f32 %v167
  %vm175 = vmor %vm173, %vm174
  %v176 = vsel %vm175, %v167, %v172
  %v177 = vrsqrt.pop %v124
  %v178 = vmul.f32 %v177, %v124
  %v179 = vmul.f32 %v178, %v177
  %v180 = vmul.f32 0.5, %v179
  %v181 = vsub.f32 1.5, %v180
  %v182 = vmul.f32 %v177, %v181
  %vm183 = vweird.f32 %v124
  %vm184 = vweird.f32 %v177
  %vm185 = vmor %vm183, %vm184
  %v186 = vsel %vm185, %v177, %v182
  %v187 = vrsqrt.pop %v125
  %v188 = vmul.f32 %v187, %v125
  %v189 = vmul.f32 %v188, %v187
  %v190 = vmul.f32 0.5, %v189
  %v191 = vsub.f32 1.5, %v190
  %v192 = vmul.f32 %v187, %v191
  %vm193 = vweird.f32 %v125
  %vm194 = vweird.f32 %v187
  %vm195 = vmor %vm193, %vm194
  %v196 = vsel %vm195, %v187, %v192
  %v197 = vrsqrt.pop %v126
  %v198 = vmul.f32 %v197, %v126
  %v199 = vmul.f32 %v198, %v197
  %v200 = vmul.f32 0.5, %v199
  %v201 = vsub.f32 1.5, %v200
  %v202 = vmul.f32 %v197, %v201
  %vm203 = vweird.f32 %v126
  %vm204 = vweird.f32 %v197
  %vm205 = vmor %vm203, %vm204
  %v206 = vsel %vm205, %v197, %v202
  %v207 = vmul.f32 %v71, %v136
  %v208 = vmul.f32 %v72, %v146
  %v209 = vmul.f32 %v73, %v156
  %v210 = vmul.f32 %v74, %v166
  %v211 = vmul.f32 %v75, %v176
  %v212 = vmul.f32 %v76, %v186
  %v213 = vmul.f32 %v77, %v196
  %v214 = vmul.f32 %v78, %v206
  %v216 = vperm.slane %v29, 0
  %v218 = vmul.f32 %v207, %v216
  %v219 = vmul.f32 %v208, %v216
  %v220 = vmul.f32 %v209, %v216
  %v221 = vmul.f32 %v210, %v216
  %v222 = vmul.f32 %v211, %v216
  %v223 = vmul.f32 %v212, %v216
  %v224 = vmul.f32 %v213, %v216
  %v225 = vmul.f32 %v214, %v216
  %v227 = vperm.slane %v30, 0
  %v229 = vadd.f32 %v218, %v227
  %v230 = vadd.f32 %v219, %v227
  %v231 = vadd.f32 %v220, %v227
  %v232 = vadd.f32 %v221, %v227
  %v233 = vadd.f32 %v222, %v227
  %v234 = vadd.f32 %v223, %v227
  %v235 = vadd.f32 %v224, %v227
  %v236 = vadd.f32 %v225, %v227
  %v237 = vld [vmem:[%s3] sm:$0xf]
  %v238 = vld [vmem:[%s3 + $0x4] sm:$0xf]
  %v239 = vld [vmem:[%s4] sm:$0x1]
  %v240 = vpack.c.bf16 %v230, %v229
  %v241 = vpack.c.bf16 %v232, %v231
  %v242 = vpack.c.bf16 %v234, %v233
  %v243 = vpack.c.bf16 %v236, %v235
  %v245 = vperm.slane %v239, 0
  %v249 = vunpack.c.l.b16 %v237
  %v250 = vunpack.c.l.b16 %v238
  %v251 = vpack.c.b16 %v250, %v249
  %v254 = vsel %vm31, %v240, 0
  %v257 = vsel %vm31, %v241, 0
  %v260 = vsel %vm31, %v242, 0
  %v263 = vsel %vm31, %v243, 0
  %265 = vmatpush.bf16.msra.mxu0 0
  %266 = vmatpush.bf16.msra.mxu0 0
  %267 = vmatpush.bf16.msra.mxu0 0
  %268 = vmatpush.bf16.msra.mxu0 0
  %269 = vmatpush.bf16.msra.mxu0 0
  %270 = vmatpush.bf16.msra.mxu0 0
  %271 = vmatpush.bf16.msra.mxu0 0
  %272 = vmatpush.bf16.msra.mxu0 %v251
  %273 = vmatmul.bf16.gmra.mxu0 %v254
  %v274 = vpop.f32.mrf.mxu0
  %v275 = vadd.f32 %v245, %v274
  %v276 = vpop.f32.mrf.mxu0
  %v277 = vadd.f32 %v245, %v276
  %278 = vmatmul.bf16.gmra.mxu0 %v257
  %v279 = vpop.f32.mrf.mxu0
  %v280 = vadd.f32 %v245, %v279
  %v281 = vpop.f32.mrf.mxu0
  %v282 = vadd.f32 %v245, %v281
  %283 = vmatmul.bf16.gmra.mxu0 %v260
  %v284 = vpop.f32.mrf.mxu0
  %v285 = vadd.f32 %v245, %v284
  %v286 = vpop.f32.mrf.mxu0
  %v287 = vadd.f32 %v245, %v286
  %288 = vmatmul.bf16.gmra.mxu0 %v263
  %v289 = vpop.f32.mrf.mxu0
  %v290 = vadd.f32 %v245, %v289
  %v291 = vpop.f32.mrf.mxu0
  %v292 = vadd.f32 %v245, %v291
  %293 = vdwg.mxu0
  %v294 = vlaneseq
  %v295 = vand.u32 %v294, 127
  %vm296 = vcmp.ge.s32.totalorder %v295, 48
  %v297 = vxor.u32 %v275, 2147483648
  %v298 = vxor.u32 %v277, 2147483648
  %v299 = vxor.u32 %v280, 2147483648
  %v300 = vxor.u32 %v282, 2147483648
  %v301 = vxor.u32 %v285, 2147483648
  %v302 = vxor.u32 %v287, 2147483648
  %v303 = vxor.u32 %v290, 2147483648
  %v304 = vxor.u32 %v292, 2147483648
  %v305 = vmul.f32 %v297, 1.442695
  %v306 = vpow.pop %v305
  %v307 = vmul.f32 %v298, 1.442695
  %v308 = vpow.pop %v307
  %v309 = vmul.f32 %v299, 1.442695
  %v310 = vpow.pop %v309
  %v311 = vmul.f32 %v300, 1.442695
  %v312 = vpow.pop %v311
  %v313 = vmul.f32 %v301, 1.442695
  %v314 = vpow.pop %v313
  %v315 = vmul.f32 %v302, 1.442695
  %v316 = vpow.pop %v315
  %v317 = vmul.f32 %v303, 1.442695
  %v318 = vpow.pop %v317
  %v319 = vmul.f32 %v304, 1.442695
  %v320 = vpow.pop %v319
  %v321 = vadd.f32 %v306, 1.0
  %v322 = vadd.f32 %v308, 1.0
  %v323 = vadd.f32 %v310, 1.0
  %v324 = vadd.f32 %v312, 1.0
  %v325 = vadd.f32 %v314, 1.0
  %v326 = vadd.f32 %v316, 1.0
  %v327 = vadd.f32 %v318, 1.0
  %v328 = vadd.f32 %v320, 1.0
  %v329 = vrcp.pop %v321
  %v330 = vmul.f32 %v321, %v329
  %v331 = vsub.f32 1.0, %v330
  %v332 = vmul.f32 %v329, %v331
  %v333 = vadd.f32 %v329, %v332
  %vm334 = vweird.f32 %v321
  %vm335 = vweird.f32 %v329
  %vm336 = vmor %vm334, %vm335
  %v337 = vsel %vm336, %v329, %v333
  %v338 = vand.u32 2147483647, %v321
  %vm339 = vcmp.eq.f32.partialorder %v338, 8.507059e+37
  %v340 = vand.u32 %v321, 2147483648
  %v341 = vor.u32 1.1754944e-38, %v340
  %v342 = vsel %vm339, %v341, %v337
  %v343 = vmul.f32 1.0, %v342
  %v344 = vrcp.pop %v322
  %v345 = vmul.f32 %v322, %v344
  %v346 = vsub.f32 1.0, %v345
  %v347 = vmul.f32 %v344, %v346
  %v348 = vadd.f32 %v344, %v347
  %vm349 = vweird.f32 %v322
  %vm350 = vweird.f32 %v344
  %vm351 = vmor %vm349, %vm350
  %v352 = vsel %vm351, %v344, %v348
  %v353 = vand.u32 2147483647, %v322
  %vm354 = vcmp.eq.f32.partialorder %v353, 8.507059e+37
  %v355 = vand.u32 %v322, 2147483648
  %v356 = vor.u32 1.1754944e-38, %v355
  %v357 = vsel %vm354, %v356, %v352
  %v358 = vmul.f32 1.0, %v357
  %v359 = vrcp.pop %v323
  %v360 = vmul.f32 %v323, %v359
  %v361 = vsub.f32 1.0, %v360
  %v362 = vmul.f32 %v359, %v361
  %v363 = vadd.f32 %v359, %v362
  %vm364 = vweird.f32 %v323
  %vm365 = vweird.f32 %v359
  %vm366 = vmor %vm364, %vm365
  %v367 = vsel %vm366, %v359, %v363
  %v368 = vand.u32 2147483647, %v323
  %vm369 = vcmp.eq.f32.partialorder %v368, 8.507059e+37
  %v370 = vand.u32 %v323, 2147483648
  %v371 = vor.u32 1.1754944e-38, %v370
  %v372 = vsel %vm369, %v371, %v367
  %v373 = vmul.f32 1.0, %v372
  %v374 = vrcp.pop %v324
  %v375 = vmul.f32 %v324, %v374
  %v376 = vsub.f32 1.0, %v375
  %v377 = vmul.f32 %v374, %v376
  %v378 = vadd.f32 %v374, %v377
  %vm379 = vweird.f32 %v324
  %vm380 = vweird.f32 %v374
  %vm381 = vmor %vm379, %vm380
  %v382 = vsel %vm381, %v374, %v378
  %v383 = vand.u32 2147483647, %v324
  %vm384 = vcmp.eq.f32.partialorder %v383, 8.507059e+37
  %v385 = vand.u32 %v324, 2147483648
  %v386 = vor.u32 1.1754944e-38, %v385
  %v387 = vsel %vm384, %v386, %v382
  %v388 = vmul.f32 1.0, %v387
  %v389 = vrcp.pop %v325
  %v390 = vmul.f32 %v325, %v389
  %v391 = vsub.f32 1.0, %v390
  %v392 = vmul.f32 %v389, %v391
  %v393 = vadd.f32 %v389, %v392
  %vm394 = vweird.f32 %v325
  %vm395 = vweird.f32 %v389
  %vm396 = vmor %vm394, %vm395
  %v397 = vsel %vm396, %v389, %v393
  %v398 = vand.u32 2147483647, %v325
  %vm399 = vcmp.eq.f32.partialorder %v398, 8.507059e+37
  %v400 = vand.u32 %v325, 2147483648
  %v401 = vor.u32 1.1754944e-38, %v400
  %v402 = vsel %vm399, %v401, %v397
  %v403 = vmul.f32 1.0, %v402
  %v404 = vrcp.pop %v326
  %v405 = vmul.f32 %v326, %v404
  %v406 = vsub.f32 1.0, %v405
  %v407 = vmul.f32 %v404, %v406
  %v408 = vadd.f32 %v404, %v407
  %vm409 = vweird.f32 %v326
  %vm410 = vweird.f32 %v404
  %vm411 = vmor %vm409, %vm410
  %v412 = vsel %vm411, %v404, %v408
  %v413 = vand.u32 2147483647, %v326
  %vm414 = vcmp.eq.f32.partialorder %v413, 8.507059e+37
  %v415 = vand.u32 %v326, 2147483648
  %v416 = vor.u32 1.1754944e-38, %v415
  %v417 = vsel %vm414, %v416, %v412
  %v418 = vmul.f32 1.0, %v417
  %v419 = vrcp.pop %v327
  %v420 = vmul.f32 %v327, %v419
  %v421 = vsub.f32 1.0, %v420
  %v422 = vmul.f32 %v419, %v421
  %v423 = vadd.f32 %v419, %v422
  %vm424 = vweird.f32 %v327
  %vm425 = vweird.f32 %v419
  %vm426 = vmor %vm424, %vm425
  %v427 = vsel %vm426, %v419, %v423
  %v428 = vand.u32 2147483647, %v327
  %vm429 = vcmp.eq.f32.partialorder %v428, 8.507059e+37
  %v430 = vand.u32 %v327, 2147483648
  %v431 = vor.u32 1.1754944e-38, %v430
  %v432 = vsel %vm429, %v431, %v427
  %v433 = vmul.f32 1.0, %v432
  %v434 = vrcp.pop %v328
  %v435 = vmul.f32 %v328, %v434
  %v436 = vsub.f32 1.0, %v435
  %v437 = vmul.f32 %v434, %v436
  %v438 = vadd.f32 %v434, %v437
  %vm439 = vweird.f32 %v328
  %vm440 = vweird.f32 %v434
  %vm441 = vmor %vm439, %vm440
  %v442 = vsel %vm441, %v434, %v438
  %v443 = vand.u32 2147483647, %v328
  %vm444 = vcmp.eq.f32.partialorder %v443, 8.507059e+37
  %v445 = vand.u32 %v328, 2147483648
  %v446 = vor.u32 1.1754944e-38, %v445
  %v447 = vsel %vm444, %v446, %v442
  %v448 = vmul.f32 1.0, %v447
  %v449 = vsel %vm296, %v343, %v275
  %v450 = vsel %vm296, %v358, %v277
  %v451 = vsel %vm296, %v373, %v280
  %v452 = vsel %vm296, %v388, %v282
  %v453 = vsel %vm296, %v403, %v285
  %v454 = vsel %vm296, %v418, %v287
  %v455 = vsel %vm296, %v433, %v290
  %v456 = vsel %vm296, %v448, %v292
  %vm457 = vcmask 654336
  %458 = vst.msk [vmem:[%s5] sm:$0xff] %vm457, %v449
  %459 = vst.msk [vmem:[%s5 + $0x8] sm:$0xff] %vm457, %v450
  %460 = vst.msk [vmem:[%s5 + $0x10] sm:$0xff] %vm457, %v451
  %461 = vst.msk [vmem:[%s5 + $0x18] sm:$0xff] %vm457, %v452
  %462 = vst.msk [vmem:[%s5 + $0x20] sm:$0xff] %vm457, %v453
  %463 = vst.msk [vmem:[%s5 + $0x28] sm:$0xff] %vm457, %v454
  %464 = vst.msk [vmem:[%s5 + $0x30] sm:$0xff] %vm457, %v455
  %465 = vst.msk [vmem:[%s5 + $0x38] sm:$0xff] %vm457, %v456
  // Predicated region
  $region22: #{iterative_simulator_fwd.72} parent=0 // pred_check
    _
  $region23: #{iterative_simulator_fwd.72} parent=0 // pred_check_branch
    %467 = sbr.rel (0) target = $region25
  $region24: #{iterative_simulator_fwd.72} parent=0 // pred_region
    _
  $region25: #{iterative_simulator_fwd.72} parent=0 // pred_fallthru
    _
  // Predicated region
  $region26: #{iterative_simulator_fwd.72} parent=0 // pred_check
    _
  $region27: #{iterative_simulator_fwd.72} parent=0 // pred_check_branch
    %469 = sbr.rel (0) target = $region29
  $region28: #{iterative_simulator_fwd.72} parent=0 // pred_region
    _
  $region29: #{iterative_simulator_fwd.72} parent=0 // pred_fallthru
    _

// kernel: iterative_simulator_fwd.74
$region0: #{iterative_simulator_fwd.74}
  #allocation0 [shape = 'u32[]', space=smem, size = 0x4, offset = 0x4, fixed_abs, tag = 'smem constant byte address 0x4 - core index']
  #allocation1 [shape = 'u32[72,128]{1,0:T(1,128)}', space=vmem, size = 0x9000, scoped, tag = 'internal scratch']
  %s0 = inlined_call_operand.vmem [shape: f32[64,32], index: 0, kind: input, shape index: {}]
  %s1 = inlined_call_operand.vmem [shape: bf16[32,16], index: 1, kind: input, shape index: {}]
  %s2 = inlined_call_operand.vmem [shape: f32[1,16], index: 2, kind: input, shape index: {}]
  %s3 = inlined_call_operand.vmem [shape: f32[64,16], index: 3, kind: input, shape index: {}]
  %s4 = inlined_call_operand.vmem [shape: f32[64,16], index: 4, kind: output, shape index: {}]
  %s5 = sld [smem:[#allocation0]]
  $region26: #{iterative_simulator_fwd.74} parent=0
    _
  %s7 = ssub.s32 1, %s5
  %s8 = scalar_select 0, %s7, %s5
  // Predicated region
  $region2: #{iterative_simulator_fwd.74} parent=0 // pred_check
    _
  $region3: #{iterative_simulator_fwd.74} parent=0 // pred_check_branch
    %10 = sbr.rel (0) target = $region5
  $region4: #{iterative_simulator_fwd.74} parent=0 // pred_region
    _
  $region5: #{iterative_simulator_fwd.74} parent=0 // pred_fallthru
    _
  // Predicated region
  $region6: #{iterative_simulator_fwd.74} parent=0 // pred_check
    _
  $region7: #{iterative_simulator_fwd.74} parent=0 // pred_check_branch
    %12 = sbr.rel (0) target = $region9
  $region8: #{iterative_simulator_fwd.74} parent=0 // pred_region
    _
  $region9: #{iterative_simulator_fwd.74} parent=0 // pred_fallthru
    _
  // Predicated region
  $region10: #{iterative_simulator_fwd.74} parent=0 // pred_check
    _
  $region11: #{iterative_simulator_fwd.74} parent=0 // pred_check_branch
    %14 = sbr.rel (0) target = $region13
  $region12: #{iterative_simulator_fwd.74} parent=0 // pred_region
    _
  $region13: #{iterative_simulator_fwd.74} parent=0 // pred_fallthru
    _
  // Predicated region
  $region14: #{iterative_simulator_fwd.74} parent=0 // pred_check
    _
  $region15: #{iterative_simulator_fwd.74} parent=0 // pred_check_branch
    %16 = sbr.rel (0) target = $region17
  $region16: #{iterative_simulator_fwd.74} parent=0 // pred_region
    _
  $region17: #{iterative_simulator_fwd.74} parent=0 // pred_fallthru
    _
  %v18 = vld [vmem:[%s0] sm:$0xff]
  %v19 = vld [vmem:[%s0 + $0x8] sm:$0xff]
  %v20 = vld [vmem:[%s0 + $0x10] sm:$0xff]
  %v21 = vld [vmem:[%s0 + $0x18] sm:$0xff]
  %v22 = vld [vmem:[%s0 + $0x20] sm:$0xff]
  %v23 = vld [vmem:[%s0 + $0x28] sm:$0xff]
  %v24 = vld [vmem:[%s0 + $0x30] sm:$0xff]
  %v25 = vld [vmem:[%s0 + $0x38] sm:$0xff]
  %v26 = vld [vmem:[%s1] sm:$0xf]
  %v27 = vld [vmem:[%s1 + $0x4] sm:$0xf]
  %v28 = vld [vmem:[%s1 + $0x8] sm:$0xf]
  %v29 = vld [vmem:[%s1 + $0xc] sm:$0xf]
  %v30 = vld [vmem:[%s2] sm:$0x1]
  %v31 = vpack.c.bf16 %v19, %v18
  %v32 = vpack.c.bf16 %v21, %v20
  %v33 = vpack.c.bf16 %v23, %v22
  %v34 = vpack.c.bf16 %v25, %v24
  %v36 = vperm.slane %v30, 0
  %v42 = vunpack.c.l.b16 %v26
  %v43 = vunpack.c.l.b16 %v27
  %v44 = vunpack.c.l.b16 %v28
  %v45 = vunpack.c.l.b16 %v29
  %v46 = vpack.c.b16 %v43, %v42
  %v47 = vpack.c.b16 %v45, %v44
  %vm50 = vcmask 261120
  %v52 = vsel %vm50, %v31, 0
  %v55 = vsel %vm50, %v32, 0
  %v58 = vsel %vm50, %v33, 0
  %v61 = vsel %vm50, %v34, 0
  %63 = vmatpush.bf16.msra.mxu0 0
  %64 = vmatpush.bf16.msra.mxu0 0
  %65 = vmatpush.bf16.msra.mxu0 0
  %66 = vmatpush.bf16.msra.mxu0 0
  %67 = vmatpush.bf16.msra.mxu0 0
  %68 = vmatpush.bf16.msra.mxu0 0
  %69 = vmatpush.bf16.msra.mxu0 %v47
  %70 = vmatpush.bf16.msra.mxu0 %v46
  %71 = vmatmul.bf16.gmra.mxu0 %v52
  %v72 = vpop.f32.mrf.mxu0
  %v73 = vadd.f32 %v36, %v72
  %v74 = vpop.f32.mrf.mxu0
  %v75 = vadd.f32 %v36, %v74
  %76 = vmatmul.bf16.gmra.mxu0 %v55
  %v77 = vpop.f32.mrf.mxu0
  %v78 = vadd.f32 %v36, %v77
  %v79 = vpop.f32.mrf.mxu0
  %v80 = vadd.f32 %v36, %v79
  %81 = vmatmul.bf16.gmra.mxu0 %v58
  %v82 = vpop.f32.mrf.mxu0
  %v83 = vadd.f32 %v36, %v82
  %v84 = vpop.f32.mrf.mxu0
  %v85 = vadd.f32 %v36, %v84
  %86 = vmatmul.bf16.gmra.mxu0 %v61
  %v87 = vpop.f32.mrf.mxu0
  %v88 = vadd.f32 %v36, %v87
  %v89 = vpop.f32.mrf.mxu0
  %v90 = vadd.f32 %v36, %v89
  %91 = vdwg.mxu0
  %v92 = vld [vmem:[%s3] sm:$0xff]
  %v93 = vld [vmem:[%s3 + $0x8] sm:$0xff]
  %v94 = vld [vmem:[%s3 + $0x10] sm:$0xff]
  %v95 = vld [vmem:[%s3 + $0x18] sm:$0xff]
  %v96 = vld [vmem:[%s3 + $0x20] sm:$0xff]
  %v97 = vld [vmem:[%s3 + $0x28] sm:$0xff]
  %v98 = vld [vmem:[%s3 + $0x30] sm:$0xff]
  %v99 = vld [vmem:[%s3 + $0x38] sm:$0xff]
  %v100 = vadd.f32 %v73, %v92
  %v101 = vadd.f32 %v75, %v93
  %v102 = vadd.f32 %v78, %v94
  %v103 = vadd.f32 %v80, %v95
  %v104 = vadd.f32 %v83, %v96
  %v105 = vadd.f32 %v85, %v97
  %v106 = vadd.f32 %v88, %v98
  %v107 = vadd.f32 %v90, %v99
  %vm108 = vcmask 130048
  %109 = vst.msk [vmem:[%s4] sm:$0xff] %vm108, %v100
  %110 = vst.msk [vmem:[%s4 + $0x8] sm:$0xff] %vm108, %v101
  %111 = vst.msk [vmem:[%s4 + $0x10] sm:$0xff] %vm108, %v102
  %112 = vst.msk [vmem:[%s4 + $0x18] sm:$0xff] %vm108, %v103
  %113 = vst.msk [vmem:[%s4 + $0x20] sm:$0xff] %vm108, %v104
  %114 = vst.msk [vmem:[%s4 + $0x28] sm:$0xff] %vm108, %v105
  %115 = vst.msk [vmem:[%s4 + $0x30] sm:$0xff] %vm108, %v106
  %116 = vst.msk [vmem:[%s4 + $0x38] sm:$0xff] %vm108, %v107
  // Predicated region
  $region18: #{iterative_simulator_fwd.74} parent=0 // pred_check
    _
  $region19: #{iterative_simulator_fwd.74} parent=0 // pred_check_branch
    %118 = sbr.rel (0) target = $region21
  $region20: #{iterative_simulator_fwd.74} parent=0 // pred_region
    _
  $region21: #{iterative_simulator_fwd.74} parent=0 // pred_fallthru
    _
  // Predicated region
  $region22: #{iterative_simulator_fwd.74} parent=0 // pred_check
    _
  $region23: #{iterative_simulator_fwd.74} parent=0 // pred_check_branch
    %120 = sbr.rel (0) target = $region25
  $region24: #{iterative_simulator_fwd.74} parent=0 // pred_region
    _
  $region25: #{iterative_simulator_fwd.74} parent=0 // pred_fallthru
    _

// kernel: iterative_simulator_fwd.73
$region0: #{iterative_simulator_fwd.73}
  #allocation0 [shape = 'u32[]', space=smem, size = 0x4, offset = 0x4, fixed_abs, tag = 'smem constant byte address 0x4 - core index']
  #allocation1 [shape = 'u32[72,128]{1,0:T(1,128)}', space=vmem, size = 0x9000, scoped, tag = 'internal scratch']
  %s0 = inlined_call_operand.vmem [shape: bf16[8,4,8], index: 0, kind: input, shape index: {}]
  %s1 = inlined_call_operand.vmem [shape: bf16[8,8,8], index: 1, kind: input, shape index: {}]
  %s2 = inlined_call_operand.vmem [shape: bf16[8,8,8], index: 2, kind: input, shape index: {}]
  %s3 = inlined_call_operand.vmem [shape: f32[8,4,8], index: 3, kind: output, shape index: {}]
  %s4 = sld [smem:[#allocation0]]
  $region22: #{iterative_simulator_fwd.73} parent=0
    _
  %s6 = ssub.s32 1, %s4
  %s7 = scalar_select 0, %s6, %s4
  // Predicated region
  $region2: #{iterative_simulator_fwd.73} parent=0 // pred_check
    _
  $region3: #{iterative_simulator_fwd.73} parent=0 // pred_check_branch
    %9 = sbr.rel (0) target = $region5
  $region4: #{iterative_simulator_fwd.73} parent=0 // pred_region
    _
  $region5: #{iterative_simulator_fwd.73} parent=0 // pred_fallthru
    _
  // Predicated region
  $region6: #{iterative_simulator_fwd.73} parent=0 // pred_check
    _
  $region7: #{iterative_simulator_fwd.73} parent=0 // pred_check_branch
    %11 = sbr.rel (0) target = $region9
  $region8: #{iterative_simulator_fwd.73} parent=0 // pred_region
    _
  $region9: #{iterative_simulator_fwd.73} parent=0 // pred_fallthru
    _
  // Predicated region
  $region10: #{iterative_simulator_fwd.73} parent=0 // pred_check
    _
  $region11: #{iterative_simulator_fwd.73} parent=0 // pred_check_branch
    %13 = sbr.rel (0) target = $region13
  $region12: #{iterative_simulator_fwd.73} parent=0 // pred_region
    _
  $region13: #{iterative_simulator_fwd.73} parent=0 // pred_fallthru
    _
  %v15 = vld [vmem:[%s0] sm:$0x3]
  %v16 = vld [vmem:[%s0 + $0x2] sm:$0x3]
  %v17 = vld [vmem:[%s0 + $0x4] sm:$0x3]
  %v18 = vld [vmem:[%s0 + $0x6] sm:$0x3]
  %v19 = vld [vmem:[%s0 + $0x8] sm:$0x3]
  %v20 = vld [vmem:[%s0 + $0xa] sm:$0x3]
  %v21 = vld [vmem:[%s0 + $0xc] sm:$0x3]
  %v22 = vld [vmem:[%s0 + $0xe] sm:$0x3]
  %v23 = vld [vmem:[%s1] sm:$0xf]
  %v24 = vld [vmem:[%s1 + $0x4] sm:$0xf]
  %v25 = vld [vmem:[%s1 + $0x8] sm:$0xf]
  %v26 = vld [vmem:[%s1 + $0xc] sm:$0xf]
  %v27 = vld [vmem:[%s1 + $0x10] sm:$0xf]
  %v28 = vld [vmem:[%s1 + $0x14] sm:$0xf]
  %v29 = vld [vmem:[%s1 + $0x18] sm:$0xf]
  %v30 = vld [vmem:[%s1 + $0x1c] sm:$0xf]
  %v31 = vld [vmem:[%s2] sm:$0xf]
  %v32 = vld [vmem:[%s2 + $0x4] sm:$0xf]
  %v33 = vld [vmem:[%s2 + $0x8] sm:$0xf]
  %v34 = vld [vmem:[%s2 + $0xc] sm:$0xf]
  %v35 = vld [vmem:[%s2 + $0x10] sm:$0xf]
  %v36 = vld [vmem:[%s2 + $0x14] sm:$0xf]
  %v37 = vld [vmem:[%s2 + $0x18] sm:$0xf]
  %v38 = vld [vmem:[%s2 + $0x1c] sm:$0xf]
  %vm39 = vcmask 64512
  %v41 = vsel %vm39, %v15, 0
  %v44 = vsel %vm39, %v23, 0
  %46 = vmatpush.bf16.xpose.msra.mxu0 0
  %47 = vmatpush.bf16.xpose.msra.mxu0 0
  %48 = vmatpush.bf16.xpose.msra.mxu0 0
  %49 = vmatpush.bf16.xpose.msra.mxu0 0
  %50 = vmatpush.bf16.xpose.msra.mxu0 0
  %51 = vmatpush.bf16.xpose.msra.mxu0 0
  %52 = vmatpush.bf16.xpose.msra.mxu0 0
  %53 = vmatpush.bf16.xpose.msra.mxu0 %v44
  %54 = vmatmul.bf16.gmra.mxu0 %v41
  %v55 = vpop.f32.mrf.mxu0
  %v56 = vadd.f32 0.0, %v55
  %v57 = vpop.f32.mrf.mxu0
  %58 = vdwg.mxu0
  %v60 = vsel %vm39, %v16, 0
  %v63 = vsel %vm39, %v24, 0
  %65 = vmatpush.bf16.xpose.msra.mxu0 0
  %66 = vmatpush.bf16.xpose.msra.mxu0 0
  %67 = vmatpush.bf16.xpose.msra.mxu0 0
  %68 = vmatpush.bf16.xpose.msra.mxu0 0
  %69 = vmatpush.bf16.xpose.msra.mxu0 0
  %70 = vmatpush.bf16.xpose.msra.mxu0 0
  %71 = vmatpush.bf16.xpose.msra.mxu0 0
  %72 = vmatpush.bf16.xpose.msra.mxu0 %v63
  %73 = vmatmul.bf16.gmra.mxu0 %v60
  %v74 = vpop.f32.mrf.mxu0
  %v75 = vadd.f32 0.0, %v74
  %v76 = vpop.f32.mrf.mxu0
  %77 = vdwg.mxu0
  %v79 = vsel %vm39, %v17, 0
  %v82 = vsel %vm39, %v25, 0
  %84 = vmatpush.bf16.xpose.msra.mxu0 0
  %85 = vmatpush.bf16.xpose.msra.mxu0 0
  %86 = vmatpush.bf16.xpose.msra.mxu0 0
  %87 = vmatpush.bf16.xpose.msra.mxu0 0
  %88 = vmatpush.bf16.xpose.msra.mxu0 0
  %89 = vmatpush.bf16.xpose.msra.mxu0 0
  %90 = vmatpush.bf16.xpose.msra.mxu0 0
  %91 = vmatpush.bf16.xpose.msra.mxu0 %v82
  %92 = vmatmul.bf16.gmra.mxu0 %v79
  %v93 = vpop.f32.mrf.mxu0
  %v94 = vadd.f32 0.0, %v93
  %v95 = vpop.f32.mrf.mxu0
  %96 = vdwg.mxu0
  %v98 = vsel %vm39, %v18, 0
  %v101 = vsel %vm39, %v26, 0
  %103 = vmatpush.bf16.xpose.msra.mxu0 0
  %104 = vmatpush.bf16.xpose.msra.mxu0 0
  %105 = vmatpush.bf16.xpose.msra.mxu0 0
  %106 = vmatpush.bf16.xpose.msra.mxu0 0
  %107 = vmatpush.bf16.xpose.msra.mxu0 0
  %108 = vmatpush.bf16.xpose.msra.mxu0 0
  %109 = vmatpush.bf16.xpose.msra.mxu0 0
  %110 = vmatpush.bf16.xpose.msra.mxu0 %v101
  %111 = vmatmul.bf16.gmra.mxu0 %v98
  %v112 = vpop.f32.mrf.mxu0
  %v113 = vadd.f32 0.0, %v112
  %v114 = vpop.f32.mrf.mxu0
  %115 = vdwg.mxu0
  %v117 = vsel %vm39, %v19, 0
  %v120 = vsel %vm39, %v27, 0
  %122 = vmatpush.bf16.xpose.msra.mxu0 0
  %123 = vmatpush.bf16.xpose.msra.mxu0 0
  %124 = vmatpush.bf16.xpose.msra.mxu0 0
  %125 = vmatpush.bf16.xpose.msra.mxu0 0
  %126 = vmatpush.bf16.xpose.msra.mxu0 0
  %127 = vmatpush.bf16.xpose.msra.mxu0 0
  %128 = vmatpush.bf16.xpose.msra.mxu0 0
  %129 = vmatpush.bf16.xpose.msra.mxu0 %v120
  %130 = vmatmul.bf16.gmra.mxu0 %v117
  %v131 = vpop.f32.mrf.mxu0
  %v132 = vadd.f32 0.0, %v131
  %v133 = vpop.f32.mrf.mxu0
  %134 = vdwg.mxu0
  %v136 = vsel %vm39, %v20, 0
  %v139 = vsel %vm39, %v28, 0
  %141 = vmatpush.bf16.xpose.msra.mxu0 0
  %142 = vmatpush.bf16.xpose.msra.mxu0 0
  %143 = vmatpush.bf16.xpose.msra.mxu0 0
  %144 = vmatpush.bf16.xpose.msra.mxu0 0
  %145 = vmatpush.bf16.xpose.msra.mxu0 0
  %146 = vmatpush.bf16.xpose.msra.mxu0 0
  %147 = vmatpush.bf16.xpose.msra.mxu0 0
  %148 = vmatpush.bf16.xpose.msra.mxu0 %v139
  %149 = vmatmul.bf16.gmra.mxu0 %v136
  %v150 = vpop.f32.mrf.mxu0
  %v151 = vadd.f32 0.0, %v150
  %v152 = vpop.f32.mrf.mxu0
  %153 = vdwg.mxu0
  %v155 = vsel %vm39, %v21, 0
  %v158 = vsel %vm39, %v29, 0
  %160 = vmatpush.bf16.xpose.msra.mxu0 0
  %161 = vmatpush.bf16.xpose.msra.mxu0 0
  %162 = vmatpush.bf16.xpose.msra.mxu0 0
  %163 = vmatpush.bf16.xpose.msra.mxu0 0
  %164 = vmatpush.bf16.xpose.msra.mxu0 0
  %165 = vmatpush.bf16.xpose.msra.mxu0 0
  %166 = vmatpush.bf16.xpose.msra.mxu0 0
  %167 = vmatpush.bf16.xpose.msra.mxu0 %v158
  %168 = vmatmul.bf16.gmra.mxu0 %v155
  %v169 = vpop.f32.mrf.mxu0
  %v170 = vadd.f32 0.0, %v169
  %v171 = vpop.f32.mrf.mxu0
  %172 = vdwg.mxu0
  %v174 = vsel %vm39, %v22, 0
  %v177 = vsel %vm39, %v30, 0
  %179 = vmatpush.bf16.xpose.msra.mxu0 0
  %180 = vmatpush.bf16.xpose.msra.mxu0 0
  %181 = vmatpush.bf16.xpose.msra.mxu0 0
  %182 = vmatpush.bf16.xpose.msra.mxu0 0
  %183 = vmatpush.bf16.xpose.msra.mxu0 0
  %184 = vmatpush.bf16.xpose.msra.mxu0 0
  %185 = vmatpush.bf16.xpose.msra.mxu0 0
  %186 = vmatpush.bf16.xpose.msra.mxu0 %v177
  %187 = vmatmul.bf16.gmra.mxu0 %v174
  %v188 = vpop.f32.mrf.mxu0
  %v189 = vadd.f32 0.0, %v188
  %v190 = vpop.f32.mrf.mxu0
  %191 = vdwg.mxu0
  %v192 = vmul.f32 %v56, 0.35355338
  %v193 = vmul.f32 %v75, 0.35355338
  %v194 = vmul.f32 %v94, 0.35355338
  %v195 = vmul.f32 %v113, 0.35355338
  %v196 = vmul.f32 %v132, 0.35355338
  %v197 = vmul.f32 %v151, 0.35355338
  %v198 = vmul.f32 %v170, 0.35355338
  %v199 = vmul.f32 %v189, 0.35355338
  %vm200 = vcmask 60416
  %v201 = vsel %vm200, %v192, -inf
  %202 = vmax.xlane.f32.xlu0 %v201
  %v203 = vpop.xlane.xlu0 %202
  %v204 = vsel %vm200, %v193, -inf
  %205 = vmax.xlane.f32.xlu0 %v204
  %v206 = vpop.xlane.xlu0 %205
  %v207 = vsel %vm200, %v194, -inf
  %208 = vmax.xlane.f32.xlu0 %v207
  %v209 = vpop.xlane.xlu0 %208
  %v210 = vsel %vm200, %v195, -inf
  %211 = vmax.xlane.f32.xlu0 %v210
  %v212 = vpop.xlane.xlu0 %211
  %v213 = vsel %vm200, %v196, -inf
  %214 = vmax.xlane.f32.xlu0 %v213
  %v215 = vpop.xlane.xlu0 %214
  %v216 = vsel %vm200, %v197, -inf
  %217 = vmax.xlane.f32.xlu0 %v216
  %v218 = vpop.xlane.xlu0 %217
  %v219 = vsel %vm200, %v198, -inf
  %220 = vmax.xlane.f32.xlu0 %v219
  %v221 = vpop.xlane.xlu0 %220
  %v222 = vsel %vm200, %v199, -inf
  %223 = vmax.xlane.f32.xlu0 %v222
  %v224 = vpop.xlane.xlu0 %223
  %v225 = vsub.f32 %v192, %v203
  %v226 = vsub.f32 %v193, %v206
  %v227 = vsub.f32 %v194, %v209
  %v228 = vsub.f32 %v195, %v212
  %v229 = vsub.f32 %v196, %v215
  %v230 = vsub.f32 %v197, %v218
  %v231 = vsub.f32 %v198, %v221
  %v232 = vsub.f32 %v199, %v224
  %v233 = vmul.f32 %v225, 1.442695
  %v234 = vpow.pop %v233
  %v235 = vmul.f32 %v226, 1.442695
  %v236 = vpow.pop %v235
  %v237 = vmul.f32 %v227, 1.442695
  %v238 = vpow.pop %v237
  %v239 = vmul.f32 %v228, 1.442695
  %v240 = vpow.pop %v239
  %v241 = vmul.f32 %v229, 1.442695
  %v242 = vpow.pop %v241
  %v243 = vmul.f32 %v230, 1.442695
  %v244 = vpow.pop %v243
  %v245 = vmul.f32 %v231, 1.442695
  %v246 = vpow.pop %v245
  %v247 = vmul.f32 %v232, 1.442695
  %v248 = vpow.pop %v247
  %v249 = vsel %vm200, %v234, 0.0
  %250 = vadd.xlane.f32.xlu0 %v249
  %v251 = vpop.xlane.xlu0 %250
  %v252 = vsel %vm200, %v236, 0.0
  %253 = vadd.xlane.f32.xlu0 %v252
  %v254 = vpop.xlane.xlu0 %253
  %v255 = vsel %vm200, %v238, 0.0
  %256 = vadd.xlane.f32.xlu0 %v255
  %v257 = vpop.xlane.xlu0 %256
  %v258 = vsel %vm200, %v240, 0.0
  %259 = vadd.xlane.f32.xlu0 %v258
  %v260 = vpop.xlane.xlu0 %259
  %v261 = vsel %vm200, %v242, 0.0
  %262 = vadd.xlane.f32.xlu0 %v261
  %v263 = vpop.xlane.xlu0 %262
  %v264 = vsel %vm200, %v244, 0.0
  %265 = vadd.xlane.f32.xlu0 %v264
  %v266 = vpop.xlane.xlu0 %265
  %v267 = vsel %vm200, %v246, 0.0
  %268 = vadd.xlane.f32.xlu0 %v267
  %v269 = vpop.xlane.xlu0 %268
  %v270 = vsel %vm200, %v248, 0.0
  %271 = vadd.xlane.f32.xlu0 %v270
  %v272 = vpop.xlane.xlu0 %271
  %v273 = vrcp.pop %v251
  %v274 = vrcp.pop %v254
  %v275 = vrcp.pop %v257
  %v276 = vrcp.pop %v260
  %v277 = vrcp.pop %v263
  %v278 = vrcp.pop %v266
  %v279 = vrcp.pop %v269
  %v280 = vrcp.pop %v272
  %v281 = vmul.f32 %v234, %v273
  %v282 = vmul.f32 %v236, %v274
  %v283 = vmul.f32 %v238, %v275
  %v284 = vmul.f32 %v240, %v276
  %v285 = vmul.f32 %v242, %v277
  %v286 = vmul.f32 %v244, %v278
  %v287 = vmul.f32 %v246, %v279
  %v288 = vmul.f32 %v248, %v280
  %v289 = vpack.c.bf16 %v281, %v281
  %v290 = vpack.c.bf16 %v282, %v282
  %v291 = vpack.c.bf16 %v283, %v283
  %v292 = vpack.c.bf16 %v284, %v284
  %v293 = vpack.c.bf16 %v285, %v285
  %v294 = vpack.c.bf16 %v286, %v286
  %v295 = vpack.c.bf16 %v287, %v287
  %v296 = vpack.c.bf16 %v288, %v288
  %v298 = vsel %vm39, %v289, 0
  %vm300 = vcmask 1043456
  %v302 = vsel %vm300, %v31, 0
  %304 = vmatpush.bf16.msra.mxu0 0
  %305 = vmatpush.bf16.msra.mxu0 0
  %306 = vmatpush.bf16.msra.mxu0 0
  %307 = vmatpush.bf16.msra.mxu0 0
  %308 = vmatpush.bf16.msra.mxu0 0
  %309 = vmatpush.bf16.msra.mxu0 0
  %310 = vmatpush.bf16.msra.mxu0 0
  %311 = vmatpush.bf16.msra.mxu0 %v302
  %312 = vmatmul.bf16.gmra.mxu0 %v298
  %v313 = vpop.f32.mrf.mxu0
  %v314 = vadd.f32 0.0, %v313
  %v315 = vpop.f32.mrf.mxu0
  %316 = vdwg.mxu0
  %v318 = vsel %vm39, %v290, 0
  %v321 = vsel %vm300, %v32, 0
  %323 = vmatpush.bf16.msra.mxu0 0
  %324 = vmatpush.bf16.msra.mxu0 0
  %325 = vmatpush.bf16.msra.mxu0 0
  %326 = vmatpush.bf16.msra.mxu0 0
  %327 = vmatpush.bf16.msra.mxu0 0
  %328 = vmatpush.bf16.msra.mxu0 0
  %329 = vmatpush.bf16.msra.mxu0 0
  %330 = vmatpush.bf16.msra.mxu0 %v321
  %331 = vmatmul.bf16.gmra.mxu0 %v318
  %v332 = vpop.f32.mrf.mxu0
  %v333 = vadd.f32 0.0, %v332
  %v334 = vpop.f32.mrf.mxu0
  %335 = vdwg.mxu0
  %v337 = vsel %vm39, %v291, 0
  %v340 = vsel %vm300, %v33, 0
  %342 = vmatpush.bf16.msra.mxu0 0
  %343 = vmatpush.bf16.msra.mxu0 0
  %344 = vmatpush.bf16.msra.mxu0 0
  %345 = vmatpush.bf16.msra.mxu0 0
  %346 = vmatpush.bf16.msra.mxu0 0
  %347 = vmatpush.bf16.msra.mxu0 0
  %348 = vmatpush.bf16.msra.mxu0 0
  %349 = vmatpush.bf16.msra.mxu0 %v340
  %350 = vmatmul.bf16.gmra.mxu0 %v337
  %v351 = vpop.f32.mrf.mxu0
  %v352 = vadd.f32 0.0, %v351
  %v353 = vpop.f32.mrf.mxu0
  %354 = vdwg.mxu0
  %v356 = vsel %vm39, %v292, 0
  %v359 = vsel %vm300, %v34, 0
  %361 = vmatpush.bf16.msra.mxu0 0
  %362 = vmatpush.bf16.msra.mxu0 0
  %363 = vmatpush.bf16.msra.mxu0 0
  %364 = vmatpush.bf16.msra.mxu0 0
  %365 = vmatpush.bf16.msra.mxu0 0
  %366 = vmatpush.bf16.msra.mxu0 0
  %367 = vmatpush.bf16.msra.mxu0 0
  %368 = vmatpush.bf16.msra.mxu0 %v359
  %369 = vmatmul.bf16.gmra.mxu0 %v356
  %v370 = vpop.f32.mrf.mxu0
  %v371 = vadd.f32 0.0, %v370
  %v372 = vpop.f32.mrf.mxu0
  %373 = vdwg.mxu0
  %v375 = vsel %vm39, %v293, 0
  %v378 = vsel %vm300, %v35, 0
  %380 = vmatpush.bf16.msra.mxu0 0
  %381 = vmatpush.bf16.msra.mxu0 0
  %382 = vmatpush.bf16.msra.mxu0 0
  %383 = vmatpush.bf16.msra.mxu0 0
  %384 = vmatpush.bf16.msra.mxu0 0
  %385 = vmatpush.bf16.msra.mxu0 0
  %386 = vmatpush.bf16.msra.mxu0 0
  %387 = vmatpush.bf16.msra.mxu0 %v378
  %388 = vmatmul.bf16.gmra.mxu0 %v375
  %v389 = vpop.f32.mrf.mxu0
  %v390 = vadd.f32 0.0, %v389
  %v391 = vpop.f32.mrf.mxu0
  %392 = vdwg.mxu0
  %v394 = vsel %vm39, %v294, 0
  %v397 = vsel %vm300, %v36, 0
  %399 = vmatpush.bf16.msra.mxu0 0
  %400 = vmatpush.bf16.msra.mxu0 0
  %401 = vmatpush.bf16.msra.mxu0 0
  %402 = vmatpush.bf16.msra.mxu0 0
  %403 = vmatpush.bf16.msra.mxu0 0
  %404 = vmatpush.bf16.msra.mxu0 0
  %405 = vmatpush.bf16.msra.mxu0 0
  %406 = vmatpush.bf16.msra.mxu0 %v397
  %407 = vmatmul.bf16.gmra.mxu0 %v394
  %v408 = vpop.f32.mrf.mxu0
  %v409 = vadd.f32 0.0, %v408
  %v410 = vpop.f32.mrf.mxu0
  %411 = vdwg.mxu0
  %v413 = vsel %vm39, %v295, 0
  %v416 = vsel %vm300, %v37, 0
  %418 = vmatpush.bf16.msra.mxu0 0
  %419 = vmatpush.bf16.msra.mxu0 0
  %420 = vmatpush.bf16.msra.mxu0 0
  %421 = vmatpush.bf16.msra.mxu0 0
  %422 = vmatpush.bf16.msra.mxu0 0
  %423 = vmatpush.bf16.msra.mxu0 0
  %424 = vmatpush.bf16.msra.mxu0 0
  %425 = vmatpush.bf16.msra.mxu0 %v416
  %426 = vmatmul.bf16.gmra.mxu0 %v413
  %v427 = vpop.f32.mrf.mxu0
  %v428 = vadd.f32 0.0, %v427
  %v429 = vpop.f32.mrf.mxu0
  %430 = vdwg.mxu0
  %v432 = vsel %vm39, %v296, 0
  %v435 = vsel %vm300, %v38, 0
  %437 = vmatpush.bf16.msra.mxu0 0
  %438 = vmatpush.bf16.msra.mxu0 0
  %439 = vmatpush.bf16.msra.mxu0 0
  %440 = vmatpush.bf16.msra.mxu0 0
  %441 = vmatpush.bf16.msra.mxu0 0
  %442 = vmatpush.bf16.msra.mxu0 0
  %443 = vmatpush.bf16.msra.mxu0 0
  %444 = vmatpush.bf16.msra.mxu0 %v435
  %445 = vmatmul.bf16.gmra.mxu0 %v432
  %v446 = vpop.f32.mrf.mxu0
  %v447 = vadd.f32 0.0, %v446
  %v448 = vpop.f32.mrf.mxu0
  %449 = vdwg.mxu0
  %450 = vst.msk [vmem:[%s3] sm:$0xf] %vm200, %v314
  %451 = vst.msk [vmem:[%s3 + $0x4] sm:$0xf] %vm200, %v333
  %452 = vst.msk [vmem:[%s3 + $0x8] sm:$0xf] %vm200, %v352
  %453 = vst.msk [vmem:[%s3 + $0xc] sm:$0xf] %vm200, %v371
  %454 = vst.msk [vmem:[%s3 + $0x10] sm:$0xf] %vm200, %v390
  %455 = vst.msk [vmem:[%s3 + $0x14] sm:$0xf] %vm200, %v409
  %456 = vst.msk [vmem:[%s3 + $0x18] sm:$0xf] %vm200, %v428
  %457 = vst.msk [vmem:[%s3 + $0x1c] sm:$0xf] %vm200, %v447
  // Predicated region
  $region14: #{iterative_simulator_fwd.73} parent=0 // pred_check
    _
  $region15: #{iterative_simulator_fwd.73} parent=0 // pred_check_branch
    %459 = sbr.rel (0) target = $region17
  $region16: #{iterative_simulator_fwd.73} parent=0 // pred_region
    _
  $region17: #{iterative_simulator_fwd.73} parent=0 // pred_fallthru
    _
  // Predicated region
  $region18: #{iterative_simulator_fwd.73} parent=0 // pred_check
    _
  $region19: #{iterative_simulator_fwd.73} parent=0 // pred_check_branch
    %461 = sbr.rel (0) target = $region21
  $region20: #{iterative_simulator_fwd.73} parent=0 // pred_region
    _
  $region21: #{iterative_simulator_fwd.73} parent=0 // pred_fallthru
    _

// kernel: iterative_simulator_fwd.76
$region0: #{iterative_simulator_fwd.76}
  #allocation0 [shape = 'u32[]', space=smem, size = 0x4, offset = 0x4, fixed_abs, tag = 'smem constant byte address 0x4 - core index']
  #allocation1 [shape = 'u32[72,128]{1,0:T(1,128)}', space=vmem, size = 0x9000, scoped, tag = 'internal scratch']
  %s0 = inlined_call_operand.vmem [shape: f32[64,64], index: 0, kind: input, shape index: {}]
  %s1 = inlined_call_operand.vmem [shape: bf16[64,16], index: 1, kind: input, shape index: {}]
  %s2 = inlined_call_operand.vmem [shape: f32[1,16], index: 2, kind: input, shape index: {}]
  %s3 = inlined_call_operand.vmem [shape: f32[64,16], index: 3, kind: input, shape index: {}]
  %s4 = inlined_call_operand.vmem [shape: f32[64,16], index: 4, kind: output, shape index: {}]
  %s5 = sld [smem:[#allocation0]]
  $region26: #{iterative_simulator_fwd.76} parent=0
    _
  %s7 = ssub.s32 1, %s5
  %s8 = scalar_select 0, %s7, %s5
  // Predicated region
  $region2: #{iterative_simulator_fwd.76} parent=0 // pred_check
    _
  $region3: #{iterative_simulator_fwd.76} parent=0 // pred_check_branch
    %10 = sbr.rel (0) target = $region5
  $region4: #{iterative_simulator_fwd.76} parent=0 // pred_region
    _
  $region5: #{iterative_simulator_fwd.76} parent=0 // pred_fallthru
    _
  // Predicated region
  $region6: #{iterative_simulator_fwd.76} parent=0 // pred_check
    _
  $region7: #{iterative_simulator_fwd.76} parent=0 // pred_check_branch
    %12 = sbr.rel (0) target = $region9
  $region8: #{iterative_simulator_fwd.76} parent=0 // pred_region
    _
  $region9: #{iterative_simulator_fwd.76} parent=0 // pred_fallthru
    _
  // Predicated region
  $region10: #{iterative_simulator_fwd.76} parent=0 // pred_check
    _
  $region11: #{iterative_simulator_fwd.76} parent=0 // pred_check_branch
    %14 = sbr.rel (0) target = $region13
  $region12: #{iterative_simulator_fwd.76} parent=0 // pred_region
    _
  $region13: #{iterative_simulator_fwd.76} parent=0 // pred_fallthru
    _
  // Predicated region
  $region14: #{iterative_simulator_fwd.76} parent=0 // pred_check
    _
  $region15: #{iterative_simulator_fwd.76} parent=0 // pred_check_branch
    %16 = sbr.rel (0) target = $region17
  $region16: #{iterative_simulator_fwd.76} parent=0 // pred_region
    _
  $region17: #{iterative_simulator_fwd.76} parent=0 // pred_fallthru
    _
  %v18 = vld [vmem:[%s0] sm:$0xff]
  %v19 = vld [vmem:[%s0 + $0x8] sm:$0xff]
  %v20 = vld [vmem:[%s0 + $0x10] sm:$0xff]
  %v21 = vld [vmem:[%s0 + $0x18] sm:$0xff]
  %v22 = vld [vmem:[%s0 + $0x20] sm:$0xff]
  %v23 = vld [vmem:[%s0 + $0x28] sm:$0xff]
  %v24 = vld [vmem:[%s0 + $0x30] sm:$0xff]
  %v25 = vld [vmem:[%s0 + $0x38] sm:$0xff]
  %v26 = vld [vmem:[%s1] sm:$0xf]
  %v27 = vld [vmem:[%s1 + $0x4] sm:$0xf]
  %v28 = vld [vmem:[%s1 + $0x8] sm:$0xf]
  %v29 = vld [vmem:[%s1 + $0xc] sm:$0xf]
  %v30 = vld [vmem:[%s1 + $0x10] sm:$0xf]
  %v31 = vld [vmem:[%s1 + $0x14] sm:$0xf]
  %v32 = vld [vmem:[%s1 + $0x18] sm:$0xf]
  %v33 = vld [vmem:[%s1 + $0x1c] sm:$0xf]
  %v34 = vld [vmem:[%s2] sm:$0x1]
  %v35 = vpack.c.bf16 %v19, %v18
  %v36 = vpack.c.bf16 %v21, %v20
  %v37 = vpack.c.bf16 %v23, %v22
  %v38 = vpack.c.bf16 %v25, %v24
  %v40 = vperm.slane %v34, 0
  %v50 = vunpack.c.l.b16 %v26
  %v51 = vunpack.c.l.b16 %v27
  %v52 = vunpack.c.l.b16 %v28
  %v53 = vunpack.c.l.b16 %v29
  %v54 = vunpack.c.l.b16 %v30
  %v55 = vunpack.c.l.b16 %v31
  %v56 = vunpack.c.l.b16 %v32
  %v57 = vunpack.c.l.b16 %v33
  %v58 = vpack.c.b16 %v51, %v50
  %v59 = vpack.c.b16 %v53, %v52
  %v60 = vpack.c.b16 %v55, %v54
  %v61 = vpack.c.b16 %v57, %v56
  %vm66 = vcmask 523264
  %v68 = vsel %vm66, %v35, 0
  %v71 = vsel %vm66, %v36, 0
  %v74 = vsel %vm66, %v37, 0
  %v77 = vsel %vm66, %v38, 0
  %79 = vmatpush.bf16.msra.mxu0 0
  %80 = vmatpush.bf16.msra.mxu0 0
  %81 = vmatpush.bf16.msra.mxu0 0
  %82 = vmatpush.bf16.msra.mxu0 0
  %83 = vmatpush.bf16.msra.mxu0 %v61
  %84 = vmatpush.bf16.msra.mxu0 %v60
  %85 = vmatpush.bf16.msra.mxu0 %v59
  %86 = vmatpush.bf16.msra.mxu0 %v58
  %87 = vmatmul.bf16.gmra.mxu0 %v68
  %v88 = vpop.f32.mrf.mxu0
  %v89 = vadd.f32 %v40, %v88
  %v90 = vpop.f32.mrf.mxu0
  %v91 = vadd.f32 %v40, %v90
  %92 = vmatmul.bf16.gmra.mxu0 %v71
  %v93 = vpop.f32.mrf.mxu0
  %v94 = vadd.f32 %v40, %v93
  %v95 = vpop.f32.mrf.mxu0
  %v96 = vadd.f32 %v40, %v95
  %97 = vmatmul.bf16.gmra.mxu0 %v74
  %v98 = vpop.f32.mrf.mxu0
  %v99 = vadd.f32 %v40, %v98
  %v100 = vpop.f32.mrf.mxu0
  %v101 = vadd.f32 %v40, %v100
  %102 = vmatmul.bf16.gmra.mxu0 %v77
  %v103 = vpop.f32.mrf.mxu0
  %v104 = vadd.f32 %v40, %v103
  %v105 = vpop.f32.mrf.mxu0
  %v106 = vadd.f32 %v40, %v105
  %107 = vdwg.mxu0
  %v108 = vld [vmem:[%s3] sm:$0xff]
  %v109 = vld [vmem:[%s3 + $0x8] sm:$0xff]
  %v110 = vld [vmem:[%s3 + $0x10] sm:$0xff]
  %v111 = vld [vmem:[%s3 + $0x18] sm:$0xff]
  %v112 = vld [vmem:[%s3 + $0x20] sm:$0xff]
  %v113 = vld [vmem:[%s3 + $0x28] sm:$0xff]
  %v114 = vld [vmem:[%s3 + $0x30] sm:$0xff]
  %v115 = vld [vmem:[%s3 + $0x38] sm:$0xff]
  %v116 = vadd.f32 %v89, %v108
  %v117 = vadd.f32 %v91, %v109
  %v118 = vadd.f32 %v94, %v110
  %v119 = vadd.f32 %v96, %v111
  %v120 = vadd.f32 %v99, %v112
  %v121 = vadd.f32 %v101, %v113
  %v122 = vadd.f32 %v104, %v114
  %v123 = vadd.f32 %v106, %v115
  %vm124 = vcmask 130048
  %125 = vst.msk [vmem:[%s4] sm:$0xff] %vm124, %v116
  %126 = vst.msk [vmem:[%s4 + $0x8] sm:$0xff] %vm124, %v117
  %127 = vst.msk [vmem:[%s4 + $0x10] sm:$0xff] %vm124, %v118
  %128 = vst.msk [vmem:[%s4 + $0x18] sm:$0xff] %vm124, %v119
  %129 = vst.msk [vmem:[%s4 + $0x20] sm:$0xff] %vm124, %v120
  %130 = vst.msk [vmem:[%s4 + $0x28] sm:$0xff] %vm124, %v121
  %131 = vst.msk [vmem:[%s4 + $0x30] sm:$0xff] %vm124, %v122
  %132 = vst.msk [vmem:[%s4 + $0x38] sm:$0xff] %vm124, %v123
  // Predicated region
  $region18: #{iterative_simulator_fwd.76} parent=0 // pred_check
    _
  $region19: #{iterative_simulator_fwd.76} parent=0 // pred_check_branch
    %134 = sbr.rel (0) target = $region21
  $region20: #{iterative_simulator_fwd.76} parent=0 // pred_region
    _
  $region21: #{iterative_simulator_fwd.76} parent=0 // pred_fallthru
    _
  // Predicated region
  $region22: #{iterative_simulator_fwd.76} parent=0 // pred_check
    _
  $region23: #{iterative_simulator_fwd.76} parent=0 // pred_check_branch
    %136 = sbr.rel (0) target = $region25
  $region24: #{iterative_simulator_fwd.76} parent=0 // pred_region
    _
  $region25: #{iterative_simulator_fwd.76} parent=0 // pred_fallthru
    _

// kernel: iterative_simulator_fwd.75
$region0: #{iterative_simulator_fwd.75}
  #allocation0 [shape = 'u32[]', space=smem, size = 0x4, offset = 0x4, fixed_abs, tag = 'smem constant byte address 0x4 - core index']
  #allocation1 [shape = 'u32[72,128]{1,0:T(1,128)}', space=vmem, size = 0x9000, scoped, tag = 'internal scratch']
  %s0 = inlined_call_operand.vmem [shape: f32[64,16], index: 0, kind: input, shape index: {}]
  %s1 = inlined_call_operand.vmem [shape: f32[1,16], index: 1, kind: input, shape index: {}]
  %s2 = inlined_call_operand.vmem [shape: f32[1,16], index: 2, kind: input, shape index: {}]
  %s3 = inlined_call_operand.vmem [shape: bf16[16,64], index: 3, kind: input, shape index: {}]
  %s4 = inlined_call_operand.vmem [shape: f32[1,64], index: 4, kind: input, shape index: {}]
  %s5 = inlined_call_operand.vmem [shape: f32[64,64], index: 5, kind: output, shape index: {}]
  %s6 = sld [smem:[#allocation0]]
  $region30: #{iterative_simulator_fwd.75} parent=0
    _
  %s8 = ssub.s32 1, %s6
  %s9 = scalar_select 0, %s8, %s6
  // Predicated region
  $region2: #{iterative_simulator_fwd.75} parent=0 // pred_check
    _
  $region3: #{iterative_simulator_fwd.75} parent=0 // pred_check_branch
    %11 = sbr.rel (0) target = $region5
  $region4: #{iterative_simulator_fwd.75} parent=0 // pred_region
    _
  $region5: #{iterative_simulator_fwd.75} parent=0 // pred_fallthru
    _
  // Predicated region
  $region6: #{iterative_simulator_fwd.75} parent=0 // pred_check
    _
  $region7: #{iterative_simulator_fwd.75} parent=0 // pred_check_branch
    %13 = sbr.rel (0) target = $region9
  $region8: #{iterative_simulator_fwd.75} parent=0 // pred_region
    _
  $region9: #{iterative_simulator_fwd.75} parent=0 // pred_fallthru
    _
  // Predicated region
  $region10: #{iterative_simulator_fwd.75} parent=0 // pred_check
    _
  $region11: #{iterative_simulator_fwd.75} parent=0 // pred_check_branch
    %15 = sbr.rel (0) target = $region13
  $region12: #{iterative_simulator_fwd.75} parent=0 // pred_region
    _
  $region13: #{iterative_simulator_fwd.75} parent=0 // pred_fallthru
    _
  // Predicated region
  $region14: #{iterative_simulator_fwd.75} parent=0 // pred_check
    _
  $region15: #{iterative_simulator_fwd.75} parent=0 // pred_check_branch
    %17 = sbr.rel (0) target = $region17
  $region16: #{iterative_simulator_fwd.75} parent=0 // pred_region
    _
  $region17: #{iterative_simulator_fwd.75} parent=0 // pred_fallthru
    _
  // Predicated region
  $region18: #{iterative_simulator_fwd.75} parent=0 // pred_check
    _
  $region19: #{iterative_simulator_fwd.75} parent=0 // pred_check_branch
    %19 = sbr.rel (0) target = $region21
  $region20: #{iterative_simulator_fwd.75} parent=0 // pred_region
    _
  $region21: #{iterative_simulator_fwd.75} parent=0 // pred_fallthru
    _
  %v21 = vld [vmem:[%s0] sm:$0xff]
  %v22 = vld [vmem:[%s0 + $0x8] sm:$0xff]
  %v23 = vld [vmem:[%s0 + $0x10] sm:$0xff]
  %v24 = vld [vmem:[%s0 + $0x18] sm:$0xff]
  %v25 = vld [vmem:[%s0 + $0x20] sm:$0xff]
  %v26 = vld [vmem:[%s0 + $0x28] sm:$0xff]
  %v27 = vld [vmem:[%s0 + $0x30] sm:$0xff]
  %v28 = vld [vmem:[%s0 + $0x38] sm:$0xff]
  %v29 = vld [vmem:[%s1] sm:$0x1]
  %v30 = vld [vmem:[%s2] sm:$0x1]
  %vm31 = vcmask 130048
  %v32 = vsel %vm31, %v21, 0.0
  %33 = vadd.xlane.f32.xlu0 %v32
  %v34 = vpop.xlane.xlu0 %33
  %v35 = vsel %vm31, %v22, 0.0
  %36 = vadd.xlane.f32.xlu0 %v35
  %v37 = vpop.xlane.xlu0 %36
  %v38 = vsel %vm31, %v23, 0.0
  %39 = vadd.xlane.f32.xlu0 %v38
  %v40 = vpop.xlane.xlu0 %39
  %v41 = vsel %vm31, %v24, 0.0
  %42 = vadd.xlane.f32.xlu0 %v41
  %v43 = vpop.xlane.xlu0 %42
  %v44 = vsel %vm31, %v25, 0.0
  %45 = vadd.xlane.f32.xlu0 %v44
  %v46 = vpop.xlane.xlu0 %45
  %v47 = vsel %vm31, %v26, 0.0
  %48 = vadd.xlane.f32.xlu0 %v47
  %v49 = vpop.xlane.xlu0 %48
  %v50 = vsel %vm31, %v27, 0.0
  %51 = vadd.xlane.f32.xlu0 %v50
  %v52 = vpop.xlane.xlu0 %51
  %v53 = vsel %vm31, %v28, 0.0
  %54 = vadd.xlane.f32.xlu0 %v53
  %v55 = vpop.xlane.xlu0 %54
  %v56 = vrcp.pop 16.0
  %v57 = vmul.f32 16.0, %v56
  %v58 = vsub.f32 1.0, %v57
  %v59 = vmul.f32 %v56, %v58
  %v60 = vadd.f32 %v56, %v59
  %vm61 = vweird.f32 %v56
  %v62 = vsel %vm61, %v56, %v60
  %v63 = vmul.f32 %v34, %v62
  %v64 = vmul.f32 %v37, %v62
  %v65 = vmul.f32 %v40, %v62
  %v66 = vmul.f32 %v43, %v62
  %v67 = vmul.f32 %v46, %v62
  %v68 = vmul.f32 %v49, %v62
  %v69 = vmul.f32 %v52, %v62
  %v70 = vmul.f32 %v55, %v62
  %v71 = vsub.f32 %v21, %v63
  %v72 = vsub.f32 %v22, %v64
  %v73 = vsub.f32 %v23, %v65
  %v74 = vsub.f32 %v24, %v66
  %v75 = vsub.f32 %v25, %v67
  %v76 = vsub.f32 %v26, %v68
  %v77 = vsub.f32 %v27, %v69
  %v78 = vsub.f32 %v28, %v70
  %v79 = vmul.f32 %v71, %v71
  %v80 = vmul.f32 %v72, %v72
  %v81 = vmul.f32 %v73, %v73
  %v82 = vmul.f32 %v74, %v74
  %v83 = vmul.f32 %v75, %v75
  %v84 = vmul.f32 %v76, %v76
  %v85 = vmul.f32 %v77, %v77
  %v86 = vmul.f32 %v78, %v78
  %v87 = vsel %vm31, %v79, 0.0
  %88 = vadd.xlane.f32.xlu0 %v87
  %v89 = vpop.xlane.xlu0 %88
  %v90 = vsel %vm31, %v80, 0.0
  %91 = vadd.xlane.f32.xlu0 %v90
  %v92 = vpop.xlane.xlu0 %91
  %v93 = vsel %vm31, %v81, 0.0
  %94 = vadd.xlane.f32.xlu0 %v93
  %v95 = vpop.xlane.xlu0 %94
  %v96 = vsel %vm31, %v82, 0.0
  %97 = vadd.xlane.f32.xlu0 %v96
  %v98 = vpop.xlane.xlu0 %97
  %v99 = vsel %vm31, %v83, 0.0
  %100 = vadd.xlane.f32.xlu0 %v99
  %v101 = vpop.xlane.xlu0 %100
  %v102 = vsel %vm31, %v84, 0.0
  %103 = vadd.xlane.f32.xlu0 %v102
  %v104 = vpop.xlane.xlu0 %103
  %v105 = vsel %vm31, %v85, 0.0
  %106 = vadd.xlane.f32.xlu0 %v105
  %v107 = vpop.xlane.xlu0 %106
  %v108 = vsel %vm31, %v86, 0.0
  %109 = vadd.xlane.f32.xlu0 %v108
  %v110 = vpop.xlane.xlu0 %109
  %v111 = vmul.f32 %v89, %v62
  %v112 = vmul.f32 %v92, %v62
  %v113 = vmul.f32 %v95, %v62
  %v114 = vmul.f32 %v98, %v62
  %v115 = vmul.f32 %v101, %v62
  %v116 = vmul.f32 %v104, %v62
  %v117 = vmul.f32 %v107, %v62
  %v118 = vmul.f32 %v110, %v62
  %v119 = vadd.f32 %v111, 1e-05
  %v120 = vadd.f32 %v112, 1e-05
  %v121 = vadd.f32 %v113, 1e-05
  %v122 = vadd.f32 %v114, 1e-05
  %v123 = vadd.f32 %v115, 1e-05
  %v124 = vadd.f32 %v116, 1e-05
  %v125 = vadd.f32 %v117, 1e-05
  %v126 = vadd.f32 %v118, 1e-05
  %v127 = vrsqrt.pop %v119
  %v128 = vmul.f32 %v127, %v119
  %v129 = vmul.f32 %v128, %v127
  %v130 = vmul.f32 0.5, %v129
  %v131 = vsub.f32 1.5, %v130
  %v132 = vmul.f32 %v127, %v131
  %vm133 = vweird.f32 %v119
  %vm134 = vweird.f32 %v127
  %vm135 = vmor %vm133, %vm134
  %v136 = vsel %vm135, %v127, %v132
  %v137 = vrsqrt.pop %v120
  %v138 = vmul.f32 %v137, %v120
  %v139 = vmul.f32 %v138, %v137
  %v140 = vmul.f32 0.5, %v139
  %v141 = vsub.f32 1.5, %v140
  %v142 = vmul.f32 %v137, %v141
  %vm143 = vweird.f32 %v120
  %vm144 = vweird.f32 %v137
  %vm145 = vmor %vm143, %vm144
  %v146 = vsel %vm145, %v137, %v142
  %v147 = vrsqrt.pop %v121
  %v148 = vmul.f32 %v147, %v121
  %v149 = vmul.f32 %v148, %v147
  %v150 = vmul.f32 0.5, %v149
  %v151 = vsub.f32 1.5, %v150
  %v152 = vmul.f32 %v147, %v151
  %vm153 = vweird.f32 %v121
  %vm154 = vweird.f32 %v147
  %vm155 = vmor %vm153, %vm154
  %v156 = vsel %vm155, %v147, %v152
  %v157 = vrsqrt.pop %v122
  %v158 = vmul.f32 %v157, %v122
  %v159 = vmul.f32 %v158, %v157
  %v160 = vmul.f32 0.5, %v159
  %v161 = vsub.f32 1.5, %v160
  %v162 = vmul.f32 %v157, %v161
  %vm163 = vweird.f32 %v122
  %vm164 = vweird.f32 %v157
  %vm165 = vmor %vm163, %vm164
  %v166 = vsel %vm165, %v157, %v162
  %v167 = vrsqrt.pop %v123
  %v168 = vmul.f32 %v167, %v123
  %v169 = vmul.f32 %v168, %v167
  %v170 = vmul.f32 0.5, %v169
  %v171 = vsub.f32 1.5, %v170
  %v172 = vmul.f32 %v167, %v171
  %vm173 = vweird.f32 %v123
  %vm174 = vweird.f32 %v167
  %vm175 = vmor %vm173, %vm174
  %v176 = vsel %vm175, %v167, %v172
  %v177 = vrsqrt.pop %v124
  %v178 = vmul.f32 %v177, %v124
  %v179 = vmul.f32 %v178, %v177
  %v180 = vmul.f32 0.5, %v179
  %v181 = vsub.f32 1.5, %v180
  %v182 = vmul.f32 %v177, %v181
  %vm183 = vweird.f32 %v124
  %vm184 = vweird.f32 %v177
  %vm185 = vmor %vm183, %vm184
  %v186 = vsel %vm185, %v177, %v182
  %v187 = vrsqrt.pop %v125
  %v188 = vmul.f32 %v187, %v125
  %v189 = vmul.f32 %v188, %v187
  %v190 = vmul.f32 0.5, %v189
  %v191 = vsub.f32 1.5, %v190
  %v192 = vmul.f32 %v187, %v191
  %vm193 = vweird.f32 %v125
  %vm194 = vweird.f32 %v187
  %vm195 = vmor %vm193, %vm194
  %v196 = vsel %vm195, %v187, %v192
  %v197 = vrsqrt.pop %v126
  %v198 = vmul.f32 %v197, %v126
  %v199 = vmul.f32 %v198, %v197
  %v200 = vmul.f32 0.5, %v199
  %v201 = vsub.f32 1.5, %v200
  %v202 = vmul.f32 %v197, %v201
  %vm203 = vweird.f32 %v126
  %vm204 = vweird.f32 %v197
  %vm205 = vmor %vm203, %vm204
  %v206 = vsel %vm205, %v197, %v202
  %v207 = vmul.f32 %v71, %v136
  %v208 = vmul.f32 %v72, %v146
  %v209 = vmul.f32 %v73, %v156
  %v210 = vmul.f32 %v74, %v166
  %v211 = vmul.f32 %v75, %v176
  %v212 = vmul.f32 %v76, %v186
  %v213 = vmul.f32 %v77, %v196
  %v214 = vmul.f32 %v78, %v206
  %v216 = vperm.slane %v29, 0
  %v218 = vmul.f32 %v207, %v216
  %v219 = vmul.f32 %v208, %v216
  %v220 = vmul.f32 %v209, %v216
  %v221 = vmul.f32 %v210, %v216
  %v222 = vmul.f32 %v211, %v216
  %v223 = vmul.f32 %v212, %v216
  %v224 = vmul.f32 %v213, %v216
  %v225 = vmul.f32 %v214, %v216
  %v227 = vperm.slane %v30, 0
  %v229 = vadd.f32 %v218, %v227
  %v230 = vadd.f32 %v219, %v227
  %v231 = vadd.f32 %v220, %v227
  %v232 = vadd.f32 %v221, %v227
  %v233 = vadd.f32 %v222, %v227
  %v234 = vadd.f32 %v223, %v227
  %v235 = vadd.f32 %v224, %v227
  %v236 = vadd.f32 %v225, %v227
  %v237 = vld [vmem:[%s3] sm:$0xf]
  %v238 = vld [vmem:[%s3 + $0x4] sm:$0xf]
  %v239 = vld [vmem:[%s4] sm:$0x1]
  %v240 = vpack.c.bf16 %v230, %v229
  %v241 = vpack.c.bf16 %v232, %v231
  %v242 = vpack.c.bf16 %v234, %v233
  %v243 = vpack.c.bf16 %v236, %v235
  %v245 = vperm.slane %v239, 0
  %v249 = vunpack.c.l.b16 %v237
  %v250 = vunpack.c.l.b16 %v238
  %v251 = vpack.c.b16 %v250, %v249
  %v254 = vsel %vm31, %v240, 0
  %v257 = vsel %vm31, %v241, 0
  %v260 = vsel %vm31, %v242, 0
  %v263 = vsel %vm31, %v243, 0
  %265 = vmatpush.bf16.msra.mxu0 0
  %266 = vmatpush.bf16.msra.mxu0 0
  %267 = vmatpush.bf16.msra.mxu0 0
  %268 = vmatpush.bf16.msra.mxu0 0
  %269 = vmatpush.bf16.msra.mxu0 0
  %270 = vmatpush.bf16.msra.mxu0 0
  %271 = vmatpush.bf16.msra.mxu0 0
  %272 = vmatpush.bf16.msra.mxu0 %v251
  %273 = vmatmul.bf16.gmra.mxu0 %v254
  %v274 = vpop.f32.mrf.mxu0
  %v275 = vadd.f32 %v245, %v274
  %v276 = vpop.f32.mrf.mxu0
  %v277 = vadd.f32 %v245, %v276
  %278 = vmatmul.bf16.gmra.mxu0 %v257
  %v279 = vpop.f32.mrf.mxu0
  %v280 = vadd.f32 %v245, %v279
  %v281 = vpop.f32.mrf.mxu0
  %v282 = vadd.f32 %v245, %v281
  %283 = vmatmul.bf16.gmra.mxu0 %v260
  %v284 = vpop.f32.mrf.mxu0
  %v285 = vadd.f32 %v245, %v284
  %v286 = vpop.f32.mrf.mxu0
  %v287 = vadd.f32 %v245, %v286
  %288 = vmatmul.bf16.gmra.mxu0 %v263
  %v289 = vpop.f32.mrf.mxu0
  %v290 = vadd.f32 %v245, %v289
  %v291 = vpop.f32.mrf.mxu0
  %v292 = vadd.f32 %v245, %v291
  %293 = vdwg.mxu0
  %v294 = vmax.f32 %v275, 0.0
  %v295 = vmax.f32 %v277, 0.0
  %v296 = vmax.f32 %v280, 0.0
  %v297 = vmax.f32 %v282, 0.0
  %v298 = vmax.f32 %v285, 0.0
  %v299 = vmax.f32 %v287, 0.0
  %v300 = vmax.f32 %v290, 0.0
  %v301 = vmax.f32 %v292, 0.0
  %vm302 = vcmask 523264
  %303 = vst.msk [vmem:[%s5] sm:$0xff] %vm302, %v294
  %304 = vst.msk [vmem:[%s5 + $0x8] sm:$0xff] %vm302, %v295
  %305 = vst.msk [vmem:[%s5 + $0x10] sm:$0xff] %vm302, %v296
  %306 = vst.msk [vmem:[%s5 + $0x18] sm:$0xff] %vm302, %v297
  %307 = vst.msk [vmem:[%s5 + $0x20] sm:$0xff] %vm302, %v298
  %308 = vst.msk [vmem:[%s5 + $0x28] sm:$0xff] %vm302, %v299
  %309 = vst.msk [vmem:[%s5 + $0x30] sm:$0xff] %vm302, %v300
  %310 = vst.msk [vmem:[%s5 + $0x38] sm:$0xff] %vm302, %v301
  // Predicated region
  $region22: #{iterative_simulator_fwd.75} parent=0 // pred_check
    _
  $region23: #{iterative_simulator_fwd.75} parent=0 // pred_check_branch
    %312 = sbr.rel (0) target = $region25
  $region24: #{iterative_simulator_fwd.75} parent=0 // pred_region
    _
  $region25: #{iterative_simulator_fwd.75} parent=0 // pred_fallthru
    _
  // Predicated region
  $region26: #{iterative_simulator_fwd.75} parent=0 // pred_check
    _
  $region27: #{iterative_simulator_fwd.75} parent=0 // pred_check_branch
    %314 = sbr.rel (0) target = $region29
  $region28: #{iterative_simulator_fwd.75} parent=0 // pred_region
    _
  $region29: #{iterative_simulator_fwd.75} parent=0 // pred_fallthru
    _

// kernel: iterative_simulator_fwd.77
$region0: #{iterative_simulator_fwd.77}
  #allocation0 [shape = 'u32[]', space=smem, size = 0x4, offset = 0x4, fixed_abs, tag = 'smem constant byte address 0x4 - core index']
  #allocation1 [shape = 'u32[72,128]{1,0:T(1,128)}', space=vmem, size = 0x9000, scoped, tag = 'internal scratch']
  %s0 = inlined_call_operand.vmem [shape: f32[64,16], index: 0, kind: input, shape index: {}]
  %s1 = inlined_call_operand.vmem [shape: f32[1,16], index: 1, kind: input, shape index: {}]
  %s2 = inlined_call_operand.vmem [shape: f32[1,16], index: 2, kind: input, shape index: {}]
  %s3 = inlined_call_operand.vmem [shape: bf16[16,8], index: 3, kind: input, shape index: {}]
  %s4 = inlined_call_operand.vmem [shape: f32[1,8], index: 4, kind: input, shape index: {}]
  %s5 = inlined_call_operand.vmem [shape: f32[64,8], index: 5, kind: output, shape index: {}]
  %s6 = sld [smem:[#allocation0]]
  $region30: #{iterative_simulator_fwd.77} parent=0
    _
  %s8 = ssub.s32 1, %s6
  %s9 = scalar_select 0, %s8, %s6
  // Predicated region
  $region2: #{iterative_simulator_fwd.77} parent=0 // pred_check
    _
  $region3: #{iterative_simulator_fwd.77} parent=0 // pred_check_branch
    %11 = sbr.rel (0) target = $region5
  $region4: #{iterative_simulator_fwd.77} parent=0 // pred_region
    _
  $region5: #{iterative_simulator_fwd.77} parent=0 // pred_fallthru
    _
  // Predicated region
  $region6: #{iterative_simulator_fwd.77} parent=0 // pred_check
    _
  $region7: #{iterative_simulator_fwd.77} parent=0 // pred_check_branch
    %13 = sbr.rel (0) target = $region9
  $region8: #{iterative_simulator_fwd.77} parent=0 // pred_region
    _
  $region9: #{iterative_simulator_fwd.77} parent=0 // pred_fallthru
    _
  // Predicated region
  $region10: #{iterative_simulator_fwd.77} parent=0 // pred_check
    _
  $region11: #{iterative_simulator_fwd.77} parent=0 // pred_check_branch
    %15 = sbr.rel (0) target = $region13
  $region12: #{iterative_simulator_fwd.77} parent=0 // pred_region
    _
  $region13: #{iterative_simulator_fwd.77} parent=0 // pred_fallthru
    _
  // Predicated region
  $region14: #{iterative_simulator_fwd.77} parent=0 // pred_check
    _
  $region15: #{iterative_simulator_fwd.77} parent=0 // pred_check_branch
    %17 = sbr.rel (0) target = $region17
  $region16: #{iterative_simulator_fwd.77} parent=0 // pred_region
    _
  $region17: #{iterative_simulator_fwd.77} parent=0 // pred_fallthru
    _
  // Predicated region
  $region18: #{iterative_simulator_fwd.77} parent=0 // pred_check
    _
  $region19: #{iterative_simulator_fwd.77} parent=0 // pred_check_branch
    %19 = sbr.rel (0) target = $region21
  $region20: #{iterative_simulator_fwd.77} parent=0 // pred_region
    _
  $region21: #{iterative_simulator_fwd.77} parent=0 // pred_fallthru
    _
  %v21 = vld [vmem:[%s0] sm:$0xff]
  %v22 = vld [vmem:[%s0 + $0x8] sm:$0xff]
  %v23 = vld [vmem:[%s0 + $0x10] sm:$0xff]
  %v24 = vld [vmem:[%s0 + $0x18] sm:$0xff]
  %v25 = vld [vmem:[%s0 + $0x20] sm:$0xff]
  %v26 = vld [vmem:[%s0 + $0x28] sm:$0xff]
  %v27 = vld [vmem:[%s0 + $0x30] sm:$0xff]
  %v28 = vld [vmem:[%s0 + $0x38] sm:$0xff]
  %v29 = vld [vmem:[%s1] sm:$0x1]
  %v30 = vld [vmem:[%s2] sm:$0x1]
  %vm31 = vcmask 130048
  %v32 = vsel %vm31, %v21, 0.0
  %33 = vadd.xlane.f32.xlu0 %v32
  %v34 = vpop.xlane.xlu0 %33
  %v35 = vsel %vm31, %v22, 0.0
  %36 = vadd.xlane.f32.xlu0 %v35
  %v37 = vpop.xlane.xlu0 %36
  %v38 = vsel %vm31, %v23, 0.0
  %39 = vadd.xlane.f32.xlu0 %v38
  %v40 = vpop.xlane.xlu0 %39
  %v41 = vsel %vm31, %v24, 0.0
  %42 = vadd.xlane.f32.xlu0 %v41
  %v43 = vpop.xlane.xlu0 %42
  %v44 = vsel %vm31, %v25, 0.0
  %45 = vadd.xlane.f32.xlu0 %v44
  %v46 = vpop.xlane.xlu0 %45
  %v47 = vsel %vm31, %v26, 0.0
  %48 = vadd.xlane.f32.xlu0 %v47
  %v49 = vpop.xlane.xlu0 %48
  %v50 = vsel %vm31, %v27, 0.0
  %51 = vadd.xlane.f32.xlu0 %v50
  %v52 = vpop.xlane.xlu0 %51
  %v53 = vsel %vm31, %v28, 0.0
  %54 = vadd.xlane.f32.xlu0 %v53
  %v55 = vpop.xlane.xlu0 %54
  %v56 = vrcp.pop 16.0
  %v57 = vmul.f32 16.0, %v56
  %v58 = vsub.f32 1.0, %v57
  %v59 = vmul.f32 %v56, %v58
  %v60 = vadd.f32 %v56, %v59
  %vm61 = vweird.f32 %v56
  %v62 = vsel %vm61, %v56, %v60
  %v63 = vmul.f32 %v34, %v62
  %v64 = vmul.f32 %v37, %v62
  %v65 = vmul.f32 %v40, %v62
  %v66 = vmul.f32 %v43, %v62
  %v67 = vmul.f32 %v46, %v62
  %v68 = vmul.f32 %v49, %v62
  %v69 = vmul.f32 %v52, %v62
  %v70 = vmul.f32 %v55, %v62
  %v71 = vsub.f32 %v21, %v63
  %v72 = vsub.f32 %v22, %v64
  %v73 = vsub.f32 %v23, %v65
  %v74 = vsub.f32 %v24, %v66
  %v75 = vsub.f32 %v25, %v67
  %v76 = vsub.f32 %v26, %v68
  %v77 = vsub.f32 %v27, %v69
  %v78 = vsub.f32 %v28, %v70
  %v79 = vmul.f32 %v71, %v71
  %v80 = vmul.f32 %v72, %v72
  %v81 = vmul.f32 %v73, %v73
  %v82 = vmul.f32 %v74, %v74
  %v83 = vmul.f32 %v75, %v75
  %v84 = vmul.f32 %v76, %v76
  %v85 = vmul.f32 %v77, %v77
  %v86 = vmul.f32 %v78, %v78
  %v87 = vsel %vm31, %v79, 0.0
  %88 = vadd.xlane.f32.xlu0 %v87
  %v89 = vpop.xlane.xlu0 %88
  %v90 = vsel %vm31, %v80, 0.0
  %91 = vadd.xlane.f32.xlu0 %v90
  %v92 = vpop.xlane.xlu0 %91
  %v93 = vsel %vm31, %v81, 0.0
  %94 = vadd.xlane.f32.xlu0 %v93
  %v95 = vpop.xlane.xlu0 %94
  %v96 = vsel %vm31, %v82, 0.0
  %97 = vadd.xlane.f32.xlu0 %v96
  %v98 = vpop.xlane.xlu0 %97
  %v99 = vsel %vm31, %v83, 0.0
  %100 = vadd.xlane.f32.xlu0 %v99
  %v101 = vpop.xlane.xlu0 %100
  %v102 = vsel %vm31, %v84, 0.0
  %103 = vadd.xlane.f32.xlu0 %v102
  %v104 = vpop.xlane.xlu0 %103
  %v105 = vsel %vm31, %v85, 0.0
  %106 = vadd.xlane.f32.xlu0 %v105
  %v107 = vpop.xlane.xlu0 %106
  %v108 = vsel %vm31, %v86, 0.0
  %109 = vadd.xlane.f32.xlu0 %v108
  %v110 = vpop.xlane.xlu0 %109
  %v111 = vmul.f32 %v89, %v62
  %v112 = vmul.f32 %v92, %v62
  %v113 = vmul.f32 %v95, %v62
  %v114 = vmul.f32 %v98, %v62
  %v115 = vmul.f32 %v101, %v62
  %v116 = vmul.f32 %v104, %v62
  %v117 = vmul.f32 %v107, %v62
  %v118 = vmul.f32 %v110, %v62
  %v119 = vadd.f32 %v111, 1e-05
  %v120 = vadd.f32 %v112, 1e-05
  %v121 = vadd.f32 %v113, 1e-05
  %v122 = vadd.f32 %v114, 1e-05
  %v123 = vadd.f32 %v115, 1e-05
  %v124 = vadd.f32 %v116, 1e-05
  %v125 = vadd.f32 %v117, 1e-05
  %v126 = vadd.f32 %v118, 1e-05
  %v127 = vrsqrt.pop %v119
  %v128 = vmul.f32 %v127, %v119
  %v129 = vmul.f32 %v128, %v127
  %v130 = vmul.f32 0.5, %v129
  %v131 = vsub.f32 1.5, %v130
  %v132 = vmul.f32 %v127, %v131
  %vm133 = vweird.f32 %v119
  %vm134 = vweird.f32 %v127
  %vm135 = vmor %vm133, %vm134
  %v136 = vsel %vm135, %v127, %v132
  %v137 = vrsqrt.pop %v120
  %v138 = vmul.f32 %v137, %v120
  %v139 = vmul.f32 %v138, %v137
  %v140 = vmul.f32 0.5, %v139
  %v141 = vsub.f32 1.5, %v140
  %v142 = vmul.f32 %v137, %v141
  %vm143 = vweird.f32 %v120
  %vm144 = vweird.f32 %v137
  %vm145 = vmor %vm143, %vm144
  %v146 = vsel %vm145, %v137, %v142
  %v147 = vrsqrt.pop %v121
  %v148 = vmul.f32 %v147, %v121
  %v149 = vmul.f32 %v148, %v147
  %v150 = vmul.f32 0.5, %v149
  %v151 = vsub.f32 1.5, %v150
  %v152 = vmul.f32 %v147, %v151
  %vm153 = vweird.f32 %v121
  %vm154 = vweird.f32 %v147
  %vm155 = vmor %vm153, %vm154
  %v156 = vsel %vm155, %v147, %v152
  %v157 = vrsqrt.pop %v122
  %v158 = vmul.f32 %v157, %v122
  %v159 = vmul.f32 %v158, %v157
  %v160 = vmul.f32 0.5, %v159
  %v161 = vsub.f32 1.5, %v160
  %v162 = vmul.f32 %v157, %v161
  %vm163 = vweird.f32 %v122
  %vm164 = vweird.f32 %v157
  %vm165 = vmor %vm163, %vm164
  %v166 = vsel %vm165, %v157, %v162
  %v167 = vrsqrt.pop %v123
  %v168 = vmul.f32 %v167, %v123
  %v169 = vmul.f32 %v168, %v167
  %v170 = vmul.f32 0.5, %v169
  %v171 = vsub.f32 1.5, %v170
  %v172 = vmul.f32 %v167, %v171
  %vm173 = vweird.f32 %v123
  %vm174 = vweird.f32 %v167
  %vm175 = vmor %vm173, %vm174
  %v176 = vsel %vm175, %v167, %v172
  %v177 = vrsqrt.pop %v124
  %v178 = vmul.f32 %v177, %v124
  %v179 = vmul.f32 %v178, %v177
  %v180 = vmul.f32 0.5, %v179
  %v181 = vsub.f32 1.5, %v180
  %v182 = vmul.f32 %v177, %v181
  %vm183 = vweird.f32 %v124
  %vm184 = vweird.f32 %v177
  %vm185 = vmor %vm183, %vm184
  %v186 = vsel %vm185, %v177, %v182
  %v187 = vrsqrt.pop %v125
  %v188 = vmul.f32 %v187, %v125
  %v189 = vmul.f32 %v188, %v187
  %v190 = vmul.f32 0.5, %v189
  %v191 = vsub.f32 1.5, %v190
  %v192 = vmul.f32 %v187, %v191
  %vm193 = vweird.f32 %v125
  %vm194 = vweird.f32 %v187
  %vm195 = vmor %vm193, %vm194
  %v196 = vsel %vm195, %v187, %v192
  %v197 = vrsqrt.pop %v126
  %v198 = vmul.f32 %v197, %v126
  %v199 = vmul.f32 %v198, %v197
  %v200 = vmul.f32 0.5, %v199
  %v201 = vsub.f32 1.5, %v200
  %v202 = vmul.f32 %v197, %v201
  %vm203 = vweird.f32 %v126
  %vm204 = vweird.f32 %v197
  %vm205 = vmor %vm203, %vm204
  %v206 = vsel %vm205, %v197, %v202
  %v207 = vmul.f32 %v71, %v136
  %v208 = vmul.f32 %v72, %v146
  %v209 = vmul.f32 %v73, %v156
  %v210 = vmul.f32 %v74, %v166
  %v211 = vmul.f32 %v75, %v176
  %v212 = vmul.f32 %v76, %v186
  %v213 = vmul.f32 %v77, %v196
  %v214 = vmul.f32 %v78, %v206
  %v216 = vperm.slane %v29, 0
  %v218 = vmul.f32 %v207, %v216
  %v219 = vmul.f32 %v208, %v216
  %v220 = vmul.f32 %v209, %v216
  %v221 = vmul.f32 %v210, %v216
  %v222 = vmul.f32 %v211, %v216
  %v223 = vmul.f32 %v212, %v216
  %v224 = vmul.f32 %v213, %v216
  %v225 = vmul.f32 %v214, %v216
  %v227 = vperm.slane %v30, 0
  %v229 = vadd.f32 %v218, %v227
  %v230 = vadd.f32 %v219, %v227
  %v231 = vadd.f32 %v220, %v227
  %v232 = vadd.f32 %v221, %v227
  %v233 = vadd.f32 %v222, %v227
  %v234 = vadd.f32 %v223, %v227
  %v235 = vadd.f32 %v224, %v227
  %v236 = vadd.f32 %v225, %v227
  %v237 = vld [vmem:[%s3] sm:$0xf]
  %v238 = vld [vmem:[%s3 + $0x4] sm:$0xf]
  %v239 = vld [vmem:[%s4] sm:$0x1]
  %v240 = vpack.c.bf16 %v230, %v229
  %v241 = vpack.c.bf16 %v232, %v231
  %v242 = vpack.c.bf16 %v234, %v233
  %v243 = vpack.c.bf16 %v236, %v235
  %v245 = vperm.slane %v239, 0
  %v249 = vunpack.c.l.b16 %v237
  %v250 = vunpack.c.l.b16 %v238
  %v251 = vpack.c.b16 %v250, %v249
  %v254 = vsel %vm31, %v240, 0
  %v257 = vsel %vm31, %v241, 0
  %v260 = vsel %vm31, %v242, 0
  %v263 = vsel %vm31, %v243, 0
  %265 = vmatpush.bf16.msra.mxu0 0
  %266 = vmatpush.bf16.msra.mxu0 0
  %267 = vmatpush.bf16.msra.mxu0 0
  %268 = vmatpush.bf16.msra.mxu0 0
  %269 = vmatpush.bf16.msra.mxu0 0
  %270 = vmatpush.bf16.msra.mxu0 0
  %271 = vmatpush.bf16.msra.mxu0 0
  %272 = vmatpush.bf16.msra.mxu0 %v251
  %273 = vmatmul.bf16.gmra.mxu0 %v254
  %v274 = vpop.f32.mrf.mxu0
  %v275 = vadd.f32 %v245, %v274
  %v276 = vpop.f32.mrf.mxu0
  %v277 = vadd.f32 %v245, %v276
  %278 = vmatmul.bf16.gmra.mxu0 %v257
  %v279 = vpop.f32.mrf.mxu0
  %v280 = vadd.f32 %v245, %v279
  %v281 = vpop.f32.mrf.mxu0
  %v282 = vadd.f32 %v245, %v281
  %283 = vmatmul.bf16.gmra.mxu0 %v260
  %v284 = vpop.f32.mrf.mxu0
  %v285 = vadd.f32 %v245, %v284
  %v286 = vpop.f32.mrf.mxu0
  %v287 = vadd.f32 %v245, %v286
  %288 = vmatmul.bf16.gmra.mxu0 %v263
  %v289 = vpop.f32.mrf.mxu0
  %v290 = vadd.f32 %v245, %v289
  %v291 = vpop.f32.mrf.mxu0
  %v292 = vadd.f32 %v245, %v291
  %293 = vdwg.mxu0
  %vm294 = vcmask 64512
  %295 = vst.msk [vmem:[%s5] sm:$0xff] %vm294, %v275
  %296 = vst.msk [vmem:[%s5 + $0x8] sm:$0xff] %vm294, %v277
  %297 = vst.msk [vmem:[%s5 + $0x10] sm:$0xff] %vm294, %v280
  %298 = vst.msk [vmem:[%s5 + $0x18] sm:$0xff] %vm294, %v282
  %299 = vst.msk [vmem:[%s5 + $0x20] sm:$0xff] %vm294, %v285
  %300 = vst.msk [vmem:[%s5 + $0x28] sm:$0xff] %vm294, %v287
  %301 = vst.msk [vmem:[%s5 + $0x30] sm:$0xff] %vm294, %v290
  %302 = vst.msk [vmem:[%s5 + $0x38] sm:$0xff] %vm294, %v292
  // Predicated region
  $region22: #{iterative_simulator_fwd.77} parent=0 // pred_check
    _
  $region23: #{iterative_simulator_fwd.77} parent=0 // pred_check_branch
    %304 = sbr.rel (0) target = $region25
  $region24: #{iterative_simulator_fwd.77} parent=0 // pred_region
    _
  $region25: #{iterative_simulator_fwd.77} parent=0 // pred_fallthru
    _
  // Predicated region
  $region26: #{iterative_simulator_fwd.77} parent=0 // pred_check
    _
  $region27: #{iterative_simulator_fwd.77} parent=0 // pred_check_branch
    %306 = sbr.rel (0) target = $region29
  $region28: #{iterative_simulator_fwd.77} parent=0 // pred_region
    _
  $region29: #{iterative_simulator_fwd.77} parent=0 // pred_fallthru
    _

// kernel: iterative_simulator_fwd.78
$region0: #{iterative_simulator_fwd.78}
  #allocation0 [shape = 'u32[]', space=smem, size = 0x4, offset = 0x4, fixed_abs, tag = 'smem constant byte address 0x4 - core index']
  #allocation1 [shape = 'u32[72,128]{1,0:T(1,128)}', space=vmem, size = 0x9000, scoped, tag = 'internal scratch']
  %s0 = inlined_call_operand.vmem [shape: bf16[1,32,8], index: 0, kind: input, shape index: {}]
  %s1 = inlined_call_operand.vmem [shape: bf16[1,8,32], index: 1, kind: input, shape index: {}]
  %s2 = inlined_call_operand.vmem [shape: f32[1,32,32], index: 2, kind: output, shape index: {}]
  %s3 = sld [smem:[#allocation0]]
  $region18: #{iterative_simulator_fwd.78} parent=0
    _
  %s5 = ssub.s32 1, %s3
  %s6 = scalar_select 0, %s5, %s3
  // Predicated region
  $region2: #{iterative_simulator_fwd.78} parent=0 // pred_check
    _
  $region3: #{iterative_simulator_fwd.78} parent=0 // pred_check_branch
    %8 = sbr.rel (0) target = $region5
  $region4: #{iterative_simulator_fwd.78} parent=0 // pred_region
    _
  $region5: #{iterative_simulator_fwd.78} parent=0 // pred_fallthru
    _
  // Predicated region
  $region6: #{iterative_simulator_fwd.78} parent=0 // pred_check
    _
  $region7: #{iterative_simulator_fwd.78} parent=0 // pred_check_branch
    %10 = sbr.rel (0) target = $region9
  $region8: #{iterative_simulator_fwd.78} parent=0 // pred_region
    _
  $region9: #{iterative_simulator_fwd.78} parent=0 // pred_fallthru
    _
  %v12 = vld [vmem:[%s0] sm:$0xf]
  %v13 = vld [vmem:[%s0 + $0x4] sm:$0xf]
  %v14 = vld [vmem:[%s0 + $0x8] sm:$0xf]
  %v15 = vld [vmem:[%s0 + $0xc] sm:$0xf]
  %v16 = vld [vmem:[%s1] sm:$0xf]
  %v21 = vunpack.c.l.b16 %v12
  %v22 = vunpack.c.l.b16 %v13
  %v23 = vunpack.c.l.b16 %v14
  %v24 = vunpack.c.l.b16 %v15
  %v25 = vpack.c.b16 %v22, %v21
  %v26 = vpack.c.b16 %v24, %v23
  %vm27 = vcmask 64512
  %v29 = vsel %vm27, %v25, 0
  %v32 = vsel %vm27, %v26, 0
  %vm34 = vcmask 1043456
  %v36 = vsel %vm34, %v16, 0
  %38 = vmatpush.bf16.msra.mxu0 0
  %39 = vmatpush.bf16.msra.mxu0 0
  %40 = vmatpush.bf16.msra.mxu0 0
  %41 = vmatpush.bf16.msra.mxu0 0
  %42 = vmatpush.bf16.msra.mxu0 0
  %43 = vmatpush.bf16.msra.mxu0 0
  %44 = vmatpush.bf16.msra.mxu0 0
  %45 = vmatpush.bf16.msra.mxu0 %v36
  %46 = vmatmul.bf16.gmra.mxu0 %v29
  %v47 = vpop.f32.mrf.mxu0
  %v48 = vadd.f32 0.0, %v47
  %v49 = vpop.f32.mrf.mxu0
  %v50 = vadd.f32 0.0, %v49
  %51 = vmatmul.bf16.gmra.mxu0 %v32
  %v52 = vpop.f32.mrf.mxu0
  %v53 = vadd.f32 0.0, %v52
  %v54 = vpop.f32.mrf.mxu0
  %v55 = vadd.f32 0.0, %v54
  %56 = vdwg.mxu0
  %vm57 = vcmask 261120
  %58 = vst.msk [vmem:[%s2] sm:$0xff] %vm57, %v48
  %59 = vst.msk [vmem:[%s2 + $0x8] sm:$0xff] %vm57, %v50
  %60 = vst.msk [vmem:[%s2 + $0x10] sm:$0xff] %vm57, %v53
  %61 = vst.msk [vmem:[%s2 + $0x18] sm:$0xff] %vm57, %v55
  // Predicated region
  $region10: #{iterative_simulator_fwd.78} parent=0 // pred_check
    _
  $region11: #{iterative_simulator_fwd.78} parent=0 // pred_check_branch
    %63 = sbr.rel (0) target = $region13
  $region12: #{iterative_simulator_fwd.78} parent=0 // pred_region
    _
  $region13: #{iterative_simulator_fwd.78} parent=0 // pred_fallthru
    _
  // Predicated region
  $region14: #{iterative_simulator_fwd.78} parent=0 // pred_check
    _
  $region15: #{iterative_simulator_fwd.78} parent=0 // pred_check_branch
    %65 = sbr.rel (0) target = $region17
  $region16: #{iterative_simulator_fwd.78} parent=0 // pred_region
    _
  $region17: #{iterative_simulator_fwd.78} parent=0 // pred_fallthru
    _

// kernel: iterative_simulator_fwd.79
$region0: #{iterative_simulator_fwd.79}
  #allocation0 [shape = 'u32[]', space=smem, size = 0x4, offset = 0x4, fixed_abs, tag = 'smem constant byte address 0x4 - core index']
  #allocation1 [shape = 'u32[72,128]{1,0:T(1,128)}', space=vmem, size = 0x9000, scoped, tag = 'internal scratch']
  %s0 = inlined_call_operand.vmem [shape: f32[64,16], index: 0, kind: input, shape index: {}]
  %s1 = inlined_call_operand.vmem [shape: bf16[16,16], index: 1, kind: input, shape index: {}]
  %s2 = inlined_call_operand.vmem [shape: f32[1,16], index: 2, kind: input, shape index: {}]
  %s3 = inlined_call_operand.vmem [shape: f32[64,16], index: 3, kind: input, shape index: {}]
  %s4 = inlined_call_operand.vmem [shape: f32[64,16], index: 4, kind: output, shape index: {}]
  %s5 = sld [smem:[#allocation0]]
  $region26: #{iterative_simulator_fwd.79} parent=0
    _
  %s7 = ssub.s32 1, %s5
  %s8 = scalar_select 0, %s7, %s5
  // Predicated region
  $region2: #{iterative_simulator_fwd.79} parent=0 // pred_check
    _
  $region3: #{iterative_simulator_fwd.79} parent=0 // pred_check_branch
    %10 = sbr.rel (0) target = $region5
  $region4: #{iterative_simulator_fwd.79} parent=0 // pred_region
    _
  $region5: #{iterative_simulator_fwd.79} parent=0 // pred_fallthru
    _
  // Predicated region
  $region6: #{iterative_simulator_fwd.79} parent=0 // pred_check
    _
  $region7: #{iterative_simulator_fwd.79} parent=0 // pred_check_branch
    %12 = sbr.rel (0) target = $region9
  $region8: #{iterative_simulator_fwd.79} parent=0 // pred_region
    _
  $region9: #{iterative_simulator_fwd.79} parent=0 // pred_fallthru
    _
  // Predicated region
  $region10: #{iterative_simulator_fwd.79} parent=0 // pred_check
    _
  $region11: #{iterative_simulator_fwd.79} parent=0 // pred_check_branch
    %14 = sbr.rel (0) target = $region13
  $region12: #{iterative_simulator_fwd.79} parent=0 // pred_region
    _
  $region13: #{iterative_simulator_fwd.79} parent=0 // pred_fallthru
    _
  // Predicated region
  $region14: #{iterative_simulator_fwd.79} parent=0 // pred_check
    _
  $region15: #{iterative_simulator_fwd.79} parent=0 // pred_check_branch
    %16 = sbr.rel (0) target = $region17
  $region16: #{iterative_simulator_fwd.79} parent=0 // pred_region
    _
  $region17: #{iterative_simulator_fwd.79} parent=0 // pred_fallthru
    _
  %v18 = vld [vmem:[%s0] sm:$0xff]
  %v19 = vld [vmem:[%s0 + $0x8] sm:$0xff]
  %v20 = vld [vmem:[%s0 + $0x10] sm:$0xff]
  %v21 = vld [vmem:[%s0 + $0x18] sm:$0xff]
  %v22 = vld [vmem:[%s0 + $0x20] sm:$0xff]
  %v23 = vld [vmem:[%s0 + $0x28] sm:$0xff]
  %v24 = vld [vmem:[%s0 + $0x30] sm:$0xff]
  %v25 = vld [vmem:[%s0 + $0x38] sm:$0xff]
  %v26 = vld [vmem:[%s1] sm:$0xf]
  %v27 = vld [vmem:[%s1 + $0x4] sm:$0xf]
  %v28 = vld [vmem:[%s2] sm:$0x1]
  %v29 = vpack.c.bf16 %v19, %v18
  %v30 = vpack.c.bf16 %v21, %v20
  %v31 = vpack.c.bf16 %v23, %v22
  %v32 = vpack.c.bf16 %v25, %v24
  %v34 = vperm.slane %v28, 0
  %v38 = vunpack.c.l.b16 %v26
  %v39 = vunpack.c.l.b16 %v27
  %v40 = vpack.c.b16 %v39, %v38
  %vm42 = vcmask 130048
  %v44 = vsel %vm42, %v29, 0
  %v47 = vsel %vm42, %v30, 0
  %v50 = vsel %vm42, %v31, 0
  %v53 = vsel %vm42, %v32, 0
  %55 = vmatpush.bf16.msra.mxu0 0
  %56 = vmatpush.bf16.msra.mxu0 0
  %57 = vmatpush.bf16.msra.mxu0 0
  %58 = vmatpush.bf16.msra.mxu0 0
  %59 = vmatpush.bf16.msra.mxu0 0
  %60 = vmatpush.bf16.msra.mxu0 0
  %61 = vmatpush.bf16.msra.mxu0 0
  %62 = vmatpush.bf16.msra.mxu0 %v40
  %63 = vmatmul.bf16.gmra.mxu0 %v44
  %v64 = vpop.f32.mrf.mxu0
  %v65 = vadd.f32 %v34, %v64
  %v66 = vpop.f32.mrf.mxu0
  %v67 = vadd.f32 %v34, %v66
  %68 = vmatmul.bf16.gmra.mxu0 %v47
  %v69 = vpop.f32.mrf.mxu0
  %v70 = vadd.f32 %v34, %v69
  %v71 = vpop.f32.mrf.mxu0
  %v72 = vadd.f32 %v34, %v71
  %73 = vmatmul.bf16.gmra.mxu0 %v50
  %v74 = vpop.f32.mrf.mxu0
  %v75 = vadd.f32 %v34, %v74
  %v76 = vpop.f32.mrf.mxu0
  %v77 = vadd.f32 %v34, %v76
  %78 = vmatmul.bf16.gmra.mxu0 %v53
  %v79 = vpop.f32.mrf.mxu0
  %v80 = vadd.f32 %v34, %v79
  %v81 = vpop.f32.mrf.mxu0
  %v82 = vadd.f32 %v34, %v81
  %83 = vdwg.mxu0
  %v84 = vld [vmem:[%s3] sm:$0xff]
  %v85 = vld [vmem:[%s3 + $0x8] sm:$0xff]
  %v86 = vld [vmem:[%s3 + $0x10] sm:$0xff]
  %v87 = vld [vmem:[%s3 + $0x18] sm:$0xff]
  %v88 = vld [vmem:[%s3 + $0x20] sm:$0xff]
  %v89 = vld [vmem:[%s3 + $0x28] sm:$0xff]
  %v90 = vld [vmem:[%s3 + $0x30] sm:$0xff]
  %v91 = vld [vmem:[%s3 + $0x38] sm:$0xff]
  %v92 = vadd.f32 %v65, %v84
  %v93 = vadd.f32 %v67, %v85
  %v94 = vadd.f32 %v70, %v86
  %v95 = vadd.f32 %v72, %v87
  %v96 = vadd.f32 %v75, %v88
  %v97 = vadd.f32 %v77, %v89
  %v98 = vadd.f32 %v80, %v90
  %v99 = vadd.f32 %v82, %v91
  %100 = vst.msk [vmem:[%s4] sm:$0xff] %vm42, %v92
  %101 = vst.msk [vmem:[%s4 + $0x8] sm:$0xff] %vm42, %v93
  %102 = vst.msk [vmem:[%s4 + $0x10] sm:$0xff] %vm42, %v94
  %103 = vst.msk [vmem:[%s4 + $0x18] sm:$0xff] %vm42, %v95
  %104 = vst.msk [vmem:[%s4 + $0x20] sm:$0xff] %vm42, %v96
  %105 = vst.msk [vmem:[%s4 + $0x28] sm:$0xff] %vm42, %v97
  %106 = vst.msk [vmem:[%s4 + $0x30] sm:$0xff] %vm42, %v98
  %107 = vst.msk [vmem:[%s4 + $0x38] sm:$0xff] %vm42, %v99
  // Predicated region
  $region18: #{iterative_simulator_fwd.79} parent=0 // pred_check
    _
  $region19: #{iterative_simulator_fwd.79} parent=0 // pred_check_branch
    %109 = sbr.rel (0) target = $region21
  $region20: #{iterative_simulator_fwd.79} parent=0 // pred_region
    _
  $region21: #{iterative_simulator_fwd.79} parent=0 // pred_fallthru
    _
  // Predicated region
  $region22: #{iterative_simulator_fwd.79} parent=0 // pred_check
    _
  $region23: #{iterative_simulator_fwd.79} parent=0 // pred_check_branch
    %111 = sbr.rel (0) target = $region25
  $region24: #{iterative_simulator_fwd.79} parent=0 // pred_region
    _
  $region25: #{iterative_simulator_fwd.79} parent=0 // pred_fallthru
    _

// kernel: iterative_simulator_fwd.80
$region0: #{iterative_simulator_fwd.80}
  #allocation0 [shape = 'u32[]', space=smem, size = 0x4, offset = 0x4, fixed_abs, tag = 'smem constant byte address 0x4 - core index']
  #allocation1 [shape = 'u32[72,128]{1,0:T(1,128)}', space=vmem, size = 0x9000, scoped, tag = 'internal scratch']
  %s0 = inlined_call_operand.vmem [shape: f32[64,16], index: 0, kind: input, shape index: {}]
  %s1 = inlined_call_operand.vmem [shape: f32[1,16], index: 1, kind: input, shape index: {}]
  %s2 = inlined_call_operand.vmem [shape: f32[1,16], index: 2, kind: input, shape index: {}]
  %s3 = inlined_call_operand.vmem [shape: bf16[16,48], index: 3, kind: input, shape index: {}]
  %s4 = inlined_call_operand.vmem [shape: f32[1,48], index: 4, kind: input, shape index: {}]
  %s5 = inlined_call_operand.vmem [shape: f32[64,48], index: 5, kind: output, shape index: {}]
  %s6 = sld [smem:[#allocation0]]
  $region30: #{iterative_simulator_fwd.80} parent=0
    _
  %s8 = ssub.s32 1, %s6
  %s9 = scalar_select 0, %s8, %s6
  // Predicated region
  $region2: #{iterative_simulator_fwd.80} parent=0 // pred_check
    _
  $region3: #{iterative_simulator_fwd.80} parent=0 // pred_check_branch
    %11 = sbr.rel (0) target = $region5
  $region4: #{iterative_simulator_fwd.80} parent=0 // pred_region
    _
  $region5: #{iterative_simulator_fwd.80} parent=0 // pred_fallthru
    _
  // Predicated region
  $region6: #{iterative_simulator_fwd.80} parent=0 // pred_check
    _
  $region7: #{iterative_simulator_fwd.80} parent=0 // pred_check_branch
    %13 = sbr.rel (0) target = $region9
  $region8: #{iterative_simulator_fwd.80} parent=0 // pred_region
    _
  $region9: #{iterative_simulator_fwd.80} parent=0 // pred_fallthru
    _
  // Predicated region
  $region10: #{iterative_simulator_fwd.80} parent=0 // pred_check
    _
  $region11: #{iterative_simulator_fwd.80} parent=0 // pred_check_branch
    %15 = sbr.rel (0) target = $region13
  $region12: #{iterative_simulator_fwd.80} parent=0 // pred_region
    _
  $region13: #{iterative_simulator_fwd.80} parent=0 // pred_fallthru
    _
  // Predicated region
  $region14: #{iterative_simulator_fwd.80} parent=0 // pred_check
    _
  $region15: #{iterative_simulator_fwd.80} parent=0 // pred_check_branch
    %17 = sbr.rel (0) target = $region17
  $region16: #{iterative_simulator_fwd.80} parent=0 // pred_region
    _
  $region17: #{iterative_simulator_fwd.80} parent=0 // pred_fallthru
    _
  // Predicated region
  $region18: #{iterative_simulator_fwd.80} parent=0 // pred_check
    _
  $region19: #{iterative_simulator_fwd.80} parent=0 // pred_check_branch
    %19 = sbr.rel (0) target = $region21
  $region20: #{iterative_simulator_fwd.80} parent=0 // pred_region
    _
  $region21: #{iterative_simulator_fwd.80} parent=0 // pred_fallthru
    _
  %v21 = vld [vmem:[%s0] sm:$0xff]
  %v22 = vld [vmem:[%s0 + $0x8] sm:$0xff]
  %v23 = vld [vmem:[%s0 + $0x10] sm:$0xff]
  %v24 = vld [vmem:[%s0 + $0x18] sm:$0xff]
  %v25 = vld [vmem:[%s0 + $0x20] sm:$0xff]
  %v26 = vld [vmem:[%s0 + $0x28] sm:$0xff]
  %v27 = vld [vmem:[%s0 + $0x30] sm:$0xff]
  %v28 = vld [vmem:[%s0 + $0x38] sm:$0xff]
  %v29 = vld [vmem:[%s1] sm:$0x1]
  %v30 = vld [vmem:[%s2] sm:$0x1]
  %vm31 = vcmask 130048
  %v32 = vsel %vm31, %v21, 0.0
  %33 = vadd.xlane.f32.xlu0 %v32
  %v34 = vpop.xlane.xlu0 %33
  %v35 = vsel %vm31, %v22, 0.0
  %36 = vadd.xlane.f32.xlu0 %v35
  %v37 = vpop.xlane.xlu0 %36
  %v38 = vsel %vm31, %v23, 0.0
  %39 = vadd.xlane.f32.xlu0 %v38
  %v40 = vpop.xlane.xlu0 %39
  %v41 = vsel %vm31, %v24, 0.0
  %42 = vadd.xlane.f32.xlu0 %v41
  %v43 = vpop.xlane.xlu0 %42
  %v44 = vsel %vm31, %v25, 0.0
  %45 = vadd.xlane.f32.xlu0 %v44
  %v46 = vpop.xlane.xlu0 %45
  %v47 = vsel %vm31, %v26, 0.0
  %48 = vadd.xlane.f32.xlu0 %v47
  %v49 = vpop.xlane.xlu0 %48
  %v50 = vsel %vm31, %v27, 0.0
  %51 = vadd.xlane.f32.xlu0 %v50
  %v52 = vpop.xlane.xlu0 %51
  %v53 = vsel %vm31, %v28, 0.0
  %54 = vadd.xlane.f32.xlu0 %v53
  %v55 = vpop.xlane.xlu0 %54
  %v56 = vrcp.pop 16.0
  %v57 = vmul.f32 16.0, %v56
  %v58 = vsub.f32 1.0, %v57
  %v59 = vmul.f32 %v56, %v58
  %v60 = vadd.f32 %v56, %v59
  %vm61 = vweird.f32 %v56
  %v62 = vsel %vm61, %v56, %v60
  %v63 = vmul.f32 %v34, %v62
  %v64 = vmul.f32 %v37, %v62
  %v65 = vmul.f32 %v40, %v62
  %v66 = vmul.f32 %v43, %v62
  %v67 = vmul.f32 %v46, %v62
  %v68 = vmul.f32 %v49, %v62
  %v69 = vmul.f32 %v52, %v62
  %v70 = vmul.f32 %v55, %v62
  %v71 = vsub.f32 %v21, %v63
  %v72 = vsub.f32 %v22, %v64
  %v73 = vsub.f32 %v23, %v65
  %v74 = vsub.f32 %v24, %v66
  %v75 = vsub.f32 %v25, %v67
  %v76 = vsub.f32 %v26, %v68
  %v77 = vsub.f32 %v27, %v69
  %v78 = vsub.f32 %v28, %v70
  %v79 = vmul.f32 %v71, %v71
  %v80 = vmul.f32 %v72, %v72
  %v81 = vmul.f32 %v73, %v73
  %v82 = vmul.f32 %v74, %v74
  %v83 = vmul.f32 %v75, %v75
  %v84 = vmul.f32 %v76, %v76
  %v85 = vmul.f32 %v77, %v77
  %v86 = vmul.f32 %v78, %v78
  %v87 = vsel %vm31, %v79, 0.0
  %88 = vadd.xlane.f32.xlu0 %v87
  %v89 = vpop.xlane.xlu0 %88
  %v90 = vsel %vm31, %v80, 0.0
  %91 = vadd.xlane.f32.xlu0 %v90
  %v92 = vpop.xlane.xlu0 %91
  %v93 = vsel %vm31, %v81, 0.0
  %94 = vadd.xlane.f32.xlu0 %v93
  %v95 = vpop.xlane.xlu0 %94
  %v96 = vsel %vm31, %v82, 0.0
  %97 = vadd.xlane.f32.xlu0 %v96
  %v98 = vpop.xlane.xlu0 %97
  %v99 = vsel %vm31, %v83, 0.0
  %100 = vadd.xlane.f32.xlu0 %v99
  %v101 = vpop.xlane.xlu0 %100
  %v102 = vsel %vm31, %v84, 0.0
  %103 = vadd.xlane.f32.xlu0 %v102
  %v104 = vpop.xlane.xlu0 %103
  %v105 = vsel %vm31, %v85, 0.0
  %106 = vadd.xlane.f32.xlu0 %v105
  %v107 = vpop.xlane.xlu0 %106
  %v108 = vsel %vm31, %v86, 0.0
  %109 = vadd.xlane.f32.xlu0 %v108
  %v110 = vpop.xlane.xlu0 %109
  %v111 = vmul.f32 %v89, %v62
  %v112 = vmul.f32 %v92, %v62
  %v113 = vmul.f32 %v95, %v62
  %v114 = vmul.f32 %v98, %v62
  %v115 = vmul.f32 %v101, %v62
  %v116 = vmul.f32 %v104, %v62
  %v117 = vmul.f32 %v107, %v62
  %v118 = vmul.f32 %v110, %v62
  %v119 = vadd.f32 %v111, 1e-05
  %v120 = vadd.f32 %v112, 1e-05
  %v121 = vadd.f32 %v113, 1e-05
  %v122 = vadd.f32 %v114, 1e-05
  %v123 = vadd.f32 %v115, 1e-05
  %v124 = vadd.f32 %v116, 1e-05
  %v125 = vadd.f32 %v117, 1e-05
  %v126 = vadd.f32 %v118, 1e-05
  %v127 = vrsqrt.pop %v119
  %v128 = vmul.f32 %v127, %v119
  %v129 = vmul.f32 %v128, %v127
  %v130 = vmul.f32 0.5, %v129
  %v131 = vsub.f32 1.5, %v130
  %v132 = vmul.f32 %v127, %v131
  %vm133 = vweird.f32 %v119
  %vm134 = vweird.f32 %v127
  %vm135 = vmor %vm133, %vm134
  %v136 = vsel %vm135, %v127, %v132
  %v137 = vrsqrt.pop %v120
  %v138 = vmul.f32 %v137, %v120
  %v139 = vmul.f32 %v138, %v137
  %v140 = vmul.f32 0.5, %v139
  %v141 = vsub.f32 1.5, %v140
  %v142 = vmul.f32 %v137, %v141
  %vm143 = vweird.f32 %v120
  %vm144 = vweird.f32 %v137
  %vm145 = vmor %vm143, %vm144
  %v146 = vsel %vm145, %v137, %v142
  %v147 = vrsqrt.pop %v121
  %v148 = vmul.f32 %v147, %v121
  %v149 = vmul.f32 %v148, %v147
  %v150 = vmul.f32 0.5, %v149
  %v151 = vsub.f32 1.5, %v150
  %v152 = vmul.f32 %v147, %v151
  %vm153 = vweird.f32 %v121
  %vm154 = vweird.f32 %v147
  %vm155 = vmor %vm153, %vm154
  %v156 = vsel %vm155, %v147, %v152
  %v157 = vrsqrt.pop %v122
  %v158 = vmul.f32 %v157, %v122
  %v159 = vmul.f32 %v158, %v157
  %v160 = vmul.f32 0.5, %v159
  %v161 = vsub.f32 1.5, %v160
  %v162 = vmul.f32 %v157, %v161
  %vm163 = vweird.f32 %v122
  %vm164 = vweird.f32 %v157
  %vm165 = vmor %vm163, %vm164
  %v166 = vsel %vm165, %v157, %v162
  %v167 = vrsqrt.pop %v123
  %v168 = vmul.f32 %v167, %v123
  %v169 = vmul.f32 %v168, %v167
  %v170 = vmul.f32 0.5, %v169
  %v171 = vsub.f32 1.5, %v170
  %v172 = vmul.f32 %v167, %v171
  %vm173 = vweird.f32 %v123
  %vm174 = vweird.f32 %v167
  %vm175 = vmor %vm173, %vm174
  %v176 = vsel %vm175, %v167, %v172
  %v177 = vrsqrt.pop %v124
  %v178 = vmul.f32 %v177, %v124
  %v179 = vmul.f32 %v178, %v177
  %v180 = vmul.f32 0.5, %v179
  %v181 = vsub.f32 1.5, %v180
  %v182 = vmul.f32 %v177, %v181
  %vm183 = vweird.f32 %v124
  %vm184 = vweird.f32 %v177
  %vm185 = vmor %vm183, %vm184
  %v186 = vsel %vm185, %v177, %v182
  %v187 = vrsqrt.pop %v125
  %v188 = vmul.f32 %v187, %v125
  %v189 = vmul.f32 %v188, %v187
  %v190 = vmul.f32 0.5, %v189
  %v191 = vsub.f32 1.5, %v190
  %v192 = vmul.f32 %v187, %v191
  %vm193 = vweird.f32 %v125
  %vm194 = vweird.f32 %v187
  %vm195 = vmor %vm193, %vm194
  %v196 = vsel %vm195, %v187, %v192
  %v197 = vrsqrt.pop %v126
  %v198 = vmul.f32 %v197, %v126
  %v199 = vmul.f32 %v198, %v197
  %v200 = vmul.f32 0.5, %v199
  %v201 = vsub.f32 1.5, %v200
  %v202 = vmul.f32 %v197, %v201
  %vm203 = vweird.f32 %v126
  %vm204 = vweird.f32 %v197
  %vm205 = vmor %vm203, %vm204
  %v206 = vsel %vm205, %v197, %v202
  %v207 = vmul.f32 %v71, %v136
  %v208 = vmul.f32 %v72, %v146
  %v209 = vmul.f32 %v73, %v156
  %v210 = vmul.f32 %v74, %v166
  %v211 = vmul.f32 %v75, %v176
  %v212 = vmul.f32 %v76, %v186
  %v213 = vmul.f32 %v77, %v196
  %v214 = vmul.f32 %v78, %v206
  %v216 = vperm.slane %v29, 0
  %v218 = vmul.f32 %v207, %v216
  %v219 = vmul.f32 %v208, %v216
  %v220 = vmul.f32 %v209, %v216
  %v221 = vmul.f32 %v210, %v216
  %v222 = vmul.f32 %v211, %v216
  %v223 = vmul.f32 %v212, %v216
  %v224 = vmul.f32 %v213, %v216
  %v225 = vmul.f32 %v214, %v216
  %v227 = vperm.slane %v30, 0
  %v229 = vadd.f32 %v218, %v227
  %v230 = vadd.f32 %v219, %v227
  %v231 = vadd.f32 %v220, %v227
  %v232 = vadd.f32 %v221, %v227
  %v233 = vadd.f32 %v222, %v227
  %v234 = vadd.f32 %v223, %v227
  %v235 = vadd.f32 %v224, %v227
  %v236 = vadd.f32 %v225, %v227
  %v237 = vld [vmem:[%s3] sm:$0xf]
  %v238 = vld [vmem:[%s3 + $0x4] sm:$0xf]
  %v239 = vld [vmem:[%s4] sm:$0x1]
  %v240 = vpack.c.bf16 %v230, %v229
  %v241 = vpack.c.bf16 %v232, %v231
  %v242 = vpack.c.bf16 %v234, %v233
  %v243 = vpack.c.bf16 %v236, %v235
  %v245 = vperm.slane %v239, 0
  %v249 = vunpack.c.l.b16 %v237
  %v250 = vunpack.c.l.b16 %v238
  %v251 = vpack.c.b16 %v250, %v249
  %v254 = vsel %vm31, %v240, 0
  %v257 = vsel %vm31, %v241, 0
  %v260 = vsel %vm31, %v242, 0
  %v263 = vsel %vm31, %v243, 0
  %265 = vmatpush.bf16.msra.mxu0 0
  %266 = vmatpush.bf16.msra.mxu0 0
  %267 = vmatpush.bf16.msra.mxu0 0
  %268 = vmatpush.bf16.msra.mxu0 0
  %269 = vmatpush.bf16.msra.mxu0 0
  %270 = vmatpush.bf16.msra.mxu0 0
  %271 = vmatpush.bf16.msra.mxu0 0
  %272 = vmatpush.bf16.msra.mxu0 %v251
  %273 = vmatmul.bf16.gmra.mxu0 %v254
  %v274 = vpop.f32.mrf.mxu0
  %v275 = vadd.f32 %v245, %v274
  %v276 = vpop.f32.mrf.mxu0
  %v277 = vadd.f32 %v245, %v276
  %278 = vmatmul.bf16.gmra.mxu0 %v257
  %v279 = vpop.f32.mrf.mxu0
  %v280 = vadd.f32 %v245, %v279
  %v281 = vpop.f32.mrf.mxu0
  %v282 = vadd.f32 %v245, %v281
  %283 = vmatmul.bf16.gmra.mxu0 %v260
  %v284 = vpop.f32.mrf.mxu0
  %v285 = vadd.f32 %v245, %v284
  %v286 = vpop.f32.mrf.mxu0
  %v287 = vadd.f32 %v245, %v286
  %288 = vmatmul.bf16.gmra.mxu0 %v263
  %v289 = vpop.f32.mrf.mxu0
  %v290 = vadd.f32 %v245, %v289
  %v291 = vpop.f32.mrf.mxu0
  %v292 = vadd.f32 %v245, %v291
  %293 = vdwg.mxu0
  %v294 = vlaneseq
  %v295 = vand.u32 %v294, 127
  %vm296 = vcmp.ge.s32.totalorder %v295, 16
  %v297 = vxor.u32 %v275, 2147483648
  %v298 = vxor.u32 %v277, 2147483648
  %v299 = vxor.u32 %v280, 2147483648
  %v300 = vxor.u32 %v282, 2147483648
  %v301 = vxor.u32 %v285, 2147483648
  %v302 = vxor.u32 %v287, 2147483648
  %v303 = vxor.u32 %v290, 2147483648
  %v304 = vxor.u32 %v292, 2147483648
  %v305 = vmul.f32 %v297, 1.442695
  %v306 = vpow.pop %v305
  %v307 = vmul.f32 %v298, 1.442695
  %v308 = vpow.pop %v307
  %v309 = vmul.f32 %v299, 1.442695
  %v310 = vpow.pop %v309
  %v311 = vmul.f32 %v300, 1.442695
  %v312 = vpow.pop %v311
  %v313 = vmul.f32 %v301, 1.442695
  %v314 = vpow.pop %v313
  %v315 = vmul.f32 %v302, 1.442695
  %v316 = vpow.pop %v315
  %v317 = vmul.f32 %v303, 1.442695
  %v318 = vpow.pop %v317
  %v319 = vmul.f32 %v304, 1.442695
  %v320 = vpow.pop %v319
  %v321 = vadd.f32 %v306, 1.0
  %v322 = vadd.f32 %v308, 1.0
  %v323 = vadd.f32 %v310, 1.0
  %v324 = vadd.f32 %v312, 1.0
  %v325 = vadd.f32 %v314, 1.0
  %v326 = vadd.f32 %v316, 1.0
  %v327 = vadd.f32 %v318, 1.0
  %v328 = vadd.f32 %v320, 1.0
  %v329 = vrcp.pop %v321
  %v330 = vmul.f32 %v321, %v329
  %v331 = vsub.f32 1.0, %v330
  %v332 = vmul.f32 %v329, %v331
  %v333 = vadd.f32 %v329, %v332
  %vm334 = vweird.f32 %v321
  %vm335 = vweird.f32 %v329
  %vm336 = vmor %vm334, %vm335
  %v337 = vsel %vm336, %v329, %v333
  %v338 = vand.u32 2147483647, %v321
  %vm339 = vcmp.eq.f32.partialorder %v338, 8.507059e+37
  %v340 = vand.u32 %v321, 2147483648
  %v341 = vor.u32 1.1754944e-38, %v340
  %v342 = vsel %vm339, %v341, %v337
  %v343 = vmul.f32 1.0, %v342
  %v344 = vrcp.pop %v322
  %v345 = vmul.f32 %v322, %v344
  %v346 = vsub.f32 1.0, %v345
  %v347 = vmul.f32 %v344, %v346
  %v348 = vadd.f32 %v344, %v347
  %vm349 = vweird.f32 %v322
  %vm350 = vweird.f32 %v344
  %vm351 = vmor %vm349, %vm350
  %v352 = vsel %vm351, %v344, %v348
  %v353 = vand.u32 2147483647, %v322
  %vm354 = vcmp.eq.f32.partialorder %v353, 8.507059e+37
  %v355 = vand.u32 %v322, 2147483648
  %v356 = vor.u32 1.1754944e-38, %v355
  %v357 = vsel %vm354, %v356, %v352
  %v358 = vmul.f32 1.0, %v357
  %v359 = vrcp.pop %v323
  %v360 = vmul.f32 %v323, %v359
  %v361 = vsub.f32 1.0, %v360
  %v362 = vmul.f32 %v359, %v361
  %v363 = vadd.f32 %v359, %v362
  %vm364 = vweird.f32 %v323
  %vm365 = vweird.f32 %v359
  %vm366 = vmor %vm364, %vm365
  %v367 = vsel %vm366, %v359, %v363
  %v368 = vand.u32 2147483647, %v323
  %vm369 = vcmp.eq.f32.partialorder %v368, 8.507059e+37
  %v370 = vand.u32 %v323, 2147483648
  %v371 = vor.u32 1.1754944e-38, %v370
  %v372 = vsel %vm369, %v371, %v367
  %v373 = vmul.f32 1.0, %v372
  %v374 = vrcp.pop %v324
  %v375 = vmul.f32 %v324, %v374
  %v376 = vsub.f32 1.0, %v375
  %v377 = vmul.f32 %v374, %v376
  %v378 = vadd.f32 %v374, %v377
  %vm379 = vweird.f32 %v324
  %vm380 = vweird.f32 %v374
  %vm381 = vmor %vm379, %vm380
  %v382 = vsel %vm381, %v374, %v378
  %v383 = vand.u32 2147483647, %v324
  %vm384 = vcmp.eq.f32.partialorder %v383, 8.507059e+37
  %v385 = vand.u32 %v324, 2147483648
  %v386 = vor.u32 1.1754944e-38, %v385
  %v387 = vsel %vm384, %v386, %v382
  %v388 = vmul.f32 1.0, %v387
  %v389 = vrcp.pop %v325
  %v390 = vmul.f32 %v325, %v389
  %v391 = vsub.f32 1.0, %v390
  %v392 = vmul.f32 %v389, %v391
  %v393 = vadd.f32 %v389, %v392
  %vm394 = vweird.f32 %v325
  %vm395 = vweird.f32 %v389
  %vm396 = vmor %vm394, %vm395
  %v397 = vsel %vm396, %v389, %v393
  %v398 = vand.u32 2147483647, %v325
  %vm399 = vcmp.eq.f32.partialorder %v398, 8.507059e+37
  %v400 = vand.u32 %v325, 2147483648
  %v401 = vor.u32 1.1754944e-38, %v400
  %v402 = vsel %vm399, %v401, %v397
  %v403 = vmul.f32 1.0, %v402
  %v404 = vrcp.pop %v326
  %v405 = vmul.f32 %v326, %v404
  %v406 = vsub.f32 1.0, %v405
  %v407 = vmul.f32 %v404, %v406
  %v408 = vadd.f32 %v404, %v407
  %vm409 = vweird.f32 %v326
  %vm410 = vweird.f32 %v404
  %vm411 = vmor %vm409, %vm410
  %v412 = vsel %vm411, %v404, %v408
  %v413 = vand.u32 2147483647, %v326
  %vm414 = vcmp.eq.f32.partialorder %v413, 8.507059e+37
  %v415 = vand.u32 %v326, 2147483648
  %v416 = vor.u32 1.1754944e-38, %v415
  %v417 = vsel %vm414, %v416, %v412
  %v418 = vmul.f32 1.0, %v417
  %v419 = vrcp.pop %v327
  %v420 = vmul.f32 %v327, %v419
  %v421 = vsub.f32 1.0, %v420
  %v422 = vmul.f32 %v419, %v421
  %v423 = vadd.f32 %v419, %v422
  %vm424 = vweird.f32 %v327
  %vm425 = vweird.f32 %v419
  %vm426 = vmor %vm424, %vm425
  %v427 = vsel %vm426, %v419, %v423
  %v428 = vand.u32 2147483647, %v327
  %vm429 = vcmp.eq.f32.partialorder %v428, 8.507059e+37
  %v430 = vand.u32 %v327, 2147483648
  %v431 = vor.u32 1.1754944e-38, %v430
  %v432 = vsel %vm429, %v431, %v427
  %v433 = vmul.f32 1.0, %v432
  %v434 = vrcp.pop %v328
  %v435 = vmul.f32 %v328, %v434
  %v436 = vsub.f32 1.0, %v435
  %v437 = vmul.f32 %v434, %v436
  %v438 = vadd.f32 %v434, %v437
  %vm439 = vweird.f32 %v328
  %vm440 = vweird.f32 %v434
  %vm441 = vmor %vm439, %vm440
  %v442 = vsel %vm441, %v434, %v438
  %v443 = vand.u32 2147483647, %v328
  %vm444 = vcmp.eq.f32.partialorder %v443, 8.507059e+37
  %v445 = vand.u32 %v328, 2147483648
  %v446 = vor.u32 1.1754944e-38, %v445
  %v447 = vsel %vm444, %v446, %v442
  %v448 = vmul.f32 1.0, %v447
  %v449 = vsel %vm296, %v343, %v275
  %v450 = vsel %vm296, %v358, %v277
  %v451 = vsel %vm296, %v373, %v280
  %v452 = vsel %vm296, %v388, %v282
  %v453 = vsel %vm296, %v403, %v285
  %v454 = vsel %vm296, %v418, %v287
  %v455 = vsel %vm296, %v433, %v290
  %v456 = vsel %vm296, %v448, %v292
  %vm457 = vcmask 392192
  %458 = vst.msk [vmem:[%s5] sm:$0xff] %vm457, %v449
  %459 = vst.msk [vmem:[%s5 + $0x8] sm:$0xff] %vm457, %v450
  %460 = vst.msk [vmem:[%s5 + $0x10] sm:$0xff] %vm457, %v451
  %461 = vst.msk [vmem:[%s5 + $0x18] sm:$0xff] %vm457, %v452
  %462 = vst.msk [vmem:[%s5 + $0x20] sm:$0xff] %vm457, %v453
  %463 = vst.msk [vmem:[%s5 + $0x28] sm:$0xff] %vm457, %v454
  %464 = vst.msk [vmem:[%s5 + $0x30] sm:$0xff] %vm457, %v455
  %465 = vst.msk [vmem:[%s5 + $0x38] sm:$0xff] %vm457, %v456
  // Predicated region
  $region22: #{iterative_simulator_fwd.80} parent=0 // pred_check
    _
  $region23: #{iterative_simulator_fwd.80} parent=0 // pred_check_branch
    %467 = sbr.rel (0) target = $region25
  $region24: #{iterative_simulator_fwd.80} parent=0 // pred_region
    _
  $region25: #{iterative_simulator_fwd.80} parent=0 // pred_fallthru
    _
  // Predicated region
  $region26: #{iterative_simulator_fwd.80} parent=0 // pred_check
    _
  $region27: #{iterative_simulator_fwd.80} parent=0 // pred_check_branch
    %469 = sbr.rel (0) target = $region29
  $region28: #{iterative_simulator_fwd.80} parent=0 // pred_region
    _
  $region29: #{iterative_simulator_fwd.80} parent=0 // pred_fallthru
    _

// kernel: iterative_simulator_fwd.81
$region0: #{iterative_simulator_fwd.81}
  #allocation0 [shape = 'u32[]', space=smem, size = 0x4, offset = 0x4, fixed_abs, tag = 'smem constant byte address 0x4 - core index']
  #allocation1 [shape = 'u32[72,128]{1,0:T(1,128)}', space=vmem, size = 0x9000, scoped, tag = 'internal scratch']
  %s0 = inlined_call_operand.vmem [shape: bf16[8,8,8], index: 0, kind: input, shape index: {}]
  %s1 = inlined_call_operand.vmem [shape: bf16[8,8,8], index: 1, kind: input, shape index: {}]
  %s2 = inlined_call_operand.vmem [shape: f32[8,8,8], index: 2, kind: output, shape index: {}]
  %s3 = sld [smem:[#allocation0]]
  $region18: #{iterative_simulator_fwd.81} parent=0
    _
  %s5 = ssub.s32 1, %s3
  %s6 = scalar_select 0, %s5, %s3
  // Predicated region
  $region2: #{iterative_simulator_fwd.81} parent=0 // pred_check
    _
  $region3: #{iterative_simulator_fwd.81} parent=0 // pred_check_branch
    %8 = sbr.rel (0) target = $region5
  $region4: #{iterative_simulator_fwd.81} parent=0 // pred_region
    _
  $region5: #{iterative_simulator_fwd.81} parent=0 // pred_fallthru
    _
  // Predicated region
  $region6: #{iterative_simulator_fwd.81} parent=0 // pred_check
    _
  $region7: #{iterative_simulator_fwd.81} parent=0 // pred_check_branch
    %10 = sbr.rel (0) target = $region9
  $region8: #{iterative_simulator_fwd.81} parent=0 // pred_region
    _
  $region9: #{iterative_simulator_fwd.81} parent=0 // pred_fallthru
    _
  %v12 = vld [vmem:[%s0] sm:$0xf]
  %v13 = vld [vmem:[%s0 + $0x4] sm:$0xf]
  %v14 = vld [vmem:[%s0 + $0x8] sm:$0xf]
  %v15 = vld [vmem:[%s0 + $0xc] sm:$0xf]
  %v16 = vld [vmem:[%s0 + $0x10] sm:$0xf]
  %v17 = vld [vmem:[%s0 + $0x14] sm:$0xf]
  %v18 = vld [vmem:[%s0 + $0x18] sm:$0xf]
  %v19 = vld [vmem:[%s0 + $0x1c] sm:$0xf]
  %v20 = vld [vmem:[%s1] sm:$0xf]
  %v21 = vld [vmem:[%s1 + $0x4] sm:$0xf]
  %v22 = vld [vmem:[%s1 + $0x8] sm:$0xf]
  %v23 = vld [vmem:[%s1 + $0xc] sm:$0xf]
  %v24 = vld [vmem:[%s1 + $0x10] sm:$0xf]
  %v25 = vld [vmem:[%s1 + $0x14] sm:$0xf]
  %v26 = vld [vmem:[%s1 + $0x18] sm:$0xf]
  %v27 = vld [vmem:[%s1 + $0x1c] sm:$0xf]
  %vm28 = vcmask 64512
  %v30 = vsel %vm28, %v12, 0
  %vm32 = vcmask 1043456
  %v34 = vsel %vm32, %v20, 0
  %36 = vmatpush.bf16.msra.mxu0 0
  %37 = vmatpush.bf16.msra.mxu0 0
  %38 = vmatpush.bf16.msra.mxu0 0
  %39 = vmatpush.bf16.msra.mxu0 0
  %40 = vmatpush.bf16.msra.mxu0 0
  %41 = vmatpush.bf16.msra.mxu0 0
  %42 = vmatpush.bf16.msra.mxu0 0
  %43 = vmatpush.bf16.msra.mxu0 %v34
  %44 = vmatmul.bf16.gmra.mxu0 %v30
  %v45 = vpop.f32.mrf.mxu0
  %v46 = vadd.f32 0.0, %v45
  %v47 = vpop.f32.mrf.mxu0
  %48 = vdwg.mxu0
  %v50 = vsel %vm28, %v13, 0
  %v53 = vsel %vm32, %v21, 0
  %55 = vmatpush.bf16.msra.mxu0 0
  %56 = vmatpush.bf16.msra.mxu0 0
  %57 = vmatpush.bf16.msra.mxu0 0
  %58 = vmatpush.bf16.msra.mxu0 0
  %59 = vmatpush.bf16.msra.mxu0 0
  %60 = vmatpush.bf16.msra.mxu0 0
  %61 = vmatpush.bf16.msra.mxu0 0
  %62 = vmatpush.bf16.msra.mxu0 %v53
  %63 = vmatmul.bf16.gmra.mxu0 %v50
  %v64 = vpop.f32.mrf.mxu0
  %v65 = vadd.f32 0.0, %v64
  %v66 = vpop.f32.mrf.mxu0
  %67 = vdwg.mxu0
  %v69 = vsel %vm28, %v14, 0
  %v72 = vsel %vm32, %v22, 0
  %74 = vmatpush.bf16.msra.mxu0 0
  %75 = vmatpush.bf16.msra.mxu0 0
  %76 = vmatpush.bf16.msra.mxu0 0
  %77 = vmatpush.bf16.msra.mxu0 0
  %78 = vmatpush.bf16.msra.mxu0 0
  %79 = vmatpush.bf16.msra.mxu0 0
  %80 = vmatpush.bf16.msra.mxu0 0
  %81 = vmatpush.bf16.msra.mxu0 %v72
  %82 = vmatmul.bf16.gmra.mxu0 %v69
  %v83 = vpop.f32.mrf.mxu0
  %v84 = vadd.f32 0.0, %v83
  %v85 = vpop.f32.mrf.mxu0
  %86 = vdwg.mxu0
  %v88 = vsel %vm28, %v15, 0
  %v91 = vsel %vm32, %v23, 0
  %93 = vmatpush.bf16.msra.mxu0 0
  %94 = vmatpush.bf16.msra.mxu0 0
  %95 = vmatpush.bf16.msra.mxu0 0
  %96 = vmatpush.bf16.msra.mxu0 0
  %97 = vmatpush.bf16.msra.mxu0 0
  %98 = vmatpush.bf16.msra.mxu0 0
  %99 = vmatpush.bf16.msra.mxu0 0
  %100 = vmatpush.bf16.msra.mxu0 %v91
  %101 = vmatmul.bf16.gmra.mxu0 %v88
  %v102 = vpop.f32.mrf.mxu0
  %v103 = vadd.f32 0.0, %v102
  %v104 = vpop.f32.mrf.mxu0
  %105 = vdwg.mxu0
  %v107 = vsel %vm28, %v16, 0
  %v110 = vsel %vm32, %v24, 0
  %112 = vmatpush.bf16.msra.mxu0 0
  %113 = vmatpush.bf16.msra.mxu0 0
  %114 = vmatpush.bf16.msra.mxu0 0
  %115 = vmatpush.bf16.msra.mxu0 0
  %116 = vmatpush.bf16.msra.mxu0 0
  %117 = vmatpush.bf16.msra.mxu0 0
  %118 = vmatpush.bf16.msra.mxu0 0
  %119 = vmatpush.bf16.msra.mxu0 %v110
  %120 = vmatmul.bf16.gmra.mxu0 %v107
  %v121 = vpop.f32.mrf.mxu0
  %v122 = vadd.f32 0.0, %v121
  %v123 = vpop.f32.mrf.mxu0
  %124 = vdwg.mxu0
  %v126 = vsel %vm28, %v17, 0
  %v129 = vsel %vm32, %v25, 0
  %131 = vmatpush.bf16.msra.mxu0 0
  %132 = vmatpush.bf16.msra.mxu0 0
  %133 = vmatpush.bf16.msra.mxu0 0
  %134 = vmatpush.bf16.msra.mxu0 0
  %135 = vmatpush.bf16.msra.mxu0 0
  %136 = vmatpush.bf16.msra.mxu0 0
  %137 = vmatpush.bf16.msra.mxu0 0
  %138 = vmatpush.bf16.msra.mxu0 %v129
  %139 = vmatmul.bf16.gmra.mxu0 %v126
  %v140 = vpop.f32.mrf.mxu0
  %v141 = vadd.f32 0.0, %v140
  %v142 = vpop.f32.mrf.mxu0
  %143 = vdwg.mxu0
  %v145 = vsel %vm28, %v18, 0
  %v148 = vsel %vm32, %v26, 0
  %150 = vmatpush.bf16.msra.mxu0 0
  %151 = vmatpush.bf16.msra.mxu0 0
  %152 = vmatpush.bf16.msra.mxu0 0
  %153 = vmatpush.bf16.msra.mxu0 0
  %154 = vmatpush.bf16.msra.mxu0 0
  %155 = vmatpush.bf16.msra.mxu0 0
  %156 = vmatpush.bf16.msra.mxu0 0
  %157 = vmatpush.bf16.msra.mxu0 %v148
  %158 = vmatmul.bf16.gmra.mxu0 %v145
  %v159 = vpop.f32.mrf.mxu0
  %v160 = vadd.f32 0.0, %v159
  %v161 = vpop.f32.mrf.mxu0
  %162 = vdwg.mxu0
  %v164 = vsel %vm28, %v19, 0
  %v167 = vsel %vm32, %v27, 0
  %169 = vmatpush.bf16.msra.mxu0 0
  %170 = vmatpush.bf16.msra.mxu0 0
  %171 = vmatpush.bf16.msra.mxu0 0
  %172 = vmatpush.bf16.msra.mxu0 0
  %173 = vmatpush.bf16.msra.mxu0 0
  %174 = vmatpush.bf16.msra.mxu0 0
  %175 = vmatpush.bf16.msra.mxu0 0
  %176 = vmatpush.bf16.msra.mxu0 %v167
  %177 = vmatmul.bf16.gmra.mxu0 %v164
  %v178 = vpop.f32.mrf.mxu0
  %v179 = vadd.f32 0.0, %v178
  %v180 = vpop.f32.mrf.mxu0
  %181 = vdwg.mxu0
  %182 = vst.msk [vmem:[%s2] sm:$0xff] %vm28, %v46
  %183 = vst.msk [vmem:[%s2 + $0x8] sm:$0xff] %vm28, %v65
  %184 = vst.msk [vmem:[%s2 + $0x10] sm:$0xff] %vm28, %v84
  %185 = vst.msk [vmem:[%s2 + $0x18] sm:$0xff] %vm28, %v103
  %186 = vst.msk [vmem:[%s2 + $0x20] sm:$0xff] %vm28, %v122
  %187 = vst.msk [vmem:[%s2 + $0x28] sm:$0xff] %vm28, %v141
  %188 = vst.msk [vmem:[%s2 + $0x30] sm:$0xff] %vm28, %v160
  %189 = vst.msk [vmem:[%s2 + $0x38] sm:$0xff] %vm28, %v179
  // Predicated region
  $region10: #{iterative_simulator_fwd.81} parent=0 // pred_check
    _
  $region11: #{iterative_simulator_fwd.81} parent=0 // pred_check_branch
    %191 = sbr.rel (0) target = $region13
  $region12: #{iterative_simulator_fwd.81} parent=0 // pred_region
    _
  $region13: #{iterative_simulator_fwd.81} parent=0 // pred_fallthru
    _
  // Predicated region
  $region14: #{iterative_simulator_fwd.81} parent=0 // pred_check
    _
  $region15: #{iterative_simulator_fwd.81} parent=0 // pred_check_branch
    %193 = sbr.rel (0) target = $region17
  $region16: #{iterative_simulator_fwd.81} parent=0 // pred_region
    _
  $region17: #{iterative_simulator_fwd.81} parent=0 // pred_fallthru
    _

// kernel: iterative_simulator_fwd.82
$region0: #{iterative_simulator_fwd.82}
  #allocation0 [shape = 'u32[]', space=smem, size = 0x4, offset = 0x4, fixed_abs, tag = 'smem constant byte address 0x4 - core index']
  #allocation1 [shape = 'u32[72,128]{1,0:T(1,128)}', space=vmem, size = 0x9000, scoped, tag = 'internal scratch']
  %s0 = inlined_call_operand.vmem [shape: f32[64,8], index: 0, kind: input, shape index: {}]
  %s1 = inlined_call_operand.vmem [shape: f32[1,8], index: 1, kind: input, shape index: {}]
  %s2 = inlined_call_operand.vmem [shape: f32[1,8], index: 2, kind: input, shape index: {}]
  %s3 = inlined_call_operand.vmem [shape: bf16[8,16], index: 3, kind: input, shape index: {}]
  %s4 = inlined_call_operand.vmem [shape: f32[1,16], index: 4, kind: input, shape index: {}]
  %s5 = inlined_call_operand.vmem [shape: f32[64,16], index: 5, kind: input, shape index: {}]
  %s6 = inlined_call_operand.vmem [shape: f32[64,16], index: 6, kind: input, shape index: {}]
  %s7 = inlined_call_operand.vmem [shape: f32[64,16], index: 7, kind: output, shape index: {}]
  %s8 = sld [smem:[#allocation0]]
  $region38: #{iterative_simulator_fwd.82} parent=0
    _
  %s10 = ssub.s32 1, %s8
  %s11 = scalar_select 0, %s10, %s8
  // Predicated region
  $region2: #{iterative_simulator_fwd.82} parent=0 // pred_check
    _
  $region3: #{iterative_simulator_fwd.82} parent=0 // pred_check_branch
    %13 = sbr.rel (0) target = $region5
  $region4: #{iterative_simulator_fwd.82} parent=0 // pred_region
    _
  $region5: #{iterative_simulator_fwd.82} parent=0 // pred_fallthru
    _
  // Predicated region
  $region6: #{iterative_simulator_fwd.82} parent=0 // pred_check
    _
  $region7: #{iterative_simulator_fwd.82} parent=0 // pred_check_branch
    %15 = sbr.rel (0) target = $region9
  $region8: #{iterative_simulator_fwd.82} parent=0 // pred_region
    _
  $region9: #{iterative_simulator_fwd.82} parent=0 // pred_fallthru
    _
  // Predicated region
  $region10: #{iterative_simulator_fwd.82} parent=0 // pred_check
    _
  $region11: #{iterative_simulator_fwd.82} parent=0 // pred_check_branch
    %17 = sbr.rel (0) target = $region13
  $region12: #{iterative_simulator_fwd.82} parent=0 // pred_region
    _
  $region13: #{iterative_simulator_fwd.82} parent=0 // pred_fallthru
    _
  // Predicated region
  $region14: #{iterative_simulator_fwd.82} parent=0 // pred_check
    _
  $region15: #{iterative_simulator_fwd.82} parent=0 // pred_check_branch
    %19 = sbr.rel (0) target = $region17
  $region16: #{iterative_simulator_fwd.82} parent=0 // pred_region
    _
  $region17: #{iterative_simulator_fwd.82} parent=0 // pred_fallthru
    _
  // Predicated region
  $region18: #{iterative_simulator_fwd.82} parent=0 // pred_check
    _
  $region19: #{iterative_simulator_fwd.82} parent=0 // pred_check_branch
    %21 = sbr.rel (0) target = $region21
  $region20: #{iterative_simulator_fwd.82} parent=0 // pred_region
    _
  $region21: #{iterative_simulator_fwd.82} parent=0 // pred_fallthru
    _
  // Predicated region
  $region22: #{iterative_simulator_fwd.82} parent=0 // pred_check
    _
  $region23: #{iterative_simulator_fwd.82} parent=0 // pred_check_branch
    %23 = sbr.rel (0) target = $region25
  $region24: #{iterative_simulator_fwd.82} parent=0 // pred_region
    _
  $region25: #{iterative_simulator_fwd.82} parent=0 // pred_fallthru
    _
  // Predicated region
  $region26: #{iterative_simulator_fwd.82} parent=0 // pred_check
    _
  $region27: #{iterative_simulator_fwd.82} parent=0 // pred_check_branch
    %25 = sbr.rel (0) target = $region29
  $region28: #{iterative_simulator_fwd.82} parent=0 // pred_region
    _
  $region29: #{iterative_simulator_fwd.82} parent=0 // pred_fallthru
    _
  %v27 = vld [vmem:[%s0] sm:$0xff]
  %v28 = vld [vmem:[%s0 + $0x8] sm:$0xff]
  %v29 = vld [vmem:[%s0 + $0x10] sm:$0xff]
  %v30 = vld [vmem:[%s0 + $0x18] sm:$0xff]
  %v31 = vld [vmem:[%s0 + $0x20] sm:$0xff]
  %v32 = vld [vmem:[%s0 + $0x28] sm:$0xff]
  %v33 = vld [vmem:[%s0 + $0x30] sm:$0xff]
  %v34 = vld [vmem:[%s0 + $0x38] sm:$0xff]
  %v35 = vld [vmem:[%s1] sm:$0x1]
  %v36 = vld [vmem:[%s2] sm:$0x1]
  %vm37 = vcmask 64512
  %v38 = vsel %vm37, %v27, 0.0
  %39 = vadd.xlane.f32.xlu0 %v38
  %v40 = vpop.xlane.xlu0 %39
  %v41 = vsel %vm37, %v28, 0.0
  %42 = vadd.xlane.f32.xlu0 %v41
  %v43 = vpop.xlane.xlu0 %42
  %v44 = vsel %vm37, %v29, 0.0
  %45 = vadd.xlane.f32.xlu0 %v44
  %v46 = vpop.xlane.xlu0 %45
  %v47 = vsel %vm37, %v30, 0.0
  %48 = vadd.xlane.f32.xlu0 %v47
  %v49 = vpop.xlane.xlu0 %48
  %v50 = vsel %vm37, %v31, 0.0
  %51 = vadd.xlane.f32.xlu0 %v50
  %v52 = vpop.xlane.xlu0 %51
  %v53 = vsel %vm37, %v32, 0.0
  %54 = vadd.xlane.f32.xlu0 %v53
  %v55 = vpop.xlane.xlu0 %54
  %v56 = vsel %vm37, %v33, 0.0
  %57 = vadd.xlane.f32.xlu0 %v56
  %v58 = vpop.xlane.xlu0 %57
  %v59 = vsel %vm37, %v34, 0.0
  %60 = vadd.xlane.f32.xlu0 %v59
  %v61 = vpop.xlane.xlu0 %60
  %v62 = vrcp.pop 8.0
  %v63 = vmul.f32 8.0, %v62
  %v64 = vsub.f32 1.0, %v63
  %v65 = vmul.f32 %v62, %v64
  %v66 = vadd.f32 %v62, %v65
  %vm67 = vweird.f32 %v62
  %v68 = vsel %vm67, %v62, %v66
  %v69 = vmul.f32 %v40, %v68
  %v70 = vmul.f32 %v43, %v68
  %v71 = vmul.f32 %v46, %v68
  %v72 = vmul.f32 %v49, %v68
  %v73 = vmul.f32 %v52, %v68
  %v74 = vmul.f32 %v55, %v68
  %v75 = vmul.f32 %v58, %v68
  %v76 = vmul.f32 %v61, %v68
  %v77 = vsub.f32 %v27, %v69
  %v78 = vsub.f32 %v28, %v70
  %v79 = vsub.f32 %v29, %v71
  %v80 = vsub.f32 %v30, %v72
  %v81 = vsub.f32 %v31, %v73
  %v82 = vsub.f32 %v32, %v74
  %v83 = vsub.f32 %v33, %v75
  %v84 = vsub.f32 %v34, %v76
  %v85 = vmul.f32 %v77, %v77
  %v86 = vmul.f32 %v78, %v78
  %v87 = vmul.f32 %v79, %v79
  %v88 = vmul.f32 %v80, %v80
  %v89 = vmul.f32 %v81, %v81
  %v90 = vmul.f32 %v82, %v82
  %v91 = vmul.f32 %v83, %v83
  %v92 = vmul.f32 %v84, %v84
  %v93 = vsel %vm37, %v85, 0.0
  %94 = vadd.xlane.f32.xlu0 %v93
  %v95 = vpop.xlane.xlu0 %94
  %v96 = vsel %vm37, %v86, 0.0
  %97 = vadd.xlane.f32.xlu0 %v96
  %v98 = vpop.xlane.xlu0 %97
  %v99 = vsel %vm37, %v87, 0.0
  %100 = vadd.xlane.f32.xlu0 %v99
  %v101 = vpop.xlane.xlu0 %100
  %v102 = vsel %vm37, %v88, 0.0
  %103 = vadd.xlane.f32.xlu0 %v102
  %v104 = vpop.xlane.xlu0 %103
  %v105 = vsel %vm37, %v89, 0.0
  %106 = vadd.xlane.f32.xlu0 %v105
  %v107 = vpop.xlane.xlu0 %106
  %v108 = vsel %vm37, %v90, 0.0
  %109 = vadd.xlane.f32.xlu0 %v108
  %v110 = vpop.xlane.xlu0 %109
  %v111 = vsel %vm37, %v91, 0.0
  %112 = vadd.xlane.f32.xlu0 %v111
  %v113 = vpop.xlane.xlu0 %112
  %v114 = vsel %vm37, %v92, 0.0
  %115 = vadd.xlane.f32.xlu0 %v114
  %v116 = vpop.xlane.xlu0 %115
  %v117 = vmul.f32 %v95, %v68
  %v118 = vmul.f32 %v98, %v68
  %v119 = vmul.f32 %v101, %v68
  %v120 = vmul.f32 %v104, %v68
  %v121 = vmul.f32 %v107, %v68
  %v122 = vmul.f32 %v110, %v68
  %v123 = vmul.f32 %v113, %v68
  %v124 = vmul.f32 %v116, %v68
  %v125 = vadd.f32 %v117, 1e-05
  %v126 = vadd.f32 %v118, 1e-05
  %v127 = vadd.f32 %v119, 1e-05
  %v128 = vadd.f32 %v120, 1e-05
  %v129 = vadd.f32 %v121, 1e-05
  %v130 = vadd.f32 %v122, 1e-05
  %v131 = vadd.f32 %v123, 1e-05
  %v132 = vadd.f32 %v124, 1e-05
  %v133 = vrsqrt.pop %v125
  %v134 = vmul.f32 %v133, %v125
  %v135 = vmul.f32 %v134, %v133
  %v136 = vmul.f32 0.5, %v135
  %v137 = vsub.f32 1.5, %v136
  %v138 = vmul.f32 %v133, %v137
  %vm139 = vweird.f32 %v125
  %vm140 = vweird.f32 %v133
  %vm141 = vmor %vm139, %vm140
  %v142 = vsel %vm141, %v133, %v138
  %v143 = vrsqrt.pop %v126
  %v144 = vmul.f32 %v143, %v126
  %v145 = vmul.f32 %v144, %v143
  %v146 = vmul.f32 0.5, %v145
  %v147 = vsub.f32 1.5, %v146
  %v148 = vmul.f32 %v143, %v147
  %vm149 = vweird.f32 %v126
  %vm150 = vweird.f32 %v143
  %vm151 = vmor %vm149, %vm150
  %v152 = vsel %vm151, %v143, %v148
  %v153 = vrsqrt.pop %v127
  %v154 = vmul.f32 %v153, %v127
  %v155 = vmul.f32 %v154, %v153
  %v156 = vmul.f32 0.5, %v155
  %v157 = vsub.f32 1.5, %v156
  %v158 = vmul.f32 %v153, %v157
  %vm159 = vweird.f32 %v127
  %vm160 = vweird.f32 %v153
  %vm161 = vmor %vm159, %vm160
  %v162 = vsel %vm161, %v153, %v158
  %v163 = vrsqrt.pop %v128
  %v164 = vmul.f32 %v163, %v128
  %v165 = vmul.f32 %v164, %v163
  %v166 = vmul.f32 0.5, %v165
  %v167 = vsub.f32 1.5, %v166
  %v168 = vmul.f32 %v163, %v167
  %vm169 = vweird.f32 %v128
  %vm170 = vweird.f32 %v163
  %vm171 = vmor %vm169, %vm170
  %v172 = vsel %vm171, %v163, %v168
  %v173 = vrsqrt.pop %v129
  %v174 = vmul.f32 %v173, %v129
  %v175 = vmul.f32 %v174, %v173
  %v176 = vmul.f32 0.5, %v175
  %v177 = vsub.f32 1.5, %v176
  %v178 = vmul.f32 %v173, %v177
  %vm179 = vweird.f32 %v129
  %vm180 = vweird.f32 %v173
  %vm181 = vmor %vm179, %vm180
  %v182 = vsel %vm181, %v173, %v178
  %v183 = vrsqrt.pop %v130
  %v184 = vmul.f32 %v183, %v130
  %v185 = vmul.f32 %v184, %v183
  %v186 = vmul.f32 0.5, %v185
  %v187 = vsub.f32 1.5, %v186
  %v188 = vmul.f32 %v183, %v187
  %vm189 = vweird.f32 %v130
  %vm190 = vweird.f32 %v183
  %vm191 = vmor %vm189, %vm190
  %v192 = vsel %vm191, %v183, %v188
  %v193 = vrsqrt.pop %v131
  %v194 = vmul.f32 %v193, %v131
  %v195 = vmul.f32 %v194, %v193
  %v196 = vmul.f32 0.5, %v195
  %v197 = vsub.f32 1.5, %v196
  %v198 = vmul.f32 %v193, %v197
  %vm199 = vweird.f32 %v131
  %vm200 = vweird.f32 %v193
  %vm201 = vmor %vm199, %vm200
  %v202 = vsel %vm201, %v193, %v198
  %v203 = vrsqrt.pop %v132
  %v204 = vmul.f32 %v203, %v132
  %v205 = vmul.f32 %v204, %v203
  %v206 = vmul.f32 0.5, %v205
  %v207 = vsub.f32 1.5, %v206
  %v208 = vmul.f32 %v203, %v207
  %vm209 = vweird.f32 %v132
  %vm210 = vweird.f32 %v203
  %vm211 = vmor %vm209, %vm210
  %v212 = vsel %vm211, %v203, %v208
  %v213 = vmul.f32 %v77, %v142
  %v214 = vmul.f32 %v78, %v152
  %v215 = vmul.f32 %v79, %v162
  %v216 = vmul.f32 %v80, %v172
  %v217 = vmul.f32 %v81, %v182
  %v218 = vmul.f32 %v82, %v192
  %v219 = vmul.f32 %v83, %v202
  %v220 = vmul.f32 %v84, %v212
  %v222 = vperm.slane %v35, 0
  %v224 = vmul.f32 %v213, %v222
  %v225 = vmul.f32 %v214, %v222
  %v226 = vmul.f32 %v215, %v222
  %v227 = vmul.f32 %v216, %v222
  %v228 = vmul.f32 %v217, %v222
  %v229 = vmul.f32 %v218, %v222
  %v230 = vmul.f32 %v219, %v222
  %v231 = vmul.f32 %v220, %v222
  %v233 = vperm.slane %v36, 0
  %v235 = vadd.f32 %v224, %v233
  %v236 = vadd.f32 %v225, %v233
  %v237 = vadd.f32 %v226, %v233
  %v238 = vadd.f32 %v227, %v233
  %v239 = vadd.f32 %v228, %v233
  %v240 = vadd.f32 %v229, %v233
  %v241 = vadd.f32 %v230, %v233
  %v242 = vadd.f32 %v231, %v233
  %v243 = vld [vmem:[%s3] sm:$0xf]
  %v244 = vld [vmem:[%s4] sm:$0x1]
  %v245 = vpack.c.bf16 %v236, %v235
  %v246 = vpack.c.bf16 %v238, %v237
  %v247 = vpack.c.bf16 %v240, %v239
  %v248 = vpack.c.bf16 %v242, %v241
  %v250 = vperm.slane %v244, 0
  %v253 = vsel %vm37, %v245, 0
  %v256 = vsel %vm37, %v246, 0
  %v259 = vsel %vm37, %v247, 0
  %v262 = vsel %vm37, %v248, 0
  %vm264 = vcmask 1043456
  %v266 = vsel %vm264, %v243, 0
  %268 = vmatpush.bf16.msra.mxu0 0
  %269 = vmatpush.bf16.msra.mxu0 0
  %270 = vmatpush.bf16.msra.mxu0 0
  %271 = vmatpush.bf16.msra.mxu0 0
  %272 = vmatpush.bf16.msra.mxu0 0
  %273 = vmatpush.bf16.msra.mxu0 0
  %274 = vmatpush.bf16.msra.mxu0 0
  %275 = vmatpush.bf16.msra.mxu0 %v266
  %276 = vmatmul.bf16.gmra.mxu0 %v253
  %v277 = vpop.f32.mrf.mxu0
  %v278 = vadd.f32 %v250, %v277
  %v279 = vpop.f32.mrf.mxu0
  %v280 = vadd.f32 %v250, %v279
  %281 = vmatmul.bf16.gmra.mxu0 %v256
  %v282 = vpop.f32.mrf.mxu0
  %v283 = vadd.f32 %v250, %v282
  %v284 = vpop.f32.mrf.mxu0
  %v285 = vadd.f32 %v250, %v284
  %286 = vmatmul.bf16.gmra.mxu0 %v259
  %v287 = vpop.f32.mrf.mxu0
  %v288 = vadd.f32 %v250, %v287
  %v289 = vpop.f32.mrf.mxu0
  %v290 = vadd.f32 %v250, %v289
  %291 = vmatmul.bf16.gmra.mxu0 %v262
  %v292 = vpop.f32.mrf.mxu0
  %v293 = vadd.f32 %v250, %v292
  %v294 = vpop.f32.mrf.mxu0
  %v295 = vadd.f32 %v250, %v294
  %296 = vdwg.mxu0
  %v297 = vld [vmem:[%s5] sm:$0xff]
  %v298 = vld [vmem:[%s5 + $0x8] sm:$0xff]
  %v299 = vld [vmem:[%s5 + $0x10] sm:$0xff]
  %v300 = vld [vmem:[%s5 + $0x18] sm:$0xff]
  %v301 = vld [vmem:[%s5 + $0x20] sm:$0xff]
  %v302 = vld [vmem:[%s5 + $0x28] sm:$0xff]
  %v303 = vld [vmem:[%s5 + $0x30] sm:$0xff]
  %v304 = vld [vmem:[%s5 + $0x38] sm:$0xff]
  %v305 = vmul.f32 %v278, %v297
  %v306 = vmul.f32 %v280, %v298
  %v307 = vmul.f32 %v283, %v299
  %v308 = vmul.f32 %v285, %v300
  %v309 = vmul.f32 %v288, %v301
  %v310 = vmul.f32 %v290, %v302
  %v311 = vmul.f32 %v293, %v303
  %v312 = vmul.f32 %v295, %v304
  %v313 = vld [vmem:[%s6] sm:$0xff]
  %v314 = vld [vmem:[%s6 + $0x8] sm:$0xff]
  %v315 = vld [vmem:[%s6 + $0x10] sm:$0xff]
  %v316 = vld [vmem:[%s6 + $0x18] sm:$0xff]
  %v317 = vld [vmem:[%s6 + $0x20] sm:$0xff]
  %v318 = vld [vmem:[%s6 + $0x28] sm:$0xff]
  %v319 = vld [vmem:[%s6 + $0x30] sm:$0xff]
  %v320 = vld [vmem:[%s6 + $0x38] sm:$0xff]
  %v321 = vadd.f32 %v305, %v313
  %v322 = vadd.f32 %v306, %v314
  %v323 = vadd.f32 %v307, %v315
  %v324 = vadd.f32 %v308, %v316
  %v325 = vadd.f32 %v309, %v317
  %v326 = vadd.f32 %v310, %v318
  %v327 = vadd.f32 %v311, %v319
  %v328 = vadd.f32 %v312, %v320
  %vm329 = vcmask 130048
  %330 = vst.msk [vmem:[%s7] sm:$0xff] %vm329, %v321
  %331 = vst.msk [vmem:[%s7 + $0x8] sm:$0xff] %vm329, %v322
  %332 = vst.msk [vmem:[%s7 + $0x10] sm:$0xff] %vm329, %v323
  %333 = vst.msk [vmem:[%s7 + $0x18] sm:$0xff] %vm329, %v324
  %334 = vst.msk [vmem:[%s7 + $0x20] sm:$0xff] %vm329, %v325
  %335 = vst.msk [vmem:[%s7 + $0x28] sm:$0xff] %vm329, %v326
  %336 = vst.msk [vmem:[%s7 + $0x30] sm:$0xff] %vm329, %v327
  %337 = vst.msk [vmem:[%s7 + $0x38] sm:$0xff] %vm329, %v328
  // Predicated region
  $region30: #{iterative_simulator_fwd.82} parent=0 // pred_check
    _
  $region31: #{iterative_simulator_fwd.82} parent=0 // pred_check_branch
    %339 = sbr.rel (0) target = $region33
  $region32: #{iterative_simulator_fwd.82} parent=0 // pred_region
    _
  $region33: #{iterative_simulator_fwd.82} parent=0 // pred_fallthru
    _
  // Predicated region
  $region34: #{iterative_simulator_fwd.82} parent=0 // pred_check
    _
  $region35: #{iterative_simulator_fwd.82} parent=0 // pred_check_branch
    %341 = sbr.rel (0) target = $region37
  $region36: #{iterative_simulator_fwd.82} parent=0 // pred_region
    _
  $region37: #{iterative_simulator_fwd.82} parent=0 // pred_fallthru
    _

// kernel: iterative_simulator_fwd.86
$region0: #{iterative_simulator_fwd.86}
  #allocation0 [shape = 'u32[]', space=smem, size = 0x4, offset = 0x4, fixed_abs, tag = 'smem constant byte address 0x4 - core index']
  #allocation1 [shape = 'u32[72,128]{1,0:T(1,128)}', space=vmem, size = 0x9000, scoped, tag = 'internal scratch']
  %s0 = inlined_call_operand.vmem [shape: f32[64,16], index: 0, kind: input, shape index: {}]
  %s1 = inlined_call_operand.vmem [shape: f32[1,16], index: 1, kind: input, shape index: {}]
  %s2 = inlined_call_operand.vmem [shape: f32[1,16], index: 2, kind: input, shape index: {}]
  %s3 = inlined_call_operand.vmem [shape: bf16[16,32], index: 3, kind: input, shape index: {}]
  %s4 = inlined_call_operand.vmem [shape: f32[1,32], index: 4, kind: input, shape index: {}]
  %s5 = inlined_call_operand.vmem [shape: f32[64,32], index: 5, kind: output, shape index: {}]
  %s6 = sld [smem:[#allocation0]]
  $region30: #{iterative_simulator_fwd.86} parent=0
    _
  %s8 = ssub.s32 1, %s6
  %s9 = scalar_select 0, %s8, %s6
  // Predicated region
  $region2: #{iterative_simulator_fwd.86} parent=0 // pred_check
    _
  $region3: #{iterative_simulator_fwd.86} parent=0 // pred_check_branch
    %11 = sbr.rel (0) target = $region5
  $region4: #{iterative_simulator_fwd.86} parent=0 // pred_region
    _
  $region5: #{iterative_simulator_fwd.86} parent=0 // pred_fallthru
    _
  // Predicated region
  $region6: #{iterative_simulator_fwd.86} parent=0 // pred_check
    _
  $region7: #{iterative_simulator_fwd.86} parent=0 // pred_check_branch
    %13 = sbr.rel (0) target = $region9
  $region8: #{iterative_simulator_fwd.86} parent=0 // pred_region
    _
  $region9: #{iterative_simulator_fwd.86} parent=0 // pred_fallthru
    _
  // Predicated region
  $region10: #{iterative_simulator_fwd.86} parent=0 // pred_check
    _
  $region11: #{iterative_simulator_fwd.86} parent=0 // pred_check_branch
    %15 = sbr.rel (0) target = $region13
  $region12: #{iterative_simulator_fwd.86} parent=0 // pred_region
    _
  $region13: #{iterative_simulator_fwd.86} parent=0 // pred_fallthru
    _
  // Predicated region
  $region14: #{iterative_simulator_fwd.86} parent=0 // pred_check
    _
  $region15: #{iterative_simulator_fwd.86} parent=0 // pred_check_branch
    %17 = sbr.rel (0) target = $region17
  $region16: #{iterative_simulator_fwd.86} parent=0 // pred_region
    _
  $region17: #{iterative_simulator_fwd.86} parent=0 // pred_fallthru
    _
  // Predicated region
  $region18: #{iterative_simulator_fwd.86} parent=0 // pred_check
    _
  $region19: #{iterative_simulator_fwd.86} parent=0 // pred_check_branch
    %19 = sbr.rel (0) target = $region21
  $region20: #{iterative_simulator_fwd.86} parent=0 // pred_region
    _
  $region21: #{iterative_simulator_fwd.86} parent=0 // pred_fallthru
    _
  %v21 = vld [vmem:[%s0] sm:$0xff]
  %v22 = vld [vmem:[%s0 + $0x8] sm:$0xff]
  %v23 = vld [vmem:[%s0 + $0x10] sm:$0xff]
  %v24 = vld [vmem:[%s0 + $0x18] sm:$0xff]
  %v25 = vld [vmem:[%s0 + $0x20] sm:$0xff]
  %v26 = vld [vmem:[%s0 + $0x28] sm:$0xff]
  %v27 = vld [vmem:[%s0 + $0x30] sm:$0xff]
  %v28 = vld [vmem:[%s0 + $0x38] sm:$0xff]
  %v29 = vld [vmem:[%s1] sm:$0x1]
  %v30 = vld [vmem:[%s2] sm:$0x1]
  %vm31 = vcmask 130048
  %v32 = vsel %vm31, %v21, 0.0
  %33 = vadd.xlane.f32.xlu0 %v32
  %v34 = vpop.xlane.xlu0 %33
  %v35 = vsel %vm31, %v22, 0.0
  %36 = vadd.xlane.f32.xlu0 %v35
  %v37 = vpop.xlane.xlu0 %36
  %v38 = vsel %vm31, %v23, 0.0
  %39 = vadd.xlane.f32.xlu0 %v38
  %v40 = vpop.xlane.xlu0 %39
  %v41 = vsel %vm31, %v24, 0.0
  %42 = vadd.xlane.f32.xlu0 %v41
  %v43 = vpop.xlane.xlu0 %42
  %v44 = vsel %vm31, %v25, 0.0
  %45 = vadd.xlane.f32.xlu0 %v44
  %v46 = vpop.xlane.xlu0 %45
  %v47 = vsel %vm31, %v26, 0.0
  %48 = vadd.xlane.f32.xlu0 %v47
  %v49 = vpop.xlane.xlu0 %48
  %v50 = vsel %vm31, %v27, 0.0
  %51 = vadd.xlane.f32.xlu0 %v50
  %v52 = vpop.xlane.xlu0 %51
  %v53 = vsel %vm31, %v28, 0.0
  %54 = vadd.xlane.f32.xlu0 %v53
  %v55 = vpop.xlane.xlu0 %54
  %v56 = vrcp.pop 16.0
  %v57 = vmul.f32 16.0, %v56
  %v58 = vsub.f32 1.0, %v57
  %v59 = vmul.f32 %v56, %v58
  %v60 = vadd.f32 %v56, %v59
  %vm61 = vweird.f32 %v56
  %v62 = vsel %vm61, %v56, %v60
  %v63 = vmul.f32 %v34, %v62
  %v64 = vmul.f32 %v37, %v62
  %v65 = vmul.f32 %v40, %v62
  %v66 = vmul.f32 %v43, %v62
  %v67 = vmul.f32 %v46, %v62
  %v68 = vmul.f32 %v49, %v62
  %v69 = vmul.f32 %v52, %v62
  %v70 = vmul.f32 %v55, %v62
  %v71 = vsub.f32 %v21, %v63
  %v72 = vsub.f32 %v22, %v64
  %v73 = vsub.f32 %v23, %v65
  %v74 = vsub.f32 %v24, %v66
  %v75 = vsub.f32 %v25, %v67
  %v76 = vsub.f32 %v26, %v68
  %v77 = vsub.f32 %v27, %v69
  %v78 = vsub.f32 %v28, %v70
  %v79 = vmul.f32 %v71, %v71
  %v80 = vmul.f32 %v72, %v72
  %v81 = vmul.f32 %v73, %v73
  %v82 = vmul.f32 %v74, %v74
  %v83 = vmul.f32 %v75, %v75
  %v84 = vmul.f32 %v76, %v76
  %v85 = vmul.f32 %v77, %v77
  %v86 = vmul.f32 %v78, %v78
  %v87 = vsel %vm31, %v79, 0.0
  %88 = vadd.xlane.f32.xlu0 %v87
  %v89 = vpop.xlane.xlu0 %88
  %v90 = vsel %vm31, %v80, 0.0
  %91 = vadd.xlane.f32.xlu0 %v90
  %v92 = vpop.xlane.xlu0 %91
  %v93 = vsel %vm31, %v81, 0.0
  %94 = vadd.xlane.f32.xlu0 %v93
  %v95 = vpop.xlane.xlu0 %94
  %v96 = vsel %vm31, %v82, 0.0
  %97 = vadd.xlane.f32.xlu0 %v96
  %v98 = vpop.xlane.xlu0 %97
  %v99 = vsel %vm31, %v83, 0.0
  %100 = vadd.xlane.f32.xlu0 %v99
  %v101 = vpop.xlane.xlu0 %100
  %v102 = vsel %vm31, %v84, 0.0
  %103 = vadd.xlane.f32.xlu0 %v102
  %v104 = vpop.xlane.xlu0 %103
  %v105 = vsel %vm31, %v85, 0.0
  %106 = vadd.xlane.f32.xlu0 %v105
  %v107 = vpop.xlane.xlu0 %106
  %v108 = vsel %vm31, %v86, 0.0
  %109 = vadd.xlane.f32.xlu0 %v108
  %v110 = vpop.xlane.xlu0 %109
  %v111 = vmul.f32 %v89, %v62
  %v112 = vmul.f32 %v92, %v62
  %v113 = vmul.f32 %v95, %v62
  %v114 = vmul.f32 %v98, %v62
  %v115 = vmul.f32 %v101, %v62
  %v116 = vmul.f32 %v104, %v62
  %v117 = vmul.f32 %v107, %v62
  %v118 = vmul.f32 %v110, %v62
  %v119 = vadd.f32 %v111, 1e-05
  %v120 = vadd.f32 %v112, 1e-05
  %v121 = vadd.f32 %v113, 1e-05
  %v122 = vadd.f32 %v114, 1e-05
  %v123 = vadd.f32 %v115, 1e-05
  %v124 = vadd.f32 %v116, 1e-05
  %v125 = vadd.f32 %v117, 1e-05
  %v126 = vadd.f32 %v118, 1e-05
  %v127 = vrsqrt.pop %v119
  %v128 = vmul.f32 %v127, %v119
  %v129 = vmul.f32 %v128, %v127
  %v130 = vmul.f32 0.5, %v129
  %v131 = vsub.f32 1.5, %v130
  %v132 = vmul.f32 %v127, %v131
  %vm133 = vweird.f32 %v119
  %vm134 = vweird.f32 %v127
  %vm135 = vmor %vm133, %vm134
  %v136 = vsel %vm135, %v127, %v132
  %v137 = vrsqrt.pop %v120
  %v138 = vmul.f32 %v137, %v120
  %v139 = vmul.f32 %v138, %v137
  %v140 = vmul.f32 0.5, %v139
  %v141 = vsub.f32 1.5, %v140
  %v142 = vmul.f32 %v137, %v141
  %vm143 = vweird.f32 %v120
  %vm144 = vweird.f32 %v137
  %vm145 = vmor %vm143, %vm144
  %v146 = vsel %vm145, %v137, %v142
  %v147 = vrsqrt.pop %v121
  %v148 = vmul.f32 %v147, %v121
  %v149 = vmul.f32 %v148, %v147
  %v150 = vmul.f32 0.5, %v149
  %v151 = vsub.f32 1.5, %v150
  %v152 = vmul.f32 %v147, %v151
  %vm153 = vweird.f32 %v121
  %vm154 = vweird.f32 %v147
  %vm155 = vmor %vm153, %vm154
  %v156 = vsel %vm155, %v147, %v152
  %v157 = vrsqrt.pop %v122
  %v158 = vmul.f32 %v157, %v122
  %v159 = vmul.f32 %v158, %v157
  %v160 = vmul.f32 0.5, %v159
  %v161 = vsub.f32 1.5, %v160
  %v162 = vmul.f32 %v157, %v161
  %vm163 = vweird.f32 %v122
  %vm164 = vweird.f32 %v157
  %vm165 = vmor %vm163, %vm164
  %v166 = vsel %vm165, %v157, %v162
  %v167 = vrsqrt.pop %v123
  %v168 = vmul.f32 %v167, %v123
  %v169 = vmul.f32 %v168, %v167
  %v170 = vmul.f32 0.5, %v169
  %v171 = vsub.f32 1.5, %v170
  %v172 = vmul.f32 %v167, %v171
  %vm173 = vweird.f32 %v123
  %vm174 = vweird.f32 %v167
  %vm175 = vmor %vm173, %vm174
  %v176 = vsel %vm175, %v167, %v172
  %v177 = vrsqrt.pop %v124
  %v178 = vmul.f32 %v177, %v124
  %v179 = vmul.f32 %v178, %v177
  %v180 = vmul.f32 0.5, %v179
  %v181 = vsub.f32 1.5, %v180
  %v182 = vmul.f32 %v177, %v181
  %vm183 = vweird.f32 %v124
  %vm184 = vweird.f32 %v177
  %vm185 = vmor %vm183, %vm184
  %v186 = vsel %vm185, %v177, %v182
  %v187 = vrsqrt.pop %v125
  %v188 = vmul.f32 %v187, %v125
  %v189 = vmul.f32 %v188, %v187
  %v190 = vmul.f32 0.5, %v189
  %v191 = vsub.f32 1.5, %v190
  %v192 = vmul.f32 %v187, %v191
  %vm193 = vweird.f32 %v125
  %vm194 = vweird.f32 %v187
  %vm195 = vmor %vm193, %vm194
  %v196 = vsel %vm195, %v187, %v192
  %v197 = vrsqrt.pop %v126
  %v198 = vmul.f32 %v197, %v126
  %v199 = vmul.f32 %v198, %v197
  %v200 = vmul.f32 0.5, %v199
  %v201 = vsub.f32 1.5, %v200
  %v202 = vmul.f32 %v197, %v201
  %vm203 = vweird.f32 %v126
  %vm204 = vweird.f32 %v197
  %vm205 = vmor %vm203, %vm204
  %v206 = vsel %vm205, %v197, %v202
  %v207 = vmul.f32 %v71, %v136
  %v208 = vmul.f32 %v72, %v146
  %v209 = vmul.f32 %v73, %v156
  %v210 = vmul.f32 %v74, %v166
  %v211 = vmul.f32 %v75, %v176
  %v212 = vmul.f32 %v76, %v186
  %v213 = vmul.f32 %v77, %v196
  %v214 = vmul.f32 %v78, %v206
  %v216 = vperm.slane %v29, 0
  %v218 = vmul.f32 %v207, %v216
  %v219 = vmul.f32 %v208, %v216
  %v220 = vmul.f32 %v209, %v216
  %v221 = vmul.f32 %v210, %v216
  %v222 = vmul.f32 %v211, %v216
  %v223 = vmul.f32 %v212, %v216
  %v224 = vmul.f32 %v213, %v216
  %v225 = vmul.f32 %v214, %v216
  %v227 = vperm.slane %v30, 0
  %v229 = vadd.f32 %v218, %v227
  %v230 = vadd.f32 %v219, %v227
  %v231 = vadd.f32 %v220, %v227
  %v232 = vadd.f32 %v221, %v227
  %v233 = vadd.f32 %v222, %v227
  %v234 = vadd.f32 %v223, %v227
  %v235 = vadd.f32 %v224, %v227
  %v236 = vadd.f32 %v225, %v227
  %v237 = vld [vmem:[%s3] sm:$0xf]
  %v238 = vld [vmem:[%s3 + $0x4] sm:$0xf]
  %v239 = vld [vmem:[%s4] sm:$0x1]
  %v240 = vpack.c.bf16 %v230, %v229
  %v241 = vpack.c.bf16 %v232, %v231
  %v242 = vpack.c.bf16 %v234, %v233
  %v243 = vpack.c.bf16 %v236, %v235
  %v245 = vperm.slane %v239, 0
  %v249 = vunpack.c.l.b16 %v237
  %v250 = vunpack.c.l.b16 %v238
  %v251 = vpack.c.b16 %v250, %v249
  %v254 = vsel %vm31, %v240, 0
  %v257 = vsel %vm31, %v241, 0
  %v260 = vsel %vm31, %v242, 0
  %v263 = vsel %vm31, %v243, 0
  %265 = vmatpush.bf16.msra.mxu0 0
  %266 = vmatpush.bf16.msra.mxu0 0
  %267 = vmatpush.bf16.msra.mxu0 0
  %268 = vmatpush.bf16.msra.mxu0 0
  %269 = vmatpush.bf16.msra.mxu0 0
  %270 = vmatpush.bf16.msra.mxu0 0
  %271 = vmatpush.bf16.msra.mxu0 0
  %272 = vmatpush.bf16.msra.mxu0 %v251
  %273 = vmatmul.bf16.gmra.mxu0 %v254
  %v274 = vpop.f32.mrf.mxu0
  %v275 = vadd.f32 %v245, %v274
  %v276 = vpop.f32.mrf.mxu0
  %v277 = vadd.f32 %v245, %v276
  %278 = vmatmul.bf16.gmra.mxu0 %v257
  %v279 = vpop.f32.mrf.mxu0
  %v280 = vadd.f32 %v245, %v279
  %v281 = vpop.f32.mrf.mxu0
  %v282 = vadd.f32 %v245, %v281
  %283 = vmatmul.bf16.gmra.mxu0 %v260
  %v284 = vpop.f32.mrf.mxu0
  %v285 = vadd.f32 %v245, %v284
  %v286 = vpop.f32.mrf.mxu0
  %v287 = vadd.f32 %v245, %v286
  %288 = vmatmul.bf16.gmra.mxu0 %v263
  %v289 = vpop.f32.mrf.mxu0
  %v290 = vadd.f32 %v245, %v289
  %v291 = vpop.f32.mrf.mxu0
  %v292 = vadd.f32 %v245, %v291
  %293 = vdwg.mxu0
  %v294 = vmax.f32 %v275, 0.0
  %v295 = vmax.f32 %v277, 0.0
  %v296 = vmax.f32 %v280, 0.0
  %v297 = vmax.f32 %v282, 0.0
  %v298 = vmax.f32 %v285, 0.0
  %v299 = vmax.f32 %v287, 0.0
  %v300 = vmax.f32 %v290, 0.0
  %v301 = vmax.f32 %v292, 0.0
  %vm302 = vcmask 261120
  %303 = vst.msk [vmem:[%s5] sm:$0xff] %vm302, %v294
  %304 = vst.msk [vmem:[%s5 + $0x8] sm:$0xff] %vm302, %v295
  %305 = vst.msk [vmem:[%s5 + $0x10] sm:$0xff] %vm302, %v296
  %306 = vst.msk [vmem:[%s5 + $0x18] sm:$0xff] %vm302, %v297
  %307 = vst.msk [vmem:[%s5 + $0x20] sm:$0xff] %vm302, %v298
  %308 = vst.msk [vmem:[%s5 + $0x28] sm:$0xff] %vm302, %v299
  %309 = vst.msk [vmem:[%s5 + $0x30] sm:$0xff] %vm302, %v300
  %310 = vst.msk [vmem:[%s5 + $0x38] sm:$0xff] %vm302, %v301
  // Predicated region
  $region22: #{iterative_simulator_fwd.86} parent=0 // pred_check
    _
  $region23: #{iterative_simulator_fwd.86} parent=0 // pred_check_branch
    %312 = sbr.rel (0) target = $region25
  $region24: #{iterative_simulator_fwd.86} parent=0 // pred_region
    _
  $region25: #{iterative_simulator_fwd.86} parent=0 // pred_fallthru
    _
  // Predicated region
  $region26: #{iterative_simulator_fwd.86} parent=0 // pred_check
    _
  $region27: #{iterative_simulator_fwd.86} parent=0 // pred_check_branch
    %314 = sbr.rel (0) target = $region29
  $region28: #{iterative_simulator_fwd.86} parent=0 // pred_region
    _
  $region29: #{iterative_simulator_fwd.86} parent=0 // pred_fallthru
    _

// kernel: iterative_simulator_fwd.93
$region0: #{iterative_simulator_fwd.93}
  #allocation0 [shape = 'u32[]', space=smem, size = 0x4, offset = 0x4, fixed_abs, tag = 'smem constant byte address 0x4 - core index']
  #allocation1 [shape = 'u32[72,128]{1,0:T(1,128)}', space=vmem, size = 0x9000, scoped, tag = 'internal scratch']
  %s0 = inlined_call_operand.vmem [shape: f32[64,32], index: 0, kind: input, shape index: {}]
  %s1 = inlined_call_operand.vmem [shape: bf16[32,32], index: 1, kind: input, shape index: {}]
  %s2 = inlined_call_operand.vmem [shape: f32[1,32], index: 2, kind: input, shape index: {}]
  %s3 = inlined_call_operand.vmem [shape: f32[64,32], index: 3, kind: input, shape index: {}]
  %s4 = inlined_call_operand.vmem [shape: f32[64,32], index: 4, kind: input, shape index: {}]
  %s5 = inlined_call_operand.vmem [shape: f32[64,32], index: 5, kind: output, shape index: {}]
  %s6 = sld [smem:[#allocation0]]
  $region30: #{iterative_simulator_fwd.93} parent=0
    _
  %s8 = ssub.s32 1, %s6
  %s9 = scalar_select 0, %s8, %s6
  // Predicated region
  $region2: #{iterative_simulator_fwd.93} parent=0 // pred_check
    _
  $region3: #{iterative_simulator_fwd.93} parent=0 // pred_check_branch
    %11 = sbr.rel (0) target = $region5
  $region4: #{iterative_simulator_fwd.93} parent=0 // pred_region
    _
  $region5: #{iterative_simulator_fwd.93} parent=0 // pred_fallthru
    _
  // Predicated region
  $region6: #{iterative_simulator_fwd.93} parent=0 // pred_check
    _
  $region7: #{iterative_simulator_fwd.93} parent=0 // pred_check_branch
    %13 = sbr.rel (0) target = $region9
  $region8: #{iterative_simulator_fwd.93} parent=0 // pred_region
    _
  $region9: #{iterative_simulator_fwd.93} parent=0 // pred_fallthru
    _
  // Predicated region
  $region10: #{iterative_simulator_fwd.93} parent=0 // pred_check
    _
  $region11: #{iterative_simulator_fwd.93} parent=0 // pred_check_branch
    %15 = sbr.rel (0) target = $region13
  $region12: #{iterative_simulator_fwd.93} parent=0 // pred_region
    _
  $region13: #{iterative_simulator_fwd.93} parent=0 // pred_fallthru
    _
  // Predicated region
  $region14: #{iterative_simulator_fwd.93} parent=0 // pred_check
    _
  $region15: #{iterative_simulator_fwd.93} parent=0 // pred_check_branch
    %17 = sbr.rel (0) target = $region17
  $region16: #{iterative_simulator_fwd.93} parent=0 // pred_region
    _
  $region17: #{iterative_simulator_fwd.93} parent=0 // pred_fallthru
    _
  // Predicated region
  $region18: #{iterative_simulator_fwd.93} parent=0 // pred_check
    _
  $region19: #{iterative_simulator_fwd.93} parent=0 // pred_check_branch
    %19 = sbr.rel (0) target = $region21
  $region20: #{iterative_simulator_fwd.93} parent=0 // pred_region
    _
  $region21: #{iterative_simulator_fwd.93} parent=0 // pred_fallthru
    _
  %v21 = vld [vmem:[%s0] sm:$0xff]
  %v22 = vld [vmem:[%s0 + $0x8] sm:$0xff]
  %v23 = vld [vmem:[%s0 + $0x10] sm:$0xff]
  %v24 = vld [vmem:[%s0 + $0x18] sm:$0xff]
  %v25 = vld [vmem:[%s0 + $0x20] sm:$0xff]
  %v26 = vld [vmem:[%s0 + $0x28] sm:$0xff]
  %v27 = vld [vmem:[%s0 + $0x30] sm:$0xff]
  %v28 = vld [vmem:[%s0 + $0x38] sm:$0xff]
  %v29 = vld [vmem:[%s1] sm:$0xf]
  %v30 = vld [vmem:[%s1 + $0x4] sm:$0xf]
  %v31 = vld [vmem:[%s1 + $0x8] sm:$0xf]
  %v32 = vld [vmem:[%s1 + $0xc] sm:$0xf]
  %v33 = vld [vmem:[%s2] sm:$0x1]
  %v34 = vld [vmem:[%s3] sm:$0xff]
  %v35 = vld [vmem:[%s3 + $0x8] sm:$0xff]
  %v36 = vld [vmem:[%s3 + $0x10] sm:$0xff]
  %v37 = vld [vmem:[%s3 + $0x18] sm:$0xff]
  %v38 = vld [vmem:[%s3 + $0x20] sm:$0xff]
  %v39 = vld [vmem:[%s3 + $0x28] sm:$0xff]
  %v40 = vld [vmem:[%s3 + $0x30] sm:$0xff]
  %v41 = vld [vmem:[%s3 + $0x38] sm:$0xff]
  %v42 = vmul.f32 %v21, %v34
  %v43 = vmul.f32 %v22, %v35
  %v44 = vmul.f32 %v23, %v36
  %v45 = vmul.f32 %v24, %v37
  %v46 = vmul.f32 %v25, %v38
  %v47 = vmul.f32 %v26, %v39
  %v48 = vmul.f32 %v27, %v40
  %v49 = vmul.f32 %v28, %v41
  %v50 = vpack.c.bf16 %v43, %v42
  %v51 = vpack.c.bf16 %v45, %v44
  %v52 = vpack.c.bf16 %v47, %v46
  %v53 = vpack.c.bf16 %v49, %v48
  %v55 = vperm.slane %v33, 0
  %v61 = vunpack.c.l.b16 %v29
  %v62 = vunpack.c.l.b16 %v30
  %v63 = vunpack.c.l.b16 %v31
  %v64 = vunpack.c.l.b16 %v32
  %v65 = vpack.c.b16 %v62, %v61
  %v66 = vpack.c.b16 %v64, %v63
  %vm69 = vcmask 261120
  %v71 = vsel %vm69, %v50, 0
  %v74 = vsel %vm69, %v51, 0
  %v77 = vsel %vm69, %v52, 0
  %v80 = vsel %vm69, %v53, 0
  %82 = vmatpush.bf16.msra.mxu0 0
  %83 = vmatpush.bf16.msra.mxu0 0
  %84 = vmatpush.bf16.msra.mxu0 0
  %85 = vmatpush.bf16.msra.mxu0 0
  %86 = vmatpush.bf16.msra.mxu0 0
  %87 = vmatpush.bf16.msra.mxu0 0
  %88 = vmatpush.bf16.msra.mxu0 %v66
  %89 = vmatpush.bf16.msra.mxu0 %v65
  %90 = vmatmul.bf16.gmra.mxu0 %v71
  %v91 = vpop.f32.mrf.mxu0
  %v92 = vadd.f32 %v55, %v91
  %v93 = vpop.f32.mrf.mxu0
  %v94 = vadd.f32 %v55, %v93
  %95 = vmatmul.bf16.gmra.mxu0 %v74
  %v96 = vpop.f32.mrf.mxu0
  %v97 = vadd.f32 %v55, %v96
  %v98 = vpop.f32.mrf.mxu0
  %v99 = vadd.f32 %v55, %v98
  %100 = vmatmul.bf16.gmra.mxu0 %v77
  %v101 = vpop.f32.mrf.mxu0
  %v102 = vadd.f32 %v55, %v101
  %v103 = vpop.f32.mrf.mxu0
  %v104 = vadd.f32 %v55, %v103
  %105 = vmatmul.bf16.gmra.mxu0 %v80
  %v106 = vpop.f32.mrf.mxu0
  %v107 = vadd.f32 %v55, %v106
  %v108 = vpop.f32.mrf.mxu0
  %v109 = vadd.f32 %v55, %v108
  %110 = vdwg.mxu0
  %v111 = vld [vmem:[%s4] sm:$0xff]
  %v112 = vld [vmem:[%s4 + $0x8] sm:$0xff]
  %v113 = vld [vmem:[%s4 + $0x10] sm:$0xff]
  %v114 = vld [vmem:[%s4 + $0x18] sm:$0xff]
  %v115 = vld [vmem:[%s4 + $0x20] sm:$0xff]
  %v116 = vld [vmem:[%s4 + $0x28] sm:$0xff]
  %v117 = vld [vmem:[%s4 + $0x30] sm:$0xff]
  %v118 = vld [vmem:[%s4 + $0x38] sm:$0xff]
  %v119 = vadd.f32 %v92, %v111
  %v120 = vadd.f32 %v94, %v112
  %v121 = vadd.f32 %v97, %v113
  %v122 = vadd.f32 %v99, %v114
  %v123 = vadd.f32 %v102, %v115
  %v124 = vadd.f32 %v104, %v116
  %v125 = vadd.f32 %v107, %v117
  %v126 = vadd.f32 %v109, %v118
  %127 = vst.msk [vmem:[%s5] sm:$0xff] %vm69, %v119
  %128 = vst.msk [vmem:[%s5 + $0x8] sm:$0xff] %vm69, %v120
  %129 = vst.msk [vmem:[%s5 + $0x10] sm:$0xff] %vm69, %v121
  %130 = vst.msk [vmem:[%s5 + $0x18] sm:$0xff] %vm69, %v122
  %131 = vst.msk [vmem:[%s5 + $0x20] sm:$0xff] %vm69, %v123
  %132 = vst.msk [vmem:[%s5 + $0x28] sm:$0xff] %vm69, %v124
  %133 = vst.msk [vmem:[%s5 + $0x30] sm:$0xff] %vm69, %v125
  %134 = vst.msk [vmem:[%s5 + $0x38] sm:$0xff] %vm69, %v126
  // Predicated region
  $region22: #{iterative_simulator_fwd.93} parent=0 // pred_check
    _
  $region23: #{iterative_simulator_fwd.93} parent=0 // pred_check_branch
    %136 = sbr.rel (0) target = $region25
  $region24: #{iterative_simulator_fwd.93} parent=0 // pred_region
    _
  $region25: #{iterative_simulator_fwd.93} parent=0 // pred_fallthru
    _
  // Predicated region
  $region26: #{iterative_simulator_fwd.93} parent=0 // pred_check
    _
  $region27: #{iterative_simulator_fwd.93} parent=0 // pred_check_branch
    %138 = sbr.rel (0) target = $region29
  $region28: #{iterative_simulator_fwd.93} parent=0 // pred_region
    _
  $region29: #{iterative_simulator_fwd.93} parent=0 // pred_fallthru
    _

// kernel: iterative_simulator_fwd.89
$region0: #{iterative_simulator_fwd.89}
  #allocation0 [shape = 'u32[]', space=smem, size = 0x4, offset = 0x4, fixed_abs, tag = 'smem constant byte address 0x4 - core index']
  #allocation1 [shape = 'u32[72,128]{1,0:T(1,128)}', space=vmem, size = 0x9000, scoped, tag = 'internal scratch']
  %s0 = inlined_call_operand.vmem [shape: f32[64,32], index: 0, kind: input, shape index: {}]
  %s1 = inlined_call_operand.vmem [shape: f32[1,32], index: 1, kind: input, shape index: {}]
  %s2 = inlined_call_operand.vmem [shape: f32[1,32], index: 2, kind: input, shape index: {}]
  %s3 = inlined_call_operand.vmem [shape: bf16[32,192], index: 3, kind: input, shape index: {}]
  %s4 = inlined_call_operand.vmem [shape: f32[1,192], index: 4, kind: input, shape index: {}]
  %s5 = inlined_call_operand.vmem [shape: f32[64,192], index: 5, kind: output, shape index: {}]
  %s6 = sld [smem:[#allocation0]]
  $region30: #{iterative_simulator_fwd.89} parent=0
    _
  %s8 = ssub.s32 1, %s6
  %s9 = scalar_select 0, %s8, %s6
  // Predicated region
  $region2: #{iterative_simulator_fwd.89} parent=0 // pred_check
    _
  $region3: #{iterative_simulator_fwd.89} parent=0 // pred_check_branch
    %11 = sbr.rel (0) target = $region5
  $region4: #{iterative_simulator_fwd.89} parent=0 // pred_region
    _
  $region5: #{iterative_simulator_fwd.89} parent=0 // pred_fallthru
    _
  // Predicated region
  $region6: #{iterative_simulator_fwd.89} parent=0 // pred_check
    _
  $region7: #{iterative_simulator_fwd.89} parent=0 // pred_check_branch
    %13 = sbr.rel (0) target = $region9
  $region8: #{iterative_simulator_fwd.89} parent=0 // pred_region
    _
  $region9: #{iterative_simulator_fwd.89} parent=0 // pred_fallthru
    _
  // Predicated region
  $region10: #{iterative_simulator_fwd.89} parent=0 // pred_check
    _
  $region11: #{iterative_simulator_fwd.89} parent=0 // pred_check_branch
    %15 = sbr.rel (0) target = $region13
  $region12: #{iterative_simulator_fwd.89} parent=0 // pred_region
    _
  $region13: #{iterative_simulator_fwd.89} parent=0 // pred_fallthru
    _
  // Predicated region
  $region14: #{iterative_simulator_fwd.89} parent=0 // pred_check
    _
  $region15: #{iterative_simulator_fwd.89} parent=0 // pred_check_branch
    %17 = sbr.rel (0) target = $region17
  $region16: #{iterative_simulator_fwd.89} parent=0 // pred_region
    _
  $region17: #{iterative_simulator_fwd.89} parent=0 // pred_fallthru
    _
  // Predicated region
  $region18: #{iterative_simulator_fwd.89} parent=0 // pred_check
    _
  $region19: #{iterative_simulator_fwd.89} parent=0 // pred_check_branch
    %19 = sbr.rel (0) target = $region21
  $region20: #{iterative_simulator_fwd.89} parent=0 // pred_region
    _
  $region21: #{iterative_simulator_fwd.89} parent=0 // pred_fallthru
    _
  %v21 = vld [vmem:[%s0] sm:$0xff]
  %v22 = vld [vmem:[%s0 + $0x8] sm:$0xff]
  %v23 = vld [vmem:[%s0 + $0x10] sm:$0xff]
  %v24 = vld [vmem:[%s0 + $0x18] sm:$0xff]
  %v25 = vld [vmem:[%s0 + $0x20] sm:$0xff]
  %v26 = vld [vmem:[%s0 + $0x28] sm:$0xff]
  %v27 = vld [vmem:[%s0 + $0x30] sm:$0xff]
  %v28 = vld [vmem:[%s0 + $0x38] sm:$0xff]
  %v29 = vld [vmem:[%s1] sm:$0x1]
  %v30 = vld [vmem:[%s2] sm:$0x1]
  %vm31 = vcmask 261120
  %v32 = vsel %vm31, %v21, 0.0
  %33 = vadd.xlane.f32.xlu0 %v32
  %v34 = vpop.xlane.xlu0 %33
  %v35 = vsel %vm31, %v22, 0.0
  %36 = vadd.xlane.f32.xlu0 %v35
  %v37 = vpop.xlane.xlu0 %36
  %v38 = vsel %vm31, %v23, 0.0
  %39 = vadd.xlane.f32.xlu0 %v38
  %v40 = vpop.xlane.xlu0 %39
  %v41 = vsel %vm31, %v24, 0.0
  %42 = vadd.xlane.f32.xlu0 %v41
  %v43 = vpop.xlane.xlu0 %42
  %v44 = vsel %vm31, %v25, 0.0
  %45 = vadd.xlane.f32.xlu0 %v44
  %v46 = vpop.xlane.xlu0 %45
  %v47 = vsel %vm31, %v26, 0.0
  %48 = vadd.xlane.f32.xlu0 %v47
  %v49 = vpop.xlane.xlu0 %48
  %v50 = vsel %vm31, %v27, 0.0
  %51 = vadd.xlane.f32.xlu0 %v50
  %v52 = vpop.xlane.xlu0 %51
  %v53 = vsel %vm31, %v28, 0.0
  %54 = vadd.xlane.f32.xlu0 %v53
  %v55 = vpop.xlane.xlu0 %54
  %v56 = vrcp.pop 32.0
  %v57 = vmul.f32 32.0, %v56
  %v58 = vsub.f32 1.0, %v57
  %v59 = vmul.f32 %v56, %v58
  %v60 = vadd.f32 %v56, %v59
  %vm61 = vweird.f32 %v56
  %v62 = vsel %vm61, %v56, %v60
  %v63 = vmul.f32 %v34, %v62
  %v64 = vmul.f32 %v37, %v62
  %v65 = vmul.f32 %v40, %v62
  %v66 = vmul.f32 %v43, %v62
  %v67 = vmul.f32 %v46, %v62
  %v68 = vmul.f32 %v49, %v62
  %v69 = vmul.f32 %v52, %v62
  %v70 = vmul.f32 %v55, %v62
  %v71 = vsub.f32 %v21, %v63
  %v72 = vsub.f32 %v22, %v64
  %v73 = vsub.f32 %v23, %v65
  %v74 = vsub.f32 %v24, %v66
  %v75 = vsub.f32 %v25, %v67
  %v76 = vsub.f32 %v26, %v68
  %v77 = vsub.f32 %v27, %v69
  %v78 = vsub.f32 %v28, %v70
  %v79 = vmul.f32 %v71, %v71
  %v80 = vmul.f32 %v72, %v72
  %v81 = vmul.f32 %v73, %v73
  %v82 = vmul.f32 %v74, %v74
  %v83 = vmul.f32 %v75, %v75
  %v84 = vmul.f32 %v76, %v76
  %v85 = vmul.f32 %v77, %v77
  %v86 = vmul.f32 %v78, %v78
  %v87 = vsel %vm31, %v79, 0.0
  %88 = vadd.xlane.f32.xlu0 %v87
  %v89 = vpop.xlane.xlu0 %88
  %v90 = vsel %vm31, %v80, 0.0
  %91 = vadd.xlane.f32.xlu0 %v90
  %v92 = vpop.xlane.xlu0 %91
  %v93 = vsel %vm31, %v81, 0.0
  %94 = vadd.xlane.f32.xlu0 %v93
  %v95 = vpop.xlane.xlu0 %94
  %v96 = vsel %vm31, %v82, 0.0
  %97 = vadd.xlane.f32.xlu0 %v96
  %v98 = vpop.xlane.xlu0 %97
  %v99 = vsel %vm31, %v83, 0.0
  %100 = vadd.xlane.f32.xlu0 %v99
  %v101 = vpop.xlane.xlu0 %100
  %v102 = vsel %vm31, %v84, 0.0
  %103 = vadd.xlane.f32.xlu0 %v102
  %v104 = vpop.xlane.xlu0 %103
  %v105 = vsel %vm31, %v85, 0.0
  %106 = vadd.xlane.f32.xlu0 %v105
  %v107 = vpop.xlane.xlu0 %106
  %v108 = vsel %vm31, %v86, 0.0
  %109 = vadd.xlane.f32.xlu0 %v108
  %v110 = vpop.xlane.xlu0 %109
  %v111 = vmul.f32 %v89, %v62
  %v112 = vmul.f32 %v92, %v62
  %v113 = vmul.f32 %v95, %v62
  %v114 = vmul.f32 %v98, %v62
  %v115 = vmul.f32 %v101, %v62
  %v116 = vmul.f32 %v104, %v62
  %v117 = vmul.f32 %v107, %v62
  %v118 = vmul.f32 %v110, %v62
  %v119 = vadd.f32 %v111, 1e-05
  %v120 = vadd.f32 %v112, 1e-05
  %v121 = vadd.f32 %v113, 1e-05
  %v122 = vadd.f32 %v114, 1e-05
  %v123 = vadd.f32 %v115, 1e-05
  %v124 = vadd.f32 %v116, 1e-05
  %v125 = vadd.f32 %v117, 1e-05
  %v126 = vadd.f32 %v118, 1e-05
  %v127 = vrsqrt.pop %v119
  %v128 = vmul.f32 %v127, %v119
  %v129 = vmul.f32 %v128, %v127
  %v130 = vmul.f32 0.5, %v129
  %v131 = vsub.f32 1.5, %v130
  %v132 = vmul.f32 %v127, %v131
  %vm133 = vweird.f32 %v119
  %vm134 = vweird.f32 %v127
  %vm135 = vmor %vm133, %vm134
  %v136 = vsel %vm135, %v127, %v132
  %v137 = vrsqrt.pop %v120
  %v138 = vmul.f32 %v137, %v120
  %v139 = vmul.f32 %v138, %v137
  %v140 = vmul.f32 0.5, %v139
  %v141 = vsub.f32 1.5, %v140
  %v142 = vmul.f32 %v137, %v141
  %vm143 = vweird.f32 %v120
  %vm144 = vweird.f32 %v137
  %vm145 = vmor %vm143, %vm144
  %v146 = vsel %vm145, %v137, %v142
  %v147 = vrsqrt.pop %v121
  %v148 = vmul.f32 %v147, %v121
  %v149 = vmul.f32 %v148, %v147
  %v150 = vmul.f32 0.5, %v149
  %v151 = vsub.f32 1.5, %v150
  %v152 = vmul.f32 %v147, %v151
  %vm153 = vweird.f32 %v121
  %vm154 = vweird.f32 %v147
  %vm155 = vmor %vm153, %vm154
  %v156 = vsel %vm155, %v147, %v152
  %v157 = vrsqrt.pop %v122
  %v158 = vmul.f32 %v157, %v122
  %v159 = vmul.f32 %v158, %v157
  %v160 = vmul.f32 0.5, %v159
  %v161 = vsub.f32 1.5, %v160
  %v162 = vmul.f32 %v157, %v161
  %vm163 = vweird.f32 %v122
  %vm164 = vweird.f32 %v157
  %vm165 = vmor %vm163, %vm164
  %v166 = vsel %vm165, %v157, %v162
  %v167 = vrsqrt.pop %v123
  %v168 = vmul.f32 %v167, %v123
  %v169 = vmul.f32 %v168, %v167
  %v170 = vmul.f32 0.5, %v169
  %v171 = vsub.f32 1.5, %v170
  %v172 = vmul.f32 %v167, %v171
  %vm173 = vweird.f32 %v123
  %vm174 = vweird.f32 %v167
  %vm175 = vmor %vm173, %vm174
  %v176 = vsel %vm175, %v167, %v172
  %v177 = vrsqrt.pop %v124
  %v178 = vmul.f32 %v177, %v124
  %v179 = vmul.f32 %v178, %v177
  %v180 = vmul.f32 0.5, %v179
  %v181 = vsub.f32 1.5, %v180
  %v182 = vmul.f32 %v177, %v181
  %vm183 = vweird.f32 %v124
  %vm184 = vweird.f32 %v177
  %vm185 = vmor %vm183, %vm184
  %v186 = vsel %vm185, %v177, %v182
  %v187 = vrsqrt.pop %v125
  %v188 = vmul.f32 %v187, %v125
  %v189 = vmul.f32 %v188, %v187
  %v190 = vmul.f32 0.5, %v189
  %v191 = vsub.f32 1.5, %v190
  %v192 = vmul.f32 %v187, %v191
  %vm193 = vweird.f32 %v125
  %vm194 = vweird.f32 %v187
  %vm195 = vmor %vm193, %vm194
  %v196 = vsel %vm195, %v187, %v192
  %v197 = vrsqrt.pop %v126
  %v198 = vmul.f32 %v197, %v126
  %v199 = vmul.f32 %v198, %v197
  %v200 = vmul.f32 0.5, %v199
  %v201 = vsub.f32 1.5, %v200
  %v202 = vmul.f32 %v197, %v201
  %vm203 = vweird.f32 %v126
  %vm204 = vweird.f32 %v197
  %vm205 = vmor %vm203, %vm204
  %v206 = vsel %vm205, %v197, %v202
  %v207 = vmul.f32 %v71, %v136
  %v208 = vmul.f32 %v72, %v146
  %v209 = vmul.f32 %v73, %v156
  %v210 = vmul.f32 %v74, %v166
  %v211 = vmul.f32 %v75, %v176
  %v212 = vmul.f32 %v76, %v186
  %v213 = vmul.f32 %v77, %v196
  %v214 = vmul.f32 %v78, %v206
  %v216 = vperm.slane %v29, 0
  %v218 = vmul.f32 %v207, %v216
  %v219 = vmul.f32 %v208, %v216
  %v220 = vmul.f32 %v209, %v216
  %v221 = vmul.f32 %v210, %v216
  %v222 = vmul.f32 %v211, %v216
  %v223 = vmul.f32 %v212, %v216
  %v224 = vmul.f32 %v213, %v216
  %v225 = vmul.f32 %v214, %v216
  %v227 = vperm.slane %v30, 0
  %v229 = vadd.f32 %v218, %v227
  %v230 = vadd.f32 %v219, %v227
  %v231 = vadd.f32 %v220, %v227
  %v232 = vadd.f32 %v221, %v227
  %v233 = vadd.f32 %v222, %v227
  %v234 = vadd.f32 %v223, %v227
  %v235 = vadd.f32 %v224, %v227
  %v236 = vadd.f32 %v225, %v227
  %v237 = vld [vmem:[%s3] sm:$0xff]
  %v238 = vld [vmem:[%s3 + $0x8] sm:$0xff]
  %v239 = vld [vmem:[%s3 + $0x10] sm:$0xff]
  %v240 = vld [vmem:[%s3 + $0x18] sm:$0xff]
  %v241 = vld [vmem:[%s4] sm:$0x3]
  %v242 = vpack.c.bf16 %v230, %v229
  %v243 = vpack.c.bf16 %v232, %v231
  %v244 = vpack.c.bf16 %v234, %v233
  %v245 = vpack.c.bf16 %v236, %v235
  %v247 = vperm.slane %v241, 0
  %v248 = vperm.slane %v241, 1
  %v255 = vunpack.c.l.b16 %v237
  %v256 = vunpack.c.h.b16 %v237
  %v257 = vunpack.c.l.b16 %v238
  %v258 = vunpack.c.h.b16 %v238
  %v259 = vunpack.c.l.b16 %v239
  %v260 = vunpack.c.h.b16 %v239
  %v261 = vunpack.c.l.b16 %v240
  %v262 = vunpack.c.h.b16 %v240
  %v263 = vpack.c.b16 %v257, %v255
  %v264 = vpack.c.b16 %v258, %v256
  %v265 = vpack.c.b16 %v261, %v259
  %v266 = vpack.c.b16 %v262, %v260
  %v272 = vsel %vm31, %v242, 0
  %v275 = vsel %vm31, %v243, 0
  %v278 = vsel %vm31, %v244, 0
  %v281 = vsel %vm31, %v245, 0
  %283 = vmatpush.bf16.msra.mxu0 0
  %284 = vmatpush.bf16.msra.mxu0 0
  %285 = vmatpush.bf16.msra.mxu0 0
  %286 = vmatpush.bf16.msra.mxu0 0
  %287 = vmatpush.bf16.msra.mxu0 0
  %288 = vmatpush.bf16.msra.mxu0 0
  %289 = vmatpush.bf16.msra.mxu0 %v265
  %290 = vmatpush.bf16.msra.mxu0 %v263
  %291 = vmatmul.bf16.gmra.mxu0 %v272
  %v292 = vpop.f32.mrf.mxu0
  %v293 = vadd.f32 %v247, %v292
  %v294 = vpop.f32.mrf.mxu0
  %v295 = vadd.f32 %v247, %v294
  %296 = vmatmul.bf16.gmra.mxu0 %v275
  %v297 = vpop.f32.mrf.mxu0
  %v298 = vadd.f32 %v247, %v297
  %v299 = vpop.f32.mrf.mxu0
  %v300 = vadd.f32 %v247, %v299
  %301 = vmatmul.bf16.gmra.mxu0 %v278
  %v302 = vpop.f32.mrf.mxu0
  %v303 = vadd.f32 %v247, %v302
  %v304 = vpop.f32.mrf.mxu0
  %v305 = vadd.f32 %v247, %v304
  %306 = vmatmul.bf16.gmra.mxu0 %v281
  %v307 = vpop.f32.mrf.mxu0
  %v308 = vadd.f32 %v247, %v307
  %v309 = vpop.f32.mrf.mxu0
  %v310 = vadd.f32 %v247, %v309
  %311 = vdwg.mxu0
  %312 = vmatpush.bf16.msra.mxu0 0
  %313 = vmatpush.bf16.msra.mxu0 0
  %314 = vmatpush.bf16.msra.mxu0 0
  %315 = vmatpush.bf16.msra.mxu0 0
  %316 = vmatpush.bf16.msra.mxu0 0
  %317 = vmatpush.bf16.msra.mxu0 0
  %318 = vmatpush.bf16.msra.mxu0 %v266
  %319 = vmatpush.bf16.msra.mxu0 %v264
  %320 = vmatmul.bf16.gmra.mxu0 %v272
  %v321 = vpop.f32.mrf.mxu0
  %v322 = vadd.f32 %v248, %v321
  %v323 = vpop.f32.mrf.mxu0
  %v324 = vadd.f32 %v248, %v323
  %325 = vmatmul.bf16.gmra.mxu0 %v275
  %v326 = vpop.f32.mrf.mxu0
  %v327 = vadd.f32 %v248, %v326
  %v328 = vpop.f32.mrf.mxu0
  %v329 = vadd.f32 %v248, %v328
  %330 = vmatmul.bf16.gmra.mxu0 %v278
  %v331 = vpop.f32.mrf.mxu0
  %v332 = vadd.f32 %v248, %v331
  %v333 = vpop.f32.mrf.mxu0
  %v334 = vadd.f32 %v248, %v333
  %335 = vmatmul.bf16.gmra.mxu0 %v281
  %v336 = vpop.f32.mrf.mxu0
  %v337 = vadd.f32 %v248, %v336
  %v338 = vpop.f32.mrf.mxu0
  %v339 = vadd.f32 %v248, %v338
  %340 = vdwg.mxu0
  %v341 = vlaneseq
  %v342 = vand.u32 %v341, 127
  %v343 = vadd.s32 %v342, 128
  %vm344 = vcmp.ge.s32.totalorder %v342, 160
  %vm345 = vcmp.ge.s32.totalorder %v343, 160
  %v346 = vxor.u32 %v293, 2147483648
  %v347 = vxor.u32 %v322, 2147483648
  %v348 = vxor.u32 %v295, 2147483648
  %v349 = vxor.u32 %v324, 2147483648
  %v350 = vxor.u32 %v298, 2147483648
  %v351 = vxor.u32 %v327, 2147483648
  %v352 = vxor.u32 %v300, 2147483648
  %v353 = vxor.u32 %v329, 2147483648
  %v354 = vxor.u32 %v303, 2147483648
  %v355 = vxor.u32 %v332, 2147483648
  %v356 = vxor.u32 %v305, 2147483648
  %v357 = vxor.u32 %v334, 2147483648
  %v358 = vxor.u32 %v308, 2147483648
  %v359 = vxor.u32 %v337, 2147483648
  %v360 = vxor.u32 %v310, 2147483648
  %v361 = vxor.u32 %v339, 2147483648
  %v362 = vmul.f32 %v346, 1.442695
  %v363 = vpow.pop %v362
  %v364 = vmul.f32 %v347, 1.442695
  %v365 = vpow.pop %v364
  %v366 = vmul.f32 %v348, 1.442695
  %v367 = vpow.pop %v366
  %v368 = vmul.f32 %v349, 1.442695
  %v369 = vpow.pop %v368
  %v370 = vmul.f32 %v350, 1.442695
  %v371 = vpow.pop %v370
  %v372 = vmul.f32 %v351, 1.442695
  %v373 = vpow.pop %v372
  %v374 = vmul.f32 %v352, 1.442695
  %v375 = vpow.pop %v374
  %v376 = vmul.f32 %v353, 1.442695
  %v377 = vpow.pop %v376
  %v378 = vmul.f32 %v354, 1.442695
  %v379 = vpow.pop %v378
  %v380 = vmul.f32 %v355, 1.442695
  %v381 = vpow.pop %v380
  %v382 = vmul.f32 %v356, 1.442695
  %v383 = vpow.pop %v382
  %v384 = vmul.f32 %v357, 1.442695
  %v385 = vpow.pop %v384
  %v386 = vmul.f32 %v358, 1.442695
  %v387 = vpow.pop %v386
  %v388 = vmul.f32 %v359, 1.442695
  %v389 = vpow.pop %v388
  %v390 = vmul.f32 %v360, 1.442695
  %v391 = vpow.pop %v390
  %v392 = vmul.f32 %v361, 1.442695
  %v393 = vpow.pop %v392
  %v394 = vadd.f32 %v363, 1.0
  %v395 = vadd.f32 %v365, 1.0
  %v396 = vadd.f32 %v367, 1.0
  %v397 = vadd.f32 %v369, 1.0
  %v398 = vadd.f32 %v371, 1.0
  %v399 = vadd.f32 %v373, 1.0
  %v400 = vadd.f32 %v375, 1.0
  %v401 = vadd.f32 %v377, 1.0
  %v402 = vadd.f32 %v379, 1.0
  %v403 = vadd.f32 %v381, 1.0
  %v404 = vadd.f32 %v383, 1.0
  %v405 = vadd.f32 %v385, 1.0
  %v406 = vadd.f32 %v387, 1.0
  %v407 = vadd.f32 %v389, 1.0
  %v408 = vadd.f32 %v391, 1.0
  %v409 = vadd.f32 %v393, 1.0
  %v410 = vrcp.pop %v394
  %v411 = vmul.f32 %v394, %v410
  %v412 = vsub.f32 1.0, %v411
  %v413 = vmul.f32 %v410, %v412
  %v414 = vadd.f32 %v410, %v413
  %vm415 = vweird.f32 %v394
  %vm416 = vweird.f32 %v410
  %vm417 = vmor %vm415, %vm416
  %v418 = vsel %vm417, %v410, %v414
  %v419 = vand.u32 2147483647, %v394
  %vm420 = vcmp.eq.f32.partialorder %v419, 8.507059e+37
  %v421 = vand.u32 %v394, 2147483648
  %v422 = vor.u32 1.1754944e-38, %v421
  %v423 = vsel %vm420, %v422, %v418
  %v424 = vmul.f32 1.0, %v423
  %v425 = vrcp.pop %v395
  %v426 = vmul.f32 %v395, %v425
  %v427 = vsub.f32 1.0, %v426
  %v428 = vmul.f32 %v425, %v427
  %v429 = vadd.f32 %v425, %v428
  %vm430 = vweird.f32 %v395
  %vm431 = vweird.f32 %v425
  %vm432 = vmor %vm430, %vm431
  %v433 = vsel %vm432, %v425, %v429
  %v434 = vand.u32 2147483647, %v395
  %vm435 = vcmp.eq.f32.partialorder %v434, 8.507059e+37
  %v436 = vand.u32 %v395, 2147483648
  %v437 = vor.u32 1.1754944e-38, %v436
  %v438 = vsel %vm435, %v437, %v433
  %v439 = vmul.f32 1.0, %v438
  %v440 = vrcp.pop %v396
  %v441 = vmul.f32 %v396, %v440
  %v442 = vsub.f32 1.0, %v441
  %v443 = vmul.f32 %v440, %v442
  %v444 = vadd.f32 %v440, %v443
  %vm445 = vweird.f32 %v396
  %vm446 = vweird.f32 %v440
  %vm447 = vmor %vm445, %vm446
  %v448 = vsel %vm447, %v440, %v444
  %v449 = vand.u32 2147483647, %v396
  %vm450 = vcmp.eq.f32.partialorder %v449, 8.507059e+37
  %v451 = vand.u32 %v396, 2147483648
  %v452 = vor.u32 1.1754944e-38, %v451
  %v453 = vsel %vm450, %v452, %v448
  %v454 = vmul.f32 1.0, %v453
  %v455 = vrcp.pop %v397
  %v456 = vmul.f32 %v397, %v455
  %v457 = vsub.f32 1.0, %v456
  %v458 = vmul.f32 %v455, %v457
  %v459 = vadd.f32 %v455, %v458
  %vm460 = vweird.f32 %v397
  %vm461 = vweird.f32 %v455
  %vm462 = vmor %vm460, %vm461
  %v463 = vsel %vm462, %v455, %v459
  %v464 = vand.u32 2147483647, %v397
  %vm465 = vcmp.eq.f32.partialorder %v464, 8.507059e+37
  %v466 = vand.u32 %v397, 2147483648
  %v467 = vor.u32 1.1754944e-38, %v466
  %v468 = vsel %vm465, %v467, %v463
  %v469 = vmul.f32 1.0, %v468
  %v470 = vrcp.pop %v398
  %v471 = vmul.f32 %v398, %v470
  %v472 = vsub.f32 1.0, %v471
  %v473 = vmul.f32 %v470, %v472
  %v474 = vadd.f32 %v470, %v473
  %vm475 = vweird.f32 %v398
  %vm476 = vweird.f32 %v470
  %vm477 = vmor %vm475, %vm476
  %v478 = vsel %vm477, %v470, %v474
  %v479 = vand.u32 2147483647, %v398
  %vm480 = vcmp.eq.f32.partialorder %v479, 8.507059e+37
  %v481 = vand.u32 %v398, 2147483648
  %v482 = vor.u32 1.1754944e-38, %v481
  %v483 = vsel %vm480, %v482, %v478
  %v484 = vmul.f32 1.0, %v483
  %v485 = vrcp.pop %v399
  %v486 = vmul.f32 %v399, %v485
  %v487 = vsub.f32 1.0, %v486
  %v488 = vmul.f32 %v485, %v487
  %v489 = vadd.f32 %v485, %v488
  %vm490 = vweird.f32 %v399
  %vm491 = vweird.f32 %v485
  %vm492 = vmor %vm490, %vm491
  %v493 = vsel %vm492, %v485, %v489
  %v494 = vand.u32 2147483647, %v399
  %vm495 = vcmp.eq.f32.partialorder %v494, 8.507059e+37
  %v496 = vand.u32 %v399, 2147483648
  %v497 = vor.u32 1.1754944e-38, %v496
  %v498 = vsel %vm495, %v497, %v493
  %v499 = vmul.f32 1.0, %v498
  %v500 = vrcp.pop %v400
  %v501 = vmul.f32 %v400, %v500
  %v502 = vsub.f32 1.0, %v501
  %v503 = vmul.f32 %v500, %v502
  %v504 = vadd.f32 %v500, %v503
  %vm505 = vweird.f32 %v400
  %vm506 = vweird.f32 %v500
  %vm507 = vmor %vm505, %vm506
  %v508 = vsel %vm507, %v500, %v504
  %v509 = vand.u32 2147483647, %v400
  %vm510 = vcmp.eq.f32.partialorder %v509, 8.507059e+37
  %v511 = vand.u32 %v400, 2147483648
  %v512 = vor.u32 1.1754944e-38, %v511
  %v513 = vsel %vm510, %v512, %v508
  %v514 = vmul.f32 1.0, %v513
  %v515 = vrcp.pop %v401
  %v516 = vmul.f32 %v401, %v515
  %v517 = vsub.f32 1.0, %v516
  %v518 = vmul.f32 %v515, %v517
  %v519 = vadd.f32 %v515, %v518
  %vm520 = vweird.f32 %v401
  %vm521 = vweird.f32 %v515
  %vm522 = vmor %vm520, %vm521
  %v523 = vsel %vm522, %v515, %v519
  %v524 = vand.u32 2147483647, %v401
  %vm525 = vcmp.eq.f32.partialorder %v524, 8.507059e+37
  %v526 = vand.u32 %v401, 2147483648
  %v527 = vor.u32 1.1754944e-38, %v526
  %v528 = vsel %vm525, %v527, %v523
  %v529 = vmul.f32 1.0, %v528
  %v530 = vrcp.pop %v402
  %v531 = vmul.f32 %v402, %v530
  %v532 = vsub.f32 1.0, %v531
  %v533 = vmul.f32 %v530, %v532
  %v534 = vadd.f32 %v530, %v533
  %vm535 = vweird.f32 %v402
  %vm536 = vweird.f32 %v530
  %vm537 = vmor %vm535, %vm536
  %v538 = vsel %vm537, %v530, %v534
  %v539 = vand.u32 2147483647, %v402
  %vm540 = vcmp.eq.f32.partialorder %v539, 8.507059e+37
  %v541 = vand.u32 %v402, 2147483648
  %v542 = vor.u32 1.1754944e-38, %v541
  %v543 = vsel %vm540, %v542, %v538
  %v544 = vmul.f32 1.0, %v543
  %v545 = vrcp.pop %v403
  %v546 = vmul.f32 %v403, %v545
  %v547 = vsub.f32 1.0, %v546
  %v548 = vmul.f32 %v545, %v547
  %v549 = vadd.f32 %v545, %v548
  %vm550 = vweird.f32 %v403
  %vm551 = vweird.f32 %v545
  %vm552 = vmor %vm550, %vm551
  %v553 = vsel %vm552, %v545, %v549
  %v554 = vand.u32 2147483647, %v403
  %vm555 = vcmp.eq.f32.partialorder %v554, 8.507059e+37
  %v556 = vand.u32 %v403, 2147483648
  %v557 = vor.u32 1.1754944e-38, %v556
  %v558 = vsel %vm555, %v557, %v553
  %v559 = vmul.f32 1.0, %v558
  %v560 = vrcp.pop %v404
  %v561 = vmul.f32 %v404, %v560
  %v562 = vsub.f32 1.0, %v561
  %v563 = vmul.f32 %v560, %v562
  %v564 = vadd.f32 %v560, %v563
  %vm565 = vweird.f32 %v404
  %vm566 = vweird.f32 %v560
  %vm567 = vmor %vm565, %vm566
  %v568 = vsel %vm567, %v560, %v564
  %v569 = vand.u32 2147483647, %v404
  %vm570 = vcmp.eq.f32.partialorder %v569, 8.507059e+37
  %v571 = vand.u32 %v404, 2147483648
  %v572 = vor.u32 1.1754944e-38, %v571
  %v573 = vsel %vm570, %v572, %v568
  %v574 = vmul.f32 1.0, %v573
  %v575 = vrcp.pop %v405
  %v576 = vmul.f32 %v405, %v575
  %v577 = vsub.f32 1.0, %v576
  %v578 = vmul.f32 %v575, %v577
  %v579 = vadd.f32 %v575, %v578
  %vm580 = vweird.f32 %v405
  %vm581 = vweird.f32 %v575
  %vm582 = vmor %vm580, %vm581
  %v583 = vsel %vm582, %v575, %v579
  %v584 = vand.u32 2147483647, %v405
  %vm585 = vcmp.eq.f32.partialorder %v584, 8.507059e+37
  %v586 = vand.u32 %v405, 2147483648
  %v587 = vor.u32 1.1754944e-38, %v586
  %v588 = vsel %vm585, %v587, %v583
  %v589 = vmul.f32 1.0, %v588
  %v590 = vrcp.pop %v406
  %v591 = vmul.f32 %v406, %v590
  %v592 = vsub.f32 1.0, %v591
  %v593 = vmul.f32 %v590, %v592
  %v594 = vadd.f32 %v590, %v593
  %vm595 = vweird.f32 %v406
  %vm596 = vweird.f32 %v590
  %vm597 = vmor %vm595, %vm596
  %v598 = vsel %vm597, %v590, %v594
  %v599 = vand.u32 2147483647, %v406
  %vm600 = vcmp.eq.f32.partialorder %v599, 8.507059e+37
  %v601 = vand.u32 %v406, 2147483648
  %v602 = vor.u32 1.1754944e-38, %v601
  %v603 = vsel %vm600, %v602, %v598
  %v604 = vmul.f32 1.0, %v603
  %v605 = vrcp.pop %v407
  %v606 = vmul.f32 %v407, %v605
  %v607 = vsub.f32 1.0, %v606
  %v608 = vmul.f32 %v605, %v607
  %v609 = vadd.f32 %v605, %v608
  %vm610 = vweird.f32 %v407
  %vm611 = vweird.f32 %v605
  %vm612 = vmor %vm610, %vm611
  %v613 = vsel %vm612, %v605, %v609
  %v614 = vand.u32 2147483647, %v407
  %vm615 = vcmp.eq.f32.partialorder %v614, 8.507059e+37
  %v616 = vand.u32 %v407, 2147483648
  %v617 = vor.u32 1.1754944e-38, %v616
  %v618 = vsel %vm615, %v617, %v613
  %v619 = vmul.f32 1.0, %v618
  %v620 = vrcp.pop %v408
  %v621 = vmul.f32 %v408, %v620
  %v622 = vsub.f32 1.0, %v621
  %v623 = vmul.f32 %v620, %v622
  %v624 = vadd.f32 %v620, %v623
  %vm625 = vweird.f32 %v408
  %vm626 = vweird.f32 %v620
  %vm627 = vmor %vm625, %vm626
  %v628 = vsel %vm627, %v620, %v624
  %v629 = vand.u32 2147483647, %v408
  %vm630 = vcmp.eq.f32.partialorder %v629, 8.507059e+37
  %v631 = vand.u32 %v408, 2147483648
  %v632 = vor.u32 1.1754944e-38, %v631
  %v633 = vsel %vm630, %v632, %v628
  %v634 = vmul.f32 1.0, %v633
  %v635 = vrcp.pop %v409
  %v636 = vmul.f32 %v409, %v635
  %v637 = vsub.f32 1.0, %v636
  %v638 = vmul.f32 %v635, %v637
  %v639 = vadd.f32 %v635, %v638
  %vm640 = vweird.f32 %v409
  %vm641 = vweird.f32 %v635
  %vm642 = vmor %vm640, %vm641
  %v643 = vsel %vm642, %v635, %v639
  %v644 = vand.u32 2147483647, %v409
  %vm645 = vcmp.eq.f32.partialorder %v644, 8.507059e+37
  %v646 = vand.u32 %v409, 2147483648
  %v647 = vor.u32 1.1754944e-38, %v646
  %v648 = vsel %vm645, %v647, %v643
  %v649 = vmul.f32 1.0, %v648
  %v650 = vsel %vm344, %v424, %v293
  %v651 = vsel %vm345, %v439, %v322
  %v652 = vsel %vm344, %v454, %v295
  %v653 = vsel %vm345, %v469, %v324
  %v654 = vsel %vm344, %v484, %v298
  %v655 = vsel %vm345, %v499, %v327
  %v656 = vsel %vm344, %v514, %v300
  %v657 = vsel %vm345, %v529, %v329
  %v658 = vsel %vm344, %v544, %v303
  %v659 = vsel %vm345, %v559, %v332
  %v660 = vsel %vm344, %v574, %v305
  %v661 = vsel %vm345, %v589, %v334
  %v662 = vsel %vm344, %v604, %v308
  %v663 = vsel %vm345, %v619, %v337
  %v664 = vsel %vm344, %v634, %v310
  %v665 = vsel %vm345, %v649, %v339
  %666 = vst [vmem:[%s5] sm:$0xff] %v650
  %vm667 = vcmask 523264
  %668 = vst.msk [vmem:[%s5 + $0x8] sm:$0xff] %vm667, %v651
  %669 = vst [vmem:[%s5 + $0x10] sm:$0xff] %v652
  %670 = vst.msk [vmem:[%s5 + $0x18] sm:$0xff] %vm667, %v653
  %671 = vst [vmem:[%s5 + $0x20] sm:$0xff] %v654
  %672 = vst.msk [vmem:[%s5 + $0x28] sm:$0xff] %vm667, %v655
  %673 = vst [vmem:[%s5 + $0x30] sm:$0xff] %v656
  %674 = vst.msk [vmem:[%s5 + $0x38] sm:$0xff] %vm667, %v657
  %675 = vst [vmem:[%s5 + $0x40] sm:$0xff] %v658
  %676 = vst.msk [vmem:[%s5 + $0x48] sm:$0xff] %vm667, %v659
  %677 = vst [vmem:[%s5 + $0x50] sm:$0xff] %v660
  %678 = vst.msk [vmem:[%s5 + $0x58] sm:$0xff] %vm667, %v661
  %679 = vst [vmem:[%s5 + $0x60] sm:$0xff] %v662
  %680 = vst.msk [vmem:[%s5 + $0x68] sm:$0xff] %vm667, %v663
  %681 = vst [vmem:[%s5 + $0x70] sm:$0xff] %v664
  %682 = vst.msk [vmem:[%s5 + $0x78] sm:$0xff] %vm667, %v665
  // Predicated region
  $region22: #{iterative_simulator_fwd.89} parent=0 // pred_check
    _
  $region23: #{iterative_simulator_fwd.89} parent=0 // pred_check_branch
    %684 = sbr.rel (0) target = $region25
  $region24: #{iterative_simulator_fwd.89} parent=0 // pred_region
    _
  $region25: #{iterative_simulator_fwd.89} parent=0 // pred_fallthru
    _
  // Predicated region
  $region26: #{iterative_simulator_fwd.89} parent=0 // pred_check
    _
  $region27: #{iterative_simulator_fwd.89} parent=0 // pred_check_branch
    %686 = sbr.rel (0) target = $region29
  $region28: #{iterative_simulator_fwd.89} parent=0 // pred_region
    _
  $region29: #{iterative_simulator_fwd.89} parent=0 // pred_fallthru
    _

// kernel: iterative_simulator_fwd.94
$region0: #{iterative_simulator_fwd.94}
  #allocation0 [shape = 'u32[]', space=smem, size = 0x4, offset = 0x4, fixed_abs, tag = 'smem constant byte address 0x4 - core index']
  #allocation1 [shape = 'u32[72,128]{1,0:T(1,128)}', space=vmem, size = 0x9000, scoped, tag = 'internal scratch']
  %s0 = inlined_call_operand.vmem [shape: f32[64,32], index: 0, kind: input, shape index: {}]
  %s1 = inlined_call_operand.vmem [shape: f32[1,32], index: 1, kind: input, shape index: {}]
  %s2 = inlined_call_operand.vmem [shape: f32[1,32], index: 2, kind: input, shape index: {}]
  %s3 = inlined_call_operand.vmem [shape: bf16[32,128], index: 3, kind: input, shape index: {}]
  %s4 = inlined_call_operand.vmem [shape: f32[1,128], index: 4, kind: input, shape index: {}]
  %s5 = inlined_call_operand.vmem [shape: f32[64,128], index: 5, kind: output, shape index: {}]
  %s6 = sld [smem:[#allocation0]]
  $region30: #{iterative_simulator_fwd.94} parent=0
    _
  %s8 = ssub.s32 1, %s6
  %s9 = scalar_select 0, %s8, %s6
  // Predicated region
  $region2: #{iterative_simulator_fwd.94} parent=0 // pred_check
    _
  $region3: #{iterative_simulator_fwd.94} parent=0 // pred_check_branch
    %11 = sbr.rel (0) target = $region5
  $region4: #{iterative_simulator_fwd.94} parent=0 // pred_region
    _
  $region5: #{iterative_simulator_fwd.94} parent=0 // pred_fallthru
    _
  // Predicated region
  $region6: #{iterative_simulator_fwd.94} parent=0 // pred_check
    _
  $region7: #{iterative_simulator_fwd.94} parent=0 // pred_check_branch
    %13 = sbr.rel (0) target = $region9
  $region8: #{iterative_simulator_fwd.94} parent=0 // pred_region
    _
  $region9: #{iterative_simulator_fwd.94} parent=0 // pred_fallthru
    _
  // Predicated region
  $region10: #{iterative_simulator_fwd.94} parent=0 // pred_check
    _
  $region11: #{iterative_simulator_fwd.94} parent=0 // pred_check_branch
    %15 = sbr.rel (0) target = $region13
  $region12: #{iterative_simulator_fwd.94} parent=0 // pred_region
    _
  $region13: #{iterative_simulator_fwd.94} parent=0 // pred_fallthru
    _
  // Predicated region
  $region14: #{iterative_simulator_fwd.94} parent=0 // pred_check
    _
  $region15: #{iterative_simulator_fwd.94} parent=0 // pred_check_branch
    %17 = sbr.rel (0) target = $region17
  $region16: #{iterative_simulator_fwd.94} parent=0 // pred_region
    _
  $region17: #{iterative_simulator_fwd.94} parent=0 // pred_fallthru
    _
  // Predicated region
  $region18: #{iterative_simulator_fwd.94} parent=0 // pred_check
    _
  $region19: #{iterative_simulator_fwd.94} parent=0 // pred_check_branch
    %19 = sbr.rel (0) target = $region21
  $region20: #{iterative_simulator_fwd.94} parent=0 // pred_region
    _
  $region21: #{iterative_simulator_fwd.94} parent=0 // pred_fallthru
    _
  %v21 = vld [vmem:[%s0] sm:$0xff]
  %v22 = vld [vmem:[%s0 + $0x8] sm:$0xff]
  %v23 = vld [vmem:[%s0 + $0x10] sm:$0xff]
  %v24 = vld [vmem:[%s0 + $0x18] sm:$0xff]
  %v25 = vld [vmem:[%s0 + $0x20] sm:$0xff]
  %v26 = vld [vmem:[%s0 + $0x28] sm:$0xff]
  %v27 = vld [vmem:[%s0 + $0x30] sm:$0xff]
  %v28 = vld [vmem:[%s0 + $0x38] sm:$0xff]
  %v29 = vld [vmem:[%s1] sm:$0x1]
  %v30 = vld [vmem:[%s2] sm:$0x1]
  %vm31 = vcmask 261120
  %v32 = vsel %vm31, %v21, 0.0
  %33 = vadd.xlane.f32.xlu0 %v32
  %v34 = vpop.xlane.xlu0 %33
  %v35 = vsel %vm31, %v22, 0.0
  %36 = vadd.xlane.f32.xlu0 %v35
  %v37 = vpop.xlane.xlu0 %36
  %v38 = vsel %vm31, %v23, 0.0
  %39 = vadd.xlane.f32.xlu0 %v38
  %v40 = vpop.xlane.xlu0 %39
  %v41 = vsel %vm31, %v24, 0.0
  %42 = vadd.xlane.f32.xlu0 %v41
  %v43 = vpop.xlane.xlu0 %42
  %v44 = vsel %vm31, %v25, 0.0
  %45 = vadd.xlane.f32.xlu0 %v44
  %v46 = vpop.xlane.xlu0 %45
  %v47 = vsel %vm31, %v26, 0.0
  %48 = vadd.xlane.f32.xlu0 %v47
  %v49 = vpop.xlane.xlu0 %48
  %v50 = vsel %vm31, %v27, 0.0
  %51 = vadd.xlane.f32.xlu0 %v50
  %v52 = vpop.xlane.xlu0 %51
  %v53 = vsel %vm31, %v28, 0.0
  %54 = vadd.xlane.f32.xlu0 %v53
  %v55 = vpop.xlane.xlu0 %54
  %v56 = vrcp.pop 32.0
  %v57 = vmul.f32 32.0, %v56
  %v58 = vsub.f32 1.0, %v57
  %v59 = vmul.f32 %v56, %v58
  %v60 = vadd.f32 %v56, %v59
  %vm61 = vweird.f32 %v56
  %v62 = vsel %vm61, %v56, %v60
  %v63 = vmul.f32 %v34, %v62
  %v64 = vmul.f32 %v37, %v62
  %v65 = vmul.f32 %v40, %v62
  %v66 = vmul.f32 %v43, %v62
  %v67 = vmul.f32 %v46, %v62
  %v68 = vmul.f32 %v49, %v62
  %v69 = vmul.f32 %v52, %v62
  %v70 = vmul.f32 %v55, %v62
  %v71 = vsub.f32 %v21, %v63
  %v72 = vsub.f32 %v22, %v64
  %v73 = vsub.f32 %v23, %v65
  %v74 = vsub.f32 %v24, %v66
  %v75 = vsub.f32 %v25, %v67
  %v76 = vsub.f32 %v26, %v68
  %v77 = vsub.f32 %v27, %v69
  %v78 = vsub.f32 %v28, %v70
  %v79 = vmul.f32 %v71, %v71
  %v80 = vmul.f32 %v72, %v72
  %v81 = vmul.f32 %v73, %v73
  %v82 = vmul.f32 %v74, %v74
  %v83 = vmul.f32 %v75, %v75
  %v84 = vmul.f32 %v76, %v76
  %v85 = vmul.f32 %v77, %v77
  %v86 = vmul.f32 %v78, %v78
  %v87 = vsel %vm31, %v79, 0.0
  %88 = vadd.xlane.f32.xlu0 %v87
  %v89 = vpop.xlane.xlu0 %88
  %v90 = vsel %vm31, %v80, 0.0
  %91 = vadd.xlane.f32.xlu0 %v90
  %v92 = vpop.xlane.xlu0 %91
  %v93 = vsel %vm31, %v81, 0.0
  %94 = vadd.xlane.f32.xlu0 %v93
  %v95 = vpop.xlane.xlu0 %94
  %v96 = vsel %vm31, %v82, 0.0
  %97 = vadd.xlane.f32.xlu0 %v96
  %v98 = vpop.xlane.xlu0 %97
  %v99 = vsel %vm31, %v83, 0.0
  %100 = vadd.xlane.f32.xlu0 %v99
  %v101 = vpop.xlane.xlu0 %100
  %v102 = vsel %vm31, %v84, 0.0
  %103 = vadd.xlane.f32.xlu0 %v102
  %v104 = vpop.xlane.xlu0 %103
  %v105 = vsel %vm31, %v85, 0.0
  %106 = vadd.xlane.f32.xlu0 %v105
  %v107 = vpop.xlane.xlu0 %106
  %v108 = vsel %vm31, %v86, 0.0
  %109 = vadd.xlane.f32.xlu0 %v108
  %v110 = vpop.xlane.xlu0 %109
  %v111 = vmul.f32 %v89, %v62
  %v112 = vmul.f32 %v92, %v62
  %v113 = vmul.f32 %v95, %v62
  %v114 = vmul.f32 %v98, %v62
  %v115 = vmul.f32 %v101, %v62
  %v116 = vmul.f32 %v104, %v62
  %v117 = vmul.f32 %v107, %v62
  %v118 = vmul.f32 %v110, %v62
  %v119 = vadd.f32 %v111, 1e-05
  %v120 = vadd.f32 %v112, 1e-05
  %v121 = vadd.f32 %v113, 1e-05
  %v122 = vadd.f32 %v114, 1e-05
  %v123 = vadd.f32 %v115, 1e-05
  %v124 = vadd.f32 %v116, 1e-05
  %v125 = vadd.f32 %v117, 1e-05
  %v126 = vadd.f32 %v118, 1e-05
  %v127 = vrsqrt.pop %v119
  %v128 = vmul.f32 %v127, %v119
  %v129 = vmul.f32 %v128, %v127
  %v130 = vmul.f32 0.5, %v129
  %v131 = vsub.f32 1.5, %v130
  %v132 = vmul.f32 %v127, %v131
  %vm133 = vweird.f32 %v119
  %vm134 = vweird.f32 %v127
  %vm135 = vmor %vm133, %vm134
  %v136 = vsel %vm135, %v127, %v132
  %v137 = vrsqrt.pop %v120
  %v138 = vmul.f32 %v137, %v120
  %v139 = vmul.f32 %v138, %v137
  %v140 = vmul.f32 0.5, %v139
  %v141 = vsub.f32 1.5, %v140
  %v142 = vmul.f32 %v137, %v141
  %vm143 = vweird.f32 %v120
  %vm144 = vweird.f32 %v137
  %vm145 = vmor %vm143, %vm144
  %v146 = vsel %vm145, %v137, %v142
  %v147 = vrsqrt.pop %v121
  %v148 = vmul.f32 %v147, %v121
  %v149 = vmul.f32 %v148, %v147
  %v150 = vmul.f32 0.5, %v149
  %v151 = vsub.f32 1.5, %v150
  %v152 = vmul.f32 %v147, %v151
  %vm153 = vweird.f32 %v121
  %vm154 = vweird.f32 %v147
  %vm155 = vmor %vm153, %vm154
  %v156 = vsel %vm155, %v147, %v152
  %v157 = vrsqrt.pop %v122
  %v158 = vmul.f32 %v157, %v122
  %v159 = vmul.f32 %v158, %v157
  %v160 = vmul.f32 0.5, %v159
  %v161 = vsub.f32 1.5, %v160
  %v162 = vmul.f32 %v157, %v161
  %vm163 = vweird.f32 %v122
  %vm164 = vweird.f32 %v157
  %vm165 = vmor %vm163, %vm164
  %v166 = vsel %vm165, %v157, %v162
  %v167 = vrsqrt.pop %v123
  %v168 = vmul.f32 %v167, %v123
  %v169 = vmul.f32 %v168, %v167
  %v170 = vmul.f32 0.5, %v169
  %v171 = vsub.f32 1.5, %v170
  %v172 = vmul.f32 %v167, %v171
  %vm173 = vweird.f32 %v123
  %vm174 = vweird.f32 %v167
  %vm175 = vmor %vm173, %vm174
  %v176 = vsel %vm175, %v167, %v172
  %v177 = vrsqrt.pop %v124
  %v178 = vmul.f32 %v177, %v124
  %v179 = vmul.f32 %v178, %v177
  %v180 = vmul.f32 0.5, %v179
  %v181 = vsub.f32 1.5, %v180
  %v182 = vmul.f32 %v177, %v181
  %vm183 = vweird.f32 %v124
  %vm184 = vweird.f32 %v177
  %vm185 = vmor %vm183, %vm184
  %v186 = vsel %vm185, %v177, %v182
  %v187 = vrsqrt.pop %v125
  %v188 = vmul.f32 %v187, %v125
  %v189 = vmul.f32 %v188, %v187
  %v190 = vmul.f32 0.5, %v189
  %v191 = vsub.f32 1.5, %v190
  %v192 = vmul.f32 %v187, %v191
  %vm193 = vweird.f32 %v125
  %vm194 = vweird.f32 %v187
  %vm195 = vmor %vm193, %vm194
  %v196 = vsel %vm195, %v187, %v192
  %v197 = vrsqrt.pop %v126
  %v198 = vmul.f32 %v197, %v126
  %v199 = vmul.f32 %v198, %v197
  %v200 = vmul.f32 0.5, %v199
  %v201 = vsub.f32 1.5, %v200
  %v202 = vmul.f32 %v197, %v201
  %vm203 = vweird.f32 %v126
  %vm204 = vweird.f32 %v197
  %vm205 = vmor %vm203, %vm204
  %v206 = vsel %vm205, %v197, %v202
  %v207 = vmul.f32 %v71, %v136
  %v208 = vmul.f32 %v72, %v146
  %v209 = vmul.f32 %v73, %v156
  %v210 = vmul.f32 %v74, %v166
  %v211 = vmul.f32 %v75, %v176
  %v212 = vmul.f32 %v76, %v186
  %v213 = vmul.f32 %v77, %v196
  %v214 = vmul.f32 %v78, %v206
  %v216 = vperm.slane %v29, 0
  %v218 = vmul.f32 %v207, %v216
  %v219 = vmul.f32 %v208, %v216
  %v220 = vmul.f32 %v209, %v216
  %v221 = vmul.f32 %v210, %v216
  %v222 = vmul.f32 %v211, %v216
  %v223 = vmul.f32 %v212, %v216
  %v224 = vmul.f32 %v213, %v216
  %v225 = vmul.f32 %v214, %v216
  %v227 = vperm.slane %v30, 0
  %v229 = vadd.f32 %v218, %v227
  %v230 = vadd.f32 %v219, %v227
  %v231 = vadd.f32 %v220, %v227
  %v232 = vadd.f32 %v221, %v227
  %v233 = vadd.f32 %v222, %v227
  %v234 = vadd.f32 %v223, %v227
  %v235 = vadd.f32 %v224, %v227
  %v236 = vadd.f32 %v225, %v227
  %v237 = vld [vmem:[%s3] sm:$0xf]
  %v238 = vld [vmem:[%s3 + $0x4] sm:$0xf]
  %v239 = vld [vmem:[%s3 + $0x8] sm:$0xf]
  %v240 = vld [vmem:[%s3 + $0xc] sm:$0xf]
  %v241 = vld [vmem:[%s4] sm:$0x1]
  %v242 = vpack.c.bf16 %v230, %v229
  %v243 = vpack.c.bf16 %v232, %v231
  %v244 = vpack.c.bf16 %v234, %v233
  %v245 = vpack.c.bf16 %v236, %v235
  %v247 = vperm.slane %v241, 0
  %v253 = vunpack.c.l.b16 %v237
  %v254 = vunpack.c.l.b16 %v238
  %v255 = vunpack.c.l.b16 %v239
  %v256 = vunpack.c.l.b16 %v240
  %v257 = vpack.c.b16 %v254, %v253
  %v258 = vpack.c.b16 %v256, %v255
  %v262 = vsel %vm31, %v242, 0
  %v265 = vsel %vm31, %v243, 0
  %v268 = vsel %vm31, %v244, 0
  %v271 = vsel %vm31, %v245, 0
  %273 = vmatpush.bf16.msra.mxu0 0
  %274 = vmatpush.bf16.msra.mxu0 0
  %275 = vmatpush.bf16.msra.mxu0 0
  %276 = vmatpush.bf16.msra.mxu0 0
  %277 = vmatpush.bf16.msra.mxu0 0
  %278 = vmatpush.bf16.msra.mxu0 0
  %279 = vmatpush.bf16.msra.mxu0 %v258
  %280 = vmatpush.bf16.msra.mxu0 %v257
  %281 = vmatmul.bf16.gmra.mxu0 %v262
  %v282 = vpop.f32.mrf.mxu0
  %v283 = vadd.f32 %v247, %v282
  %v284 = vpop.f32.mrf.mxu0
  %v285 = vadd.f32 %v247, %v284
  %286 = vmatmul.bf16.gmra.mxu0 %v265
  %v287 = vpop.f32.mrf.mxu0
  %v288 = vadd.f32 %v247, %v287
  %v289 = vpop.f32.mrf.mxu0
  %v290 = vadd.f32 %v247, %v289
  %291 = vmatmul.bf16.gmra.mxu0 %v268
  %v292 = vpop.f32.mrf.mxu0
  %v293 = vadd.f32 %v247, %v292
  %v294 = vpop.f32.mrf.mxu0
  %v295 = vadd.f32 %v247, %v294
  %296 = vmatmul.bf16.gmra.mxu0 %v271
  %v297 = vpop.f32.mrf.mxu0
  %v298 = vadd.f32 %v247, %v297
  %v299 = vpop.f32.mrf.mxu0
  %v300 = vadd.f32 %v247, %v299
  %301 = vdwg.mxu0
  %v302 = vlaneseq
  %v303 = vand.u32 %v302, 127
  %vm304 = vcmp.ge.s32.totalorder %v303, 96
  %v305 = vxor.u32 %v283, 2147483648
  %v306 = vxor.u32 %v285, 2147483648
  %v307 = vxor.u32 %v288, 2147483648
  %v308 = vxor.u32 %v290, 2147483648
  %v309 = vxor.u32 %v293, 2147483648
  %v310 = vxor.u32 %v295, 2147483648
  %v311 = vxor.u32 %v298, 2147483648
  %v312 = vxor.u32 %v300, 2147483648
  %v313 = vmul.f32 %v305, 1.442695
  %v314 = vpow.pop %v313
  %v315 = vmul.f32 %v306, 1.442695
  %v316 = vpow.pop %v315
  %v317 = vmul.f32 %v307, 1.442695
  %v318 = vpow.pop %v317
  %v319 = vmul.f32 %v308, 1.442695
  %v320 = vpow.pop %v319
  %v321 = vmul.f32 %v309, 1.442695
  %v322 = vpow.pop %v321
  %v323 = vmul.f32 %v310, 1.442695
  %v324 = vpow.pop %v323
  %v325 = vmul.f32 %v311, 1.442695
  %v326 = vpow.pop %v325
  %v327 = vmul.f32 %v312, 1.442695
  %v328 = vpow.pop %v327
  %v329 = vadd.f32 %v314, 1.0
  %v330 = vadd.f32 %v316, 1.0
  %v331 = vadd.f32 %v318, 1.0
  %v332 = vadd.f32 %v320, 1.0
  %v333 = vadd.f32 %v322, 1.0
  %v334 = vadd.f32 %v324, 1.0
  %v335 = vadd.f32 %v326, 1.0
  %v336 = vadd.f32 %v328, 1.0
  %v337 = vrcp.pop %v329
  %v338 = vmul.f32 %v329, %v337
  %v339 = vsub.f32 1.0, %v338
  %v340 = vmul.f32 %v337, %v339
  %v341 = vadd.f32 %v337, %v340
  %vm342 = vweird.f32 %v329
  %vm343 = vweird.f32 %v337
  %vm344 = vmor %vm342, %vm343
  %v345 = vsel %vm344, %v337, %v341
  %v346 = vand.u32 2147483647, %v329
  %vm347 = vcmp.eq.f32.partialorder %v346, 8.507059e+37
  %v348 = vand.u32 %v329, 2147483648
  %v349 = vor.u32 1.1754944e-38, %v348
  %v350 = vsel %vm347, %v349, %v345
  %v351 = vmul.f32 1.0, %v350
  %v352 = vrcp.pop %v330
  %v353 = vmul.f32 %v330, %v352
  %v354 = vsub.f32 1.0, %v353
  %v355 = vmul.f32 %v352, %v354
  %v356 = vadd.f32 %v352, %v355
  %vm357 = vweird.f32 %v330
  %vm358 = vweird.f32 %v352
  %vm359 = vmor %vm357, %vm358
  %v360 = vsel %vm359, %v352, %v356
  %v361 = vand.u32 2147483647, %v330
  %vm362 = vcmp.eq.f32.partialorder %v361, 8.507059e+37
  %v363 = vand.u32 %v330, 2147483648
  %v364 = vor.u32 1.1754944e-38, %v363
  %v365 = vsel %vm362, %v364, %v360
  %v366 = vmul.f32 1.0, %v365
  %v367 = vrcp.pop %v331
  %v368 = vmul.f32 %v331, %v367
  %v369 = vsub.f32 1.0, %v368
  %v370 = vmul.f32 %v367, %v369
  %v371 = vadd.f32 %v367, %v370
  %vm372 = vweird.f32 %v331
  %vm373 = vweird.f32 %v367
  %vm374 = vmor %vm372, %vm373
  %v375 = vsel %vm374, %v367, %v371
  %v376 = vand.u32 2147483647, %v331
  %vm377 = vcmp.eq.f32.partialorder %v376, 8.507059e+37
  %v378 = vand.u32 %v331, 2147483648
  %v379 = vor.u32 1.1754944e-38, %v378
  %v380 = vsel %vm377, %v379, %v375
  %v381 = vmul.f32 1.0, %v380
  %v382 = vrcp.pop %v332
  %v383 = vmul.f32 %v332, %v382
  %v384 = vsub.f32 1.0, %v383
  %v385 = vmul.f32 %v382, %v384
  %v386 = vadd.f32 %v382, %v385
  %vm387 = vweird.f32 %v332
  %vm388 = vweird.f32 %v382
  %vm389 = vmor %vm387, %vm388
  %v390 = vsel %vm389, %v382, %v386
  %v391 = vand.u32 2147483647, %v332
  %vm392 = vcmp.eq.f32.partialorder %v391, 8.507059e+37
  %v393 = vand.u32 %v332, 2147483648
  %v394 = vor.u32 1.1754944e-38, %v393
  %v395 = vsel %vm392, %v394, %v390
  %v396 = vmul.f32 1.0, %v395
  %v397 = vrcp.pop %v333
  %v398 = vmul.f32 %v333, %v397
  %v399 = vsub.f32 1.0, %v398
  %v400 = vmul.f32 %v397, %v399
  %v401 = vadd.f32 %v397, %v400
  %vm402 = vweird.f32 %v333
  %vm403 = vweird.f32 %v397
  %vm404 = vmor %vm402, %vm403
  %v405 = vsel %vm404, %v397, %v401
  %v406 = vand.u32 2147483647, %v333
  %vm407 = vcmp.eq.f32.partialorder %v406, 8.507059e+37
  %v408 = vand.u32 %v333, 2147483648
  %v409 = vor.u32 1.1754944e-38, %v408
  %v410 = vsel %vm407, %v409, %v405
  %v411 = vmul.f32 1.0, %v410
  %v412 = vrcp.pop %v334
  %v413 = vmul.f32 %v334, %v412
  %v414 = vsub.f32 1.0, %v413
  %v415 = vmul.f32 %v412, %v414
  %v416 = vadd.f32 %v412, %v415
  %vm417 = vweird.f32 %v334
  %vm418 = vweird.f32 %v412
  %vm419 = vmor %vm417, %vm418
  %v420 = vsel %vm419, %v412, %v416
  %v421 = vand.u32 2147483647, %v334
  %vm422 = vcmp.eq.f32.partialorder %v421, 8.507059e+37
  %v423 = vand.u32 %v334, 2147483648
  %v424 = vor.u32 1.1754944e-38, %v423
  %v425 = vsel %vm422, %v424, %v420
  %v426 = vmul.f32 1.0, %v425
  %v427 = vrcp.pop %v335
  %v428 = vmul.f32 %v335, %v427
  %v429 = vsub.f32 1.0, %v428
  %v430 = vmul.f32 %v427, %v429
  %v431 = vadd.f32 %v427, %v430
  %vm432 = vweird.f32 %v335
  %vm433 = vweird.f32 %v427
  %vm434 = vmor %vm432, %vm433
  %v435 = vsel %vm434, %v427, %v431
  %v436 = vand.u32 2147483647, %v335
  %vm437 = vcmp.eq.f32.partialorder %v436, 8.507059e+37
  %v438 = vand.u32 %v335, 2147483648
  %v439 = vor.u32 1.1754944e-38, %v438
  %v440 = vsel %vm437, %v439, %v435
  %v441 = vmul.f32 1.0, %v440
  %v442 = vrcp.pop %v336
  %v443 = vmul.f32 %v336, %v442
  %v444 = vsub.f32 1.0, %v443
  %v445 = vmul.f32 %v442, %v444
  %v446 = vadd.f32 %v442, %v445
  %vm447 = vweird.f32 %v336
  %vm448 = vweird.f32 %v442
  %vm449 = vmor %vm447, %vm448
  %v450 = vsel %vm449, %v442, %v446
  %v451 = vand.u32 2147483647, %v336
  %vm452 = vcmp.eq.f32.partialorder %v451, 8.507059e+37
  %v453 = vand.u32 %v336, 2147483648
  %v454 = vor.u32 1.1754944e-38, %v453
  %v455 = vsel %vm452, %v454, %v450
  %v456 = vmul.f32 1.0, %v455
  %v457 = vsel %vm304, %v351, %v283
  %v458 = vsel %vm304, %v366, %v285
  %v459 = vsel %vm304, %v381, %v288
  %v460 = vsel %vm304, %v396, %v290
  %v461 = vsel %vm304, %v411, %v293
  %v462 = vsel %vm304, %v426, %v295
  %v463 = vsel %vm304, %v441, %v298
  %v464 = vsel %vm304, %v456, %v300
  %465 = vst [vmem:[%s5] sm:$0xff] %v457
  %466 = vst [vmem:[%s5 + $0x8] sm:$0xff] %v458
  %467 = vst [vmem:[%s5 + $0x10] sm:$0xff] %v459
  %468 = vst [vmem:[%s5 + $0x18] sm:$0xff] %v460
  %469 = vst [vmem:[%s5 + $0x20] sm:$0xff] %v461
  %470 = vst [vmem:[%s5 + $0x28] sm:$0xff] %v462
  %471 = vst [vmem:[%s5 + $0x30] sm:$0xff] %v463
  %472 = vst [vmem:[%s5 + $0x38] sm:$0xff] %v464
  // Predicated region
  $region22: #{iterative_simulator_fwd.94} parent=0 // pred_check
    _
  $region23: #{iterative_simulator_fwd.94} parent=0 // pred_check_branch
    %474 = sbr.rel (0) target = $region25
  $region24: #{iterative_simulator_fwd.94} parent=0 // pred_region
    _
  $region25: #{iterative_simulator_fwd.94} parent=0 // pred_fallthru
    _
  // Predicated region
  $region26: #{iterative_simulator_fwd.94} parent=0 // pred_check
    _
  $region27: #{iterative_simulator_fwd.94} parent=0 // pred_check_branch
    %476 = sbr.rel (0) target = $region29
  $region28: #{iterative_simulator_fwd.94} parent=0 // pred_region
    _
  $region29: #{iterative_simulator_fwd.94} parent=0 // pred_fallthru
    _

// kernel: iterative_simulator_fwd.97
$region0: #{iterative_simulator_fwd.97}
  #allocation0 [shape = 'u32[]', space=smem, size = 0x4, offset = 0x4, fixed_abs, tag = 'smem constant byte address 0x4 - core index']
  #allocation1 [shape = 'u32[72,128]{1,0:T(1,128)}', space=vmem, size = 0x9000, scoped, tag = 'internal scratch']
  %s0 = inlined_call_operand.vmem [shape: f32[64,32], index: 0, kind: input, shape index: {}]
  %s1 = inlined_call_operand.vmem [shape: f32[1,32], index: 1, kind: input, shape index: {}]
  %s2 = inlined_call_operand.vmem [shape: f32[1,32], index: 2, kind: input, shape index: {}]
  %s3 = inlined_call_operand.vmem [shape: bf16[32,128], index: 3, kind: input, shape index: {}]
  %s4 = inlined_call_operand.vmem [shape: f32[1,128], index: 4, kind: input, shape index: {}]
  %s5 = inlined_call_operand.vmem [shape: f32[64,128], index: 5, kind: output, shape index: {}]
  %s6 = sld [smem:[#allocation0]]
  $region30: #{iterative_simulator_fwd.97} parent=0
    _
  %s8 = ssub.s32 1, %s6
  %s9 = scalar_select 0, %s8, %s6
  // Predicated region
  $region2: #{iterative_simulator_fwd.97} parent=0 // pred_check
    _
  $region3: #{iterative_simulator_fwd.97} parent=0 // pred_check_branch
    %11 = sbr.rel (0) target = $region5
  $region4: #{iterative_simulator_fwd.97} parent=0 // pred_region
    _
  $region5: #{iterative_simulator_fwd.97} parent=0 // pred_fallthru
    _
  // Predicated region
  $region6: #{iterative_simulator_fwd.97} parent=0 // pred_check
    _
  $region7: #{iterative_simulator_fwd.97} parent=0 // pred_check_branch
    %13 = sbr.rel (0) target = $region9
  $region8: #{iterative_simulator_fwd.97} parent=0 // pred_region
    _
  $region9: #{iterative_simulator_fwd.97} parent=0 // pred_fallthru
    _
  // Predicated region
  $region10: #{iterative_simulator_fwd.97} parent=0 // pred_check
    _
  $region11: #{iterative_simulator_fwd.97} parent=0 // pred_check_branch
    %15 = sbr.rel (0) target = $region13
  $region12: #{iterative_simulator_fwd.97} parent=0 // pred_region
    _
  $region13: #{iterative_simulator_fwd.97} parent=0 // pred_fallthru
    _
  // Predicated region
  $region14: #{iterative_simulator_fwd.97} parent=0 // pred_check
    _
  $region15: #{iterative_simulator_fwd.97} parent=0 // pred_check_branch
    %17 = sbr.rel (0) target = $region17
  $region16: #{iterative_simulator_fwd.97} parent=0 // pred_region
    _
  $region17: #{iterative_simulator_fwd.97} parent=0 // pred_fallthru
    _
  // Predicated region
  $region18: #{iterative_simulator_fwd.97} parent=0 // pred_check
    _
  $region19: #{iterative_simulator_fwd.97} parent=0 // pred_check_branch
    %19 = sbr.rel (0) target = $region21
  $region20: #{iterative_simulator_fwd.97} parent=0 // pred_region
    _
  $region21: #{iterative_simulator_fwd.97} parent=0 // pred_fallthru
    _
  %v21 = vld [vmem:[%s0] sm:$0xff]
  %v22 = vld [vmem:[%s0 + $0x8] sm:$0xff]
  %v23 = vld [vmem:[%s0 + $0x10] sm:$0xff]
  %v24 = vld [vmem:[%s0 + $0x18] sm:$0xff]
  %v25 = vld [vmem:[%s0 + $0x20] sm:$0xff]
  %v26 = vld [vmem:[%s0 + $0x28] sm:$0xff]
  %v27 = vld [vmem:[%s0 + $0x30] sm:$0xff]
  %v28 = vld [vmem:[%s0 + $0x38] sm:$0xff]
  %v29 = vld [vmem:[%s1] sm:$0x1]
  %v30 = vld [vmem:[%s2] sm:$0x1]
  %vm31 = vcmask 261120
  %v32 = vsel %vm31, %v21, 0.0
  %33 = vadd.xlane.f32.xlu0 %v32
  %v34 = vpop.xlane.xlu0 %33
  %v35 = vsel %vm31, %v22, 0.0
  %36 = vadd.xlane.f32.xlu0 %v35
  %v37 = vpop.xlane.xlu0 %36
  %v38 = vsel %vm31, %v23, 0.0
  %39 = vadd.xlane.f32.xlu0 %v38
  %v40 = vpop.xlane.xlu0 %39
  %v41 = vsel %vm31, %v24, 0.0
  %42 = vadd.xlane.f32.xlu0 %v41
  %v43 = vpop.xlane.xlu0 %42
  %v44 = vsel %vm31, %v25, 0.0
  %45 = vadd.xlane.f32.xlu0 %v44
  %v46 = vpop.xlane.xlu0 %45
  %v47 = vsel %vm31, %v26, 0.0
  %48 = vadd.xlane.f32.xlu0 %v47
  %v49 = vpop.xlane.xlu0 %48
  %v50 = vsel %vm31, %v27, 0.0
  %51 = vadd.xlane.f32.xlu0 %v50
  %v52 = vpop.xlane.xlu0 %51
  %v53 = vsel %vm31, %v28, 0.0
  %54 = vadd.xlane.f32.xlu0 %v53
  %v55 = vpop.xlane.xlu0 %54
  %v56 = vrcp.pop 32.0
  %v57 = vmul.f32 32.0, %v56
  %v58 = vsub.f32 1.0, %v57
  %v59 = vmul.f32 %v56, %v58
  %v60 = vadd.f32 %v56, %v59
  %vm61 = vweird.f32 %v56
  %v62 = vsel %vm61, %v56, %v60
  %v63 = vmul.f32 %v34, %v62
  %v64 = vmul.f32 %v37, %v62
  %v65 = vmul.f32 %v40, %v62
  %v66 = vmul.f32 %v43, %v62
  %v67 = vmul.f32 %v46, %v62
  %v68 = vmul.f32 %v49, %v62
  %v69 = vmul.f32 %v52, %v62
  %v70 = vmul.f32 %v55, %v62
  %v71 = vsub.f32 %v21, %v63
  %v72 = vsub.f32 %v22, %v64
  %v73 = vsub.f32 %v23, %v65
  %v74 = vsub.f32 %v24, %v66
  %v75 = vsub.f32 %v25, %v67
  %v76 = vsub.f32 %v26, %v68
  %v77 = vsub.f32 %v27, %v69
  %v78 = vsub.f32 %v28, %v70
  %v79 = vmul.f32 %v71, %v71
  %v80 = vmul.f32 %v72, %v72
  %v81 = vmul.f32 %v73, %v73
  %v82 = vmul.f32 %v74, %v74
  %v83 = vmul.f32 %v75, %v75
  %v84 = vmul.f32 %v76, %v76
  %v85 = vmul.f32 %v77, %v77
  %v86 = vmul.f32 %v78, %v78
  %v87 = vsel %vm31, %v79, 0.0
  %88 = vadd.xlane.f32.xlu0 %v87
  %v89 = vpop.xlane.xlu0 %88
  %v90 = vsel %vm31, %v80, 0.0
  %91 = vadd.xlane.f32.xlu0 %v90
  %v92 = vpop.xlane.xlu0 %91
  %v93 = vsel %vm31, %v81, 0.0
  %94 = vadd.xlane.f32.xlu0 %v93
  %v95 = vpop.xlane.xlu0 %94
  %v96 = vsel %vm31, %v82, 0.0
  %97 = vadd.xlane.f32.xlu0 %v96
  %v98 = vpop.xlane.xlu0 %97
  %v99 = vsel %vm31, %v83, 0.0
  %100 = vadd.xlane.f32.xlu0 %v99
  %v101 = vpop.xlane.xlu0 %100
  %v102 = vsel %vm31, %v84, 0.0
  %103 = vadd.xlane.f32.xlu0 %v102
  %v104 = vpop.xlane.xlu0 %103
  %v105 = vsel %vm31, %v85, 0.0
  %106 = vadd.xlane.f32.xlu0 %v105
  %v107 = vpop.xlane.xlu0 %106
  %v108 = vsel %vm31, %v86, 0.0
  %109 = vadd.xlane.f32.xlu0 %v108
  %v110 = vpop.xlane.xlu0 %109
  %v111 = vmul.f32 %v89, %v62
  %v112 = vmul.f32 %v92, %v62
  %v113 = vmul.f32 %v95, %v62
  %v114 = vmul.f32 %v98, %v62
  %v115 = vmul.f32 %v101, %v62
  %v116 = vmul.f32 %v104, %v62
  %v117 = vmul.f32 %v107, %v62
  %v118 = vmul.f32 %v110, %v62
  %v119 = vadd.f32 %v111, 1e-05
  %v120 = vadd.f32 %v112, 1e-05
  %v121 = vadd.f32 %v113, 1e-05
  %v122 = vadd.f32 %v114, 1e-05
  %v123 = vadd.f32 %v115, 1e-05
  %v124 = vadd.f32 %v116, 1e-05
  %v125 = vadd.f32 %v117, 1e-05
  %v126 = vadd.f32 %v118, 1e-05
  %v127 = vrsqrt.pop %v119
  %v128 = vmul.f32 %v127, %v119
  %v129 = vmul.f32 %v128, %v127
  %v130 = vmul.f32 0.5, %v129
  %v131 = vsub.f32 1.5, %v130
  %v132 = vmul.f32 %v127, %v131
  %vm133 = vweird.f32 %v119
  %vm134 = vweird.f32 %v127
  %vm135 = vmor %vm133, %vm134
  %v136 = vsel %vm135, %v127, %v132
  %v137 = vrsqrt.pop %v120
  %v138 = vmul.f32 %v137, %v120
  %v139 = vmul.f32 %v138, %v137
  %v140 = vmul.f32 0.5, %v139
  %v141 = vsub.f32 1.5, %v140
  %v142 = vmul.f32 %v137, %v141
  %vm143 = vweird.f32 %v120
  %vm144 = vweird.f32 %v137
  %vm145 = vmor %vm143, %vm144
  %v146 = vsel %vm145, %v137, %v142
  %v147 = vrsqrt.pop %v121
  %v148 = vmul.f32 %v147, %v121
  %v149 = vmul.f32 %v148, %v147
  %v150 = vmul.f32 0.5, %v149
  %v151 = vsub.f32 1.5, %v150
  %v152 = vmul.f32 %v147, %v151
  %vm153 = vweird.f32 %v121
  %vm154 = vweird.f32 %v147
  %vm155 = vmor %vm153, %vm154
  %v156 = vsel %vm155, %v147, %v152
  %v157 = vrsqrt.pop %v122
  %v158 = vmul.f32 %v157, %v122
  %v159 = vmul.f32 %v158, %v157
  %v160 = vmul.f32 0.5, %v159
  %v161 = vsub.f32 1.5, %v160
  %v162 = vmul.f32 %v157, %v161
  %vm163 = vweird.f32 %v122
  %vm164 = vweird.f32 %v157
  %vm165 = vmor %vm163, %vm164
  %v166 = vsel %vm165, %v157, %v162
  %v167 = vrsqrt.pop %v123
  %v168 = vmul.f32 %v167, %v123
  %v169 = vmul.f32 %v168, %v167
  %v170 = vmul.f32 0.5, %v169
  %v171 = vsub.f32 1.5, %v170
  %v172 = vmul.f32 %v167, %v171
  %vm173 = vweird.f32 %v123
  %vm174 = vweird.f32 %v167
  %vm175 = vmor %vm173, %vm174
  %v176 = vsel %vm175, %v167, %v172
  %v177 = vrsqrt.pop %v124
  %v178 = vmul.f32 %v177, %v124
  %v179 = vmul.f32 %v178, %v177
  %v180 = vmul.f32 0.5, %v179
  %v181 = vsub.f32 1.5, %v180
  %v182 = vmul.f32 %v177, %v181
  %vm183 = vweird.f32 %v124
  %vm184 = vweird.f32 %v177
  %vm185 = vmor %vm183, %vm184
  %v186 = vsel %vm185, %v177, %v182
  %v187 = vrsqrt.pop %v125
  %v188 = vmul.f32 %v187, %v125
  %v189 = vmul.f32 %v188, %v187
  %v190 = vmul.f32 0.5, %v189
  %v191 = vsub.f32 1.5, %v190
  %v192 = vmul.f32 %v187, %v191
  %vm193 = vweird.f32 %v125
  %vm194 = vweird.f32 %v187
  %vm195 = vmor %vm193, %vm194
  %v196 = vsel %vm195, %v187, %v192
  %v197 = vrsqrt.pop %v126
  %v198 = vmul.f32 %v197, %v126
  %v199 = vmul.f32 %v198, %v197
  %v200 = vmul.f32 0.5, %v199
  %v201 = vsub.f32 1.5, %v200
  %v202 = vmul.f32 %v197, %v201
  %vm203 = vweird.f32 %v126
  %vm204 = vweird.f32 %v197
  %vm205 = vmor %vm203, %vm204
  %v206 = vsel %vm205, %v197, %v202
  %v207 = vmul.f32 %v71, %v136
  %v208 = vmul.f32 %v72, %v146
  %v209 = vmul.f32 %v73, %v156
  %v210 = vmul.f32 %v74, %v166
  %v211 = vmul.f32 %v75, %v176
  %v212 = vmul.f32 %v76, %v186
  %v213 = vmul.f32 %v77, %v196
  %v214 = vmul.f32 %v78, %v206
  %v216 = vperm.slane %v29, 0
  %v218 = vmul.f32 %v207, %v216
  %v219 = vmul.f32 %v208, %v216
  %v220 = vmul.f32 %v209, %v216
  %v221 = vmul.f32 %v210, %v216
  %v222 = vmul.f32 %v211, %v216
  %v223 = vmul.f32 %v212, %v216
  %v224 = vmul.f32 %v213, %v216
  %v225 = vmul.f32 %v214, %v216
  %v227 = vperm.slane %v30, 0
  %v229 = vadd.f32 %v218, %v227
  %v230 = vadd.f32 %v219, %v227
  %v231 = vadd.f32 %v220, %v227
  %v232 = vadd.f32 %v221, %v227
  %v233 = vadd.f32 %v222, %v227
  %v234 = vadd.f32 %v223, %v227
  %v235 = vadd.f32 %v224, %v227
  %v236 = vadd.f32 %v225, %v227
  %v237 = vld [vmem:[%s3] sm:$0xf]
  %v238 = vld [vmem:[%s3 + $0x4] sm:$0xf]
  %v239 = vld [vmem:[%s3 + $0x8] sm:$0xf]
  %v240 = vld [vmem:[%s3 + $0xc] sm:$0xf]
  %v241 = vld [vmem:[%s4] sm:$0x1]
  %v242 = vpack.c.bf16 %v230, %v229
  %v243 = vpack.c.bf16 %v232, %v231
  %v244 = vpack.c.bf16 %v234, %v233
  %v245 = vpack.c.bf16 %v236, %v235
  %v247 = vperm.slane %v241, 0
  %v253 = vunpack.c.l.b16 %v237
  %v254 = vunpack.c.l.b16 %v238
  %v255 = vunpack.c.l.b16 %v239
  %v256 = vunpack.c.l.b16 %v240
  %v257 = vpack.c.b16 %v254, %v253
  %v258 = vpack.c.b16 %v256, %v255
  %v262 = vsel %vm31, %v242, 0
  %v265 = vsel %vm31, %v243, 0
  %v268 = vsel %vm31, %v244, 0
  %v271 = vsel %vm31, %v245, 0
  %273 = vmatpush.bf16.msra.mxu0 0
  %274 = vmatpush.bf16.msra.mxu0 0
  %275 = vmatpush.bf16.msra.mxu0 0
  %276 = vmatpush.bf16.msra.mxu0 0
  %277 = vmatpush.bf16.msra.mxu0 0
  %278 = vmatpush.bf16.msra.mxu0 0
  %279 = vmatpush.bf16.msra.mxu0 %v258
  %280 = vmatpush.bf16.msra.mxu0 %v257
  %281 = vmatmul.bf16.gmra.mxu0 %v262
  %v282 = vpop.f32.mrf.mxu0
  %v283 = vadd.f32 %v247, %v282
  %v284 = vpop.f32.mrf.mxu0
  %v285 = vadd.f32 %v247, %v284
  %286 = vmatmul.bf16.gmra.mxu0 %v265
  %v287 = vpop.f32.mrf.mxu0
  %v288 = vadd.f32 %v247, %v287
  %v289 = vpop.f32.mrf.mxu0
  %v290 = vadd.f32 %v247, %v289
  %291 = vmatmul.bf16.gmra.mxu0 %v268
  %v292 = vpop.f32.mrf.mxu0
  %v293 = vadd.f32 %v247, %v292
  %v294 = vpop.f32.mrf.mxu0
  %v295 = vadd.f32 %v247, %v294
  %296 = vmatmul.bf16.gmra.mxu0 %v271
  %v297 = vpop.f32.mrf.mxu0
  %v298 = vadd.f32 %v247, %v297
  %v299 = vpop.f32.mrf.mxu0
  %v300 = vadd.f32 %v247, %v299
  %301 = vdwg.mxu0
  %v302 = vmax.f32 %v283, 0.0
  %v303 = vmax.f32 %v285, 0.0
  %v304 = vmax.f32 %v288, 0.0
  %v305 = vmax.f32 %v290, 0.0
  %v306 = vmax.f32 %v293, 0.0
  %v307 = vmax.f32 %v295, 0.0
  %v308 = vmax.f32 %v298, 0.0
  %v309 = vmax.f32 %v300, 0.0
  %310 = vst [vmem:[%s5] sm:$0xff] %v302
  %311 = vst [vmem:[%s5 + $0x8] sm:$0xff] %v303
  %312 = vst [vmem:[%s5 + $0x10] sm:$0xff] %v304
  %313 = vst [vmem:[%s5 + $0x18] sm:$0xff] %v305
  %314 = vst [vmem:[%s5 + $0x20] sm:$0xff] %v306
  %315 = vst [vmem:[%s5 + $0x28] sm:$0xff] %v307
  %316 = vst [vmem:[%s5 + $0x30] sm:$0xff] %v308
  %317 = vst [vmem:[%s5 + $0x38] sm:$0xff] %v309
  // Predicated region
  $region22: #{iterative_simulator_fwd.97} parent=0 // pred_check
    _
  $region23: #{iterative_simulator_fwd.97} parent=0 // pred_check_branch
    %319 = sbr.rel (0) target = $region25
  $region24: #{iterative_simulator_fwd.97} parent=0 // pred_region
    _
  $region25: #{iterative_simulator_fwd.97} parent=0 // pred_fallthru
    _
  // Predicated region
  $region26: #{iterative_simulator_fwd.97} parent=0 // pred_check
    _
  $region27: #{iterative_simulator_fwd.97} parent=0 // pred_check_branch
    %321 = sbr.rel (0) target = $region29
  $region28: #{iterative_simulator_fwd.97} parent=0 // pred_region
    _
  $region29: #{iterative_simulator_fwd.97} parent=0 // pred_fallthru
    _

// kernel: iterative_simulator_fwd.98
$region0: #{iterative_simulator_fwd.98}
  #allocation0 [shape = 'u32[]', space=smem, size = 0x4, offset = 0x4, fixed_abs, tag = 'smem constant byte address 0x4 - core index']
  #allocation1 [shape = 'u32[72,128]{1,0:T(1,128)}', space=vmem, size = 0x9000, scoped, tag = 'internal scratch']
  %s0 = inlined_call_operand.vmem [shape: f32[64,128], index: 0, kind: input, shape index: {}]
  %s1 = inlined_call_operand.vmem [shape: bf16[128,32], index: 1, kind: input, shape index: {}]
  %s2 = inlined_call_operand.vmem [shape: f32[1,32], index: 2, kind: input, shape index: {}]
  %s3 = inlined_call_operand.vmem [shape: f32[64,32], index: 3, kind: input, shape index: {}]
  %s4 = inlined_call_operand.vmem [shape: f32[64,32], index: 4, kind: output, shape index: {}]
  %s5 = sld [smem:[#allocation0]]
  $region26: #{iterative_simulator_fwd.98} parent=0
    _
  %s7 = ssub.s32 1, %s5
  %s8 = scalar_select 0, %s7, %s5
  // Predicated region
  $region2: #{iterative_simulator_fwd.98} parent=0 // pred_check
    _
  $region3: #{iterative_simulator_fwd.98} parent=0 // pred_check_branch
    %10 = sbr.rel (0) target = $region5
  $region4: #{iterative_simulator_fwd.98} parent=0 // pred_region
    _
  $region5: #{iterative_simulator_fwd.98} parent=0 // pred_fallthru
    _
  // Predicated region
  $region6: #{iterative_simulator_fwd.98} parent=0 // pred_check
    _
  $region7: #{iterative_simulator_fwd.98} parent=0 // pred_check_branch
    %12 = sbr.rel (0) target = $region9
  $region8: #{iterative_simulator_fwd.98} parent=0 // pred_region
    _
  $region9: #{iterative_simulator_fwd.98} parent=0 // pred_fallthru
    _
  // Predicated region
  $region10: #{iterative_simulator_fwd.98} parent=0 // pred_check
    _
  $region11: #{iterative_simulator_fwd.98} parent=0 // pred_check_branch
    %14 = sbr.rel (0) target = $region13
  $region12: #{iterative_simulator_fwd.98} parent=0 // pred_region
    _
  $region13: #{iterative_simulator_fwd.98} parent=0 // pred_fallthru
    _
  // Predicated region
  $region14: #{iterative_simulator_fwd.98} parent=0 // pred_check
    _
  $region15: #{iterative_simulator_fwd.98} parent=0 // pred_check_branch
    %16 = sbr.rel (0) target = $region17
  $region16: #{iterative_simulator_fwd.98} parent=0 // pred_region
    _
  $region17: #{iterative_simulator_fwd.98} parent=0 // pred_fallthru
    _
  %v17 = vld [vmem:[%s0] sm:$0xff]
  %v18 = vld [vmem:[%s0 + $0x8] sm:$0xff]
  %v19 = vld [vmem:[%s0 + $0x10] sm:$0xff]
  %v20 = vld [vmem:[%s0 + $0x18] sm:$0xff]
  %v21 = vld [vmem:[%s0 + $0x20] sm:$0xff]
  %v22 = vld [vmem:[%s0 + $0x28] sm:$0xff]
  %v23 = vld [vmem:[%s0 + $0x30] sm:$0xff]
  %v24 = vld [vmem:[%s0 + $0x38] sm:$0xff]
  %v25 = vld [vmem:[%s1] sm:$0xf]
  %v26 = vld [vmem:[%s1 + $0x4] sm:$0xf]
  %v27 = vld [vmem:[%s1 + $0x8] sm:$0xf]
  %v28 = vld [vmem:[%s1 + $0xc] sm:$0xf]
  %v29 = vld [vmem:[%s1 + $0x10] sm:$0xf]
  %v30 = vld [vmem:[%s1 + $0x14] sm:$0xf]
  %v31 = vld [vmem:[%s1 + $0x18] sm:$0xf]
  %v32 = vld [vmem:[%s1 + $0x1c] sm:$0xf]
  %v33 = vld [vmem:[%s1 + $0x20] sm:$0xf]
  %v34 = vld [vmem:[%s1 + $0x24] sm:$0xf]
  %v35 = vld [vmem:[%s1 + $0x28] sm:$0xf]
  %v36 = vld [vmem:[%s1 + $0x2c] sm:$0xf]
  %v37 = vld [vmem:[%s1 + $0x30] sm:$0xf]
  %v38 = vld [vmem:[%s1 + $0x34] sm:$0xf]
  %v39 = vld [vmem:[%s1 + $0x38] sm:$0xf]
  %v40 = vld [vmem:[%s1 + $0x3c] sm:$0xf]
  %v41 = vld [vmem:[%s2] sm:$0x1]
  %v42 = vpack.c.bf16 %v18, %v17
  %v43 = vpack.c.bf16 %v20, %v19
  %v44 = vpack.c.bf16 %v22, %v21
  %v45 = vpack.c.bf16 %v24, %v23
  %v47 = vperm.slane %v41, 0
  %v65 = vunpack.c.l.b16 %v25
  %v66 = vunpack.c.l.b16 %v26
  %v67 = vunpack.c.l.b16 %v27
  %v68 = vunpack.c.l.b16 %v28
  %v69 = vunpack.c.l.b16 %v29
  %v70 = vunpack.c.l.b16 %v30
  %v71 = vunpack.c.l.b16 %v31
  %v72 = vunpack.c.l.b16 %v32
  %v73 = vunpack.c.l.b16 %v33
  %v74 = vunpack.c.l.b16 %v34
  %v75 = vunpack.c.l.b16 %v35
  %v76 = vunpack.c.l.b16 %v36
  %v77 = vunpack.c.l.b16 %v37
  %v78 = vunpack.c.l.b16 %v38
  %v79 = vunpack.c.l.b16 %v39
  %v80 = vunpack.c.l.b16 %v40
  %v81 = vpack.c.b16 %v66, %v65
  %v82 = vpack.c.b16 %v68, %v67
  %v83 = vpack.c.b16 %v70, %v69
  %v84 = vpack.c.b16 %v72, %v71
  %v85 = vpack.c.b16 %v74, %v73
  %v86 = vpack.c.b16 %v76, %v75
  %v87 = vpack.c.b16 %v78, %v77
  %v88 = vpack.c.b16 %v80, %v79
  %97 = vmatpush.bf16.msra.mxu0 %v88
  %98 = vmatpush.bf16.msra.mxu0 %v87
  %99 = vmatpush.bf16.msra.mxu0 %v86
  %100 = vmatpush.bf16.msra.mxu0 %v85
  %101 = vmatpush.bf16.msra.mxu0 %v84
  %102 = vmatpush.bf16.msra.mxu0 %v83
  %103 = vmatpush.bf16.msra.mxu0 %v82
  %104 = vmatpush.bf16.msra.mxu0 %v81
  %105 = vmatmul.bf16.gmra.mxu0 %v42
  %v106 = vpop.f32.mrf.mxu0
  %v107 = vadd.f32 %v47, %v106
  %v108 = vpop.f32.mrf.mxu0
  %v109 = vadd.f32 %v47, %v108
  %110 = vmatmul.bf16.gmra.mxu0 %v43
  %v111 = vpop.f32.mrf.mxu0
  %v112 = vadd.f32 %v47, %v111
  %v113 = vpop.f32.mrf.mxu0
  %v114 = vadd.f32 %v47, %v113
  %115 = vmatmul.bf16.gmra.mxu0 %v44
  %v116 = vpop.f32.mrf.mxu0
  %v117 = vadd.f32 %v47, %v116
  %v118 = vpop.f32.mrf.mxu0
  %v119 = vadd.f32 %v47, %v118
  %120 = vmatmul.bf16.gmra.mxu0 %v45
  %v121 = vpop.f32.mrf.mxu0
  %v122 = vadd.f32 %v47, %v121
  %v123 = vpop.f32.mrf.mxu0
  %v124 = vadd.f32 %v47, %v123
  %125 = vdwg.mxu0
  %v126 = vld [vmem:[%s3] sm:$0xff]
  %v127 = vld [vmem:[%s3 + $0x8] sm:$0xff]
  %v128 = vld [vmem:[%s3 + $0x10] sm:$0xff]
  %v129 = vld [vmem:[%s3 + $0x18] sm:$0xff]
  %v130 = vld [vmem:[%s3 + $0x20] sm:$0xff]
  %v131 = vld [vmem:[%s3 + $0x28] sm:$0xff]
  %v132 = vld [vmem:[%s3 + $0x30] sm:$0xff]
  %v133 = vld [vmem:[%s3 + $0x38] sm:$0xff]
  %v134 = vadd.f32 %v107, %v126
  %v135 = vadd.f32 %v109, %v127
  %v136 = vadd.f32 %v112, %v128
  %v137 = vadd.f32 %v114, %v129
  %v138 = vadd.f32 %v117, %v130
  %v139 = vadd.f32 %v119, %v131
  %v140 = vadd.f32 %v122, %v132
  %v141 = vadd.f32 %v124, %v133
  %vm142 = vcmask 261120
  %143 = vst.msk [vmem:[%s4] sm:$0xff] %vm142, %v134
  %144 = vst.msk [vmem:[%s4 + $0x8] sm:$0xff] %vm142, %v135
  %145 = vst.msk [vmem:[%s4 + $0x10] sm:$0xff] %vm142, %v136
  %146 = vst.msk [vmem:[%s4 + $0x18] sm:$0xff] %vm142, %v137
  %147 = vst.msk [vmem:[%s4 + $0x20] sm:$0xff] %vm142, %v138
  %148 = vst.msk [vmem:[%s4 + $0x28] sm:$0xff] %vm142, %v139
  %149 = vst.msk [vmem:[%s4 + $0x30] sm:$0xff] %vm142, %v140
  %150 = vst.msk [vmem:[%s4 + $0x38] sm:$0xff] %vm142, %v141
  // Predicated region
  $region18: #{iterative_simulator_fwd.98} parent=0 // pred_check
    _
  $region19: #{iterative_simulator_fwd.98} parent=0 // pred_check_branch
    %152 = sbr.rel (0) target = $region21
  $region20: #{iterative_simulator_fwd.98} parent=0 // pred_region
    _
  $region21: #{iterative_simulator_fwd.98} parent=0 // pred_fallthru
    _
  // Predicated region
  $region22: #{iterative_simulator_fwd.98} parent=0 // pred_check
    _
  $region23: #{iterative_simulator_fwd.98} parent=0 // pred_check_branch
    %154 = sbr.rel (0) target = $region25
  $region24: #{iterative_simulator_fwd.98} parent=0 // pred_region
    _
  $region25: #{iterative_simulator_fwd.98} parent=0 // pred_fallthru
    _

// kernel: iterative_simulator_fwd.99
$region0: #{iterative_simulator_fwd.99}
  #allocation0 [shape = 'u32[]', space=smem, size = 0x4, offset = 0x4, fixed_abs, tag = 'smem constant byte address 0x4 - core index']
  #allocation1 [shape = 'u32[72,128]{1,0:T(1,128)}', space=vmem, size = 0x9000, scoped, tag = 'internal scratch']
  %s0 = inlined_call_operand.vmem [shape: f32[64,32], index: 0, kind: input, shape index: {}]
  %s1 = inlined_call_operand.vmem [shape: f32[1,32], index: 1, kind: input, shape index: {}]
  %s2 = inlined_call_operand.vmem [shape: f32[1,32], index: 2, kind: input, shape index: {}]
  %s3 = inlined_call_operand.vmem [shape: bf16[32,8], index: 3, kind: input, shape index: {}]
  %s4 = inlined_call_operand.vmem [shape: f32[1,8], index: 4, kind: input, shape index: {}]
  %s5 = inlined_call_operand.vmem [shape: f32[64,8], index: 5, kind: output, shape index: {}]
  %s6 = sld [smem:[#allocation0]]
  $region30: #{iterative_simulator_fwd.99} parent=0
    _
  %s8 = ssub.s32 1, %s6
  %s9 = scalar_select 0, %s8, %s6
  // Predicated region
  $region2: #{iterative_simulator_fwd.99} parent=0 // pred_check
    _
  $region3: #{iterative_simulator_fwd.99} parent=0 // pred_check_branch
    %11 = sbr.rel (0) target = $region5
  $region4: #{iterative_simulator_fwd.99} parent=0 // pred_region
    _
  $region5: #{iterative_simulator_fwd.99} parent=0 // pred_fallthru
    _
  // Predicated region
  $region6: #{iterative_simulator_fwd.99} parent=0 // pred_check
    _
  $region7: #{iterative_simulator_fwd.99} parent=0 // pred_check_branch
    %13 = sbr.rel (0) target = $region9
  $region8: #{iterative_simulator_fwd.99} parent=0 // pred_region
    _
  $region9: #{iterative_simulator_fwd.99} parent=0 // pred_fallthru
    _
  // Predicated region
  $region10: #{iterative_simulator_fwd.99} parent=0 // pred_check
    _
  $region11: #{iterative_simulator_fwd.99} parent=0 // pred_check_branch
    %15 = sbr.rel (0) target = $region13
  $region12: #{iterative_simulator_fwd.99} parent=0 // pred_region
    _
  $region13: #{iterative_simulator_fwd.99} parent=0 // pred_fallthru
    _
  // Predicated region
  $region14: #{iterative_simulator_fwd.99} parent=0 // pred_check
    _
  $region15: #{iterative_simulator_fwd.99} parent=0 // pred_check_branch
    %17 = sbr.rel (0) target = $region17
  $region16: #{iterative_simulator_fwd.99} parent=0 // pred_region
    _
  $region17: #{iterative_simulator_fwd.99} parent=0 // pred_fallthru
    _
  // Predicated region
  $region18: #{iterative_simulator_fwd.99} parent=0 // pred_check
    _
  $region19: #{iterative_simulator_fwd.99} parent=0 // pred_check_branch
    %19 = sbr.rel (0) target = $region21
  $region20: #{iterative_simulator_fwd.99} parent=0 // pred_region
    _
  $region21: #{iterative_simulator_fwd.99} parent=0 // pred_fallthru
    _
  %v21 = vld [vmem:[%s0] sm:$0xff]
  %v22 = vld [vmem:[%s0 + $0x8] sm:$0xff]
  %v23 = vld [vmem:[%s0 + $0x10] sm:$0xff]
  %v24 = vld [vmem:[%s0 + $0x18] sm:$0xff]
  %v25 = vld [vmem:[%s0 + $0x20] sm:$0xff]
  %v26 = vld [vmem:[%s0 + $0x28] sm:$0xff]
  %v27 = vld [vmem:[%s0 + $0x30] sm:$0xff]
  %v28 = vld [vmem:[%s0 + $0x38] sm:$0xff]
  %v29 = vld [vmem:[%s1] sm:$0x1]
  %v30 = vld [vmem:[%s2] sm:$0x1]
  %vm31 = vcmask 261120
  %v32 = vsel %vm31, %v21, 0.0
  %33 = vadd.xlane.f32.xlu0 %v32
  %v34 = vpop.xlane.xlu0 %33
  %v35 = vsel %vm31, %v22, 0.0
  %36 = vadd.xlane.f32.xlu0 %v35
  %v37 = vpop.xlane.xlu0 %36
  %v38 = vsel %vm31, %v23, 0.0
  %39 = vadd.xlane.f32.xlu0 %v38
  %v40 = vpop.xlane.xlu0 %39
  %v41 = vsel %vm31, %v24, 0.0
  %42 = vadd.xlane.f32.xlu0 %v41
  %v43 = vpop.xlane.xlu0 %42
  %v44 = vsel %vm31, %v25, 0.0
  %45 = vadd.xlane.f32.xlu0 %v44
  %v46 = vpop.xlane.xlu0 %45
  %v47 = vsel %vm31, %v26, 0.0
  %48 = vadd.xlane.f32.xlu0 %v47
  %v49 = vpop.xlane.xlu0 %48
  %v50 = vsel %vm31, %v27, 0.0
  %51 = vadd.xlane.f32.xlu0 %v50
  %v52 = vpop.xlane.xlu0 %51
  %v53 = vsel %vm31, %v28, 0.0
  %54 = vadd.xlane.f32.xlu0 %v53
  %v55 = vpop.xlane.xlu0 %54
  %v56 = vrcp.pop 32.0
  %v57 = vmul.f32 32.0, %v56
  %v58 = vsub.f32 1.0, %v57
  %v59 = vmul.f32 %v56, %v58
  %v60 = vadd.f32 %v56, %v59
  %vm61 = vweird.f32 %v56
  %v62 = vsel %vm61, %v56, %v60
  %v63 = vmul.f32 %v34, %v62
  %v64 = vmul.f32 %v37, %v62
  %v65 = vmul.f32 %v40, %v62
  %v66 = vmul.f32 %v43, %v62
  %v67 = vmul.f32 %v46, %v62
  %v68 = vmul.f32 %v49, %v62
  %v69 = vmul.f32 %v52, %v62
  %v70 = vmul.f32 %v55, %v62
  %v71 = vsub.f32 %v21, %v63
  %v72 = vsub.f32 %v22, %v64
  %v73 = vsub.f32 %v23, %v65
  %v74 = vsub.f32 %v24, %v66
  %v75 = vsub.f32 %v25, %v67
  %v76 = vsub.f32 %v26, %v68
  %v77 = vsub.f32 %v27, %v69
  %v78 = vsub.f32 %v28, %v70
  %v79 = vmul.f32 %v71, %v71
  %v80 = vmul.f32 %v72, %v72
  %v81 = vmul.f32 %v73, %v73
  %v82 = vmul.f32 %v74, %v74
  %v83 = vmul.f32 %v75, %v75
  %v84 = vmul.f32 %v76, %v76
  %v85 = vmul.f32 %v77, %v77
  %v86 = vmul.f32 %v78, %v78
  %v87 = vsel %vm31, %v79, 0.0
  %88 = vadd.xlane.f32.xlu0 %v87
  %v89 = vpop.xlane.xlu0 %88
  %v90 = vsel %vm31, %v80, 0.0
  %91 = vadd.xlane.f32.xlu0 %v90
  %v92 = vpop.xlane.xlu0 %91
  %v93 = vsel %vm31, %v81, 0.0
  %94 = vadd.xlane.f32.xlu0 %v93
  %v95 = vpop.xlane.xlu0 %94
  %v96 = vsel %vm31, %v82, 0.0
  %97 = vadd.xlane.f32.xlu0 %v96
  %v98 = vpop.xlane.xlu0 %97
  %v99 = vsel %vm31, %v83, 0.0
  %100 = vadd.xlane.f32.xlu0 %v99
  %v101 = vpop.xlane.xlu0 %100
  %v102 = vsel %vm31, %v84, 0.0
  %103 = vadd.xlane.f32.xlu0 %v102
  %v104 = vpop.xlane.xlu0 %103
  %v105 = vsel %vm31, %v85, 0.0
  %106 = vadd.xlane.f32.xlu0 %v105
  %v107 = vpop.xlane.xlu0 %106
  %v108 = vsel %vm31, %v86, 0.0
  %109 = vadd.xlane.f32.xlu0 %v108
  %v110 = vpop.xlane.xlu0 %109
  %v111 = vmul.f32 %v89, %v62
  %v112 = vmul.f32 %v92, %v62
  %v113 = vmul.f32 %v95, %v62
  %v114 = vmul.f32 %v98, %v62
  %v115 = vmul.f32 %v101, %v62
  %v116 = vmul.f32 %v104, %v62
  %v117 = vmul.f32 %v107, %v62
  %v118 = vmul.f32 %v110, %v62
  %v119 = vadd.f32 %v111, 1e-05
  %v120 = vadd.f32 %v112, 1e-05
  %v121 = vadd.f32 %v113, 1e-05
  %v122 = vadd.f32 %v114, 1e-05
  %v123 = vadd.f32 %v115, 1e-05
  %v124 = vadd.f32 %v116, 1e-05
  %v125 = vadd.f32 %v117, 1e-05
  %v126 = vadd.f32 %v118, 1e-05
  %v127 = vrsqrt.pop %v119
  %v128 = vmul.f32 %v127, %v119
  %v129 = vmul.f32 %v128, %v127
  %v130 = vmul.f32 0.5, %v129
  %v131 = vsub.f32 1.5, %v130
  %v132 = vmul.f32 %v127, %v131
  %vm133 = vweird.f32 %v119
  %vm134 = vweird.f32 %v127
  %vm135 = vmor %vm133, %vm134
  %v136 = vsel %vm135, %v127, %v132
  %v137 = vrsqrt.pop %v120
  %v138 = vmul.f32 %v137, %v120
  %v139 = vmul.f32 %v138, %v137
  %v140 = vmul.f32 0.5, %v139
  %v141 = vsub.f32 1.5, %v140
  %v142 = vmul.f32 %v137, %v141
  %vm143 = vweird.f32 %v120
  %vm144 = vweird.f32 %v137
  %vm145 = vmor %vm143, %vm144
  %v146 = vsel %vm145, %v137, %v142
  %v147 = vrsqrt.pop %v121
  %v148 = vmul.f32 %v147, %v121
  %v149 = vmul.f32 %v148, %v147
  %v150 = vmul.f32 0.5, %v149
  %v151 = vsub.f32 1.5, %v150
  %v152 = vmul.f32 %v147, %v151
  %vm153 = vweird.f32 %v121
  %vm154 = vweird.f32 %v147
  %vm155 = vmor %vm153, %vm154
  %v156 = vsel %vm155, %v147, %v152
  %v157 = vrsqrt.pop %v122
  %v158 = vmul.f32 %v157, %v122
  %v159 = vmul.f32 %v158, %v157
  %v160 = vmul.f32 0.5, %v159
  %v161 = vsub.f32 1.5, %v160
  %v162 = vmul.f32 %v157, %v161
  %vm163 = vweird.f32 %v122
  %vm164 = vweird.f32 %v157
  %vm165 = vmor %vm163, %vm164
  %v166 = vsel %vm165, %v157, %v162
  %v167 = vrsqrt.pop %v123
  %v168 = vmul.f32 %v167, %v123
  %v169 = vmul.f32 %v168, %v167
  %v170 = vmul.f32 0.5, %v169
  %v171 = vsub.f32 1.5, %v170
  %v172 = vmul.f32 %v167, %v171
  %vm173 = vweird.f32 %v123
  %vm174 = vweird.f32 %v167
  %vm175 = vmor %vm173, %vm174
  %v176 = vsel %vm175, %v167, %v172
  %v177 = vrsqrt.pop %v124
  %v178 = vmul.f32 %v177, %v124
  %v179 = vmul.f32 %v178, %v177
  %v180 = vmul.f32 0.5, %v179
  %v181 = vsub.f32 1.5, %v180
  %v182 = vmul.f32 %v177, %v181
  %vm183 = vweird.f32 %v124
  %vm184 = vweird.f32 %v177
  %vm185 = vmor %vm183, %vm184
  %v186 = vsel %vm185, %v177, %v182
  %v187 = vrsqrt.pop %v125
  %v188 = vmul.f32 %v187, %v125
  %v189 = vmul.f32 %v188, %v187
  %v190 = vmul.f32 0.5, %v189
  %v191 = vsub.f32 1.5, %v190
  %v192 = vmul.f32 %v187, %v191
  %vm193 = vweird.f32 %v125
  %vm194 = vweird.f32 %v187
  %vm195 = vmor %vm193, %vm194
  %v196 = vsel %vm195, %v187, %v192
  %v197 = vrsqrt.pop %v126
  %v198 = vmul.f32 %v197, %v126
  %v199 = vmul.f32 %v198, %v197
  %v200 = vmul.f32 0.5, %v199
  %v201 = vsub.f32 1.5, %v200
  %v202 = vmul.f32 %v197, %v201
  %vm203 = vweird.f32 %v126
  %vm204 = vweird.f32 %v197
  %vm205 = vmor %vm203, %vm204
  %v206 = vsel %vm205, %v197, %v202
  %v207 = vmul.f32 %v71, %v136
  %v208 = vmul.f32 %v72, %v146
  %v209 = vmul.f32 %v73, %v156
  %v210 = vmul.f32 %v74, %v166
  %v211 = vmul.f32 %v75, %v176
  %v212 = vmul.f32 %v76, %v186
  %v213 = vmul.f32 %v77, %v196
  %v214 = vmul.f32 %v78, %v206
  %v216 = vperm.slane %v29, 0
  %v218 = vmul.f32 %v207, %v216
  %v219 = vmul.f32 %v208, %v216
  %v220 = vmul.f32 %v209, %v216
  %v221 = vmul.f32 %v210, %v216
  %v222 = vmul.f32 %v211, %v216
  %v223 = vmul.f32 %v212, %v216
  %v224 = vmul.f32 %v213, %v216
  %v225 = vmul.f32 %v214, %v216
  %v227 = vperm.slane %v30, 0
  %v229 = vadd.f32 %v218, %v227
  %v230 = vadd.f32 %v219, %v227
  %v231 = vadd.f32 %v220, %v227
  %v232 = vadd.f32 %v221, %v227
  %v233 = vadd.f32 %v222, %v227
  %v234 = vadd.f32 %v223, %v227
  %v235 = vadd.f32 %v224, %v227
  %v236 = vadd.f32 %v225, %v227
  %v237 = vld [vmem:[%s3] sm:$0xf]
  %v238 = vld [vmem:[%s3 + $0x4] sm:$0xf]
  %v239 = vld [vmem:[%s3 + $0x8] sm:$0xf]
  %v240 = vld [vmem:[%s3 + $0xc] sm:$0xf]
  %v241 = vld [vmem:[%s4] sm:$0x1]
  %v242 = vpack.c.bf16 %v230, %v229
  %v243 = vpack.c.bf16 %v232, %v231
  %v244 = vpack.c.bf16 %v234, %v233
  %v245 = vpack.c.bf16 %v236, %v235
  %v247 = vperm.slane %v241, 0
  %v253 = vunpack.c.l.b16 %v237
  %v254 = vunpack.c.l.b16 %v238
  %v255 = vunpack.c.l.b16 %v239
  %v256 = vunpack.c.l.b16 %v240
  %v257 = vpack.c.b16 %v254, %v253
  %v258 = vpack.c.b16 %v256, %v255
  %v262 = vsel %vm31, %v242, 0
  %v265 = vsel %vm31, %v243, 0
  %v268 = vsel %vm31, %v244, 0
  %v271 = vsel %vm31, %v245, 0
  %273 = vmatpush.bf16.msra.mxu0 0
  %274 = vmatpush.bf16.msra.mxu0 0
  %275 = vmatpush.bf16.msra.mxu0 0
  %276 = vmatpush.bf16.msra.mxu0 0
  %277 = vmatpush.bf16.msra.mxu0 0
  %278 = vmatpush.bf16.msra.mxu0 0
  %279 = vmatpush.bf16.msra.mxu0 %v258
  %280 = vmatpush.bf16.msra.mxu0 %v257
  %281 = vmatmul.bf16.gmra.mxu0 %v262
  %v282 = vpop.f32.mrf.mxu0
  %v283 = vadd.f32 %v247, %v282
  %v284 = vpop.f32.mrf.mxu0
  %v285 = vadd.f32 %v247, %v284
  %286 = vmatmul.bf16.gmra.mxu0 %v265
  %v287 = vpop.f32.mrf.mxu0
  %v288 = vadd.f32 %v247, %v287
  %v289 = vpop.f32.mrf.mxu0
  %v290 = vadd.f32 %v247, %v289
  %291 = vmatmul.bf16.gmra.mxu0 %v268
  %v292 = vpop.f32.mrf.mxu0
  %v293 = vadd.f32 %v247, %v292
  %v294 = vpop.f32.mrf.mxu0
  %v295 = vadd.f32 %v247, %v294
  %296 = vmatmul.bf16.gmra.mxu0 %v271
  %v297 = vpop.f32.mrf.mxu0
  %v298 = vadd.f32 %v247, %v297
  %v299 = vpop.f32.mrf.mxu0
  %v300 = vadd.f32 %v247, %v299
  %301 = vdwg.mxu0
  %vm302 = vcmask 64512
  %303 = vst.msk [vmem:[%s5] sm:$0xff] %vm302, %v283
  %304 = vst.msk [vmem:[%s5 + $0x8] sm:$0xff] %vm302, %v285
  %305 = vst.msk [vmem:[%s5 + $0x10] sm:$0xff] %vm302, %v288
  %306 = vst.msk [vmem:[%s5 + $0x18] sm:$0xff] %vm302, %v290
  %307 = vst.msk [vmem:[%s5 + $0x20] sm:$0xff] %vm302, %v293
  %308 = vst.msk [vmem:[%s5 + $0x28] sm:$0xff] %vm302, %v295
  %309 = vst.msk [vmem:[%s5 + $0x30] sm:$0xff] %vm302, %v298
  %310 = vst.msk [vmem:[%s5 + $0x38] sm:$0xff] %vm302, %v300
  // Predicated region
  $region22: #{iterative_simulator_fwd.99} parent=0 // pred_check
    _
  $region23: #{iterative_simulator_fwd.99} parent=0 // pred_check_branch
    %312 = sbr.rel (0) target = $region25
  $region24: #{iterative_simulator_fwd.99} parent=0 // pred_region
    _
  $region25: #{iterative_simulator_fwd.99} parent=0 // pred_fallthru
    _
  // Predicated region
  $region26: #{iterative_simulator_fwd.99} parent=0 // pred_check
    _
  $region27: #{iterative_simulator_fwd.99} parent=0 // pred_check_branch
    %314 = sbr.rel (0) target = $region29
  $region28: #{iterative_simulator_fwd.99} parent=0 // pred_region
    _
  $region29: #{iterative_simulator_fwd.99} parent=0 // pred_fallthru
    _

// kernel: iterative_simulator_fwd.131
$region0: #{iterative_simulator_fwd.131}
  #allocation0 [shape = 'u32[]', space=smem, size = 0x4, offset = 0x4, fixed_abs, tag = 'smem constant byte address 0x4 - core index']
  #allocation1 [shape = 'u32[72,128]{1,0:T(1,128)}', space=vmem, size = 0x9000, scoped, tag = 'internal scratch']
  %s0 = inlined_call_operand.vmem [shape: f32[64,32], index: 0, kind: input, shape index: {}]
  %s1 = inlined_call_operand.vmem [shape: bf16[32,16], index: 1, kind: input, shape index: {}]
  %s2 = inlined_call_operand.vmem [shape: f32[1,16], index: 2, kind: input, shape index: {}]
  %s3 = inlined_call_operand.vmem [shape: f32[64,16], index: 3, kind: input, shape index: {}]
  %s4 = inlined_call_operand.hbm [shape: f32[64,16], index: 4, kind: output, shape index: {}]
  %s5 = sld [smem:[#allocation0]]
  $region26: #{iterative_simulator_fwd.131} parent=0
    _
  %s7 = ssub.s32 1, %s5
  %s8 = scalar_select 0, %s7, %s5
  $region1: #{iterative_simulator_fwd.131} parent=0
    #allocation2 [shape = 'u8[32768]{0}', space=vmem, size = 0x8000, scoped, tag = 'output window, operand 0, single buffered']
    #allocation3 [shape = 's32[1]{0}', space=sflag, size = 0x4, scoped, tag = 'scoped memory for iterative_simulator_fwd.131']
    %9 = vsyncpa [#allocation3], 0
    // Predicated region
    $region2: #{iterative_simulator_fwd.131} parent=1 // pred_check
      _
    $region3: #{iterative_simulator_fwd.131} parent=1 // pred_check_branch
      %11 = sbr.rel (0) target = $region5
    $region4: #{iterative_simulator_fwd.131} parent=1 // pred_region
      _
    $region5: #{iterative_simulator_fwd.131} parent=1 // pred_fallthru
      _
    // Predicated region
    $region6: #{iterative_simulator_fwd.131} parent=1 // pred_check
      _
    $region7: #{iterative_simulator_fwd.131} parent=1 // pred_check_branch
      %13 = sbr.rel (0) target = $region9
    $region8: #{iterative_simulator_fwd.131} parent=1 // pred_region
      _
    $region9: #{iterative_simulator_fwd.131} parent=1 // pred_fallthru
      _
    // Predicated region
    $region10: #{iterative_simulator_fwd.131} parent=1 // pred_check
      _
    $region11: #{iterative_simulator_fwd.131} parent=1 // pred_check_branch
      %15 = sbr.rel (0) target = $region13
    $region12: #{iterative_simulator_fwd.131} parent=1 // pred_region
      _
    $region13: #{iterative_simulator_fwd.131} parent=1 // pred_fallthru
      _
    // Predicated region
    $region14: #{iterative_simulator_fwd.131} parent=1 // pred_check
      _
    $region15: #{iterative_simulator_fwd.131} parent=1 // pred_check_branch
      %17 = sbr.rel (0) target = $region17
    $region16: #{iterative_simulator_fwd.131} parent=1 // pred_region
      _
    $region17: #{iterative_simulator_fwd.131} parent=1 // pred_fallthru
      _
    %v19 = vld [vmem:[%s0] sm:$0xff]
    %v20 = vld [vmem:[%s0 + $0x8] sm:$0xff]
    %v21 = vld [vmem:[%s0 + $0x10] sm:$0xff]
    %v22 = vld [vmem:[%s0 + $0x18] sm:$0xff]
    %v23 = vld [vmem:[%s0 + $0x20] sm:$0xff]
    %v24 = vld [vmem:[%s0 + $0x28] sm:$0xff]
    %v25 = vld [vmem:[%s0 + $0x30] sm:$0xff]
    %v26 = vld [vmem:[%s0 + $0x38] sm:$0xff]
    %v27 = vld [vmem:[%s1] sm:$0xf]
    %v28 = vld [vmem:[%s1 + $0x4] sm:$0xf]
    %v29 = vld [vmem:[%s1 + $0x8] sm:$0xf]
    %v30 = vld [vmem:[%s1 + $0xc] sm:$0xf]
    %v31 = vld [vmem:[%s2] sm:$0x1]
    %v32 = vpack.c.bf16 %v20, %v19
    %v33 = vpack.c.bf16 %v22, %v21
    %v34 = vpack.c.bf16 %v24, %v23
    %v35 = vpack.c.bf16 %v26, %v25
    %v37 = vperm.slane %v31, 0
    %v43 = vunpack.c.l.b16 %v27
    %v44 = vunpack.c.l.b16 %v28
    %v45 = vunpack.c.l.b16 %v29
    %v46 = vunpack.c.l.b16 %v30
    %v47 = vpack.c.b16 %v44, %v43
    %v48 = vpack.c.b16 %v46, %v45
    %vm51 = vcmask 261120
    %v53 = vsel %vm51, %v32, 0
    %v56 = vsel %vm51, %v33, 0
    %v59 = vsel %vm51, %v34, 0
    %v62 = vsel %vm51, %v35, 0
    %64 = vmatpush.bf16.msra.mxu0 0
    %65 = vmatpush.bf16.msra.mxu0 0
    %66 = vmatpush.bf16.msra.mxu0 0
    %67 = vmatpush.bf16.msra.mxu0 0
    %68 = vmatpush.bf16.msra.mxu0 0
    %69 = vmatpush.bf16.msra.mxu0 0
    %70 = vmatpush.bf16.msra.mxu0 %v48
    %71 = vmatpush.bf16.msra.mxu0 %v47
    %72 = vmatmul.bf16.gmra.mxu0 %v53
    %v73 = vpop.f32.mrf.mxu0
    %v74 = vadd.f32 %v37, %v73
    %v75 = vpop.f32.mrf.mxu0
    %v76 = vadd.f32 %v37, %v75
    %77 = vmatmul.bf16.gmra.mxu0 %v56
    %v78 = vpop.f32.mrf.mxu0
    %v79 = vadd.f32 %v37, %v78
    %v80 = vpop.f32.mrf.mxu0
    %v81 = vadd.f32 %v37, %v80
    %82 = vmatmul.bf16.gmra.mxu0 %v59
    %v83 = vpop.f32.mrf.mxu0
    %v84 = vadd.f32 %v37, %v83
    %v85 = vpop.f32.mrf.mxu0
    %v86 = vadd.f32 %v37, %v85
    %87 = vmatmul.bf16.gmra.mxu0 %v62
    %v88 = vpop.f32.mrf.mxu0
    %v89 = vadd.f32 %v37, %v88
    %v90 = vpop.f32.mrf.mxu0
    %v91 = vadd.f32 %v37, %v90
    %92 = vdwg.mxu0
    %v93 = vld [vmem:[%s3] sm:$0xff]
    %v94 = vld [vmem:[%s3 + $0x8] sm:$0xff]
    %v95 = vld [vmem:[%s3 + $0x10] sm:$0xff]
    %v96 = vld [vmem:[%s3 + $0x18] sm:$0xff]
    %v97 = vld [vmem:[%s3 + $0x20] sm:$0xff]
    %v98 = vld [vmem:[%s3 + $0x28] sm:$0xff]
    %v99 = vld [vmem:[%s3 + $0x30] sm:$0xff]
    %v100 = vld [vmem:[%s3 + $0x38] sm:$0xff]
    %v101 = vadd.f32 %v74, %v93
    %v102 = vadd.f32 %v76, %v94
    %v103 = vadd.f32 %v79, %v95
    %v104 = vadd.f32 %v81, %v96
    %v105 = vadd.f32 %v84, %v97
    %v106 = vadd.f32 %v86, %v98
    %v107 = vadd.f32 %v89, %v99
    %v108 = vadd.f32 %v91, %v100
    %vm109 = vcmask 130048
    %110 = vst.msk [vmem:[#allocation2] sm:$0xff] %vm109, %v101
    %111 = vst.msk [vmem:[#allocation2 + $0x8] sm:$0xff] %vm109, %v102
    %112 = vst.msk [vmem:[#allocation2 + $0x10] sm:$0xff] %vm109, %v103
    %113 = vst.msk [vmem:[#allocation2 + $0x18] sm:$0xff] %vm109, %v104
    %114 = vst.msk [vmem:[#allocation2 + $0x20] sm:$0xff] %vm109, %v105
    %115 = vst.msk [vmem:[#allocation2 + $0x28] sm:$0xff] %vm109, %v106
    %116 = vst.msk [vmem:[#allocation2 + $0x30] sm:$0xff] %vm109, %v107
    %117 = vst.msk [vmem:[#allocation2 + $0x38] sm:$0xff] %vm109, %v108
    // Predicated region
    $region18: #{iterative_simulator_fwd.131} parent=1 // pred_check
      _
    $region19: #{iterative_simulator_fwd.131} parent=1 // pred_check_branch
      %119 = sbr.rel (0) target = $region21
    $region20: #{iterative_simulator_fwd.131} parent=1 // pred_region
      %121 = vsyncadd [#allocation3], 0
      %s122 = sshll.u32 [#allocation2], 4
      %s123 = int_to_ptr.vmem [resolvable:$true] %s122
      %s124 = sshll.u32 %s4, 4
      %s125 = int_to_ptr.hbm [resolvable:$true] %s124
      %130 = dma.vmem_to_hbm [thread:$0]  %s123, 1024, %s125, [#allocation3], 128, 128, 8
    $region21: #{iterative_simulator_fwd.131} parent=1 // pred_fallthru
      _
    // Predicated region
    $region22: #{iterative_simulator_fwd.131} parent=1 // pred_check
      _
    $region23: #{iterative_simulator_fwd.131} parent=1 // pred_check_branch
      %132 = sbr.rel (0) target = $region25
    $region24: #{iterative_simulator_fwd.131} parent=1 // pred_region
      %134 = dma.done [#allocation3], 1024
    $region25: #{iterative_simulator_fwd.131} parent=1 // pred_fallthru
      _
    %135 = vsyncpa [#allocation3], 1

// kernel: iterative_simulator_fwd.95
$region0: #{iterative_simulator_fwd.95}
  #allocation0 [shape = 'u32[]', space=smem, size = 0x4, offset = 0x4, fixed_abs, tag = 'smem constant byte address 0x4 - core index']
  #allocation1 [shape = 'u32[72,128]{1,0:T(1,128)}', space=vmem, size = 0x9000, scoped, tag = 'internal scratch']
  %s0 = inlined_call_operand.vmem [shape: bf16[32,8,8], index: 0, kind: input, shape index: {}]
  %s1 = inlined_call_operand.vmem [shape: bf16[32,8,8], index: 1, kind: input, shape index: {}]
  %s2 = inlined_call_operand.vmem [shape: bf16[32,8,8], index: 2, kind: input, shape index: {}]
  %s3 = inlined_call_operand.vmem [shape: f32[32,8,8], index: 3, kind: output, shape index: {}]
  %s4 = sld [smem:[#allocation0]]
  $region22: #{iterative_simulator_fwd.95} parent=0
    _
  %s6 = ssub.s32 1, %s4
  %s7 = scalar_select 0, %s6, %s4
  // Predicated region
  $region2: #{iterative_simulator_fwd.95} parent=0 // pred_check
    _
  $region3: #{iterative_simulator_fwd.95} parent=0 // pred_check_branch
    %9 = sbr.rel (0) target = $region5
  $region4: #{iterative_simulator_fwd.95} parent=0 // pred_region
    _
  $region5: #{iterative_simulator_fwd.95} parent=0 // pred_fallthru
    _
  // Predicated region
  $region6: #{iterative_simulator_fwd.95} parent=0 // pred_check
    _
  $region7: #{iterative_simulator_fwd.95} parent=0 // pred_check_branch
    %11 = sbr.rel (0) target = $region9
  $region8: #{iterative_simulator_fwd.95} parent=0 // pred_region
    _
  $region9: #{iterative_simulator_fwd.95} parent=0 // pred_fallthru
    _
  // Predicated region
  $region10: #{iterative_simulator_fwd.95} parent=0 // pred_check
    _
  $region11: #{iterative_simulator_fwd.95} parent=0 // pred_check_branch
    %13 = sbr.rel (0) target = $region13
  $region12: #{iterative_simulator_fwd.95} parent=0 // pred_region
    _
  $region13: #{iterative_simulator_fwd.95} parent=0 // pred_fallthru
    _
  %v15 = vld [vmem:[%s0] sm:$0xf]
  %v16 = vld [vmem:[%s0 + $0x4] sm:$0xf]
  %v17 = vld [vmem:[%s0 + $0x8] sm:$0xf]
  %v18 = vld [vmem:[%s0 + $0xc] sm:$0xf]
  %v19 = vld [vmem:[%s0 + $0x10] sm:$0xf]
  %v20 = vld [vmem:[%s0 + $0x14] sm:$0xf]
  %v21 = vld [vmem:[%s0 + $0x18] sm:$0xf]
  %v22 = vld [vmem:[%s0 + $0x1c] sm:$0xf]
  %v23 = vld [vmem:[%s0 + $0x20] sm:$0xf]
  %v24 = vld [vmem:[%s0 + $0x24] sm:$0xf]
  %v25 = vld [vmem:[%s0 + $0x28] sm:$0xf]
  %v26 = vld [vmem:[%s0 + $0x2c] sm:$0xf]
  %v27 = vld [vmem:[%s0 + $0x30] sm:$0xf]
  %v28 = vld [vmem:[%s0 + $0x34] sm:$0xf]
  %v29 = vld [vmem:[%s0 + $0x38] sm:$0xf]
  %v30 = vld [vmem:[%s0 + $0x3c] sm:$0xf]
  %v31 = vld [vmem:[%s0 + $0x40] sm:$0xf]
  %v32 = vld [vmem:[%s0 + $0x44] sm:$0xf]
  %v33 = vld [vmem:[%s0 + $0x48] sm:$0xf]
  %v34 = vld [vmem:[%s0 + $0x4c] sm:$0xf]
  %v35 = vld [vmem:[%s0 + $0x50] sm:$0xf]
  %v36 = vld [vmem:[%s0 + $0x54] sm:$0xf]
  %v37 = vld [vmem:[%s0 + $0x58] sm:$0xf]
  %v38 = vld [vmem:[%s0 + $0x5c] sm:$0xf]
  %v39 = vld [vmem:[%s0 + $0x60] sm:$0xf]
  %v40 = vld [vmem:[%s0 + $0x64] sm:$0xf]
  %v41 = vld [vmem:[%s0 + $0x68] sm:$0xf]
  %v42 = vld [vmem:[%s0 + $0x6c] sm:$0xf]
  %v43 = vld [vmem:[%s0 + $0x70] sm:$0xf]
  %v44 = vld [vmem:[%s0 + $0x74] sm:$0xf]
  %v45 = vld [vmem:[%s0 + $0x78] sm:$0xf]
  %v46 = vld [vmem:[%s0 + $0x7c] sm:$0xf]
  %v47 = vld [vmem:[%s1] sm:$0xf]
  %v48 = vld [vmem:[%s1 + $0x4] sm:$0xf]
  %v49 = vld [vmem:[%s1 + $0x8] sm:$0xf]
  %v50 = vld [vmem:[%s1 + $0xc] sm:$0xf]
  %v51 = vld [vmem:[%s1 + $0x10] sm:$0xf]
  %v52 = vld [vmem:[%s1 + $0x14] sm:$0xf]
  %v53 = vld [vmem:[%s1 + $0x18] sm:$0xf]
  %v54 = vld [vmem:[%s1 + $0x1c] sm:$0xf]
  %v55 = vld [vmem:[%s1 + $0x20] sm:$0xf]
  %v56 = vld [vmem:[%s1 + $0x24] sm:$0xf]
  %v57 = vld [vmem:[%s1 + $0x28] sm:$0xf]
  %v58 = vld [vmem:[%s1 + $0x2c] sm:$0xf]
  %v59 = vld [vmem:[%s1 + $0x30] sm:$0xf]
  %v60 = vld [vmem:[%s1 + $0x34] sm:$0xf]
  %v61 = vld [vmem:[%s1 + $0x38] sm:$0xf]
  %v62 = vld [vmem:[%s1 + $0x3c] sm:$0xf]
  %v63 = vld [vmem:[%s1 + $0x40] sm:$0xf]
  %v64 = vld [vmem:[%s1 + $0x44] sm:$0xf]
  %v65 = vld [vmem:[%s1 + $0x48] sm:$0xf]
  %v66 = vld [vmem:[%s1 + $0x4c] sm:$0xf]
  %v67 = vld [vmem:[%s1 + $0x50] sm:$0xf]
  %v68 = vld [vmem:[%s1 + $0x54] sm:$0xf]
  %v69 = vld [vmem:[%s1 + $0x58] sm:$0xf]
  %v70 = vld [vmem:[%s1 + $0x5c] sm:$0xf]
  %v71 = vld [vmem:[%s1 + $0x60] sm:$0xf]
  %v72 = vld [vmem:[%s1 + $0x64] sm:$0xf]
  %v73 = vld [vmem:[%s1 + $0x68] sm:$0xf]
  %v74 = vld [vmem:[%s1 + $0x6c] sm:$0xf]
  %v75 = vld [vmem:[%s1 + $0x70] sm:$0xf]
  %v76 = vld [vmem:[%s1 + $0x74] sm:$0xf]
  %v77 = vld [vmem:[%s1 + $0x78] sm:$0xf]
  %v78 = vld [vmem:[%s1 + $0x7c] sm:$0xf]
  %v79 = vld [vmem:[%s2] sm:$0xf]
  %v80 = vld [vmem:[%s2 + $0x4] sm:$0xf]
  %v81 = vld [vmem:[%s2 + $0x8] sm:$0xf]
  %v82 = vld [vmem:[%s2 + $0xc] sm:$0xf]
  %v83 = vld [vmem:[%s2 + $0x10] sm:$0xf]
  %v84 = vld [vmem:[%s2 + $0x14] sm:$0xf]
  %v85 = vld [vmem:[%s2 + $0x18] sm:$0xf]
  %v86 = vld [vmem:[%s2 + $0x1c] sm:$0xf]
  %v87 = vld [vmem:[%s2 + $0x20] sm:$0xf]
  %v88 = vld [vmem:[%s2 + $0x24] sm:$0xf]
  %v89 = vld [vmem:[%s2 + $0x28] sm:$0xf]
  %v90 = vld [vmem:[%s2 + $0x2c] sm:$0xf]
  %v91 = vld [vmem:[%s2 + $0x30] sm:$0xf]
  %v92 = vld [vmem:[%s2 + $0x34] sm:$0xf]
  %v93 = vld [vmem:[%s2 + $0x38] sm:$0xf]
  %v94 = vld [vmem:[%s2 + $0x3c] sm:$0xf]
  %v95 = vld [vmem:[%s2 + $0x40] sm:$0xf]
  %v96 = vld [vmem:[%s2 + $0x44] sm:$0xf]
  %v97 = vld [vmem:[%s2 + $0x48] sm:$0xf]
  %v98 = vld [vmem:[%s2 + $0x4c] sm:$0xf]
  %v99 = vld [vmem:[%s2 + $0x50] sm:$0xf]
  %v100 = vld [vmem:[%s2 + $0x54] sm:$0xf]
  %v101 = vld [vmem:[%s2 + $0x58] sm:$0xf]
  %v102 = vld [vmem:[%s2 + $0x5c] sm:$0xf]
  %v103 = vld [vmem:[%s2 + $0x60] sm:$0xf]
  %v104 = vld [vmem:[%s2 + $0x64] sm:$0xf]
  %v105 = vld [vmem:[%s2 + $0x68] sm:$0xf]
  %v106 = vld [vmem:[%s2 + $0x6c] sm:$0xf]
  %v107 = vld [vmem:[%s2 + $0x70] sm:$0xf]
  %v108 = vld [vmem:[%s2 + $0x74] sm:$0xf]
  %v109 = vld [vmem:[%s2 + $0x78] sm:$0xf]
  %v110 = vld [vmem:[%s2 + $0x7c] sm:$0xf]
  %vm111 = vcmask 64512
  %v113 = vsel %vm111, %v15, 0
  %v116 = vsel %vm111, %v47, 0
  %118 = vmatpush.bf16.xpose.msra.mxu0 0
  %119 = vmatpush.bf16.xpose.msra.mxu0 0
  %120 = vmatpush.bf16.xpose.msra.mxu0 0
  %121 = vmatpush.bf16.xpose.msra.mxu0 0
  %122 = vmatpush.bf16.xpose.msra.mxu0 0
  %123 = vmatpush.bf16.xpose.msra.mxu0 0
  %124 = vmatpush.bf16.xpose.msra.mxu0 0
  %125 = vmatpush.bf16.xpose.msra.mxu0 %v116
  %126 = vmatmul.bf16.gmra.mxu0 %v113
  %v127 = vpop.f32.mrf.mxu0
  %v128 = vadd.f32 0.0, %v127
  %v129 = vpop.f32.mrf.mxu0
  %130 = vdwg.mxu0
  %v132 = vsel %vm111, %v16, 0
  %v135 = vsel %vm111, %v48, 0
  %137 = vmatpush.bf16.xpose.msra.mxu0 0
  %138 = vmatpush.bf16.xpose.msra.mxu0 0
  %139 = vmatpush.bf16.xpose.msra.mxu0 0
  %140 = vmatpush.bf16.xpose.msra.mxu0 0
  %141 = vmatpush.bf16.xpose.msra.mxu0 0
  %142 = vmatpush.bf16.xpose.msra.mxu0 0
  %143 = vmatpush.bf16.xpose.msra.mxu0 0
  %144 = vmatpush.bf16.xpose.msra.mxu0 %v135
  %145 = vmatmul.bf16.gmra.mxu0 %v132
  %v146 = vpop.f32.mrf.mxu0
  %v147 = vadd.f32 0.0, %v146
  %v148 = vpop.f32.mrf.mxu0
  %149 = vdwg.mxu0
  %v151 = vsel %vm111, %v17, 0
  %v154 = vsel %vm111, %v49, 0
  %156 = vmatpush.bf16.xpose.msra.mxu0 0
  %157 = vmatpush.bf16.xpose.msra.mxu0 0
  %158 = vmatpush.bf16.xpose.msra.mxu0 0
  %159 = vmatpush.bf16.xpose.msra.mxu0 0
  %160 = vmatpush.bf16.xpose.msra.mxu0 0
  %161 = vmatpush.bf16.xpose.msra.mxu0 0
  %162 = vmatpush.bf16.xpose.msra.mxu0 0
  %163 = vmatpush.bf16.xpose.msra.mxu0 %v154
  %164 = vmatmul.bf16.gmra.mxu0 %v151
  %v165 = vpop.f32.mrf.mxu0
  %v166 = vadd.f32 0.0, %v165
  %v167 = vpop.f32.mrf.mxu0
  %168 = vdwg.mxu0
  %v170 = vsel %vm111, %v18, 0
  %v173 = vsel %vm111, %v50, 0
  %175 = vmatpush.bf16.xpose.msra.mxu0 0
  %176 = vmatpush.bf16.xpose.msra.mxu0 0
  %177 = vmatpush.bf16.xpose.msra.mxu0 0
  %178 = vmatpush.bf16.xpose.msra.mxu0 0
  %179 = vmatpush.bf16.xpose.msra.mxu0 0
  %180 = vmatpush.bf16.xpose.msra.mxu0 0
  %181 = vmatpush.bf16.xpose.msra.mxu0 0
  %182 = vmatpush.bf16.xpose.msra.mxu0 %v173
  %183 = vmatmul.bf16.gmra.mxu0 %v170
  %v184 = vpop.f32.mrf.mxu0
  %v185 = vadd.f32 0.0, %v184
  %v186 = vpop.f32.mrf.mxu0
  %187 = vdwg.mxu0
  %v189 = vsel %vm111, %v19, 0
  %v192 = vsel %vm111, %v51, 0
  %194 = vmatpush.bf16.xpose.msra.mxu0 0
  %195 = vmatpush.bf16.xpose.msra.mxu0 0
  %196 = vmatpush.bf16.xpose.msra.mxu0 0
  %197 = vmatpush.bf16.xpose.msra.mxu0 0
  %198 = vmatpush.bf16.xpose.msra.mxu0 0
  %199 = vmatpush.bf16.xpose.msra.mxu0 0
  %200 = vmatpush.bf16.xpose.msra.mxu0 0
  %201 = vmatpush.bf16.xpose.msra.mxu0 %v192
  %202 = vmatmul.bf16.gmra.mxu0 %v189
  %v203 = vpop.f32.mrf.mxu0
  %v204 = vadd.f32 0.0, %v203
  %v205 = vpop.f32.mrf.mxu0
  %206 = vdwg.mxu0
  %v208 = vsel %vm111, %v20, 0
  %v211 = vsel %vm111, %v52, 0
  %213 = vmatpush.bf16.xpose.msra.mxu0 0
  %214 = vmatpush.bf16.xpose.msra.mxu0 0
  %215 = vmatpush.bf16.xpose.msra.mxu0 0
  %216 = vmatpush.bf16.xpose.msra.mxu0 0
  %217 = vmatpush.bf16.xpose.msra.mxu0 0
  %218 = vmatpush.bf16.xpose.msra.mxu0 0
  %219 = vmatpush.bf16.xpose.msra.mxu0 0
  %220 = vmatpush.bf16.xpose.msra.mxu0 %v211
  %221 = vmatmul.bf16.gmra.mxu0 %v208
  %v222 = vpop.f32.mrf.mxu0
  %v223 = vadd.f32 0.0, %v222
  %v224 = vpop.f32.mrf.mxu0
  %225 = vdwg.mxu0
  %v227 = vsel %vm111, %v21, 0
  %v230 = vsel %vm111, %v53, 0
  %232 = vmatpush.bf16.xpose.msra.mxu0 0
  %233 = vmatpush.bf16.xpose.msra.mxu0 0
  %234 = vmatpush.bf16.xpose.msra.mxu0 0
  %235 = vmatpush.bf16.xpose.msra.mxu0 0
  %236 = vmatpush.bf16.xpose.msra.mxu0 0
  %237 = vmatpush.bf16.xpose.msra.mxu0 0
  %238 = vmatpush.bf16.xpose.msra.mxu0 0
  %239 = vmatpush.bf16.xpose.msra.mxu0 %v230
  %240 = vmatmul.bf16.gmra.mxu0 %v227
  %v241 = vpop.f32.mrf.mxu0
  %v242 = vadd.f32 0.0, %v241
  %v243 = vpop.f32.mrf.mxu0
  %244 = vdwg.mxu0
  %v246 = vsel %vm111, %v22, 0
  %v249 = vsel %vm111, %v54, 0
  %251 = vmatpush.bf16.xpose.msra.mxu0 0
  %252 = vmatpush.bf16.xpose.msra.mxu0 0
  %253 = vmatpush.bf16.xpose.msra.mxu0 0
  %254 = vmatpush.bf16.xpose.msra.mxu0 0
  %255 = vmatpush.bf16.xpose.msra.mxu0 0
  %256 = vmatpush.bf16.xpose.msra.mxu0 0
  %257 = vmatpush.bf16.xpose.msra.mxu0 0
  %258 = vmatpush.bf16.xpose.msra.mxu0 %v249
  %259 = vmatmul.bf16.gmra.mxu0 %v246
  %v260 = vpop.f32.mrf.mxu0
  %v261 = vadd.f32 0.0, %v260
  %v262 = vpop.f32.mrf.mxu0
  %263 = vdwg.mxu0
  %v265 = vsel %vm111, %v23, 0
  %v268 = vsel %vm111, %v55, 0
  %270 = vmatpush.bf16.xpose.msra.mxu0 0
  %271 = vmatpush.bf16.xpose.msra.mxu0 0
  %272 = vmatpush.bf16.xpose.msra.mxu0 0
  %273 = vmatpush.bf16.xpose.msra.mxu0 0
  %274 = vmatpush.bf16.xpose.msra.mxu0 0
  %275 = vmatpush.bf16.xpose.msra.mxu0 0
  %276 = vmatpush.bf16.xpose.msra.mxu0 0
  %277 = vmatpush.bf16.xpose.msra.mxu0 %v268
  %278 = vmatmul.bf16.gmra.mxu0 %v265
  %v279 = vpop.f32.mrf.mxu0
  %v280 = vadd.f32 0.0, %v279
  %v281 = vpop.f32.mrf.mxu0
  %282 = vdwg.mxu0
  %v284 = vsel %vm111, %v24, 0
  %v287 = vsel %vm111, %v56, 0
  %289 = vmatpush.bf16.xpose.msra.mxu0 0
  %290 = vmatpush.bf16.xpose.msra.mxu0 0
  %291 = vmatpush.bf16.xpose.msra.mxu0 0
  %292 = vmatpush.bf16.xpose.msra.mxu0 0
  %293 = vmatpush.bf16.xpose.msra.mxu0 0
  %294 = vmatpush.bf16.xpose.msra.mxu0 0
  %295 = vmatpush.bf16.xpose.msra.mxu0 0
  %296 = vmatpush.bf16.xpose.msra.mxu0 %v287
  %297 = vmatmul.bf16.gmra.mxu0 %v284
  %v298 = vpop.f32.mrf.mxu0
  %v299 = vadd.f32 0.0, %v298
  %v300 = vpop.f32.mrf.mxu0
  %301 = vdwg.mxu0
  %v303 = vsel %vm111, %v25, 0
  %v306 = vsel %vm111, %v57, 0
  %308 = vmatpush.bf16.xpose.msra.mxu0 0
  %309 = vmatpush.bf16.xpose.msra.mxu0 0
  %310 = vmatpush.bf16.xpose.msra.mxu0 0
  %311 = vmatpush.bf16.xpose.msra.mxu0 0
  %312 = vmatpush.bf16.xpose.msra.mxu0 0
  %313 = vmatpush.bf16.xpose.msra.mxu0 0
  %314 = vmatpush.bf16.xpose.msra.mxu0 0
  %315 = vmatpush.bf16.xpose.msra.mxu0 %v306
  %316 = vmatmul.bf16.gmra.mxu0 %v303
  %v317 = vpop.f32.mrf.mxu0
  %v318 = vadd.f32 0.0, %v317
  %v319 = vpop.f32.mrf.mxu0
  %320 = vdwg.mxu0
  %v322 = vsel %vm111, %v26, 0
  %v325 = vsel %vm111, %v58, 0
  %327 = vmatpush.bf16.xpose.msra.mxu0 0
  %328 = vmatpush.bf16.xpose.msra.mxu0 0
  %329 = vmatpush.bf16.xpose.msra.mxu0 0
  %330 = vmatpush.bf16.xpose.msra.mxu0 0
  %331 = vmatpush.bf16.xpose.msra.mxu0 0
  %332 = vmatpush.bf16.xpose.msra.mxu0 0
  %333 = vmatpush.bf16.xpose.msra.mxu0 0
  %334 = vmatpush.bf16.xpose.msra.mxu0 %v325
  %335 = vmatmul.bf16.gmra.mxu0 %v322
  %v336 = vpop.f32.mrf.mxu0
  %v337 = vadd.f32 0.0, %v336
  %v338 = vpop.f32.mrf.mxu0
  %339 = vdwg.mxu0
  %v341 = vsel %vm111, %v27, 0
  %v344 = vsel %vm111, %v59, 0
  %346 = vmatpush.bf16.xpose.msra.mxu0 0
  %347 = vmatpush.bf16.xpose.msra.mxu0 0
  %348 = vmatpush.bf16.xpose.msra.mxu0 0
  %349 = vmatpush.bf16.xpose.msra.mxu0 0
  %350 = vmatpush.bf16.xpose.msra.mxu0 0
  %351 = vmatpush.bf16.xpose.msra.mxu0 0
  %352 = vmatpush.bf16.xpose.msra.mxu0 0
  %353 = vmatpush.bf16.xpose.msra.mxu0 %v344
  %354 = vmatmul.bf16.gmra.mxu0 %v341
  %v355 = vpop.f32.mrf.mxu0
  %v356 = vadd.f32 0.0, %v355
  %v357 = vpop.f32.mrf.mxu0
  %358 = vdwg.mxu0
  %v360 = vsel %vm111, %v28, 0
  %v363 = vsel %vm111, %v60, 0
  %365 = vmatpush.bf16.xpose.msra.mxu0 0
  %366 = vmatpush.bf16.xpose.msra.mxu0 0
  %367 = vmatpush.bf16.xpose.msra.mxu0 0
  %368 = vmatpush.bf16.xpose.msra.mxu0 0
  %369 = vmatpush.bf16.xpose.msra.mxu0 0
  %370 = vmatpush.bf16.xpose.msra.mxu0 0
  %371 = vmatpush.bf16.xpose.msra.mxu0 0
  %372 = vmatpush.bf16.xpose.msra.mxu0 %v363
  %373 = vmatmul.bf16.gmra.mxu0 %v360
  %v374 = vpop.f32.mrf.mxu0
  %v375 = vadd.f32 0.0, %v374
  %v376 = vpop.f32.mrf.mxu0
  %377 = vdwg.mxu0
  %v379 = vsel %vm111, %v29, 0
  %v382 = vsel %vm111, %v61, 0
  %384 = vmatpush.bf16.xpose.msra.mxu0 0
  %385 = vmatpush.bf16.xpose.msra.mxu0 0
  %386 = vmatpush.bf16.xpose.msra.mxu0 0
  %387 = vmatpush.bf16.xpose.msra.mxu0 0
  %388 = vmatpush.bf16.xpose.msra.mxu0 0
  %389 = vmatpush.bf16.xpose.msra.mxu0 0
  %390 = vmatpush.bf16.xpose.msra.mxu0 0
  %391 = vmatpush.bf16.xpose.msra.mxu0 %v382
  %392 = vmatmul.bf16.gmra.mxu0 %v379
  %v393 = vpop.f32.mrf.mxu0
  %v394 = vadd.f32 0.0, %v393
  %v395 = vpop.f32.mrf.mxu0
  %396 = vdwg.mxu0
  %v398 = vsel %vm111, %v30, 0
  %v401 = vsel %vm111, %v62, 0
  %403 = vmatpush.bf16.xpose.msra.mxu0 0
  %404 = vmatpush.bf16.xpose.msra.mxu0 0
  %405 = vmatpush.bf16.xpose.msra.mxu0 0
  %406 = vmatpush.bf16.xpose.msra.mxu0 0
  %407 = vmatpush.bf16.xpose.msra.mxu0 0
  %408 = vmatpush.bf16.xpose.msra.mxu0 0
  %409 = vmatpush.bf16.xpose.msra.mxu0 0
  %410 = vmatpush.bf16.xpose.msra.mxu0 %v401
  %411 = vmatmul.bf16.gmra.mxu0 %v398
  %v412 = vpop.f32.mrf.mxu0
  %v413 = vadd.f32 0.0, %v412
  %v414 = vpop.f32.mrf.mxu0
  %415 = vdwg.mxu0
  %v417 = vsel %vm111, %v31, 0
  %v420 = vsel %vm111, %v63, 0
  %422 = vmatpush.bf16.xpose.msra.mxu0 0
  %423 = vmatpush.bf16.xpose.msra.mxu0 0
  %424 = vmatpush.bf16.xpose.msra.mxu0 0
  %425 = vmatpush.bf16.xpose.msra.mxu0 0
  %426 = vmatpush.bf16.xpose.msra.mxu0 0
  %427 = vmatpush.bf16.xpose.msra.mxu0 0
  %428 = vmatpush.bf16.xpose.msra.mxu0 0
  %429 = vmatpush.bf16.xpose.msra.mxu0 %v420
  %430 = vmatmul.bf16.gmra.mxu0 %v417
  %v431 = vpop.f32.mrf.mxu0
  %v432 = vadd.f32 0.0, %v431
  %v433 = vpop.f32.mrf.mxu0
  %434 = vdwg.mxu0
  %v436 = vsel %vm111, %v32, 0
  %v439 = vsel %vm111, %v64, 0
  %441 = vmatpush.bf16.xpose.msra.mxu0 0
  %442 = vmatpush.bf16.xpose.msra.mxu0 0
  %443 = vmatpush.bf16.xpose.msra.mxu0 0
  %444 = vmatpush.bf16.xpose.msra.mxu0 0
  %445 = vmatpush.bf16.xpose.msra.mxu0 0
  %446 = vmatpush.bf16.xpose.msra.mxu0 0
  %447 = vmatpush.bf16.xpose.msra.mxu0 0
  %448 = vmatpush.bf16.xpose.msra.mxu0 %v439
  %449 = vmatmul.bf16.gmra.mxu0 %v436
  %v450 = vpop.f32.mrf.mxu0
  %v451 = vadd.f32 0.0, %v450
  %v452 = vpop.f32.mrf.mxu0
  %453 = vdwg.mxu0
  %v455 = vsel %vm111, %v33, 0
  %v458 = vsel %vm111, %v65, 0
  %460 = vmatpush.bf16.xpose.msra.mxu0 0
  %461 = vmatpush.bf16.xpose.msra.mxu0 0
  %462 = vmatpush.bf16.xpose.msra.mxu0 0
  %463 = vmatpush.bf16.xpose.msra.mxu0 0
  %464 = vmatpush.bf16.xpose.msra.mxu0 0
  %465 = vmatpush.bf16.xpose.msra.mxu0 0
  %466 = vmatpush.bf16.xpose.msra.mxu0 0
  %467 = vmatpush.bf16.xpose.msra.mxu0 %v458
  %468 = vmatmul.bf16.gmra.mxu0 %v455
  %v469 = vpop.f32.mrf.mxu0
  %v470 = vadd.f32 0.0, %v469
  %v471 = vpop.f32.mrf.mxu0
  %472 = vdwg.mxu0
  %v474 = vsel %vm111, %v34, 0
  %v477 = vsel %vm111, %v66, 0
  %479 = vmatpush.bf16.xpose.msra.mxu0 0
  %480 = vmatpush.bf16.xpose.msra.mxu0 0
  %481 = vmatpush.bf16.xpose.msra.mxu0 0
  %482 = vmatpush.bf16.xpose.msra.mxu0 0
  %483 = vmatpush.bf16.xpose.msra.mxu0 0
  %484 = vmatpush.bf16.xpose.msra.mxu0 0
  %485 = vmatpush.bf16.xpose.msra.mxu0 0
  %486 = vmatpush.bf16.xpose.msra.mxu0 %v477
  %487 = vmatmul.bf16.gmra.mxu0 %v474
  %v488 = vpop.f32.mrf.mxu0
  %v489 = vadd.f32 0.0, %v488
  %v490 = vpop.f32.mrf.mxu0
  %491 = vdwg.mxu0
  %v493 = vsel %vm111, %v35, 0
  %v496 = vsel %vm111, %v67, 0
  %498 = vmatpush.bf16.xpose.msra.mxu0 0
  %499 = vmatpush.bf16.xpose.msra.mxu0 0
  %500 = vmatpush.bf16.xpose.msra.mxu0 0
  %501 = vmatpush.bf16.xpose.msra.mxu0 0
  %502 = vmatpush.bf16.xpose.msra.mxu0 0
  %503 = vmatpush.bf16.xpose.msra.mxu0 0
  %504 = vmatpush.bf16.xpose.msra.mxu0 0
  %505 = vmatpush.bf16.xpose.msra.mxu0 %v496
  %506 = vmatmul.bf16.gmra.mxu0 %v493
  %v507 = vpop.f32.mrf.mxu0
  %v508 = vadd.f32 0.0, %v507
  %v509 = vpop.f32.mrf.mxu0
  %510 = vdwg.mxu0
  %v512 = vsel %vm111, %v36, 0
  %v515 = vsel %vm111, %v68, 0
  %517 = vmatpush.bf16.xpose.msra.mxu0 0
  %518 = vmatpush.bf16.xpose.msra.mxu0 0
  %519 = vmatpush.bf16.xpose.msra.mxu0 0
  %520 = vmatpush.bf16.xpose.msra.mxu0 0
  %521 = vmatpush.bf16.xpose.msra.mxu0 0
  %522 = vmatpush.bf16.xpose.msra.mxu0 0
  %523 = vmatpush.bf16.xpose.msra.mxu0 0
  %524 = vmatpush.bf16.xpose.msra.mxu0 %v515
  %525 = vmatmul.bf16.gmra.mxu0 %v512
  %v526 = vpop.f32.mrf.mxu0
  %v527 = vadd.f32 0.0, %v526
  %v528 = vpop.f32.mrf.mxu0
  %529 = vdwg.mxu0
  %v531 = vsel %vm111, %v37, 0
  %v534 = vsel %vm111, %v69, 0
  %536 = vmatpush.bf16.xpose.msra.mxu0 0
  %537 = vmatpush.bf16.xpose.msra.mxu0 0
  %538 = vmatpush.bf16.xpose.msra.mxu0 0
  %539 = vmatpush.bf16.xpose.msra.mxu0 0
  %540 = vmatpush.bf16.xpose.msra.mxu0 0
  %541 = vmatpush.bf16.xpose.msra.mxu0 0
  %542 = vmatpush.bf16.xpose.msra.mxu0 0
  %543 = vmatpush.bf16.xpose.msra.mxu0 %v534
  %544 = vmatmul.bf16.gmra.mxu0 %v531
  %v545 = vpop.f32.mrf.mxu0
  %v546 = vadd.f32 0.0, %v545
  %v547 = vpop.f32.mrf.mxu0
  %548 = vdwg.mxu0
  %v550 = vsel %vm111, %v38, 0
  %v553 = vsel %vm111, %v70, 0
  %555 = vmatpush.bf16.xpose.msra.mxu0 0
  %556 = vmatpush.bf16.xpose.msra.mxu0 0
  %557 = vmatpush.bf16.xpose.msra.mxu0 0
  %558 = vmatpush.bf16.xpose.msra.mxu0 0
  %559 = vmatpush.bf16.xpose.msra.mxu0 0
  %560 = vmatpush.bf16.xpose.msra.mxu0 0
  %561 = vmatpush.bf16.xpose.msra.mxu0 0
  %562 = vmatpush.bf16.xpose.msra.mxu0 %v553
  %563 = vmatmul.bf16.gmra.mxu0 %v550
  %v564 = vpop.f32.mrf.mxu0
  %v565 = vadd.f32 0.0, %v564
  %v566 = vpop.f32.mrf.mxu0
  %567 = vdwg.mxu0
  %v569 = vsel %vm111, %v39, 0
  %v572 = vsel %vm111, %v71, 0
  %574 = vmatpush.bf16.xpose.msra.mxu0 0
  %575 = vmatpush.bf16.xpose.msra.mxu0 0
  %576 = vmatpush.bf16.xpose.msra.mxu0 0
  %577 = vmatpush.bf16.xpose.msra.mxu0 0
  %578 = vmatpush.bf16.xpose.msra.mxu0 0
  %579 = vmatpush.bf16.xpose.msra.mxu0 0
  %580 = vmatpush.bf16.xpose.msra.mxu0 0
  %581 = vmatpush.bf16.xpose.msra.mxu0 %v572
  %582 = vmatmul.bf16.gmra.mxu0 %v569
  %v583 = vpop.f32.mrf.mxu0
  %v584 = vadd.f32 0.0, %v583
  %v585 = vpop.f32.mrf.mxu0
  %586 = vdwg.mxu0
  %v588 = vsel %vm111, %v40, 0
  %v591 = vsel %vm111, %v72, 0
  %593 = vmatpush.bf16.xpose.msra.mxu0 0
  %594 = vmatpush.bf16.xpose.msra.mxu0 0
  %595 = vmatpush.bf16.xpose.msra.mxu0 0
  %596 = vmatpush.bf16.xpose.msra.mxu0 0
  %597 = vmatpush.bf16.xpose.msra.mxu0 0
  %598 = vmatpush.bf16.xpose.msra.mxu0 0
  %599 = vmatpush.bf16.xpose.msra.mxu0 0
  %600 = vmatpush.bf16.xpose.msra.mxu0 %v591
  %601 = vmatmul.bf16.gmra.mxu0 %v588
  %v602 = vpop.f32.mrf.mxu0
  %v603 = vadd.f32 0.0, %v602
  %v604 = vpop.f32.mrf.mxu0
  %605 = vdwg.mxu0
  %v607 = vsel %vm111, %v41, 0
  %v610 = vsel %vm111, %v73, 0
  %612 = vmatpush.bf16.xpose.msra.mxu0 0
  %613 = vmatpush.bf16.xpose.msra.mxu0 0
  %614 = vmatpush.bf16.xpose.msra.mxu0 0
  %615 = vmatpush.bf16.xpose.msra.mxu0 0
  %616 = vmatpush.bf16.xpose.msra.mxu0 0
  %617 = vmatpush.bf16.xpose.msra.mxu0 0
  %618 = vmatpush.bf16.xpose.msra.mxu0 0
  %619 = vmatpush.bf16.xpose.msra.mxu0 %v610
  %620 = vmatmul.bf16.gmra.mxu0 %v607
  %v621 = vpop.f32.mrf.mxu0
  %v622 = vadd.f32 0.0, %v621
  %v623 = vpop.f32.mrf.mxu0
  %624 = vdwg.mxu0
  %v626 = vsel %vm111, %v42, 0
  %v629 = vsel %vm111, %v74, 0
  %631 = vmatpush.bf16.xpose.msra.mxu0 0
  %632 = vmatpush.bf16.xpose.msra.mxu0 0
  %633 = vmatpush.bf16.xpose.msra.mxu0 0
  %634 = vmatpush.bf16.xpose.msra.mxu0 0
  %635 = vmatpush.bf16.xpose.msra.mxu0 0
  %636 = vmatpush.bf16.xpose.msra.mxu0 0
  %637 = vmatpush.bf16.xpose.msra.mxu0 0
  %638 = vmatpush.bf16.xpose.msra.mxu0 %v629
  %639 = vmatmul.bf16.gmra.mxu0 %v626
  %v640 = vpop.f32.mrf.mxu0
  %v641 = vadd.f32 0.0, %v640
  %v642 = vpop.f32.mrf.mxu0
  %643 = vdwg.mxu0
  %v645 = vsel %vm111, %v43, 0
  %v648 = vsel %vm111, %v75, 0
  %650 = vmatpush.bf16.xpose.msra.mxu0 0
  %651 = vmatpush.bf16.xpose.msra.mxu0 0
  %652 = vmatpush.bf16.xpose.msra.mxu0 0
  %653 = vmatpush.bf16.xpose.msra.mxu0 0
  %654 = vmatpush.bf16.xpose.msra.mxu0 0
  %655 = vmatpush.bf16.xpose.msra.mxu0 0
  %656 = vmatpush.bf16.xpose.msra.mxu0 0
  %657 = vmatpush.bf16.xpose.msra.mxu0 %v648
  %658 = vmatmul.bf16.gmra.mxu0 %v645
  %v659 = vpop.f32.mrf.mxu0
  %v660 = vadd.f32 0.0, %v659
  %v661 = vpop.f32.mrf.mxu0
  %662 = vdwg.mxu0
  %v664 = vsel %vm111, %v44, 0
  %v667 = vsel %vm111, %v76, 0
  %669 = vmatpush.bf16.xpose.msra.mxu0 0
  %670 = vmatpush.bf16.xpose.msra.mxu0 0
  %671 = vmatpush.bf16.xpose.msra.mxu0 0
  %672 = vmatpush.bf16.xpose.msra.mxu0 0
  %673 = vmatpush.bf16.xpose.msra.mxu0 0
  %674 = vmatpush.bf16.xpose.msra.mxu0 0
  %675 = vmatpush.bf16.xpose.msra.mxu0 0
  %676 = vmatpush.bf16.xpose.msra.mxu0 %v667
  %677 = vmatmul.bf16.gmra.mxu0 %v664
  %v678 = vpop.f32.mrf.mxu0
  %v679 = vadd.f32 0.0, %v678
  %v680 = vpop.f32.mrf.mxu0
  %681 = vdwg.mxu0
  %v683 = vsel %vm111, %v45, 0
  %v686 = vsel %vm111, %v77, 0
  %688 = vmatpush.bf16.xpose.msra.mxu0 0
  %689 = vmatpush.bf16.xpose.msra.mxu0 0
  %690 = vmatpush.bf16.xpose.msra.mxu0 0
  %691 = vmatpush.bf16.xpose.msra.mxu0 0
  %692 = vmatpush.bf16.xpose.msra.mxu0 0
  %693 = vmatpush.bf16.xpose.msra.mxu0 0
  %694 = vmatpush.bf16.xpose.msra.mxu0 0
  %695 = vmatpush.bf16.xpose.msra.mxu0 %v686
  %696 = vmatmul.bf16.gmra.mxu0 %v683
  %v697 = vpop.f32.mrf.mxu0
  %v698 = vadd.f32 0.0, %v697
  %v699 = vpop.f32.mrf.mxu0
  %700 = vdwg.mxu0
  %v702 = vsel %vm111, %v46, 0
  %v705 = vsel %vm111, %v78, 0
  %707 = vmatpush.bf16.xpose.msra.mxu0 0
  %708 = vmatpush.bf16.xpose.msra.mxu0 0
  %709 = vmatpush.bf16.xpose.msra.mxu0 0
  %710 = vmatpush.bf16.xpose.msra.mxu0 0
  %711 = vmatpush.bf16.xpose.msra.mxu0 0
  %712 = vmatpush.bf16.xpose.msra.mxu0 0
  %713 = vmatpush.bf16.xpose.msra.mxu0 0
  %714 = vmatpush.bf16.xpose.msra.mxu0 %v705
  %715 = vmatmul.bf16.gmra.mxu0 %v702
  %v716 = vpop.f32.mrf.mxu0
  %v717 = vadd.f32 0.0, %v716
  %v718 = vpop.f32.mrf.mxu0
  %719 = vdwg.mxu0
  %v720 = vmul.f32 %v128, 0.35355338
  %v721 = vmul.f32 %v147, 0.35355338
  %v722 = vmul.f32 %v166, 0.35355338
  %v723 = vmul.f32 %v185, 0.35355338
  %v724 = vmul.f32 %v204, 0.35355338
  %v725 = vmul.f32 %v223, 0.35355338
  %v726 = vmul.f32 %v242, 0.35355338
  %v727 = vmul.f32 %v261, 0.35355338
  %v728 = vmul.f32 %v280, 0.35355338
  %v729 = vmul.f32 %v299, 0.35355338
  %v730 = vmul.f32 %v318, 0.35355338
  %v731 = vmul.f32 %v337, 0.35355338
  %v732 = vmul.f32 %v356, 0.35355338
  %v733 = vmul.f32 %v375, 0.35355338
  %v734 = vmul.f32 %v394, 0.35355338
  %v735 = vmul.f32 %v413, 0.35355338
  %v736 = vmul.f32 %v432, 0.35355338
  %v737 = vmul.f32 %v451, 0.35355338
  %v738 = vmul.f32 %v470, 0.35355338
  %v739 = vmul.f32 %v489, 0.35355338
  %v740 = vmul.f32 %v508, 0.35355338
  %v741 = vmul.f32 %v527, 0.35355338
  %v742 = vmul.f32 %v546, 0.35355338
  %v743 = vmul.f32 %v565, 0.35355338
  %v744 = vmul.f32 %v584, 0.35355338
  %v745 = vmul.f32 %v603, 0.35355338
  %v746 = vmul.f32 %v622, 0.35355338
  %v747 = vmul.f32 %v641, 0.35355338
  %v748 = vmul.f32 %v660, 0.35355338
  %v749 = vmul.f32 %v679, 0.35355338
  %v750 = vmul.f32 %v698, 0.35355338
  %v751 = vmul.f32 %v717, 0.35355338
  %v752 = vsel %vm111, %v720, -inf
  %753 = vmax.xlane.f32.xlu0 %v752
  %v754 = vpop.xlane.xlu0 %753
  %v755 = vsel %vm111, %v721, -inf
  %756 = vmax.xlane.f32.xlu0 %v755
  %v757 = vpop.xlane.xlu0 %756
  %v758 = vsel %vm111, %v722, -inf
  %759 = vmax.xlane.f32.xlu0 %v758
  %v760 = vpop.xlane.xlu0 %759
  %v761 = vsel %vm111, %v723, -inf
  %762 = vmax.xlane.f32.xlu0 %v761
  %v763 = vpop.xlane.xlu0 %762
  %v764 = vsel %vm111, %v724, -inf
  %765 = vmax.xlane.f32.xlu0 %v764
  %v766 = vpop.xlane.xlu0 %765
  %v767 = vsel %vm111, %v725, -inf
  %768 = vmax.xlane.f32.xlu0 %v767
  %v769 = vpop.xlane.xlu0 %768
  %v770 = vsel %vm111, %v726, -inf
  %771 = vmax.xlane.f32.xlu0 %v770
  %v772 = vpop.xlane.xlu0 %771
  %v773 = vsel %vm111, %v727, -inf
  %774 = vmax.xlane.f32.xlu0 %v773
  %v775 = vpop.xlane.xlu0 %774
  %v776 = vsel %vm111, %v728, -inf
  %777 = vmax.xlane.f32.xlu0 %v776
  %v778 = vpop.xlane.xlu0 %777
  %v779 = vsel %vm111, %v729, -inf
  %780 = vmax.xlane.f32.xlu0 %v779
  %v781 = vpop.xlane.xlu0 %780
  %v782 = vsel %vm111, %v730, -inf
  %783 = vmax.xlane.f32.xlu0 %v782
  %v784 = vpop.xlane.xlu0 %783
  %v785 = vsel %vm111, %v731, -inf
  %786 = vmax.xlane.f32.xlu0 %v785
  %v787 = vpop.xlane.xlu0 %786
  %v788 = vsel %vm111, %v732, -inf
  %789 = vmax.xlane.f32.xlu0 %v788
  %v790 = vpop.xlane.xlu0 %789
  %v791 = vsel %vm111, %v733, -inf
  %792 = vmax.xlane.f32.xlu0 %v791
  %v793 = vpop.xlane.xlu0 %792
  %v794 = vsel %vm111, %v734, -inf
  %795 = vmax.xlane.f32.xlu0 %v794
  %v796 = vpop.xlane.xlu0 %795
  %v797 = vsel %vm111, %v735, -inf
  %798 = vmax.xlane.f32.xlu0 %v797
  %v799 = vpop.xlane.xlu0 %798
  %v800 = vsel %vm111, %v736, -inf
  %801 = vmax.xlane.f32.xlu0 %v800
  %v802 = vpop.xlane.xlu0 %801
  %v803 = vsel %vm111, %v737, -inf
  %804 = vmax.xlane.f32.xlu0 %v803
  %v805 = vpop.xlane.xlu0 %804
  %v806 = vsel %vm111, %v738, -inf
  %807 = vmax.xlane.f32.xlu0 %v806
  %v808 = vpop.xlane.xlu0 %807
  %v809 = vsel %vm111, %v739, -inf
  %810 = vmax.xlane.f32.xlu0 %v809
  %v811 = vpop.xlane.xlu0 %810
  %v812 = vsel %vm111, %v740, -inf
  %813 = vmax.xlane.f32.xlu0 %v812
  %v814 = vpop.xlane.xlu0 %813
  %v815 = vsel %vm111, %v741, -inf
  %816 = vmax.xlane.f32.xlu0 %v815
  %v817 = vpop.xlane.xlu0 %816
  %v818 = vsel %vm111, %v742, -inf
  %819 = vmax.xlane.f32.xlu0 %v818
  %v820 = vpop.xlane.xlu0 %819
  %v821 = vsel %vm111, %v743, -inf
  %822 = vmax.xlane.f32.xlu0 %v821
  %v823 = vpop.xlane.xlu0 %822
  %v824 = vsel %vm111, %v744, -inf
  %825 = vmax.xlane.f32.xlu0 %v824
  %v826 = vpop.xlane.xlu0 %825
  %v827 = vsel %vm111, %v745, -inf
  %828 = vmax.xlane.f32.xlu0 %v827
  %v829 = vpop.xlane.xlu0 %828
  %v830 = vsel %vm111, %v746, -inf
  %831 = vmax.xlane.f32.xlu0 %v830
  %v832 = vpop.xlane.xlu0 %831
  %v833 = vsel %vm111, %v747, -inf
  %834 = vmax.xlane.f32.xlu0 %v833
  %v835 = vpop.xlane.xlu0 %834
  %v836 = vsel %vm111, %v748, -inf
  %837 = vmax.xlane.f32.xlu0 %v836
  %v838 = vpop.xlane.xlu0 %837
  %v839 = vsel %vm111, %v749, -inf
  %840 = vmax.xlane.f32.xlu0 %v839
  %v841 = vpop.xlane.xlu0 %840
  %v842 = vsel %vm111, %v750, -inf
  %843 = vmax.xlane.f32.xlu0 %v842
  %v844 = vpop.xlane.xlu0 %843
  %v845 = vsel %vm111, %v751, -inf
  %846 = vmax.xlane.f32.xlu0 %v845
  %v847 = vpop.xlane.xlu0 %846
  %v848 = vsub.f32 %v720, %v754
  %v849 = vsub.f32 %v721, %v757
  %v850 = vsub.f32 %v722, %v760
  %v851 = vsub.f32 %v723, %v763
  %v852 = vsub.f32 %v724, %v766
  %v853 = vsub.f32 %v725, %v769
  %v854 = vsub.f32 %v726, %v772
  %v855 = vsub.f32 %v727, %v775
  %v856 = vsub.f32 %v728, %v778
  %v857 = vsub.f32 %v729, %v781
  %v858 = vsub.f32 %v730, %v784
  %v859 = vsub.f32 %v731, %v787
  %v860 = vsub.f32 %v732, %v790
  %v861 = vsub.f32 %v733, %v793
  %v862 = vsub.f32 %v734, %v796
  %v863 = vsub.f32 %v735, %v799
  %v864 = vsub.f32 %v736, %v802
  %v865 = vsub.f32 %v737, %v805
  %v866 = vsub.f32 %v738, %v808
  %v867 = vsub.f32 %v739, %v811
  %v868 = vsub.f32 %v740, %v814
  %v869 = vsub.f32 %v741, %v817
  %v870 = vsub.f32 %v742, %v820
  %v871 = vsub.f32 %v743, %v823
  %v872 = vsub.f32 %v744, %v826
  %v873 = vsub.f32 %v745, %v829
  %v874 = vsub.f32 %v746, %v832
  %v875 = vsub.f32 %v747, %v835
  %v876 = vsub.f32 %v748, %v838
  %v877 = vsub.f32 %v749, %v841
  %v878 = vsub.f32 %v750, %v844
  %v879 = vsub.f32 %v751, %v847
  %v880 = vmul.f32 %v848, 1.442695
  %v881 = vpow.pop %v880
  %v882 = vmul.f32 %v849, 1.442695
  %v883 = vpow.pop %v882
  %v884 = vmul.f32 %v850, 1.442695
  %v885 = vpow.pop %v884
  %v886 = vmul.f32 %v851, 1.442695
  %v887 = vpow.pop %v886
  %v888 = vmul.f32 %v852, 1.442695
  %v889 = vpow.pop %v888
  %v890 = vmul.f32 %v853, 1.442695
  %v891 = vpow.pop %v890
  %v892 = vmul.f32 %v854, 1.442695
  %v893 = vpow.pop %v892
  %v894 = vmul.f32 %v855, 1.442695
  %v895 = vpow.pop %v894
  %v896 = vmul.f32 %v856, 1.442695
  %v897 = vpow.pop %v896
  %v898 = vmul.f32 %v857, 1.442695
  %v899 = vpow.pop %v898
  %v900 = vmul.f32 %v858, 1.442695
  %v901 = vpow.pop %v900
  %v902 = vmul.f32 %v859, 1.442695
  %v903 = vpow.pop %v902
  %v904 = vmul.f32 %v860, 1.442695
  %v905 = vpow.pop %v904
  %v906 = vmul.f32 %v861, 1.442695
  %v907 = vpow.pop %v906
  %v908 = vmul.f32 %v862, 1.442695
  %v909 = vpow.pop %v908
  %v910 = vmul.f32 %v863, 1.442695
  %v911 = vpow.pop %v910
  %v912 = vmul.f32 %v864, 1.442695
  %v913 = vpow.pop %v912
  %v914 = vmul.f32 %v865, 1.442695
  %v915 = vpow.pop %v914
  %v916 = vmul.f32 %v866, 1.442695
  %v917 = vpow.pop %v916
  %v918 = vmul.f32 %v867, 1.442695
  %v919 = vpow.pop %v918
  %v920 = vmul.f32 %v868, 1.442695
  %v921 = vpow.pop %v920
  %v922 = vmul.f32 %v869, 1.442695
  %v923 = vpow.pop %v922
  %v924 = vmul.f32 %v870, 1.442695
  %v925 = vpow.pop %v924
  %v926 = vmul.f32 %v871, 1.442695
  %v927 = vpow.pop %v926
  %v928 = vmul.f32 %v872, 1.442695
  %v929 = vpow.pop %v928
  %v930 = vmul.f32 %v873, 1.442695
  %v931 = vpow.pop %v930
  %v932 = vmul.f32 %v874, 1.442695
  %v933 = vpow.pop %v932
  %v934 = vmul.f32 %v875, 1.442695
  %v935 = vpow.pop %v934
  %v936 = vmul.f32 %v876, 1.442695
  %v937 = vpow.pop %v936
  %v938 = vmul.f32 %v877, 1.442695
  %v939 = vpow.pop %v938
  %v940 = vmul.f32 %v878, 1.442695
  %v941 = vpow.pop %v940
  %v942 = vmul.f32 %v879, 1.442695
  %v943 = vpow.pop %v942
  %v944 = vsel %vm111, %v881, 0.0
  %945 = vadd.xlane.f32.xlu0 %v944
  %v946 = vpop.xlane.xlu0 %945
  %v947 = vsel %vm111, %v883, 0.0
  %948 = vadd.xlane.f32.xlu0 %v947
  %v949 = vpop.xlane.xlu0 %948
  %v950 = vsel %vm111, %v885, 0.0
  %951 = vadd.xlane.f32.xlu0 %v950
  %v952 = vpop.xlane.xlu0 %951
  %v953 = vsel %vm111, %v887, 0.0
  %954 = vadd.xlane.f32.xlu0 %v953
  %v955 = vpop.xlane.xlu0 %954
  %v956 = vsel %vm111, %v889, 0.0
  %957 = vadd.xlane.f32.xlu0 %v956
  %v958 = vpop.xlane.xlu0 %957
  %v959 = vsel %vm111, %v891, 0.0
  %960 = vadd.xlane.f32.xlu0 %v959
  %v961 = vpop.xlane.xlu0 %960
  %v962 = vsel %vm111, %v893, 0.0
  %963 = vadd.xlane.f32.xlu0 %v962
  %v964 = vpop.xlane.xlu0 %963
  %v965 = vsel %vm111, %v895, 0.0
  %966 = vadd.xlane.f32.xlu0 %v965
  %v967 = vpop.xlane.xlu0 %966
  %v968 = vsel %vm111, %v897, 0.0
  %969 = vadd.xlane.f32.xlu0 %v968
  %v970 = vpop.xlane.xlu0 %969
  %v971 = vsel %vm111, %v899, 0.0
  %972 = vadd.xlane.f32.xlu0 %v971
  %v973 = vpop.xlane.xlu0 %972
  %v974 = vsel %vm111, %v901, 0.0
  %975 = vadd.xlane.f32.xlu0 %v974
  %v976 = vpop.xlane.xlu0 %975
  %v977 = vsel %vm111, %v903, 0.0
  %978 = vadd.xlane.f32.xlu0 %v977
  %v979 = vpop.xlane.xlu0 %978
  %v980 = vsel %vm111, %v905, 0.0
  %981 = vadd.xlane.f32.xlu0 %v980
  %v982 = vpop.xlane.xlu0 %981
  %v983 = vsel %vm111, %v907, 0.0
  %984 = vadd.xlane.f32.xlu0 %v983
  %v985 = vpop.xlane.xlu0 %984
  %v986 = vsel %vm111, %v909, 0.0
  %987 = vadd.xlane.f32.xlu0 %v986
  %v988 = vpop.xlane.xlu0 %987
  %v989 = vsel %vm111, %v911, 0.0
  %990 = vadd.xlane.f32.xlu0 %v989
  %v991 = vpop.xlane.xlu0 %990
  %v992 = vsel %vm111, %v913, 0.0
  %993 = vadd.xlane.f32.xlu0 %v992
  %v994 = vpop.xlane.xlu0 %993
  %v995 = vsel %vm111, %v915, 0.0
  %996 = vadd.xlane.f32.xlu0 %v995
  %v997 = vpop.xlane.xlu0 %996
  %v998 = vsel %vm111, %v917, 0.0
  %999 = vadd.xlane.f32.xlu0 %v998
  %v1000 = vpop.xlane.xlu0 %999
  %v1001 = vsel %vm111, %v919, 0.0
  %1002 = vadd.xlane.f32.xlu0 %v1001
  %v1003 = vpop.xlane.xlu0 %1002
  %v1004 = vsel %vm111, %v921, 0.0
  %1005 = vadd.xlane.f32.xlu0 %v1004
  %v1006 = vpop.xlane.xlu0 %1005
  %v1007 = vsel %vm111, %v923, 0.0
  %1008 = vadd.xlane.f32.xlu0 %v1007
  %v1009 = vpop.xlane.xlu0 %1008
  %v1010 = vsel %vm111, %v925, 0.0
  %1011 = vadd.xlane.f32.xlu0 %v1010
  %v1012 = vpop.xlane.xlu0 %1011
  %v1013 = vsel %vm111, %v927, 0.0
  %1014 = vadd.xlane.f32.xlu0 %v1013
  %v1015 = vpop.xlane.xlu0 %1014
  %v1016 = vsel %vm111, %v929, 0.0
  %1017 = vadd.xlane.f32.xlu0 %v1016
  %v1018 = vpop.xlane.xlu0 %1017
  %v1019 = vsel %vm111, %v931, 0.0
  %1020 = vadd.xlane.f32.xlu0 %v1019
  %v1021 = vpop.xlane.xlu0 %1020
  %v1022 = vsel %vm111, %v933, 0.0
  %1023 = vadd.xlane.f32.xlu0 %v1022
  %v1024 = vpop.xlane.xlu0 %1023
  %v1025 = vsel %vm111, %v935, 0.0
  %1026 = vadd.xlane.f32.xlu0 %v1025
  %v1027 = vpop.xlane.xlu0 %1026
  %v1028 = vsel %vm111, %v937, 0.0
  %1029 = vadd.xlane.f32.xlu0 %v1028
  %v1030 = vpop.xlane.xlu0 %1029
  %v1031 = vsel %vm111, %v939, 0.0
  %1032 = vadd.xlane.f32.xlu0 %v1031
  %v1033 = vpop.xlane.xlu0 %1032
  %v1034 = vsel %vm111, %v941, 0.0
  %1035 = vadd.xlane.f32.xlu0 %v1034
  %v1036 = vpop.xlane.xlu0 %1035
  %v1037 = vsel %vm111, %v943, 0.0
  %1038 = vadd.xlane.f32.xlu0 %v1037
  %v1039 = vpop.xlane.xlu0 %1038
  %v1040 = vrcp.pop %v946
  %v1041 = vrcp.pop %v949
  %v1042 = vrcp.pop %v952
  %v1043 = vrcp.pop %v955
  %v1044 = vrcp.pop %v958
  %v1045 = vrcp.pop %v961
  %v1046 = vrcp.pop %v964
  %v1047 = vrcp.pop %v967
  %v1048 = vrcp.pop %v970
  %v1049 = vrcp.pop %v973
  %v1050 = vrcp.pop %v976
  %v1051 = vrcp.pop %v979
  %v1052 = vrcp.pop %v982
  %v1053 = vrcp.pop %v985
  %v1054 = vrcp.pop %v988
  %v1055 = vrcp.pop %v991
  %v1056 = vrcp.pop %v994
  %v1057 = vrcp.pop %v997
  %v1058 = vrcp.pop %v1000
  %v1059 = vrcp.pop %v1003
  %v1060 = vrcp.pop %v1006
  %v1061 = vrcp.pop %v1009
  %v1062 = vrcp.pop %v1012
  %v1063 = vrcp.pop %v1015
  %v1064 = vrcp.pop %v1018
  %v1065 = vrcp.pop %v1021
  %v1066 = vrcp.pop %v1024
  %v1067 = vrcp.pop %v1027
  %v1068 = vrcp.pop %v1030
  %v1069 = vrcp.pop %v1033
  %v1070 = vrcp.pop %v1036
  %v1071 = vrcp.pop %v1039
  %v1072 = vmul.f32 %v881, %v1040
  %v1073 = vmul.f32 %v883, %v1041
  %v1074 = vmul.f32 %v885, %v1042
  %v1075 = vmul.f32 %v887, %v1043
  %v1076 = vmul.f32 %v889, %v1044
  %v1077 = vmul.f32 %v891, %v1045
  %v1078 = vmul.f32 %v893, %v1046
  %v1079 = vmul.f32 %v895, %v1047
  %v1080 = vmul.f32 %v897, %v1048
  %v1081 = vmul.f32 %v899, %v1049
  %v1082 = vmul.f32 %v901, %v1050
  %v1083 = vmul.f32 %v903, %v1051
  %v1084 = vmul.f32 %v905, %v1052
  %v1085 = vmul.f32 %v907, %v1053
  %v1086 = vmul.f32 %v909, %v1054
  %v1087 = vmul.f32 %v911, %v1055
  %v1088 = vmul.f32 %v913, %v1056
  %v1089 = vmul.f32 %v915, %v1057
  %v1090 = vmul.f32 %v917, %v1058
  %v1091 = vmul.f32 %v919, %v1059
  %v1092 = vmul.f32 %v921, %v1060
  %v1093 = vmul.f32 %v923, %v1061
  %v1094 = vmul.f32 %v925, %v1062
  %v1095 = vmul.f32 %v927, %v1063
  %v1096 = vmul.f32 %v929, %v1064
  %v1097 = vmul.f32 %v931, %v1065
  %v1098 = vmul.f32 %v933, %v1066
  %v1099 = vmul.f32 %v935, %v1067
  %v1100 = vmul.f32 %v937, %v1068
  %v1101 = vmul.f32 %v939, %v1069
  %v1102 = vmul.f32 %v941, %v1070
  %v1103 = vmul.f32 %v943, %v1071
  %v1104 = vpack.c.bf16 %v1072, %v1072
  %v1105 = vpack.c.bf16 %v1073, %v1073
  %v1106 = vpack.c.bf16 %v1074, %v1074
  %v1107 = vpack.c.bf16 %v1075, %v1075
  %v1108 = vpack.c.bf16 %v1076, %v1076
  %v1109 = vpack.c.bf16 %v1077, %v1077
  %v1110 = vpack.c.bf16 %v1078, %v1078
  %v1111 = vpack.c.bf16 %v1079, %v1079
  %v1112 = vpack.c.bf16 %v1080, %v1080
  %v1113 = vpack.c.bf16 %v1081, %v1081
  %v1114 = vpack.c.bf16 %v1082, %v1082
  %v1115 = vpack.c.bf16 %v1083, %v1083
  %v1116 = vpack.c.bf16 %v1084, %v1084
  %v1117 = vpack.c.bf16 %v1085, %v1085
  %v1118 = vpack.c.bf16 %v1086, %v1086
  %v1119 = vpack.c.bf16 %v1087, %v1087
  %v1120 = vpack.c.bf16 %v1088, %v1088
  %v1121 = vpack.c.bf16 %v1089, %v1089
  %v1122 = vpack.c.bf16 %v1090, %v1090
  %v1123 = vpack.c.bf16 %v1091, %v1091
  %v1124 = vpack.c.bf16 %v1092, %v1092
  %v1125 = vpack.c.bf16 %v1093, %v1093
  %v1126 = vpack.c.bf16 %v1094, %v1094
  %v1127 = vpack.c.bf16 %v1095, %v1095
  %v1128 = vpack.c.bf16 %v1096, %v1096
  %v1129 = vpack.c.bf16 %v1097, %v1097
  %v1130 = vpack.c.bf16 %v1098, %v1098
  %v1131 = vpack.c.bf16 %v1099, %v1099
  %v1132 = vpack.c.bf16 %v1100, %v1100
  %v1133 = vpack.c.bf16 %v1101, %v1101
  %v1134 = vpack.c.bf16 %v1102, %v1102
  %v1135 = vpack.c.bf16 %v1103, %v1103
  %v1137 = vsel %vm111, %v1104, 0
  %vm1139 = vcmask 1043456
  %v1141 = vsel %vm1139, %v79, 0
  %1143 = vmatpush.bf16.msra.mxu0 0
  %1144 = vmatpush.bf16.msra.mxu0 0
  %1145 = vmatpush.bf16.msra.mxu0 0
  %1146 = vmatpush.bf16.msra.mxu0 0
  %1147 = vmatpush.bf16.msra.mxu0 0
  %1148 = vmatpush.bf16.msra.mxu0 0
  %1149 = vmatpush.bf16.msra.mxu0 0
  %1150 = vmatpush.bf16.msra.mxu0 %v1141
  %1151 = vmatmul.bf16.gmra.mxu0 %v1137
  %v1152 = vpop.f32.mrf.mxu0
  %v1153 = vadd.f32 0.0, %v1152
  %v1154 = vpop.f32.mrf.mxu0
  %1155 = vdwg.mxu0
  %v1157 = vsel %vm111, %v1105, 0
  %v1160 = vsel %vm1139, %v80, 0
  %1162 = vmatpush.bf16.msra.mxu0 0
  %1163 = vmatpush.bf16.msra.mxu0 0
  %1164 = vmatpush.bf16.msra.mxu0 0
  %1165 = vmatpush.bf16.msra.mxu0 0
  %1166 = vmatpush.bf16.msra.mxu0 0
  %1167 = vmatpush.bf16.msra.mxu0 0
  %1168 = vmatpush.bf16.msra.mxu0 0
  %1169 = vmatpush.bf16.msra.mxu0 %v1160
  %1170 = vmatmul.bf16.gmra.mxu0 %v1157
  %v1171 = vpop.f32.mrf.mxu0
  %v1172 = vadd.f32 0.0, %v1171
  %v1173 = vpop.f32.mrf.mxu0
  %1174 = vdwg.mxu0
  %v1176 = vsel %vm111, %v1106, 0
  %v1179 = vsel %vm1139, %v81, 0
  %1181 = vmatpush.bf16.msra.mxu0 0
  %1182 = vmatpush.bf16.msra.mxu0 0
  %1183 = vmatpush.bf16.msra.mxu0 0
  %1184 = vmatpush.bf16.msra.mxu0 0
  %1185 = vmatpush.bf16.msra.mxu0 0
  %1186 = vmatpush.bf16.msra.mxu0 0
  %1187 = vmatpush.bf16.msra.mxu0 0
  %1188 = vmatpush.bf16.msra.mxu0 %v1179
  %1189 = vmatmul.bf16.gmra.mxu0 %v1176
  %v1190 = vpop.f32.mrf.mxu0
  %v1191 = vadd.f32 0.0, %v1190
  %v1192 = vpop.f32.mrf.mxu0
  %1193 = vdwg.mxu0
  %v1195 = vsel %vm111, %v1107, 0
  %v1198 = vsel %vm1139, %v82, 0
  %1200 = vmatpush.bf16.msra.mxu0 0
  %1201 = vmatpush.bf16.msra.mxu0 0
  %1202 = vmatpush.bf16.msra.mxu0 0
  %1203 = vmatpush.bf16.msra.mxu0 0
  %1204 = vmatpush.bf16.msra.mxu0 0
  %1205 = vmatpush.bf16.msra.mxu0 0
  %1206 = vmatpush.bf16.msra.mxu0 0
  %1207 = vmatpush.bf16.msra.mxu0 %v1198
  %1208 = vmatmul.bf16.gmra.mxu0 %v1195
  %v1209 = vpop.f32.mrf.mxu0
  %v1210 = vadd.f32 0.0, %v1209
  %v1211 = vpop.f32.mrf.mxu0
  %1212 = vdwg.mxu0
  %v1214 = vsel %vm111, %v1108, 0
  %v1217 = vsel %vm1139, %v83, 0
  %1219 = vmatpush.bf16.msra.mxu0 0
  %1220 = vmatpush.bf16.msra.mxu0 0
  %1221 = vmatpush.bf16.msra.mxu0 0
  %1222 = vmatpush.bf16.msra.mxu0 0
  %1223 = vmatpush.bf16.msra.mxu0 0
  %1224 = vmatpush.bf16.msra.mxu0 0
  %1225 = vmatpush.bf16.msra.mxu0 0
  %1226 = vmatpush.bf16.msra.mxu0 %v1217
  %1227 = vmatmul.bf16.gmra.mxu0 %v1214
  %v1228 = vpop.f32.mrf.mxu0
  %v1229 = vadd.f32 0.0, %v1228
  %v1230 = vpop.f32.mrf.mxu0
  %1231 = vdwg.mxu0
  %v1233 = vsel %vm111, %v1109, 0
  %v1236 = vsel %vm1139, %v84, 0
  %1238 = vmatpush.bf16.msra.mxu0 0
  %1239 = vmatpush.bf16.msra.mxu0 0
  %1240 = vmatpush.bf16.msra.mxu0 0
  %1241 = vmatpush.bf16.msra.mxu0 0
  %1242 = vmatpush.bf16.msra.mxu0 0
  %1243 = vmatpush.bf16.msra.mxu0 0
  %1244 = vmatpush.bf16.msra.mxu0 0
  %1245 = vmatpush.bf16.msra.mxu0 %v1236
  %1246 = vmatmul.bf16.gmra.mxu0 %v1233
  %v1247 = vpop.f32.mrf.mxu0
  %v1248 = vadd.f32 0.0, %v1247
  %v1249 = vpop.f32.mrf.mxu0
  %1250 = vdwg.mxu0
  %v1252 = vsel %vm111, %v1110, 0
  %v1255 = vsel %vm1139, %v85, 0
  %1257 = vmatpush.bf16.msra.mxu0 0
  %1258 = vmatpush.bf16.msra.mxu0 0
  %1259 = vmatpush.bf16.msra.mxu0 0
  %1260 = vmatpush.bf16.msra.mxu0 0
  %1261 = vmatpush.bf16.msra.mxu0 0
  %1262 = vmatpush.bf16.msra.mxu0 0
  %1263 = vmatpush.bf16.msra.mxu0 0
  %1264 = vmatpush.bf16.msra.mxu0 %v1255
  %1265 = vmatmul.bf16.gmra.mxu0 %v1252
  %v1266 = vpop.f32.mrf.mxu0
  %v1267 = vadd.f32 0.0, %v1266
  %v1268 = vpop.f32.mrf.mxu0
  %1269 = vdwg.mxu0
  %v1271 = vsel %vm111, %v1111, 0
  %v1274 = vsel %vm1139, %v86, 0
  %1276 = vmatpush.bf16.msra.mxu0 0
  %1277 = vmatpush.bf16.msra.mxu0 0
  %1278 = vmatpush.bf16.msra.mxu0 0
  %1279 = vmatpush.bf16.msra.mxu0 0
  %1280 = vmatpush.bf16.msra.mxu0 0
  %1281 = vmatpush.bf16.msra.mxu0 0
  %1282 = vmatpush.bf16.msra.mxu0 0
  %1283 = vmatpush.bf16.msra.mxu0 %v1274
  %1284 = vmatmul.bf16.gmra.mxu0 %v1271
  %v1285 = vpop.f32.mrf.mxu0
  %v1286 = vadd.f32 0.0, %v1285
  %v1287 = vpop.f32.mrf.mxu0
  %1288 = vdwg.mxu0
  %v1290 = vsel %vm111, %v1112, 0
  %v1293 = vsel %vm1139, %v87, 0
  %1295 = vmatpush.bf16.msra.mxu0 0
  %1296 = vmatpush.bf16.msra.mxu0 0
  %1297 = vmatpush.bf16.msra.mxu0 0
  %1298 = vmatpush.bf16.msra.mxu0 0
  %1299 = vmatpush.bf16.msra.mxu0 0
  %1300 = vmatpush.bf16.msra.mxu0 0
  %1301 = vmatpush.bf16.msra.mxu0 0
  %1302 = vmatpush.bf16.msra.mxu0 %v1293
  %1303 = vmatmul.bf16.gmra.mxu0 %v1290
  %v1304 = vpop.f32.mrf.mxu0
  %v1305 = vadd.f32 0.0, %v1304
  %v1306 = vpop.f32.mrf.mxu0
  %1307 = vdwg.mxu0
  %v1309 = vsel %vm111, %v1113, 0
  %v1312 = vsel %vm1139, %v88, 0
  %1314 = vmatpush.bf16.msra.mxu0 0
  %1315 = vmatpush.bf16.msra.mxu0 0
  %1316 = vmatpush.bf16.msra.mxu0 0
  %1317 = vmatpush.bf16.msra.mxu0 0
  %1318 = vmatpush.bf16.msra.mxu0 0
  %1319 = vmatpush.bf16.msra.mxu0 0
  %1320 = vmatpush.bf16.msra.mxu0 0
  %1321 = vmatpush.bf16.msra.mxu0 %v1312
  %1322 = vmatmul.bf16.gmra.mxu0 %v1309
  %v1323 = vpop.f32.mrf.mxu0
  %v1324 = vadd.f32 0.0, %v1323
  %v1325 = vpop.f32.mrf.mxu0
  %1326 = vdwg.mxu0
  %v1328 = vsel %vm111, %v1114, 0
  %v1331 = vsel %vm1139, %v89, 0
  %1333 = vmatpush.bf16.msra.mxu0 0
  %1334 = vmatpush.bf16.msra.mxu0 0
  %1335 = vmatpush.bf16.msra.mxu0 0
  %1336 = vmatpush.bf16.msra.mxu0 0
  %1337 = vmatpush.bf16.msra.mxu0 0
  %1338 = vmatpush.bf16.msra.mxu0 0
  %1339 = vmatpush.bf16.msra.mxu0 0
  %1340 = vmatpush.bf16.msra.mxu0 %v1331
  %1341 = vmatmul.bf16.gmra.mxu0 %v1328
  %v1342 = vpop.f32.mrf.mxu0
  %v1343 = vadd.f32 0.0, %v1342
  %v1344 = vpop.f32.mrf.mxu0
  %1345 = vdwg.mxu0
  %v1347 = vsel %vm111, %v1115, 0
  %v1350 = vsel %vm1139, %v90, 0
  %1352 = vmatpush.bf16.msra.mxu0 0
  %1353 = vmatpush.bf16.msra.mxu0 0
  %1354 = vmatpush.bf16.msra.mxu0 0
  %1355 = vmatpush.bf16.msra.mxu0 0
  %1356 = vmatpush.bf16.msra.mxu0 0
  %1357 = vmatpush.bf16.msra.mxu0 0
  %1358 = vmatpush.bf16.msra.mxu0 0
  %1359 = vmatpush.bf16.msra.mxu0 %v1350
  %1360 = vmatmul.bf16.gmra.mxu0 %v1347
  %v1361 = vpop.f32.mrf.mxu0
  %v1362 = vadd.f32 0.0, %v1361
  %v1363 = vpop.f32.mrf.mxu0
  %1364 = vdwg.mxu0
  %v1366 = vsel %vm111, %v1116, 0
  %v1369 = vsel %vm1139, %v91, 0
  %1371 = vmatpush.bf16.msra.mxu0 0
  %1372 = vmatpush.bf16.msra.mxu0 0
  %1373 = vmatpush.bf16.msra.mxu0 0
  %1374 = vmatpush.bf16.msra.mxu0 0
  %1375 = vmatpush.bf16.msra.mxu0 0
  %1376 = vmatpush.bf16.msra.mxu0 0
  %1377 = vmatpush.bf16.msra.mxu0 0
  %1378 = vmatpush.bf16.msra.mxu0 %v1369
  %1379 = vmatmul.bf16.gmra.mxu0 %v1366
  %v1380 = vpop.f32.mrf.mxu0
  %v1381 = vadd.f32 0.0, %v1380
  %v1382 = vpop.f32.mrf.mxu0
  %1383 = vdwg.mxu0
  %v1385 = vsel %vm111, %v1117, 0
  %v1388 = vsel %vm1139, %v92, 0
  %1390 = vmatpush.bf16.msra.mxu0 0
  %1391 = vmatpush.bf16.msra.mxu0 0
  %1392 = vmatpush.bf16.msra.mxu0 0
  %1393 = vmatpush.bf16.msra.mxu0 0
  %1394 = vmatpush.bf16.msra.mxu0 0
  %1395 = vmatpush.bf16.msra.mxu0 0
  %1396 = vmatpush.bf16.msra.mxu0 0
  %1397 = vmatpush.bf16.msra.mxu0 %v1388
  %1398 = vmatmul.bf16.gmra.mxu0 %v1385
  %v1399 = vpop.f32.mrf.mxu0
  %v1400 = vadd.f32 0.0, %v1399
  %v1401 = vpop.f32.mrf.mxu0
  %1402 = vdwg.mxu0
  %v1404 = vsel %vm111, %v1118, 0
  %v1407 = vsel %vm1139, %v93, 0
  %1409 = vmatpush.bf16.msra.mxu0 0
  %1410 = vmatpush.bf16.msra.mxu0 0
  %1411 = vmatpush.bf16.msra.mxu0 0
  %1412 = vmatpush.bf16.msra.mxu0 0
  %1413 = vmatpush.bf16.msra.mxu0 0
  %1414 = vmatpush.bf16.msra.mxu0 0
  %1415 = vmatpush.bf16.msra.mxu0 0
  %1416 = vmatpush.bf16.msra.mxu0 %v1407
  %1417 = vmatmul.bf16.gmra.mxu0 %v1404
  %v1418 = vpop.f32.mrf.mxu0
  %v1419 = vadd.f32 0.0, %v1418
  %v1420 = vpop.f32.mrf.mxu0
  %1421 = vdwg.mxu0
  %v1423 = vsel %vm111, %v1119, 0
  %v1426 = vsel %vm1139, %v94, 0
  %1428 = vmatpush.bf16.msra.mxu0 0
  %1429 = vmatpush.bf16.msra.mxu0 0
  %1430 = vmatpush.bf16.msra.mxu0 0
  %1431 = vmatpush.bf16.msra.mxu0 0
  %1432 = vmatpush.bf16.msra.mxu0 0
  %1433 = vmatpush.bf16.msra.mxu0 0
  %1434 = vmatpush.bf16.msra.mxu0 0
  %1435 = vmatpush.bf16.msra.mxu0 %v1426
  %1436 = vmatmul.bf16.gmra.mxu0 %v1423
  %v1437 = vpop.f32.mrf.mxu0
  %v1438 = vadd.f32 0.0, %v1437
  %v1439 = vpop.f32.mrf.mxu0
  %1440 = vdwg.mxu0
  %v1442 = vsel %vm111, %v1120, 0
  %v1445 = vsel %vm1139, %v95, 0
  %1447 = vmatpush.bf16.msra.mxu0 0
  %1448 = vmatpush.bf16.msra.mxu0 0
  %1449 = vmatpush.bf16.msra.mxu0 0
  %1450 = vmatpush.bf16.msra.mxu0 0
  %1451 = vmatpush.bf16.msra.mxu0 0
  %1452 = vmatpush.bf16.msra.mxu0 0
  %1453 = vmatpush.bf16.msra.mxu0 0
  %1454 = vmatpush.bf16.msra.mxu0 %v1445
  %1455 = vmatmul.bf16.gmra.mxu0 %v1442
  %v1456 = vpop.f32.mrf.mxu0
  %v1457 = vadd.f32 0.0, %v1456
  %v1458 = vpop.f32.mrf.mxu0
  %1459 = vdwg.mxu0
  %v1461 = vsel %vm111, %v1121, 0
  %v1464 = vsel %vm1139, %v96, 0
  %1466 = vmatpush.bf16.msra.mxu0 0
  %1467 = vmatpush.bf16.msra.mxu0 0
  %1468 = vmatpush.bf16.msra.mxu0 0
  %1469 = vmatpush.bf16.msra.mxu0 0
  %1470 = vmatpush.bf16.msra.mxu0 0
  %1471 = vmatpush.bf16.msra.mxu0 0
  %1472 = vmatpush.bf16.msra.mxu0 0
  %1473 = vmatpush.bf16.msra.mxu0 %v1464
  %1474 = vmatmul.bf16.gmra.mxu0 %v1461
  %v1475 = vpop.f32.mrf.mxu0
  %v1476 = vadd.f32 0.0, %v1475
  %v1477 = vpop.f32.mrf.mxu0
  %1478 = vdwg.mxu0
  %v1480 = vsel %vm111, %v1122, 0
  %v1483 = vsel %vm1139, %v97, 0
  %1485 = vmatpush.bf16.msra.mxu0 0
  %1486 = vmatpush.bf16.msra.mxu0 0
  %1487 = vmatpush.bf16.msra.mxu0 0
  %1488 = vmatpush.bf16.msra.mxu0 0
  %1489 = vmatpush.bf16.msra.mxu0 0
  %1490 = vmatpush.bf16.msra.mxu0 0
  %1491 = vmatpush.bf16.msra.mxu0 0
  %1492 = vmatpush.bf16.msra.mxu0 %v1483
  %1493 = vmatmul.bf16.gmra.mxu0 %v1480
  %v1494 = vpop.f32.mrf.mxu0
  %v1495 = vadd.f32 0.0, %v1494
  %v1496 = vpop.f32.mrf.mxu0
  %1497 = vdwg.mxu0
  %v1499 = vsel %vm111, %v1123, 0
  %v1502 = vsel %vm1139, %v98, 0
  %1504 = vmatpush.bf16.msra.mxu0 0
  %1505 = vmatpush.bf16.msra.mxu0 0
  %1506 = vmatpush.bf16.msra.mxu0 0
  %1507 = vmatpush.bf16.msra.mxu0 0
  %1508 = vmatpush.bf16.msra.mxu0 0
  %1509 = vmatpush.bf16.msra.mxu0 0
  %1510 = vmatpush.bf16.msra.mxu0 0
  %1511 = vmatpush.bf16.msra.mxu0 %v1502
  %1512 = vmatmul.bf16.gmra.mxu0 %v1499
  %v1513 = vpop.f32.mrf.mxu0
  %v1514 = vadd.f32 0.0, %v1513
  %v1515 = vpop.f32.mrf.mxu0
  %1516 = vdwg.mxu0
  %v1518 = vsel %vm111, %v1124, 0
  %v1521 = vsel %vm1139, %v99, 0
  %1523 = vmatpush.bf16.msra.mxu0 0
  %1524 = vmatpush.bf16.msra.mxu0 0
  %1525 = vmatpush.bf16.msra.mxu0 0
  %1526 = vmatpush.bf16.msra.mxu0 0
  %1527 = vmatpush.bf16.msra.mxu0 0
  %1528 = vmatpush.bf16.msra.mxu0 0
  %1529 = vmatpush.bf16.msra.mxu0 0
  %1530 = vmatpush.bf16.msra.mxu0 %v1521
  %1531 = vmatmul.bf16.gmra.mxu0 %v1518
  %v1532 = vpop.f32.mrf.mxu0
  %v1533 = vadd.f32 0.0, %v1532
  %v1534 = vpop.f32.mrf.mxu0
  %1535 = vdwg.mxu0
  %v1537 = vsel %vm111, %v1125, 0
  %v1540 = vsel %vm1139, %v100, 0
  %1542 = vmatpush.bf16.msra.mxu0 0
  %1543 = vmatpush.bf16.msra.mxu0 0
  %1544 = vmatpush.bf16.msra.mxu0 0
  %1545 = vmatpush.bf16.msra.mxu0 0
  %1546 = vmatpush.bf16.msra.mxu0 0
  %1547 = vmatpush.bf16.msra.mxu0 0
  %1548 = vmatpush.bf16.msra.mxu0 0
  %1549 = vmatpush.bf16.msra.mxu0 %v1540
  %1550 = vmatmul.bf16.gmra.mxu0 %v1537
  %v1551 = vpop.f32.mrf.mxu0
  %v1552 = vadd.f32 0.0, %v1551
  %v1553 = vpop.f32.mrf.mxu0
  %1554 = vdwg.mxu0
  %v1556 = vsel %vm111, %v1126, 0
  %v1559 = vsel %vm1139, %v101, 0
  %1561 = vmatpush.bf16.msra.mxu0 0
  %1562 = vmatpush.bf16.msra.mxu0 0
  %1563 = vmatpush.bf16.msra.mxu0 0
  %1564 = vmatpush.bf16.msra.mxu0 0
  %1565 = vmatpush.bf16.msra.mxu0 0
  %1566 = vmatpush.bf16.msra.mxu0 0
  %1567 = vmatpush.bf16.msra.mxu0 0
  %1568 = vmatpush.bf16.msra.mxu0 %v1559
  %1569 = vmatmul.bf16.gmra.mxu0 %v1556
  %v1570 = vpop.f32.mrf.mxu0
  %v1571 = vadd.f32 0.0, %v1570
  %v1572 = vpop.f32.mrf.mxu0
  %1573 = vdwg.mxu0
  %v1575 = vsel %vm111, %v1127, 0
  %v1578 = vsel %vm1139, %v102, 0
  %1580 = vmatpush.bf16.msra.mxu0 0
  %1581 = vmatpush.bf16.msra.mxu0 0
  %1582 = vmatpush.bf16.msra.mxu0 0
  %1583 = vmatpush.bf16.msra.mxu0 0
  %1584 = vmatpush.bf16.msra.mxu0 0
  %1585 = vmatpush.bf16.msra.mxu0 0
  %1586 = vmatpush.bf16.msra.mxu0 0
  %1587 = vmatpush.bf16.msra.mxu0 %v1578
  %1588 = vmatmul.bf16.gmra.mxu0 %v1575
  %v1589 = vpop.f32.mrf.mxu0
  %v1590 = vadd.f32 0.0, %v1589
  %v1591 = vpop.f32.mrf.mxu0
  %1592 = vdwg.mxu0
  %v1594 = vsel %vm111, %v1128, 0
  %v1597 = vsel %vm1139, %v103, 0
  %1599 = vmatpush.bf16.msra.mxu0 0
  %1600 = vmatpush.bf16.msra.mxu0 0
  %1601 = vmatpush.bf16.msra.mxu0 0
  %1602 = vmatpush.bf16.msra.mxu0 0
  %1603 = vmatpush.bf16.msra.mxu0 0
  %1604 = vmatpush.bf16.msra.mxu0 0
  %1605 = vmatpush.bf16.msra.mxu0 0
  %1606 = vmatpush.bf16.msra.mxu0 %v1597
  %1607 = vmatmul.bf16.gmra.mxu0 %v1594
  %v1608 = vpop.f32.mrf.mxu0
  %v1609 = vadd.f32 0.0, %v1608
  %v1610 = vpop.f32.mrf.mxu0
  %1611 = vdwg.mxu0
  %v1613 = vsel %vm111, %v1129, 0
  %v1616 = vsel %vm1139, %v104, 0
  %1618 = vmatpush.bf16.msra.mxu0 0
  %1619 = vmatpush.bf16.msra.mxu0 0
  %1620 = vmatpush.bf16.msra.mxu0 0
  %1621 = vmatpush.bf16.msra.mxu0 0
  %1622 = vmatpush.bf16.msra.mxu0 0
  %1623 = vmatpush.bf16.msra.mxu0 0
  %1624 = vmatpush.bf16.msra.mxu0 0
  %1625 = vmatpush.bf16.msra.mxu0 %v1616
  %1626 = vmatmul.bf16.gmra.mxu0 %v1613
  %v1627 = vpop.f32.mrf.mxu0
  %v1628 = vadd.f32 0.0, %v1627
  %v1629 = vpop.f32.mrf.mxu0
  %1630 = vdwg.mxu0
  %v1632 = vsel %vm111, %v1130, 0
  %v1635 = vsel %vm1139, %v105, 0
  %1637 = vmatpush.bf16.msra.mxu0 0
  %1638 = vmatpush.bf16.msra.mxu0 0
  %1639 = vmatpush.bf16.msra.mxu0 0
  %1640 = vmatpush.bf16.msra.mxu0 0
  %1641 = vmatpush.bf16.msra.mxu0 0
  %1642 = vmatpush.bf16.msra.mxu0 0
  %1643 = vmatpush.bf16.msra.mxu0 0
  %1644 = vmatpush.bf16.msra.mxu0 %v1635
  %1645 = vmatmul.bf16.gmra.mxu0 %v1632
  %v1646 = vpop.f32.mrf.mxu0
  %v1647 = vadd.f32 0.0, %v1646
  %v1648 = vpop.f32.mrf.mxu0
  %1649 = vdwg.mxu0
  %v1651 = vsel %vm111, %v1131, 0
  %v1654 = vsel %vm1139, %v106, 0
  %1656 = vmatpush.bf16.msra.mxu0 0
  %1657 = vmatpush.bf16.msra.mxu0 0
  %1658 = vmatpush.bf16.msra.mxu0 0
  %1659 = vmatpush.bf16.msra.mxu0 0
  %1660 = vmatpush.bf16.msra.mxu0 0
  %1661 = vmatpush.bf16.msra.mxu0 0
  %1662 = vmatpush.bf16.msra.mxu0 0
  %1663 = vmatpush.bf16.msra.mxu0 %v1654
  %1664 = vmatmul.bf16.gmra.mxu0 %v1651
  %v1665 = vpop.f32.mrf.mxu0
  %v1666 = vadd.f32 0.0, %v1665
  %v1667 = vpop.f32.mrf.mxu0
  %1668 = vdwg.mxu0
  %v1670 = vsel %vm111, %v1132, 0
  %v1673 = vsel %vm1139, %v107, 0
  %1675 = vmatpush.bf16.msra.mxu0 0
  %1676 = vmatpush.bf16.msra.mxu0 0
  %1677 = vmatpush.bf16.msra.mxu0 0
  %1678 = vmatpush.bf16.msra.mxu0 0
  %1679 = vmatpush.bf16.msra.mxu0 0
  %1680 = vmatpush.bf16.msra.mxu0 0
  %1681 = vmatpush.bf16.msra.mxu0 0
  %1682 = vmatpush.bf16.msra.mxu0 %v1673
  %1683 = vmatmul.bf16.gmra.mxu0 %v1670
  %v1684 = vpop.f32.mrf.mxu0
  %v1685 = vadd.f32 0.0, %v1684
  %v1686 = vpop.f32.mrf.mxu0
  %1687 = vdwg.mxu0
  %v1689 = vsel %vm111, %v1133, 0
  %v1692 = vsel %vm1139, %v108, 0
  %1694 = vmatpush.bf16.msra.mxu0 0
  %1695 = vmatpush.bf16.msra.mxu0 0
  %1696 = vmatpush.bf16.msra.mxu0 0
  %1697 = vmatpush.bf16.msra.mxu0 0
  %1698 = vmatpush.bf16.msra.mxu0 0
  %1699 = vmatpush.bf16.msra.mxu0 0
  %1700 = vmatpush.bf16.msra.mxu0 0
  %1701 = vmatpush.bf16.msra.mxu0 %v1692
  %1702 = vmatmul.bf16.gmra.mxu0 %v1689
  %v1703 = vpop.f32.mrf.mxu0
  %v1704 = vadd.f32 0.0, %v1703
  %v1705 = vpop.f32.mrf.mxu0
  %1706 = vdwg.mxu0
  %v1708 = vsel %vm111, %v1134, 0
  %v1711 = vsel %vm1139, %v109, 0
  %1713 = vmatpush.bf16.msra.mxu0 0
  %1714 = vmatpush.bf16.msra.mxu0 0
  %1715 = vmatpush.bf16.msra.mxu0 0
  %1716 = vmatpush.bf16.msra.mxu0 0
  %1717 = vmatpush.bf16.msra.mxu0 0
  %1718 = vmatpush.bf16.msra.mxu0 0
  %1719 = vmatpush.bf16.msra.mxu0 0
  %1720 = vmatpush.bf16.msra.mxu0 %v1711
  %1721 = vmatmul.bf16.gmra.mxu0 %v1708
  %v1722 = vpop.f32.mrf.mxu0
  %v1723 = vadd.f32 0.0, %v1722
  %v1724 = vpop.f32.mrf.mxu0
  %1725 = vdwg.mxu0
  %v1727 = vsel %vm111, %v1135, 0
  %v1730 = vsel %vm1139, %v110, 0
  %1732 = vmatpush.bf16.msra.mxu0 0
  %1733 = vmatpush.bf16.msra.mxu0 0
  %1734 = vmatpush.bf16.msra.mxu0 0
  %1735 = vmatpush.bf16.msra.mxu0 0
  %1736 = vmatpush.bf16.msra.mxu0 0
  %1737 = vmatpush.bf16.msra.mxu0 0
  %1738 = vmatpush.bf16.msra.mxu0 0
  %1739 = vmatpush.bf16.msra.mxu0 %v1730
  %1740 = vmatmul.bf16.gmra.mxu0 %v1727
  %v1741 = vpop.f32.mrf.mxu0
  %v1742 = vadd.f32 0.0, %v1741
  %v1743 = vpop.f32.mrf.mxu0
  %1744 = vdwg.mxu0
  %1745 = vst.msk [vmem:[%s3] sm:$0xff] %vm111, %v1153
  %1746 = vst.msk [vmem:[%s3 + $0x8] sm:$0xff] %vm111, %v1172
  %1747 = vst.msk [vmem:[%s3 + $0x10] sm:$0xff] %vm111, %v1191
  %1748 = vst.msk [vmem:[%s3 + $0x18] sm:$0xff] %vm111, %v1210
  %1749 = vst.msk [vmem:[%s3 + $0x20] sm:$0xff] %vm111, %v1229
  %1750 = vst.msk [vmem:[%s3 + $0x28] sm:$0xff] %vm111, %v1248
  %1751 = vst.msk [vmem:[%s3 + $0x30] sm:$0xff] %vm111, %v1267
  %1752 = vst.msk [vmem:[%s3 + $0x38] sm:$0xff] %vm111, %v1286
  %1753 = vst.msk [vmem:[%s3 + $0x40] sm:$0xff] %vm111, %v1305
  %1754 = vst.msk [vmem:[%s3 + $0x48] sm:$0xff] %vm111, %v1324
  %1755 = vst.msk [vmem:[%s3 + $0x50] sm:$0xff] %vm111, %v1343
  %1756 = vst.msk [vmem:[%s3 + $0x58] sm:$0xff] %vm111, %v1362
  %1757 = vst.msk [vmem:[%s3 + $0x60] sm:$0xff] %vm111, %v1381
  %1758 = vst.msk [vmem:[%s3 + $0x68] sm:$0xff] %vm111, %v1400
  %1759 = vst.msk [vmem:[%s3 + $0x70] sm:$0xff] %vm111, %v1419
  %1760 = vst.msk [vmem:[%s3 + $0x78] sm:$0xff] %vm111, %v1438
  %1761 = vst.msk [vmem:[%s3 + $0x80] sm:$0xff] %vm111, %v1457
  %1762 = vst.msk [vmem:[%s3 + $0x88] sm:$0xff] %vm111, %v1476
  %1763 = vst.msk [vmem:[%s3 + $0x90] sm:$0xff] %vm111, %v1495
  %1764 = vst.msk [vmem:[%s3 + $0x98] sm:$0xff] %vm111, %v1514
  %1765 = vst.msk [vmem:[%s3 + $0xa0] sm:$0xff] %vm111, %v1533
  %1766 = vst.msk [vmem:[%s3 + $0xa8] sm:$0xff] %vm111, %v1552
  %1767 = vst.msk [vmem:[%s3 + $0xb0] sm:$0xff] %vm111, %v1571
  %1768 = vst.msk [vmem:[%s3 + $0xb8] sm:$0xff] %vm111, %v1590
  %1769 = vst.msk [vmem:[%s3 + $0xc0] sm:$0xff] %vm111, %v1609
  %1770 = vst.msk [vmem:[%s3 + $0xc8] sm:$0xff] %vm111, %v1628
  %1771 = vst.msk [vmem:[%s3 + $0xd0] sm:$0xff] %vm111, %v1647
  %1772 = vst.msk [vmem:[%s3 + $0xd8] sm:$0xff] %vm111, %v1666
  %1773 = vst.msk [vmem:[%s3 + $0xe0] sm:$0xff] %vm111, %v1685
  %1774 = vst.msk [vmem:[%s3 + $0xe8] sm:$0xff] %vm111, %v1704
  %1775 = vst.msk [vmem:[%s3 + $0xf0] sm:$0xff] %vm111, %v1723
  %1776 = vst.msk [vmem:[%s3 + $0xf8] sm:$0xff] %vm111, %v1742
  // Predicated region
  $region14: #{iterative_simulator_fwd.95} parent=0 // pred_check
    _
  $region15: #{iterative_simulator_fwd.95} parent=0 // pred_check_branch
    %1778 = sbr.rel (0) target = $region17
  $region16: #{iterative_simulator_fwd.95} parent=0 // pred_region
    _
  $region17: #{iterative_simulator_fwd.95} parent=0 // pred_fallthru
    _
  // Predicated region
  $region18: #{iterative_simulator_fwd.95} parent=0 // pred_check
    _
  $region19: #{iterative_simulator_fwd.95} parent=0 // pred_check_branch
    %1780 = sbr.rel (0) target = $region21
  $region20: #{iterative_simulator_fwd.95} parent=0 // pred_region
    _
  $region21: #{iterative_simulator_fwd.95} parent=0 // pred_fallthru
    _

</llo_original>
